<compile_context>
chip_gen: v7x
topology: tpu7x:2x2x1
jax: 0.10.0
libtpu: 0.0.40
codegen_flags: <defaults>
</compile_context>

<pallas_src>
import jax
import jax.numpy as jnp
from jax.experimental import pallas as pl
from jax.experimental.pallas import tpu as pltpu

FEATURE_DIM = 25088          # 512 * 7 * 7, as in the PyTorch module
HIDDEN = 512
NUM_BBOX = 4
NUM_CLASSES = 3              # len(label2target): e.g. {bg, classA, classB}
CLS_PAD = 128                # cls columns padded to one full 128-lane block
REG_PAD = 128                # bbox columns padded to one full 128-lane block
N_FUSED = HIDDEN + CLS_PAD   # 640 fused output columns
TK = 6272                    # K tile: 25088 / 6272 = 4 steps (multiple of 128)
ROW_ALIGN = 16               # pad batch rows for bf16 sublane packing

# Keep the kernel's acc[:, HIDDEN:] slice and the fuse layout in sync.
assert N_FUSED == HIDDEN + CLS_PAD
assert FEATURE_DIM % TK == 0 and TK % 128 == 0


def rcnn_head_kernel(x_ref, wq_ref, scale_ref, b1_ref, w2_ref, b2_ref, bc_ref,
                     clss_ref, reg_ref, acc_ref):
    """Fused K-tiled matmul feeding both heads; finalize at the last K step."""
    k = pl.program_id(1)

    @pl.when(k == 0)
    def _():
        acc_ref[...] = jnp.zeros_like(acc_ref)

    # Hot path: [TB, TK] bf16 x [TK, 640] int8->bf16 matmul, f32 accumulation.
    # Per-column scales are applied once at finalize, so the dequant here is
    # a plain cast that hides under the (larger) weight DMA.
    acc_ref[...] += jnp.dot(x_ref[...], wq_ref[...].astype(jnp.bfloat16),
                            preferred_element_type=jnp.float32)

    @pl.when(k == pl.num_programs(1) - 1)
    def _():
        acc = acc_ref[...] * scale_ref[...]          # per-column dequant, f32
        # bbox head: ReLU -> Linear(512, 4 padded to 128) -> Tanh
        h = jnp.maximum(acc[:, :HIDDEN] + b1_ref[...], 0.0)
        reg = jnp.tanh(jnp.dot(h, w2_ref[...],
                               preferred_element_type=jnp.float32) + b2_ref[...])
        reg_ref[...] = reg.astype(reg_ref.dtype)     # lane-dense [TB, 128] store
        # classification head: its columns live at [HIDDEN, HIDDEN + 128).
        clss_ref[...] = (acc[:, HIDDEN:] + bc_ref[...]).astype(clss_ref.dtype)


def quantize_fused(w1, wc):
    """Pack bbox-W1 [25088,512] and cls-W [25088,C] into an int8 [25088,640]
    fused weight with per-column f32 scales (scale applied post-accumulation)."""
    C = wc.shape[1]
    assert C <= CLS_PAD
    wc_pad = jnp.zeros((w1.shape[0], CLS_PAD), jnp.float32).at[:, :C].set(wc)
    w = jnp.concatenate([w1, wc_pad], axis=1)                 # [K, 640] f32
    col_max = jnp.max(jnp.abs(w), axis=0, keepdims=True)      # [1, 640]
    scale = jnp.where(col_max > 0, col_max / 127.0, 1.0)
    q = jnp.clip(jnp.round(w / scale), -127, 127).astype(jnp.int8)
    return q, scale.astype(jnp.float32)


def rcnn_forward(features, params, *, row_shards=1):
    """features: [B, FEATURE_DIM] f32 -> (clss [B, C], reg [B, 4]).

    row_shards: leading "parallel" grid axis.  Keep 1 on single-TC chips
    (v5e/v6e) — each extra shard re-streams the full weight.  On v7x with a
    large ROI batch, row_shards=2 splits the batch across both TensorCores.
    """
    B, K = features.shape
    assert K == FEATURE_DIM
    wq, scale = params["wq"], params["scale"]
    b1, w2p, b2p, bcp = params["b1"], params["w2p"], params["b2p"], params["bcp"]
    C = params["num_classes"]

    # Pad the ROI batch so each row shard is a multiple of 16 rows (bf16
    # sublane packing).  Padded rows are sliced off below.
    align = ROW_ALIGN * row_shards
    Bp = ((B + align - 1) // align) * align
    if Bp != B:
        features = jnp.pad(features, ((0, Bp - B), (0, 0)))
    x = features.astype(jnp.bfloat16)        # halve the feature HBM stream
    TB = Bp // row_shards
    nk = K // TK

    clss_pad, reg_pad = pl.pallas_call(
        rcnn_head_kernel,
        out_shape=(jax.ShapeDtypeStruct((Bp, CLS_PAD), jnp.float32),
                   jax.ShapeDtypeStruct((Bp, REG_PAD), jnp.float32)),
        grid_spec=pltpu.PrefetchScalarGridSpec(
            num_scalar_prefetch=0,
            grid=(row_shards, nk),
            in_specs=[
                pl.BlockSpec((TB, TK), lambda b, k: (b, k)),          # bf16 feats
                pl.BlockSpec((TK, N_FUSED), lambda b, k: (k, 0)),     # int8 W
                pl.BlockSpec((1, N_FUSED), lambda b, k: (0, 0)),      # scales
                pl.BlockSpec((1, HIDDEN), lambda b, k: (0, 0)),       # bbox b1
                pl.BlockSpec((HIDDEN, REG_PAD), lambda b, k: (0, 0)), # bbox W2p
                pl.BlockSpec((1, REG_PAD), lambda b, k: (0, 0)),      # bbox b2p
                pl.BlockSpec((1, CLS_PAD), lambda b, k: (0, 0)),      # cls bias p
            ],
            out_specs=[
                pl.BlockSpec((TB, CLS_PAD), lambda b, k: (b, 0)),     # clss
                pl.BlockSpec((TB, REG_PAD), lambda b, k: (b, 0)),     # reg
            ],
            scratch_shapes=[
                pltpu.VMEM((TB, N_FUSED), jnp.float32),               # fused acc
            ],
        ),
        compiler_params=pltpu.CompilerParams(
            dimension_semantics=("parallel", "arbitrary"),
            vmem_limit_bytes=48 << 20,      # v7x headroom; load-bearing on v5e
        ),
    )(x, wq, scale, b1, w2p, b2p, bcp)

    return clss_pad[:B, :C], reg_pad[:B, :NUM_BBOX]


def init_params(key, num_classes=NUM_CLASSES):
    """Deterministic synthetic parameters with nn.Linear-like scaling."""
    ks = jax.random.split(key, 6)

    def uniform(k, shape, fan_in):
        bound = 1.0 / jnp.sqrt(fan_in)
        return jax.random.uniform(k, shape, jnp.float32, -bound, bound)

    w1 = uniform(ks[0], (FEATURE_DIM, HIDDEN), FEATURE_DIM)
    wc = uniform(ks[1], (FEATURE_DIM, num_classes), FEATURE_DIM)
    b1 = uniform(ks[2], (1, HIDDEN), FEATURE_DIM)
    w2 = uniform(ks[3], (HIDDEN, NUM_BBOX), HIDDEN)
    b2 = uniform(ks[4], (1, NUM_BBOX), HIDDEN)
    bc = uniform(ks[5], (1, num_classes), FEATURE_DIM)

    wq, scale = quantize_fused(w1, wc)
    w2p = jnp.zeros((HIDDEN, REG_PAD), jnp.float32).at[:, :NUM_BBOX].set(w2)
    b2p = jnp.zeros((1, REG_PAD), jnp.float32).at[:, :NUM_BBOX].set(b2)
    bcp = jnp.zeros((1, CLS_PAD), jnp.float32).at[:, :num_classes].set(bc)
    return {"wq": wq, "scale": scale, "b1": b1, "w2p": w2p, "b2p": b2p,
            "bcp": bcp, "num_classes": num_classes}


def rcnn_forward_ref(features, p):
    """Reference mirroring the kernel's math exactly (bf16 features,
    int8->bf16 weights, f32 accumulation, per-column scale at the end)."""
    x = features.astype(jnp.bfloat16)
    acc = jnp.dot(x, p["wq"].astype(jnp.bfloat16),
                  preferred_element_type=jnp.float32) * p["scale"]
    h = jnp.maximum(acc[:, :HIDDEN] + p["b1"], 0.0)
    reg = jnp.tanh(h @ p["w2p"][:, :NUM_BBOX] + p["b2p"][:, :NUM_BBOX])
    C = p["num_classes"]
    clss = acc[:, HIDDEN:HIDDEN + C] + p["bcp"][:, :C]
    return clss, reg


if __name__ == "__main__":
    key = jax.random.PRNGKey(0)
    k_feat, k_params = jax.random.split(key)

    B = 2
    # Pre-extracted VGG features (base_model output), small batch for the demo.
    # TODO(synk): real RCNN workloads should batch 100s of ROI crops per call
    # (and pass row_shards=2 on v7x) to amortize the int8 weight stream; the
    # wrapper pads B internally so any batch size works.
    features = jax.random.normal(k_feat, (B, FEATURE_DIM), jnp.float32) * 0.05
    params = init_params(k_params)

    clss, reg = rcnn_forward(features, params, row_shards=1)
    clss = jax.block_until_ready(clss)
    reg = jax.block_until_ready(reg)

    clss_ref, reg_ref = rcnn_forward_ref(features, params)
    assert clss.shape == (B, NUM_CLASSES) and reg.shape == (B, NUM_BBOX)
    assert jnp.allclose(clss, clss_ref, atol=1e-2, rtol=1e-2)
    assert jnp.allclose(reg, reg_ref, atol=1e-2, rtol=1e-2)

    print("KERNEL_OK")
</pallas_src>

<mosaic_0001>
module attributes {stable_mosaic.version = 11 : i64} {
  func.func @rcnn_head_kernel(%arg0: i32, %arg1: i32, %arg2: memref<16x6272xbf16, #tpu.memory_space<vmem>>, %arg3: memref<6272x640xi8, #tpu.memory_space<vmem>>, %arg4: memref<1x640xf32, #tpu.memory_space<vmem>>, %arg5: memref<1x512xf32, #tpu.memory_space<vmem>>, %arg6: memref<512x128xf32, #tpu.memory_space<vmem>>, %arg7: memref<1x128xf32, #tpu.memory_space<vmem>>, %arg8: memref<1x128xf32, #tpu.memory_space<vmem>>, %arg9: memref<16x128xf32, #tpu.memory_space<vmem>>, %arg10: memref<16x128xf32, #tpu.memory_space<vmem>>, %arg11: memref<16x640xf32, #tpu.memory_space<vmem>>) attributes {dimension_semantics = [#tpu.dimension_semantics<parallel>, #tpu.dimension_semantics<arbitrary>], iteration_bounds = array<i64: 1, 4>, scalar_prefetch = 0 : i64, scratch_operands = 1 : i64, tpu.core_type = #tpu.core_type<tc>, window_params = [{transform_indices = @transform_0, window_bounds = array<i64: 16, 6272>}, {transform_indices = @transform_1, window_bounds = array<i64: 6272, 640>}, {pipeline_mode = #tpu.pipeline_mode<synchronous>, transform_indices = @transform_2, window_bounds = array<i64: 1, 640>}, {pipeline_mode = #tpu.pipeline_mode<synchronous>, transform_indices = @transform_3, window_bounds = array<i64: 1, 512>}, {pipeline_mode = #tpu.pipeline_mode<synchronous>, transform_indices = @transform_4, window_bounds = array<i64: 512, 128>}, {pipeline_mode = #tpu.pipeline_mode<synchronous>, transform_indices = @transform_5, window_bounds = array<i64: 1, 128>}, {pipeline_mode = #tpu.pipeline_mode<synchronous>, transform_indices = @transform_6, window_bounds = array<i64: 1, 128>}, {transform_indices = @transform_7, window_bounds = array<i64: 16, 128>}, {transform_indices = @transform_8, window_bounds = array<i64: 16, 128>}]} {
    %c0_i32 = arith.constant 0 : i32
    %0 = arith.cmpi eq, %arg1, %c0_i32 : i32
    %1 = arith.extui %0 : i1 to i32
    %c0_i32_0 = arith.constant 0 : i32
    %2 = arith.cmpi ne, %1, %c0_i32_0 : i32
    scf.if %2 {
      %cst_9 = arith.constant 0.000000e+00 : f32
      %13 = vector.broadcast %cst_9 : f32 to vector<16x640xf32>
      %c0_10 = arith.constant 0 : index
      %c0_11 = arith.constant 0 : index
      %14 = vector.load %arg11[%c0_10, %c0_11] : memref<16x640xf32, #tpu.memory_space<vmem>>, vector<16x640xf32>
      tpu.vector_store %arg11[%c0_10, %c0_11], %13 {strides = array<i32>} : memref<16x640xf32, #tpu.memory_space<vmem>>, vector<16x640xf32>,
    } else {
    }
    %c0 = arith.constant 0 : index
    %c0_1 = arith.constant 0 : index
    %3 = vector.load %arg11[%c0, %c0_1] : memref<16x640xf32, #tpu.memory_space<vmem>>, vector<16x640xf32>
    %c0_2 = arith.constant 0 : index
    %c0_3 = arith.constant 0 : index
    %4 = vector.load %arg2[%c0_2, %c0_3] : memref<16x6272xbf16, #tpu.memory_space<vmem>>, vector<16x6272xbf16>
    %c0_4 = arith.constant 0 : index
    %c0_5 = arith.constant 0 : index
    %5 = vector.load %arg3[%c0_4, %c0_5] : memref<6272x640xi8, #tpu.memory_space<vmem>>, vector<6272x640xi8>
    %6 = arith.sitofp %5 : vector<6272x640xi8> to vector<6272x640xbf16>
    %cst = arith.constant dense<0.000000e+00> : vector<16x640xf32>
    %7 = tpu.matmul %4, %6, %cst {dimension_numbers = #tpu.dot_dimension_numbers<[1], [0], [0], [1], [0, 0, 1, 1], [], []>} : vector<16x6272xbf16>, vector<6272x640xbf16>, vector<16x640xf32> -> vector<16x640xf32>
    %8 = arith.addf %3, %7 : vector<16x640xf32>
    %c0_6 = arith.constant 0 : index
    %c0_7 = arith.constant 0 : index
    %9 = vector.load %arg11[%c0_6, %c0_7] : memref<16x640xf32, #tpu.memory_space<vmem>>, vector<16x640xf32>
    tpu.vector_store %arg11[%c0_6, %c0_7], %8 {strides = array<i32>} : memref<16x640xf32, #tpu.memory_space<vmem>>, vector<16x640xf32>,
    %c3_i32 = arith.constant 3 : i32
    %10 = arith.cmpi eq, %arg1, %c3_i32 : i32
    %11 = arith.extui %10 : i1 to i32
    %c0_i32_8 = arith.constant 0 : i32
    %12 = arith.cmpi ne, %11, %c0_i32_8 : i32
    scf.if %12 {
      %c0_9 = arith.constant 0 : index
      %c0_10 = arith.constant 0 : index
      %13 = vector.load %arg11[%c0_9, %c0_10] : memref<16x640xf32, #tpu.memory_space<vmem>>, vector<16x640xf32>
      %c0_11 = arith.constant 0 : index
      %c0_12 = arith.constant 0 : index
      %14 = vector.load %arg4[%c0_11, %c0_12] : memref<1x640xf32, #tpu.memory_space<vmem>>, vector<1x640xf32>
      %15 = vector.broadcast %14 : vector<1x640xf32> to vector<16x640xf32>
      %16 = arith.mulf %13, %15 : vector<16x640xf32>
      %17 = vector.extract_strided_slice %16 {offsets = [0, 0], sizes = [16, 512], strides = [1, 1]} : vector<16x640xf32> to vector<16x512xf32>
      %c0_13 = arith.constant 0 : index
      %c0_14 = arith.constant 0 : index
      %18 = vector.load %arg5[%c0_13, %c0_14] : memref<1x512xf32, #tpu.memory_space<vmem>>, vector<1x512xf32>
      %19 = vector.broadcast %18 : vector<1x512xf32> to vector<16x512xf32>
      %20 = arith.addf %17, %19 : vector<16x512xf32>
      %cst_15 = arith.constant 0.000000e+00 : f32
      %21 = vector.broadcast %cst_15 : f32 to vector<16x512xf32>
      %22 = arith.maximumf %20, %21 : vector<16x512xf32>
      %c0_16 = arith.constant 0 : index
      %c0_17 = arith.constant 0 : index
      %23 = vector.load %arg6[%c0_16, %c0_17] : memref<512x128xf32, #tpu.memory_space<vmem>>, vector<512x128xf32>
      %cst_18 = arith.constant dense<0.000000e+00> : vector<16x128xf32>
      %24 = tpu.matmul %22, %23, %cst_18 {dimension_numbers = #tpu.dot_dimension_numbers<[1], [0], [0], [1], [0, 0, 1, 1], [], []>} : vector<16x512xf32>, vector<512x128xf32>, vector<16x128xf32> -> vector<16x128xf32>
      %c0_19 = arith.constant 0 : index
      %c0_20 = arith.constant 0 : index
      %25 = vector.load %arg7[%c0_19, %c0_20] : memref<1x128xf32, #tpu.memory_space<vmem>>, vector<1x128xf32>
      %26 = vector.broadcast %25 : vector<1x128xf32> to vector<16x128xf32>
      %27 = arith.addf %24, %26 : vector<16x128xf32>
      %28 = math.tanh %27 : vector<16x128xf32>
      %c0_21 = arith.constant 0 : index
      %c0_22 = arith.constant 0 : index
      %29 = vector.load %arg10[%c0_21, %c0_22] : memref<16x128xf32, #tpu.memory_space<vmem>>, vector<16x128xf32>
      tpu.vector_store %arg10[%c0_21, %c0_22], %28 {strides = array<i32>} : memref<16x128xf32, #tpu.memory_space<vmem>>, vector<16x128xf32>,
      %30 = vector.extract_strided_slice %16 {offsets = [0, 512], sizes = [16, 128], strides = [1, 1]} : vector<16x640xf32> to vector<16x128xf32>
      %c0_23 = arith.constant 0 : index
      %c0_24 = arith.constant 0 : index
      %31 = vector.load %arg8[%c0_23, %c0_24] : memref<1x128xf32, #tpu.memory_space<vmem>>, vector<1x128xf32>
      %32 = vector.broadcast %31 : vector<1x128xf32> to vector<16x128xf32>
      %33 = arith.addf %30, %32 : vector<16x128xf32>
      %c0_25 = arith.constant 0 : index
      %c0_26 = arith.constant 0 : index
      %34 = vector.load %arg9[%c0_25, %c0_26] : memref<16x128xf32, #tpu.memory_space<vmem>>, vector<16x128xf32>
      tpu.vector_store %arg9[%c0_25, %c0_26], %33 {strides = array<i32>} : memref<16x128xf32, #tpu.memory_space<vmem>>, vector<16x128xf32>,
    } else {
    }
    return
  }
  func.func @transform_0(%arg0: i32, %arg1: i32) -> (i32, i32) {
    %c0_i32 = arith.constant 0 : i32
    return %arg0, %arg1 : i32, i32
  }
  func.func @transform_1(%arg0: i32, %arg1: i32) -> (i32, i32) {
    %c0_i32 = arith.constant 0 : i32
    %c0_i32_0 = arith.constant 0 : i32
    return %arg1, %c0_i32 : i32, i32
  }
  func.func @transform_2(%arg0: i32, %arg1: i32) -> (i32, i32) {
    %c0_i32 = arith.constant 0 : i32
    %c0_i32_0 = arith.constant 0 : i32
    %c0_i32_1 = arith.constant 0 : i32
    return %c0_i32, %c0_i32_0 : i32, i32
  }
  func.func @transform_3(%arg0: i32, %arg1: i32) -> (i32, i32) {
    %c0_i32 = arith.constant 0 : i32
    %c0_i32_0 = arith.constant 0 : i32
    %c0_i32_1 = arith.constant 0 : i32
    return %c0_i32, %c0_i32_0 : i32, i32
  }
  func.func @transform_4(%arg0: i32, %arg1: i32) -> (i32, i32) {
    %c0_i32 = arith.constant 0 : i32
    %c0_i32_0 = arith.constant 0 : i32
    %c0_i32_1 = arith.constant 0 : i32
    return %c0_i32, %c0_i32_0 : i32, i32
  }
  func.func @transform_5(%arg0: i32, %arg1: i32) -> (i32, i32) {
    %c0_i32 = arith.constant 0 : i32
    %c0_i32_0 = arith.constant 0 : i32
    %c0_i32_1 = arith.constant 0 : i32
    return %c0_i32, %c0_i32_0 : i32, i32
  }
  func.func @transform_6(%arg0: i32, %arg1: i32) -> (i32, i32) {
    %c0_i32 = arith.constant 0 : i32
    %c0_i32_0 = arith.constant 0 : i32
    %c0_i32_1 = arith.constant 0 : i32
    return %c0_i32, %c0_i32_0 : i32, i32
  }
  func.func @transform_7(%arg0: i32, %arg1: i32) -> (i32, i32) {
    %c0_i32 = arith.constant 0 : i32
    %c0_i32_0 = arith.constant 0 : i32
    return %arg0, %c0_i32 : i32, i32
  }
  func.func @transform_8(%arg0: i32, %arg1: i32) -> (i32, i32) {
    %c0_i32 = arith.constant 0 : i32
    %c0_i32_0 = arith.constant 0 : i32
    return %arg0, %c0_i32 : i32, i32
  }
}

</mosaic_0001>

<llo_original>
// kernel: tpu_custom_call.1
$region0: #{tpu_custom_call.1}
  #allocation0 [shape = 'u32[]', space=smem, size = 0x4, offset = 0x4, fixed_abs, tag = 'smem constant byte address 0x4 - core index']
  #allocation1 [shape = 'u32[144,128]{1,0:T(1,128)}', space=vmem, size = 0x12000, scoped, tag = 'internal scratch']
  #allocation2 [shape = 'f32[16,640]{1,0:T(8,128)}', space=vmem, size = 0xa000, scoped, tag = 'scratch operand']
  %s0 = inlined_call_operand.hbm [shape: bf16[16,25088], index: 0, kind: input, shape index: {}]
  %s1 = inlined_call_operand.hbm [shape: s8[25088,640], index: 1, kind: input, shape index: {}]
  %s2 = inlined_call_operand.hbm [shape: f32[1,640], index: 2, kind: input, shape index: {}]
  %s3 = inlined_call_operand.hbm [shape: f32[1,512], index: 3, kind: input, shape index: {}]
  %s4 = inlined_call_operand.hbm [shape: f32[512,128], index: 4, kind: input, shape index: {}]
  %s5 = inlined_call_operand.hbm [shape: f32[1,128], index: 5, kind: input, shape index: {}]
  %s6 = inlined_call_operand.hbm [shape: f32[1,128], index: 6, kind: input, shape index: {}]
  %s7 = inlined_call_operand.hbm [shape: f32[16,128], index: 7, kind: output, shape index: {0}]
  %s8 = inlined_call_operand.hbm [shape: f32[16,128], index: 8, kind: output, shape index: {1}]
  %9 = xla_tuple %s7, %s8
  %s10 = sld [smem:[#allocation0]]
  $region105: #{tpu_custom_call.1} parent=0
    _
  %s12 = ssub.s32 1, %s10
  %s13 = scalar_select 0, %s12, %s10
  $region1: #{tpu_custom_call.1} parent=0
    #allocation3 [shape = 'u8[401408]{0}', space=vmem, size = 0x62000, scoped, tag = 'input window, operand 0']
    #allocation4 [shape = 's32[2]{0}', space=sflag, size = 0x8, scoped, tag = 'scoped memory for tpu_custom_call.1']
    #allocation5 [shape = 's32[2]{0}', space=sflag, size = 0x8, scoped, tag = 'scoped memory for tpu_custom_call.1']
    #allocation6 [shape = 'u8[8028160]{0}', space=vmem, size = 0x7a8000, scoped, tag = 'input window, operand 1']
    #allocation7 [shape = 's32[2]{0}', space=sflag, size = 0x8, scoped, tag = 'scoped memory for tpu_custom_call.1']
    #allocation8 [shape = 'u8[2560]{0}', space=vmem, size = 0xc00, scoped, tag = 'input window, operand 2, single buffered']
    #allocation9 [shape = 'u8[2048]{0}', space=vmem, size = 0x800, scoped, tag = 'input window, operand 3, single buffered']
    #allocation10 [shape = 's32[1]{0}', space=sflag, size = 0x4, scoped, tag = 'scoped memory for tpu_custom_call.1']
    #allocation11 [shape = 'u8[262144]{0}', space=vmem, size = 0x40000, scoped, tag = 'input window, operand 4, single buffered']
    #allocation12 [shape = 'u8[512]{0}', space=vmem, size = 0x400, scoped, tag = 'input window, operand 5, single buffered']
    #allocation13 [shape = 's32[1]{0}', space=sflag, size = 0x4, scoped, tag = 'scoped memory for tpu_custom_call.1']
    #allocation14 [shape = 'u8[512]{0}', space=vmem, size = 0x400, scoped, tag = 'input window, operand 6, single buffered']
    #allocation15 [shape = 'u8[8192]{0}', space=vmem, size = 0x2000, scoped, tag = 'output window, operand 0, single buffered']
    #allocation16 [shape = 'u8[8192]{0}', space=vmem, size = 0x2000, scoped, tag = 'output window, operand 1, single buffered']
    #allocation17 [shape = 's32[1]{0}', space=sflag, size = 0x4, scoped, tag = 'scoped memory for tpu_custom_call.1']
    %14 = vsyncpa [#allocation4], 0
    %s15 = scalar_lea.sflag [#allocation4], 1
    %16 = vsyncpa %s15, 0
    %17 = vsyncpa [#allocation7], 0
    %s18 = scalar_lea.sflag [#allocation7], 1
    %19 = vsyncpa %s18, 0
    %20 = vsyncpa [#allocation10], 0
    %21 = vsyncpa [#allocation13], 0
    %22 = vsyncpa [#allocation5], 0
    %23 = vsyncpa [#allocation17], 0
    loop: start=0, step=1, limit=6
    $region2: #{tpu_custom_call.1} parent=1 // loop_pre_header
      _
    $region3: #{tpu_custom_call.1} parent=1 // loop_header
      %s25 = sphi 0, %s29
      %p26 = scmp.ge.s32.totalorder %s25, 6
      %s32 = sphi 0, %s44
      %s33 = sphi 0, %s40
      %s34 = sphi 0, %s32
      %s35 = sphi 0, %s33
      %s36 = sphi 0, %s34
      %s37 = sphi 0, %s35
      %s49 = sphi 0, %s51
      %s52 = sphi 0, %s49
      %s53 = sphi 0, %s52
      %s69 = sphi 0, %s53
      %s75 = sphi 0, %s77
      %s78 = sphi 0, %s75
      %s79 = sphi 0, %s78
      %s95 = sphi 0, %s79
      %s99 = sphi 0, %s99
      %s101 = sphi 0, %s99
      %s102 = sphi 0, %s101
      %s116 = sphi 0, %s102
      %s120 = sphi 0, %s120
      %s122 = sphi 0, %s120
      %s123 = sphi 0, %s122
      %s137 = sphi 0, %s123
      %s141 = sphi 0, %s141
      %s143 = sphi 0, %s141
      %s144 = sphi 0, %s143
      %s158 = sphi 0, %s144
      %s162 = sphi 0, %s162
      %s164 = sphi 0, %s162
      %s165 = sphi 0, %s164
      %s179 = sphi 0, %s165
      %s183 = sphi 0, %s183
      %s185 = sphi 0, %s183
      %s186 = sphi 0, %s185
      %s200 = sphi 0, %s186
      %s206 = sphi 0, %s208
      %s209 = sphi 0, %s206
      %s210 = sphi 0, %s209
      %s226 = sphi 0, %s210
      %s232 = sphi 0, %s234
      %s235 = sphi 0, %s232
      %s236 = sphi 0, %s235
      %s252 = sphi 0, %s236
    $region4: #{tpu_custom_call.1} parent=1 // loop_header_branch
      %28 = sbr.rel (%p26) target = $region8
    $region5: #{tpu_custom_call.1} parent=1 // loop_body
      %s30 = ssub.s32 %s25, 1
      %s31 = ssub.s32 %s25, 2
      %s38 = sadd.s32 1, %s33
      %p39 = scmp.ge.s32.totalorder %s38, 4
      %s40 = scalar_select %p39, 0, %s38
      %s41 = sadd.s32 1, %s32
      %s42 = scalar_select %p39, %s41, %s32
      %p43 = scmp.ge.s32.totalorder %s42, 1
      %s44 = scalar_select %p43, 0, %s42
      %s45 = ssub.s32 %s32, %s44
      %s46 = ssub.s32 %s33, %s40
      %s47 = sor.u32 %s45, %s46
      %p48 = scmp.eq.s32.totalorder %s47, 0
      %s50 = sadd.s32 %s49, 1
      %s51 = scalar_select %p48, %s49, %s50
      %p54 = pneg %p48
      %p55 = scmp.eq.s32.totalorder %s25, 3
      %p56 = por %p54, %p55
      %p57 = scmp.ne.s32.totalorder %s49, %s52
      %p58 = scmp.eq.s32.totalorder %s25, 0
      %p59 = por %p57, %p58
      %p60 = scmp.ne.s32.totalorder %s49, %s52
      %p61 = scmp.eq.s32.totalorder %s30, 3
      %p62 = por %p60, %p61
      %p63 = scmp.ne.s32.totalorder %s52, %s53
      %p64 = scmp.eq.s32.totalorder %s30, 0
      %p65 = por %p63, %p64
      %p66 = scmp.ne.s32.totalorder %s52, %s53
      %p67 = scmp.eq.s32.totalorder %s31, 3
      %p68 = por %p66, %p67
      %p70 = scmp.ne.s32.totalorder %s53, %s69
      %p71 = scmp.eq.s32.totalorder %s31, 0
      %p72 = por %p70, %p71
      %s73 = ssub.s32 %s33, %s40
      %p74 = scmp.eq.s32.totalorder %s73, 0
      %s76 = sadd.s32 %s75, 1
      %s77 = scalar_select %p74, %s75, %s76
      %p80 = pneg %p74
      %p81 = scmp.eq.s32.totalorder %s25, 3
      %p82 = por %p80, %p81
      %p83 = scmp.ne.s32.totalorder %s75, %s78
      %p84 = scmp.eq.s32.totalorder %s25, 0
      %p85 = por %p83, %p84
      %p86 = scmp.ne.s32.totalorder %s75, %s78
      %p87 = scmp.eq.s32.totalorder %s30, 3
      %p88 = por %p86, %p87
      %p89 = scmp.ne.s32.totalorder %s78, %s79
      %p90 = scmp.eq.s32.totalorder %s30, 0
      %p91 = por %p89, %p90
      %p92 = scmp.ne.s32.totalorder %s78, %s79
      %p93 = scmp.eq.s32.totalorder %s31, 3
      %p94 = por %p92, %p93
      %p96 = scmp.ne.s32.totalorder %s79, %s95
      %p97 = scmp.eq.s32.totalorder %s31, 0
      %p98 = por %p96, %p97
      %s100 = sadd.s32 %s99, 1
      %p103 = scmp.eq.s32.totalorder %s25, 3
      %p104 = scmp.ne.s32.totalorder %s99, %s101
      %p105 = scmp.eq.s32.totalorder %s25, 0
      %p106 = por %p104, %p105
      %p107 = scmp.ne.s32.totalorder %s99, %s101
      %p108 = scmp.eq.s32.totalorder %s30, 3
      %p109 = por %p107, %p108
      %p110 = scmp.ne.s32.totalorder %s101, %s102
      %p111 = scmp.eq.s32.totalorder %s30, 0
      %p112 = por %p110, %p111
      %p113 = scmp.ne.s32.totalorder %s101, %s102
      %p114 = scmp.eq.s32.totalorder %s31, 3
      %p115 = por %p113, %p114
      %p117 = scmp.ne.s32.totalorder %s102, %s116
      %p118 = scmp.eq.s32.totalorder %s31, 0
      %p119 = por %p117, %p118
      %s121 = sadd.s32 %s120, 1
      %p124 = scmp.eq.s32.totalorder %s25, 3
      %p125 = scmp.ne.s32.totalorder %s120, %s122
      %p126 = scmp.eq.s32.totalorder %s25, 0
      %p127 = por %p125, %p126
      %p128 = scmp.ne.s32.totalorder %s120, %s122
      %p129 = scmp.eq.s32.totalorder %s30, 3
      %p130 = por %p128, %p129
      %p131 = scmp.ne.s32.totalorder %s122, %s123
      %p132 = scmp.eq.s32.totalorder %s30, 0
      %p133 = por %p131, %p132
      %p134 = scmp.ne.s32.totalorder %s122, %s123
      %p135 = scmp.eq.s32.totalorder %s31, 3
      %p136 = por %p134, %p135
      %p138 = scmp.ne.s32.totalorder %s123, %s137
      %p139 = scmp.eq.s32.totalorder %s31, 0
      %p140 = por %p138, %p139
      %s142 = sadd.s32 %s141, 1
      %p145 = scmp.eq.s32.totalorder %s25, 3
      %p146 = scmp.ne.s32.totalorder %s141, %s143
      %p147 = scmp.eq.s32.totalorder %s25, 0
      %p148 = por %p146, %p147
      %p149 = scmp.ne.s32.totalorder %s141, %s143
      %p150 = scmp.eq.s32.totalorder %s30, 3
      %p151 = por %p149, %p150
      %p152 = scmp.ne.s32.totalorder %s143, %s144
      %p153 = scmp.eq.s32.totalorder %s30, 0
      %p154 = por %p152, %p153
      %p155 = scmp.ne.s32.totalorder %s143, %s144
      %p156 = scmp.eq.s32.totalorder %s31, 3
      %p157 = por %p155, %p156
      %p159 = scmp.ne.s32.totalorder %s144, %s158
      %p160 = scmp.eq.s32.totalorder %s31, 0
      %p161 = por %p159, %p160
      %s163 = sadd.s32 %s162, 1
      %p166 = scmp.eq.s32.totalorder %s25, 3
      %p167 = scmp.ne.s32.totalorder %s162, %s164
      %p168 = scmp.eq.s32.totalorder %s25, 0
      %p169 = por %p167, %p168
      %p170 = scmp.ne.s32.totalorder %s162, %s164
      %p171 = scmp.eq.s32.totalorder %s30, 3
      %p172 = por %p170, %p171
      %p173 = scmp.ne.s32.totalorder %s164, %s165
      %p174 = scmp.eq.s32.totalorder %s30, 0
      %p175 = por %p173, %p174
      %p176 = scmp.ne.s32.totalorder %s164, %s165
      %p177 = scmp.eq.s32.totalorder %s31, 3
      %p178 = por %p176, %p177
      %p180 = scmp.ne.s32.totalorder %s165, %s179
      %p181 = scmp.eq.s32.totalorder %s31, 0
      %p182 = por %p180, %p181
      %s184 = sadd.s32 %s183, 1
      %p187 = scmp.eq.s32.totalorder %s25, 3
      %p188 = scmp.ne.s32.totalorder %s183, %s185
      %p189 = scmp.eq.s32.totalorder %s25, 0
      %p190 = por %p188, %p189
      %p191 = scmp.ne.s32.totalorder %s183, %s185
      %p192 = scmp.eq.s32.totalorder %s30, 3
      %p193 = por %p191, %p192
      %p194 = scmp.ne.s32.totalorder %s185, %s186
      %p195 = scmp.eq.s32.totalorder %s30, 0
      %p196 = por %p194, %p195
      %p197 = scmp.ne.s32.totalorder %s185, %s186
      %p198 = scmp.eq.s32.totalorder %s31, 3
      %p199 = por %p197, %p198
      %p201 = scmp.ne.s32.totalorder %s186, %s200
      %p202 = scmp.eq.s32.totalorder %s31, 0
      %p203 = por %p201, %p202
      %s204 = ssub.s32 %s32, %s44
      %p205 = scmp.eq.s32.totalorder %s204, 0
      %s207 = sadd.s32 %s206, 1
      %s208 = scalar_select %p205, %s206, %s207
      %p211 = pneg %p205
      %p212 = scmp.eq.s32.totalorder %s25, 3
      %p213 = por %p211, %p212
      %p214 = scmp.ne.s32.totalorder %s206, %s209
      %p215 = scmp.eq.s32.totalorder %s25, 0
      %p216 = por %p214, %p215
      %p217 = scmp.ne.s32.totalorder %s206, %s209
      %p218 = scmp.eq.s32.totalorder %s30, 3
      %p219 = por %p217, %p218
      %p220 = scmp.ne.s32.totalorder %s209, %s210
      %p221 = scmp.eq.s32.totalorder %s30, 0
      %p222 = por %p220, %p221
      %p223 = scmp.ne.s32.totalorder %s209, %s210
      %p224 = scmp.eq.s32.totalorder %s31, 3
      %p225 = por %p223, %p224
      %p227 = scmp.ne.s32.totalorder %s210, %s226
      %p228 = scmp.eq.s32.totalorder %s31, 0
      %p229 = por %p227, %p228
      %s230 = ssub.s32 %s32, %s44
      %p231 = scmp.eq.s32.totalorder %s230, 0
      %s233 = sadd.s32 %s232, 1
      %s234 = scalar_select %p231, %s232, %s233
      %p237 = pneg %p231
      %p238 = scmp.eq.s32.totalorder %s25, 3
      %p239 = por %p237, %p238
      %p240 = scmp.ne.s32.totalorder %s232, %s235
      %p241 = scmp.eq.s32.totalorder %s25, 0
      %p242 = por %p240, %p241
      %p243 = scmp.ne.s32.totalorder %s232, %s235
      %p244 = scmp.eq.s32.totalorder %s30, 3
      %p245 = por %p243, %p244
      %p246 = scmp.ne.s32.totalorder %s235, %s236
      %p247 = scmp.eq.s32.totalorder %s30, 0
      %p248 = por %p246, %p247
      %p249 = scmp.ne.s32.totalorder %s235, %s236
      %p250 = scmp.eq.s32.totalorder %s31, 3
      %p251 = por %p249, %p250
      %p253 = scmp.ne.s32.totalorder %s236, %s252
      %p254 = scmp.eq.s32.totalorder %s31, 0
      %p255 = por %p253, %p254
      %p256 = scmp.le.s32.totalorder 1, %s25
      %p257 = scmp.lt.s32.totalorder %s25, 5
      %p258 = pnand %p256, %p257
      %p259 = pneg %p258
      // Predicated region
      $region9: #{tpu_custom_call.1} parent=5 // pred_check
        _
      $region10: #{tpu_custom_call.1} parent=5 // pred_check_branch
        %261 = sbr.rel (%p258) target = $region12
      $region11: #{tpu_custom_call.1} parent=5 // pred_region
        %s262 = ssub.s32 %s25, 1
        // Predicated region
        $region13: #{tpu_custom_call.1} parent=11 // pred_check
          %p263 = pneg %p112
        $region14: #{tpu_custom_call.1} parent=11 // pred_check_branch
          %265 = sbr.rel (%p263) target = $region16
        $region15: #{tpu_custom_call.1} parent=11 // pred_region
          %s267 = ssub.s32 80, 80
          %268 = vsyncadd [#allocation7], %s267
          %s270 = sshll.u32 [#allocation8], 4
          %s271 = int_to_ptr.vmem [resolvable:$true] %s270
          %273 = dma.hbm_to_vmem [thread:$0]  %s2, 80, %s271, [#allocation7]
        $region16: #{tpu_custom_call.1} parent=11 // pred_fallthru
          _
        // Predicated region
        $region17: #{tpu_custom_call.1} parent=11 // pred_check
          %p274 = pneg %p133
        $region18: #{tpu_custom_call.1} parent=11 // pred_check_branch
          %276 = sbr.rel (%p274) target = $region20
        $region19: #{tpu_custom_call.1} parent=11 // pred_region
          %s278 = ssub.s32 64, 64
          %279 = vsyncadd [#allocation10], %s278
          %s281 = sshll.u32 [#allocation9], 4
          %s282 = int_to_ptr.vmem [resolvable:$true] %s281
          %284 = dma.hbm_to_vmem [thread:$0]  %s3, 64, %s282, [#allocation10]
        $region20: #{tpu_custom_call.1} parent=11 // pred_fallthru
          _
        // Predicated region
        $region21: #{tpu_custom_call.1} parent=11 // pred_check
          %p285 = pneg %p154
        $region22: #{tpu_custom_call.1} parent=11 // pred_check_branch
          %287 = sbr.rel (%p285) target = $region24
        $region23: #{tpu_custom_call.1} parent=11 // pred_region
          %s289 = ssub.s32 8192, 8192
          %290 = vsyncadd [#allocation10], %s289
          %s291 = sshll.u32 [#allocation11], 4
          %s292 = int_to_ptr.vmem [resolvable:$true] %s291
          %297 = dma.hbm_to_vmem [thread:$0]  %s4, 8192, %s292, [#allocation10], 128, 128, 8
        $region24: #{tpu_custom_call.1} parent=11 // pred_fallthru
          _
        // Predicated region
        $region25: #{tpu_custom_call.1} parent=11 // pred_check
          %p298 = pneg %p175
        $region26: #{tpu_custom_call.1} parent=11 // pred_check_branch
          %300 = sbr.rel (%p298) target = $region28
        $region27: #{tpu_custom_call.1} parent=11 // pred_region
          %s302 = ssub.s32 16, 16
          %303 = vsyncadd [#allocation13], %s302
          %s305 = sshll.u32 [#allocation12], 4
          %s306 = int_to_ptr.vmem [resolvable:$true] %s305
          %308 = dma.hbm_to_vmem [thread:$0]  %s5, 16, %s306, [#allocation13]
        $region28: #{tpu_custom_call.1} parent=11 // pred_fallthru
          _
        // Predicated region
        $region29: #{tpu_custom_call.1} parent=11 // pred_check
          %p309 = pneg %p196
        $region30: #{tpu_custom_call.1} parent=11 // pred_check_branch
          %311 = sbr.rel (%p309) target = $region32
        $region31: #{tpu_custom_call.1} parent=11 // pred_region
          %s313 = ssub.s32 16, 16
          %314 = vsyncadd [#allocation13], %s313
          %s316 = sshll.u32 [#allocation14], 4
          %s317 = int_to_ptr.vmem [resolvable:$true] %s316
          %319 = dma.hbm_to_vmem [thread:$0]  %s6, 16, %s317, [#allocation13]
        $region32: #{tpu_custom_call.1} parent=11 // pred_fallthru
          _
      $region12: #{tpu_custom_call.1} parent=5 // pred_fallthru
        _
      %p320 = scmp.lt.s32.totalorder %s25, 4
      // Predicated region
      $region33: #{tpu_custom_call.1} parent=5 // pred_check
        %p321 = pneg %p320
      $region34: #{tpu_custom_call.1} parent=5 // pred_check_branch
        %323 = sbr.rel (%p321) target = $region36
      $region35: #{tpu_custom_call.1} parent=5 // pred_region
        // Predicated region
        $region37: #{tpu_custom_call.1} parent=35 // pred_check
          %p324 = pneg %p59
        $region38: #{tpu_custom_call.1} parent=35 // pred_check_branch
          %326 = sbr.rel (%p324) target = $region40
        $region39: #{tpu_custom_call.1} parent=35 // pred_region
          %s327 = sand.u32 %s49, 1
          %s328 = scalar_lea.sflag [#allocation4], %s327
          %s329 = sand.u32 %s49, 1
          %s330 = smul.addr %s329, 392
          %s331 = scalar_lea.vmem [#allocation3], %s330
          %s332 = smul.u32 2, %s32
          %s333 = smul.u32 49, %s33
          %s335 = ssub.s32 6272, 6272
          %336 = vsyncadd %s328, %s335
          %s337 = smul.addr %s332, 196
          %s338 = sadd.s32 %s333, %s337
          %s339 = smul.addr %s338, 64
          %s340 = scalar_lea.hbm %s0, %s339
          %s341 = sshll.u32 %s331, 4
          %s342 = int_to_ptr.vmem [resolvable:$true] %s341
          %347 = dma.hbm_to_vmem [thread:$0]  %s340, 6272, %s342, %s328, 12544, 3136, 196
        $region40: #{tpu_custom_call.1} parent=35 // pred_fallthru
          _
        // Predicated region
        $region41: #{tpu_custom_call.1} parent=35 // pred_check
          %p348 = pneg %p85
        $region42: #{tpu_custom_call.1} parent=35 // pred_check_branch
          %350 = sbr.rel (%p348) target = $region44
        $region43: #{tpu_custom_call.1} parent=35 // pred_region
          %s351 = sand.u32 %s25, 1
          %s352 = scalar_lea.sflag [#allocation7], %s351
          %s353 = sand.u32 %s75, 1
          %s354 = smul.addr %s353, 7840
          %s355 = scalar_lea.vmem [#allocation6], %s354
          %s356 = smul.u32 196, %s33
          %s358 = ssub.s32 125440, 125440
          %359 = vsyncadd %s352, %s358
          %s360 = smul.addr %s356, 5
          %s361 = smul.addr %s360, 128
          %s362 = scalar_lea.hbm %s1, %s361
          %s363 = sshll.u32 %s355, 4
          %s364 = int_to_ptr.vmem [resolvable:$true] %s363
          %369 = dma.hbm_to_vmem [thread:$0]  %s362, 125440, %s364, %s352, 640, 640, 40
        $region44: #{tpu_custom_call.1} parent=35 // pred_fallthru
          _
      $region36: #{tpu_custom_call.1} parent=5 // pred_fallthru
        _
      %p370 = scmp.le.s32.totalorder 1, %s25
      %p371 = scmp.lt.s32.totalorder %s25, 5
      %p372 = pnand %p370, %p371
      %p373 = pneg %p372
      // Predicated region
      $region45: #{tpu_custom_call.1} parent=5 // pred_check
        _
      $region46: #{tpu_custom_call.1} parent=5 // pred_check_branch
        %375 = sbr.rel (%p372) target = $region48
      $region47: #{tpu_custom_call.1} parent=5 // pred_region
        %s376 = ssub.s32 %s25, 1
        %s377 = sand.u32 %s52, 1
        %s378 = scalar_lea.sflag [#allocation4], %s377
        %s379 = sand.u32 %s52, 1
        %s380 = smul.addr %s379, 392
        %s381 = scalar_lea.vmem [#allocation3], %s380
        // Predicated region
        $region49: #{tpu_custom_call.1} parent=47 // pred_check
          %p382 = pneg %p65
        $region50: #{tpu_custom_call.1} parent=47 // pred_check_branch
          %384 = sbr.rel (%p382) target = $region52
        $region51: #{tpu_custom_call.1} parent=47 // pred_region
          %385 = dma.done %s378, 6272
        $region52: #{tpu_custom_call.1} parent=47 // pred_fallthru
          _
        %s386 = sand.u32 %s30, 1
        %s387 = scalar_lea.sflag [#allocation7], %s386
        %s388 = sand.u32 %s78, 1
        %s389 = smul.addr %s388, 7840
        %s390 = scalar_lea.vmem [#allocation6], %s389
        // Predicated region
        $region53: #{tpu_custom_call.1} parent=47 // pred_check
          %p391 = pneg %p91
        $region54: #{tpu_custom_call.1} parent=47 // pred_check_branch
          %393 = sbr.rel (%p391) target = $region56
        $region55: #{tpu_custom_call.1} parent=47 // pred_region
          %394 = dma.done %s387, 125440
        $region56: #{tpu_custom_call.1} parent=47 // pred_fallthru
          _
        // Predicated region
        $region57: #{tpu_custom_call.1} parent=47 // pred_check
          %p395 = pneg %p112
        $region58: #{tpu_custom_call.1} parent=47 // pred_check_branch
          %397 = sbr.rel (%p395) target = $region60
        $region59: #{tpu_custom_call.1} parent=47 // pred_region
          %398 = dma.done [#allocation7], 80
        $region60: #{tpu_custom_call.1} parent=47 // pred_fallthru
          _
        // Predicated region
        $region61: #{tpu_custom_call.1} parent=47 // pred_check
          %p399 = pneg %p133
        $region62: #{tpu_custom_call.1} parent=47 // pred_check_branch
          %401 = sbr.rel (%p399) target = $region64
        $region63: #{tpu_custom_call.1} parent=47 // pred_region
          %402 = dma.done [#allocation10], 64
        $region64: #{tpu_custom_call.1} parent=47 // pred_fallthru
          _
        // Predicated region
        $region65: #{tpu_custom_call.1} parent=47 // pred_check
          %p403 = pneg %p154
        $region66: #{tpu_custom_call.1} parent=47 // pred_check_branch
          %405 = sbr.rel (%p403) target = $region68
        $region67: #{tpu_custom_call.1} parent=47 // pred_region
          %406 = dma.done [#allocation10], 8192
        $region68: #{tpu_custom_call.1} parent=47 // pred_fallthru
          _
        // Predicated region
        $region69: #{tpu_custom_call.1} parent=47 // pred_check
          %p407 = pneg %p175
        $region70: #{tpu_custom_call.1} parent=47 // pred_check_branch
          %409 = sbr.rel (%p407) target = $region72
        $region71: #{tpu_custom_call.1} parent=47 // pred_region
          %410 = dma.done [#allocation13], 16
        $region72: #{tpu_custom_call.1} parent=47 // pred_fallthru
          _
        // Predicated region
        $region73: #{tpu_custom_call.1} parent=47 // pred_check
          %p411 = pneg %p196
        $region74: #{tpu_custom_call.1} parent=47 // pred_check_branch
          %413 = sbr.rel (%p411) target = $region76
        $region75: #{tpu_custom_call.1} parent=47 // pred_region
          %414 = dma.done [#allocation13], 16
        $region76: #{tpu_custom_call.1} parent=47 // pred_fallthru
          _
        %s415 = sand.u32 %s52, 1
        %s416 = scalar_lea.sflag [#allocation4], %s415
        %s417 = sand.u32 %s52, 1
        %s418 = smul.addr %s417, 392
        %s419 = scalar_lea.vmem [#allocation3], %s418
        %p420 = pneg %p65
        %p421 = pneg %p62
        %s422 = sand.u32 %s30, 1
        %s423 = scalar_lea.sflag [#allocation7], %s422
        %s424 = sand.u32 %s78, 1
        %s425 = smul.addr %s424, 7840
        %s426 = scalar_lea.vmem [#allocation6], %s425
        %p427 = pneg %p91
        %p428 = pneg %p88
        %p429 = pneg %p112
        %p430 = pneg %p109
        %p431 = pneg %p133
        %p432 = pneg %p130
        %p433 = pneg %p154
        %p434 = pneg %p151
        %p435 = pneg %p175
        %p436 = pneg %p172
        %p437 = pneg %p196
        %p438 = pneg %p193
        %p439 = pneg %p222
        %p440 = pneg %p219
        %p441 = pneg %p248
        %p442 = pneg %p245
        %s443 = smul.u32 2, %s34
        %s444 = smul.u32 49, %s35
        %s445 = smul.u32 196, %s35
        %s446 = smul.u32 2, %s34
        %s447 = smul.u32 2, %s34
        %p449 = scmp.eq.s32.totalorder %s35, 0
        // Predicated region
        $region77: #{tpu_custom_call.1} parent=47 // pred_check
          %p450 = pneg %p449
        $region78: #{tpu_custom_call.1} parent=47 // pred_check_branch
          %452 = sbr.rel (%p450) target = $region80
        $region79: #{tpu_custom_call.1} parent=47 // pred_region
          %453 = vst [vmem:[#allocation2] sm:$0xff] 0.0
          %454 = vst [vmem:[#allocation2 + $0x8] sm:$0xff] 0.0
          %455 = vst [vmem:[#allocation2 + $0x10] sm:$0xff] 0.0
          %456 = vst [vmem:[#allocation2 + $0x18] sm:$0xff] 0.0
          %457 = vst [vmem:[#allocation2 + $0x20] sm:$0xff] 0.0
          %458 = vst [vmem:[#allocation2 + $0x28] sm:$0xff] 0.0
          %459 = vst [vmem:[#allocation2 + $0x30] sm:$0xff] 0.0
          %460 = vst [vmem:[#allocation2 + $0x38] sm:$0xff] 0.0
          %461 = vst [vmem:[#allocation2 + $0x40] sm:$0xff] 0.0
          %462 = vst [vmem:[#allocation2 + $0x48] sm:$0xff] 0.0
        $region80: #{tpu_custom_call.1} parent=47 // pred_fallthru
          _
        %v463 = vld [vmem:[#allocation2] sm:$0xff]
        %v464 = vld [vmem:[#allocation2 + $0x8] sm:$0xff]
        %v465 = vld [vmem:[#allocation2 + $0x10] sm:$0xff]
        %v466 = vld [vmem:[#allocation2 + $0x18] sm:$0xff]
        %v467 = vld [vmem:[#allocation2 + $0x20] sm:$0xff]
        %v468 = vld [vmem:[#allocation2 + $0x28] sm:$0xff]
        %v469 = vld [vmem:[#allocation2 + $0x30] sm:$0xff]
        %v470 = vld [vmem:[#allocation2 + $0x38] sm:$0xff]
        %v471 = vld [vmem:[#allocation2 + $0x40] sm:$0xff]
        %v472 = vld [vmem:[#allocation2 + $0x48] sm:$0xff]
        %v473 = vld [vmem:[%s381] sm:$0xff]
        %v474 = vld [vmem:[%s381 + $0x8] sm:$0xff]
        %v475 = vld [vmem:[%s381 + $0x10] sm:$0xff]
        %v476 = vld [vmem:[%s381 + $0x18] sm:$0xff]
        %v477 = vld [vmem:[%s381 + $0x20] sm:$0xff]
        %v478 = vld [vmem:[%s381 + $0x28] sm:$0xff]
        %v479 = vld [vmem:[%s381 + $0x30] sm:$0xff]
        %v480 = vld [vmem:[%s381 + $0x38] sm:$0xff]
        %v481 = vld [vmem:[%s381 + $0x40] sm:$0xff]
        %v482 = vld [vmem:[%s381 + $0x48] sm:$0xff]
        %v483 = vld [vmem:[%s381 + $0x50] sm:$0xff]
        %v484 = vld [vmem:[%s381 + $0x58] sm:$0xff]
        %v485 = vld [vmem:[%s381 + $0x60] sm:$0xff]
        %v486 = vld [vmem:[%s381 + $0x68] sm:$0xff]
        %v487 = vld [vmem:[%s381 + $0x70] sm:$0xff]
        %v488 = vld [vmem:[%s381 + $0x78] sm:$0xff]
        %v489 = vld [vmem:[%s381 + $0x80] sm:$0xff]
        %v490 = vld [vmem:[%s381 + $0x88] sm:$0xff]
        %v491 = vld [vmem:[%s381 + $0x90] sm:$0xff]
        %v492 = vld [vmem:[%s381 + $0x98] sm:$0xff]
        %v493 = vld [vmem:[%s381 + $0xa0] sm:$0xff]
        %v494 = vld [vmem:[%s381 + $0xa8] sm:$0xff]
        %v495 = vld [vmem:[%s381 + $0xb0] sm:$0xff]
        %v496 = vld [vmem:[%s381 + $0xb8] sm:$0xff]
        %v497 = vld [vmem:[%s381 + $0xc0] sm:$0xf]
        %v498 = vld [vmem:[%s381 + $0xc4] sm:$0xff]
        %v499 = vld [vmem:[%s381 + $0xcc] sm:$0xff]
        %v500 = vld [vmem:[%s381 + $0xd4] sm:$0xff]
        %v501 = vld [vmem:[%s381 + $0xdc] sm:$0xff]
        %v502 = vld [vmem:[%s381 + $0xe4] sm:$0xff]
        %v503 = vld [vmem:[%s381 + $0xec] sm:$0xff]
        %v504 = vld [vmem:[%s381 + $0xf4] sm:$0xff]
        %v505 = vld [vmem:[%s381 + $0xfc] sm:$0xff]
        %v506 = vld [vmem:[%s381 + $0x104] sm:$0xff]
        %v507 = vld [vmem:[%s381 + $0x10c] sm:$0xff]
        %v508 = vld [vmem:[%s381 + $0x114] sm:$0xff]
        %v509 = vld [vmem:[%s381 + $0x11c] sm:$0xff]
        %v510 = vld [vmem:[%s381 + $0x124] sm:$0xff]
        %v511 = vld [vmem:[%s381 + $0x12c] sm:$0xff]
        %v512 = vld [vmem:[%s381 + $0x134] sm:$0xff]
        %v513 = vld [vmem:[%s381 + $0x13c] sm:$0xff]
        %v514 = vld [vmem:[%s381 + $0x144] sm:$0xff]
        %v515 = vld [vmem:[%s381 + $0x14c] sm:$0xff]
        %v516 = vld [vmem:[%s381 + $0x154] sm:$0xff]
        %v517 = vld [vmem:[%s381 + $0x15c] sm:$0xff]
        %v518 = vld [vmem:[%s381 + $0x164] sm:$0xff]
        %v519 = vld [vmem:[%s381 + $0x16c] sm:$0xff]
        %v520 = vld [vmem:[%s381 + $0x174] sm:$0xff]
        %v521 = vld [vmem:[%s381 + $0x17c] sm:$0xff]
        %v522 = vld [vmem:[%s381 + $0x184] sm:$0xf]
        %v523 = vld [vmem:[%s390] sm:$0xff]
        %v524 = vld [vmem:[%s390 + $0x8] sm:$0xff]
        %v525 = vld [vmem:[%s390 + $0x10] sm:$0xff]
        %v526 = vld [vmem:[%s390 + $0x18] sm:$0xff]
        %v527 = vld [vmem:[%s390 + $0x20] sm:$0xff]
        %v528 = vld [vmem:[%s390 + $0x28] sm:$0xff]
        %v529 = vld [vmem:[%s390 + $0x30] sm:$0xff]
        %v530 = vld [vmem:[%s390 + $0x38] sm:$0xff]
        %v531 = vld [vmem:[%s390 + $0x40] sm:$0xff]
        %v532 = vld [vmem:[%s390 + $0x48] sm:$0xff]
        %v533 = vld [vmem:[%s390 + $0x50] sm:$0xff]
        %v534 = vld [vmem:[%s390 + $0x58] sm:$0xff]
        %v535 = vld [vmem:[%s390 + $0x60] sm:$0xff]
        %v536 = vld [vmem:[%s390 + $0x68] sm:$0xff]
        %v537 = vld [vmem:[%s390 + $0x70] sm:$0xff]
        %v538 = vld [vmem:[%s390 + $0x78] sm:$0xff]
        %v539 = vld [vmem:[%s390 + $0x80] sm:$0xff]
        %v540 = vld [vmem:[%s390 + $0x88] sm:$0xff]
        %v541 = vld [vmem:[%s390 + $0x90] sm:$0xff]
        %v542 = vld [vmem:[%s390 + $0x98] sm:$0xff]
        %v543 = vld [vmem:[%s390 + $0xa0] sm:$0xff]
        %v544 = vld [vmem:[%s390 + $0xa8] sm:$0xff]
        %v545 = vld [vmem:[%s390 + $0xb0] sm:$0xff]
        %v546 = vld [vmem:[%s390 + $0xb8] sm:$0xff]
        %v547 = vld [vmem:[%s390 + $0xc0] sm:$0xff]
        %v548 = vld [vmem:[%s390 + $0xc8] sm:$0xff]
        %v549 = vld [vmem:[%s390 + $0xd0] sm:$0xff]
        %v550 = vld [vmem:[%s390 + $0xd8] sm:$0xff]
        %v551 = vld [vmem:[%s390 + $0xe0] sm:$0xff]
        %v552 = vld [vmem:[%s390 + $0xe8] sm:$0xff]
        %v553 = vld [vmem:[%s390 + $0xf0] sm:$0xff]
        %v554 = vld [vmem:[%s390 + $0xf8] sm:$0xff]
        %v555 = vld [vmem:[%s390 + $0x100] sm:$0xff]
        %v556 = vld [vmem:[%s390 + $0x108] sm:$0xff]
        %v557 = vld [vmem:[%s390 + $0x110] sm:$0xff]
        %v558 = vld [vmem:[%s390 + $0x118] sm:$0xff]
        %v559 = vld [vmem:[%s390 + $0x120] sm:$0xff]
        %v560 = vld [vmem:[%s390 + $0x128] sm:$0xff]
        %v561 = vld [vmem:[%s390 + $0x130] sm:$0xff]
        %v562 = vld [vmem:[%s390 + $0x138] sm:$0xff]
        %v563 = vld [vmem:[%s390 + $0x140] sm:$0xff]
        %v564 = vld [vmem:[%s390 + $0x148] sm:$0xff]
        %v565 = vld [vmem:[%s390 + $0x150] sm:$0xff]
        %v566 = vld [vmem:[%s390 + $0x158] sm:$0xff]
        %v567 = vld [vmem:[%s390 + $0x160] sm:$0xff]
        %v568 = vld [vmem:[%s390 + $0x168] sm:$0xff]
        %v569 = vld [vmem:[%s390 + $0x170] sm:$0xff]
        %v570 = vld [vmem:[%s390 + $0x178] sm:$0xff]
        %v571 = vld [vmem:[%s390 + $0x180] sm:$0xff]
        %v572 = vld [vmem:[%s390 + $0x188] sm:$0xff]
        %v573 = vld [vmem:[%s390 + $0x190] sm:$0xff]
        %v574 = vld [vmem:[%s390 + $0x198] sm:$0xff]
        %v575 = vld [vmem:[%s390 + $0x1a0] sm:$0xff]
        %v576 = vld [vmem:[%s390 + $0x1a8] sm:$0xff]
        %v577 = vld [vmem:[%s390 + $0x1b0] sm:$0xff]
        %v578 = vld [vmem:[%s390 + $0x1b8] sm:$0xff]
        %v579 = vld [vmem:[%s390 + $0x1c0] sm:$0xff]
        %v580 = vld [vmem:[%s390 + $0x1c8] sm:$0xff]
        %v581 = vld [vmem:[%s390 + $0x1d0] sm:$0xff]
        %v582 = vld [vmem:[%s390 + $0x1d8] sm:$0xff]
        %v583 = vld [vmem:[%s390 + $0x1e0] sm:$0xff]
        %v584 = vld [vmem:[%s390 + $0x1e8] sm:$0xff]
        %v585 = vld [vmem:[%s390 + $0x1f0] sm:$0xff]
        %v586 = vld [vmem:[%s390 + $0x1f8] sm:$0xff]
        %v587 = vld [vmem:[%s390 + $0x200] sm:$0xff]
        %v588 = vld [vmem:[%s390 + $0x208] sm:$0xff]
        %v589 = vld [vmem:[%s390 + $0x210] sm:$0xff]
        %v590 = vld [vmem:[%s390 + $0x218] sm:$0xff]
        %v591 = vld [vmem:[%s390 + $0x220] sm:$0xff]
        %v592 = vld [vmem:[%s390 + $0x228] sm:$0xff]
        %v593 = vld [vmem:[%s390 + $0x230] sm:$0xff]
        %v594 = vld [vmem:[%s390 + $0x238] sm:$0xff]
        %v595 = vld [vmem:[%s390 + $0x240] sm:$0xff]
        %v596 = vld [vmem:[%s390 + $0x248] sm:$0xff]
        %v597 = vld [vmem:[%s390 + $0x250] sm:$0xff]
        %v598 = vld [vmem:[%s390 + $0x258] sm:$0xff]
        %v599 = vld [vmem:[%s390 + $0x260] sm:$0xff]
        %v600 = vld [vmem:[%s390 + $0x268] sm:$0xff]
        %v601 = vld [vmem:[%s390 + $0x270] sm:$0xff]
        %v602 = vld [vmem:[%s390 + $0x278] sm:$0xff]
        %v603 = vld [vmem:[%s390 + $0x280] sm:$0xff]
        %v604 = vld [vmem:[%s390 + $0x288] sm:$0xff]
        %v605 = vld [vmem:[%s390 + $0x290] sm:$0xff]
        %v606 = vld [vmem:[%s390 + $0x298] sm:$0xff]
        %v607 = vld [vmem:[%s390 + $0x2a0] sm:$0xff]
        %v608 = vld [vmem:[%s390 + $0x2a8] sm:$0xff]
        %v609 = vld [vmem:[%s390 + $0x2b0] sm:$0xff]
        %v610 = vld [vmem:[%s390 + $0x2b8] sm:$0xff]
        %v611 = vld [vmem:[%s390 + $0x2c0] sm:$0xff]
        %v612 = vld [vmem:[%s390 + $0x2c8] sm:$0xff]
        %v613 = vld [vmem:[%s390 + $0x2d0] sm:$0xff]
        %v614 = vld [vmem:[%s390 + $0x2d8] sm:$0xff]
        %v615 = vld [vmem:[%s390 + $0x2e0] sm:$0xff]
        %v616 = vld [vmem:[%s390 + $0x2e8] sm:$0xff]
        %v617 = vld [vmem:[%s390 + $0x2f0] sm:$0xff]
        %v618 = vld [vmem:[%s390 + $0x2f8] sm:$0xff]
        %v619 = vld [vmem:[%s390 + $0x300] sm:$0xff]
        %v620 = vld [vmem:[%s390 + $0x308] sm:$0xff]
        %v621 = vld [vmem:[%s390 + $0x310] sm:$0xff]
        %v622 = vld [vmem:[%s390 + $0x318] sm:$0xff]
        %v623 = vld [vmem:[%s390 + $0x320] sm:$0xff]
        %v624 = vld [vmem:[%s390 + $0x328] sm:$0xff]
        %v625 = vld [vmem:[%s390 + $0x330] sm:$0xff]
        %v626 = vld [vmem:[%s390 + $0x338] sm:$0xff]
        %v627 = vld [vmem:[%s390 + $0x340] sm:$0xff]
        %v628 = vld [vmem:[%s390 + $0x348] sm:$0xff]
        %v629 = vld [vmem:[%s390 + $0x350] sm:$0xff]
        %v630 = vld [vmem:[%s390 + $0x358] sm:$0xff]
        %v631 = vld [vmem:[%s390 + $0x360] sm:$0xff]
        %v632 = vld [vmem:[%s390 + $0x368] sm:$0xff]
        %v633 = vld [vmem:[%s390 + $0x370] sm:$0xff]
        %v634 = vld [vmem:[%s390 + $0x378] sm:$0xff]
        %v635 = vld [vmem:[%s390 + $0x380] sm:$0xff]
        %v636 = vld [vmem:[%s390 + $0x388] sm:$0xff]
        %v637 = vld [vmem:[%s390 + $0x390] sm:$0xff]
        %v638 = vld [vmem:[%s390 + $0x398] sm:$0xff]
        %v639 = vld [vmem:[%s390 + $0x3a0] sm:$0xff]
        %v640 = vld [vmem:[%s390 + $0x3a8] sm:$0xff]
        %v641 = vld [vmem:[%s390 + $0x3b0] sm:$0xff]
        %v642 = vld [vmem:[%s390 + $0x3b8] sm:$0xff]
        %v643 = vld [vmem:[%s390 + $0x3c0] sm:$0xff]
        %v644 = vld [vmem:[%s390 + $0x3c8] sm:$0xff]
        %v645 = vld [vmem:[%s390 + $0x3d0] sm:$0xff]
        %v646 = vld [vmem:[%s390 + $0x3d8] sm:$0xff]
        %v647 = vld [vmem:[%s390 + $0x3e0] sm:$0xff]
        %v648 = vld [vmem:[%s390 + $0x3e8] sm:$0xff]
        %v649 = vld [vmem:[%s390 + $0x3f0] sm:$0xff]
        %v650 = vld [vmem:[%s390 + $0x3f8] sm:$0xff]
        %v651 = vld [vmem:[%s390 + $0x400] sm:$0xff]
        %v652 = vld [vmem:[%s390 + $0x408] sm:$0xff]
        %v653 = vld [vmem:[%s390 + $0x410] sm:$0xff]
        %v654 = vld [vmem:[%s390 + $0x418] sm:$0xff]
        %v655 = vld [vmem:[%s390 + $0x420] sm:$0xff]
        %v656 = vld [vmem:[%s390 + $0x428] sm:$0xff]
        %v657 = vld [vmem:[%s390 + $0x430] sm:$0xff]
        %v658 = vld [vmem:[%s390 + $0x438] sm:$0xff]
        %v659 = vld [vmem:[%s390 + $0x440] sm:$0xff]
        %v660 = vld [vmem:[%s390 + $0x448] sm:$0xff]
        %v661 = vld [vmem:[%s390 + $0x450] sm:$0xff]
        %v662 = vld [vmem:[%s390 + $0x458] sm:$0xff]
        %v663 = vld [vmem:[%s390 + $0x460] sm:$0xff]
        %v664 = vld [vmem:[%s390 + $0x468] sm:$0xff]
        %v665 = vld [vmem:[%s390 + $0x470] sm:$0xff]
        %v666 = vld [vmem:[%s390 + $0x478] sm:$0xff]
        %v667 = vld [vmem:[%s390 + $0x480] sm:$0xff]
        %v668 = vld [vmem:[%s390 + $0x488] sm:$0xff]
        %v669 = vld [vmem:[%s390 + $0x490] sm:$0xff]
        %v670 = vld [vmem:[%s390 + $0x498] sm:$0xff]
        %v671 = vld [vmem:[%s390 + $0x4a0] sm:$0xff]
        %v672 = vld [vmem:[%s390 + $0x4a8] sm:$0xff]
        %v673 = vld [vmem:[%s390 + $0x4b0] sm:$0xff]
        %v674 = vld [vmem:[%s390 + $0x4b8] sm:$0xff]
        %v675 = vld [vmem:[%s390 + $0x4c0] sm:$0xff]
        %v676 = vld [vmem:[%s390 + $0x4c8] sm:$0xff]
        %v677 = vld [vmem:[%s390 + $0x4d0] sm:$0xff]
        %v678 = vld [vmem:[%s390 + $0x4d8] sm:$0xff]
        %v679 = vld [vmem:[%s390 + $0x4e0] sm:$0xff]
        %v680 = vld [vmem:[%s390 + $0x4e8] sm:$0xff]
        %v681 = vld [vmem:[%s390 + $0x4f0] sm:$0xff]
        %v682 = vld [vmem:[%s390 + $0x4f8] sm:$0xff]
        %v683 = vld [vmem:[%s390 + $0x500] sm:$0xff]
        %v684 = vld [vmem:[%s390 + $0x508] sm:$0xff]
        %v685 = vld [vmem:[%s390 + $0x510] sm:$0xff]
        %v686 = vld [vmem:[%s390 + $0x518] sm:$0xff]
        %v687 = vld [vmem:[%s390 + $0x520] sm:$0xff]
        %v688 = vld [vmem:[%s390 + $0x528] sm:$0xff]
        %v689 = vld [vmem:[%s390 + $0x530] sm:$0xff]
        %v690 = vld [vmem:[%s390 + $0x538] sm:$0xff]
        %v691 = vld [vmem:[%s390 + $0x540] sm:$0xff]
        %v692 = vld [vmem:[%s390 + $0x548] sm:$0xff]
        %v693 = vld [vmem:[%s390 + $0x550] sm:$0xff]
        %v694 = vld [vmem:[%s390 + $0x558] sm:$0xff]
        %v695 = vld [vmem:[%s390 + $0x560] sm:$0xff]
        %v696 = vld [vmem:[%s390 + $0x568] sm:$0xff]
        %v697 = vld [vmem:[%s390 + $0x570] sm:$0xff]
        %v698 = vld [vmem:[%s390 + $0x578] sm:$0xff]
        %v699 = vld [vmem:[%s390 + $0x580] sm:$0xff]
        %v700 = vld [vmem:[%s390 + $0x588] sm:$0xff]
        %v701 = vld [vmem:[%s390 + $0x590] sm:$0xff]
        %v702 = vld [vmem:[%s390 + $0x598] sm:$0xff]
        %v703 = vld [vmem:[%s390 + $0x5a0] sm:$0xff]
        %v704 = vld [vmem:[%s390 + $0x5a8] sm:$0xff]
        %v705 = vld [vmem:[%s390 + $0x5b0] sm:$0xff]
        %v706 = vld [vmem:[%s390 + $0x5b8] sm:$0xff]
        %v707 = vld [vmem:[%s390 + $0x5c0] sm:$0xff]
        %v708 = vld [vmem:[%s390 + $0x5c8] sm:$0xff]
        %v709 = vld [vmem:[%s390 + $0x5d0] sm:$0xff]
        %v710 = vld [vmem:[%s390 + $0x5d8] sm:$0xff]
        %v711 = vld [vmem:[%s390 + $0x5e0] sm:$0xff]
        %v712 = vld [vmem:[%s390 + $0x5e8] sm:$0xff]
        %v713 = vld [vmem:[%s390 + $0x5f0] sm:$0xff]
        %v714 = vld [vmem:[%s390 + $0x5f8] sm:$0xff]
        %v715 = vld [vmem:[%s390 + $0x600] sm:$0xff]
        %v716 = vld [vmem:[%s390 + $0x608] sm:$0xff]
        %v717 = vld [vmem:[%s390 + $0x610] sm:$0xff]
        %v718 = vld [vmem:[%s390 + $0x618] sm:$0xff]
        %v719 = vld [vmem:[%s390 + $0x620] sm:$0xff]
        %v720 = vld [vmem:[%s390 + $0x628] sm:$0xff]
        %v721 = vld [vmem:[%s390 + $0x630] sm:$0xff]
        %v722 = vld [vmem:[%s390 + $0x638] sm:$0xff]
        %v723 = vld [vmem:[%s390 + $0x640] sm:$0xff]
        %v724 = vld [vmem:[%s390 + $0x648] sm:$0xff]
        %v725 = vld [vmem:[%s390 + $0x650] sm:$0xff]
        %v726 = vld [vmem:[%s390 + $0x658] sm:$0xff]
        %v727 = vld [vmem:[%s390 + $0x660] sm:$0xff]
        %v728 = vld [vmem:[%s390 + $0x668] sm:$0xff]
        %v729 = vld [vmem:[%s390 + $0x670] sm:$0xff]
        %v730 = vld [vmem:[%s390 + $0x678] sm:$0xff]
        %v731 = vld [vmem:[%s390 + $0x680] sm:$0xff]
        %v732 = vld [vmem:[%s390 + $0x688] sm:$0xff]
        %v733 = vld [vmem:[%s390 + $0x690] sm:$0xff]
        %v734 = vld [vmem:[%s390 + $0x698] sm:$0xff]
        %v735 = vld [vmem:[%s390 + $0x6a0] sm:$0xff]
        %v736 = vld [vmem:[%s390 + $0x6a8] sm:$0xff]
        %v737 = vld [vmem:[%s390 + $0x6b0] sm:$0xff]
        %v738 = vld [vmem:[%s390 + $0x6b8] sm:$0xff]
        %v739 = vld [vmem:[%s390 + $0x6c0] sm:$0xff]
        %v740 = vld [vmem:[%s390 + $0x6c8] sm:$0xff]
        %v741 = vld [vmem:[%s390 + $0x6d0] sm:$0xff]
        %v742 = vld [vmem:[%s390 + $0x6d8] sm:$0xff]
        %v743 = vld [vmem:[%s390 + $0x6e0] sm:$0xff]
        %v744 = vld [vmem:[%s390 + $0x6e8] sm:$0xff]
        %v745 = vld [vmem:[%s390 + $0x6f0] sm:$0xff]
        %v746 = vld [vmem:[%s390 + $0x6f8] sm:$0xff]
        %v747 = vld [vmem:[%s390 + $0x700] sm:$0xff]
        %v748 = vld [vmem:[%s390 + $0x708] sm:$0xff]
        %v749 = vld [vmem:[%s390 + $0x710] sm:$0xff]
        %v750 = vld [vmem:[%s390 + $0x718] sm:$0xff]
        %v751 = vld [vmem:[%s390 + $0x720] sm:$0xff]
        %v752 = vld [vmem:[%s390 + $0x728] sm:$0xff]
        %v753 = vld [vmem:[%s390 + $0x730] sm:$0xff]
        %v754 = vld [vmem:[%s390 + $0x738] sm:$0xff]
        %v755 = vld [vmem:[%s390 + $0x740] sm:$0xff]
        %v756 = vld [vmem:[%s390 + $0x748] sm:$0xff]
        %v757 = vld [vmem:[%s390 + $0x750] sm:$0xff]
        %v758 = vld [vmem:[%s390 + $0x758] sm:$0xff]
        %v759 = vld [vmem:[%s390 + $0x760] sm:$0xff]
        %v760 = vld [vmem:[%s390 + $0x768] sm:$0xff]
        %v761 = vld [vmem:[%s390 + $0x770] sm:$0xff]
        %v762 = vld [vmem:[%s390 + $0x778] sm:$0xff]
        %v763 = vld [vmem:[%s390 + $0x780] sm:$0xff]
        %v764 = vld [vmem:[%s390 + $0x788] sm:$0xff]
        %v765 = vld [vmem:[%s390 + $0x790] sm:$0xff]
        %v766 = vld [vmem:[%s390 + $0x798] sm:$0xff]
        %v767 = vld [vmem:[%s390 + $0x7a0] sm:$0xff]
        %v768 = vld [vmem:[%s390 + $0x7a8] sm:$0xff]
        %v769 = vld [vmem:[%s390 + $0x7b0] sm:$0xff]
        %v770 = vld [vmem:[%s390 + $0x7b8] sm:$0xff]
        %v771 = vld [vmem:[%s390 + $0x7c0] sm:$0xff]
        %v772 = vld [vmem:[%s390 + $0x7c8] sm:$0xff]
        %v773 = vld [vmem:[%s390 + $0x7d0] sm:$0xff]
        %v774 = vld [vmem:[%s390 + $0x7d8] sm:$0xff]
        %v775 = vld [vmem:[%s390 + $0x7e0] sm:$0xff]
        %v776 = vld [vmem:[%s390 + $0x7e8] sm:$0xff]
        %v777 = vld [vmem:[%s390 + $0x7f0] sm:$0xff]
        %v778 = vld [vmem:[%s390 + $0x7f8] sm:$0xff]
        %v779 = vld [vmem:[%s390 + $0x800] sm:$0xff]
        %v780 = vld [vmem:[%s390 + $0x808] sm:$0xff]
        %v781 = vld [vmem:[%s390 + $0x810] sm:$0xff]
        %v782 = vld [vmem:[%s390 + $0x818] sm:$0xff]
        %v783 = vld [vmem:[%s390 + $0x820] sm:$0xff]
        %v784 = vld [vmem:[%s390 + $0x828] sm:$0xff]
        %v785 = vld [vmem:[%s390 + $0x830] sm:$0xff]
        %v786 = vld [vmem:[%s390 + $0x838] sm:$0xff]
        %v787 = vld [vmem:[%s390 + $0x840] sm:$0xff]
        %v788 = vld [vmem:[%s390 + $0x848] sm:$0xff]
        %v789 = vld [vmem:[%s390 + $0x850] sm:$0xff]
        %v790 = vld [vmem:[%s390 + $0x858] sm:$0xff]
        %v791 = vld [vmem:[%s390 + $0x860] sm:$0xff]
        %v792 = vld [vmem:[%s390 + $0x868] sm:$0xff]
        %v793 = vld [vmem:[%s390 + $0x870] sm:$0xff]
        %v794 = vld [vmem:[%s390 + $0x878] sm:$0xff]
        %v795 = vld [vmem:[%s390 + $0x880] sm:$0xff]
        %v796 = vld [vmem:[%s390 + $0x888] sm:$0xff]
        %v797 = vld [vmem:[%s390 + $0x890] sm:$0xff]
        %v798 = vld [vmem:[%s390 + $0x898] sm:$0xff]
        %v799 = vld [vmem:[%s390 + $0x8a0] sm:$0xff]
        %v800 = vld [vmem:[%s390 + $0x8a8] sm:$0xff]
        %v801 = vld [vmem:[%s390 + $0x8b0] sm:$0xff]
        %v802 = vld [vmem:[%s390 + $0x8b8] sm:$0xff]
        %v803 = vld [vmem:[%s390 + $0x8c0] sm:$0xff]
        %v804 = vld [vmem:[%s390 + $0x8c8] sm:$0xff]
        %v805 = vld [vmem:[%s390 + $0x8d0] sm:$0xff]
        %v806 = vld [vmem:[%s390 + $0x8d8] sm:$0xff]
        %v807 = vld [vmem:[%s390 + $0x8e0] sm:$0xff]
        %v808 = vld [vmem:[%s390 + $0x8e8] sm:$0xff]
        %v809 = vld [vmem:[%s390 + $0x8f0] sm:$0xff]
        %v810 = vld [vmem:[%s390 + $0x8f8] sm:$0xff]
        %v811 = vld [vmem:[%s390 + $0x900] sm:$0xff]
        %v812 = vld [vmem:[%s390 + $0x908] sm:$0xff]
        %v813 = vld [vmem:[%s390 + $0x910] sm:$0xff]
        %v814 = vld [vmem:[%s390 + $0x918] sm:$0xff]
        %v815 = vld [vmem:[%s390 + $0x920] sm:$0xff]
        %v816 = vld [vmem:[%s390 + $0x928] sm:$0xff]
        %v817 = vld [vmem:[%s390 + $0x930] sm:$0xff]
        %v818 = vld [vmem:[%s390 + $0x938] sm:$0xff]
        %v819 = vld [vmem:[%s390 + $0x940] sm:$0xff]
        %v820 = vld [vmem:[%s390 + $0x948] sm:$0xff]
        %v821 = vld [vmem:[%s390 + $0x950] sm:$0xff]
        %v822 = vld [vmem:[%s390 + $0x958] sm:$0xff]
        %v823 = vld [vmem:[%s390 + $0x960] sm:$0xff]
        %v824 = vld [vmem:[%s390 + $0x968] sm:$0xff]
        %v825 = vld [vmem:[%s390 + $0x970] sm:$0xff]
        %v826 = vld [vmem:[%s390 + $0x978] sm:$0xff]
        %v827 = vld [vmem:[%s390 + $0x980] sm:$0xff]
        %v828 = vld [vmem:[%s390 + $0x988] sm:$0xff]
        %v829 = vld [vmem:[%s390 + $0x990] sm:$0xff]
        %v830 = vld [vmem:[%s390 + $0x998] sm:$0xff]
        %v831 = vld [vmem:[%s390 + $0x9a0] sm:$0xff]
        %v832 = vld [vmem:[%s390 + $0x9a8] sm:$0xff]
        %v833 = vld [vmem:[%s390 + $0x9b0] sm:$0xff]
        %v834 = vld [vmem:[%s390 + $0x9b8] sm:$0xff]
        %v835 = vld [vmem:[%s390 + $0x9c0] sm:$0xff]
        %v836 = vld [vmem:[%s390 + $0x9c8] sm:$0xff]
        %v837 = vld [vmem:[%s390 + $0x9d0] sm:$0xff]
        %v838 = vld [vmem:[%s390 + $0x9d8] sm:$0xff]
        %v839 = vld [vmem:[%s390 + $0x9e0] sm:$0xff]
        %v840 = vld [vmem:[%s390 + $0x9e8] sm:$0xff]
        %v841 = vld [vmem:[%s390 + $0x9f0] sm:$0xff]
        %v842 = vld [vmem:[%s390 + $0x9f8] sm:$0xff]
        %v843 = vld [vmem:[%s390 + $0xa00] sm:$0xff]
        %v844 = vld [vmem:[%s390 + $0xa08] sm:$0xff]
        %v845 = vld [vmem:[%s390 + $0xa10] sm:$0xff]
        %v846 = vld [vmem:[%s390 + $0xa18] sm:$0xff]
        %v847 = vld [vmem:[%s390 + $0xa20] sm:$0xff]
        %v848 = vld [vmem:[%s390 + $0xa28] sm:$0xff]
        %v849 = vld [vmem:[%s390 + $0xa30] sm:$0xff]
        %v850 = vld [vmem:[%s390 + $0xa38] sm:$0xff]
        %v851 = vld [vmem:[%s390 + $0xa40] sm:$0xff]
        %v852 = vld [vmem:[%s390 + $0xa48] sm:$0xff]
        %v853 = vld [vmem:[%s390 + $0xa50] sm:$0xff]
        %v854 = vld [vmem:[%s390 + $0xa58] sm:$0xff]
        %v855 = vld [vmem:[%s390 + $0xa60] sm:$0xff]
        %v856 = vld [vmem:[%s390 + $0xa68] sm:$0xff]
        %v857 = vld [vmem:[%s390 + $0xa70] sm:$0xff]
        %v858 = vld [vmem:[%s390 + $0xa78] sm:$0xff]
        %v859 = vld [vmem:[%s390 + $0xa80] sm:$0xff]
        %v860 = vld [vmem:[%s390 + $0xa88] sm:$0xff]
        %v861 = vld [vmem:[%s390 + $0xa90] sm:$0xff]
        %v862 = vld [vmem:[%s390 + $0xa98] sm:$0xff]
        %v863 = vld [vmem:[%s390 + $0xaa0] sm:$0xff]
        %v864 = vld [vmem:[%s390 + $0xaa8] sm:$0xff]
        %v865 = vld [vmem:[%s390 + $0xab0] sm:$0xff]
        %v866 = vld [vmem:[%s390 + $0xab8] sm:$0xff]
        %v867 = vld [vmem:[%s390 + $0xac0] sm:$0xff]
        %v868 = vld [vmem:[%s390 + $0xac8] sm:$0xff]
        %v869 = vld [vmem:[%s390 + $0xad0] sm:$0xff]
        %v870 = vld [vmem:[%s390 + $0xad8] sm:$0xff]
        %v871 = vld [vmem:[%s390 + $0xae0] sm:$0xff]
        %v872 = vld [vmem:[%s390 + $0xae8] sm:$0xff]
        %v873 = vld [vmem:[%s390 + $0xaf0] sm:$0xff]
        %v874 = vld [vmem:[%s390 + $0xaf8] sm:$0xff]
        %v875 = vld [vmem:[%s390 + $0xb00] sm:$0xff]
        %v876 = vld [vmem:[%s390 + $0xb08] sm:$0xff]
        %v877 = vld [vmem:[%s390 + $0xb10] sm:$0xff]
        %v878 = vld [vmem:[%s390 + $0xb18] sm:$0xff]
        %v879 = vld [vmem:[%s390 + $0xb20] sm:$0xff]
        %v880 = vld [vmem:[%s390 + $0xb28] sm:$0xff]
        %v881 = vld [vmem:[%s390 + $0xb30] sm:$0xff]
        %v882 = vld [vmem:[%s390 + $0xb38] sm:$0xff]
        %v883 = vld [vmem:[%s390 + $0xb40] sm:$0xff]
        %v884 = vld [vmem:[%s390 + $0xb48] sm:$0xff]
        %v885 = vld [vmem:[%s390 + $0xb50] sm:$0xff]
        %v886 = vld [vmem:[%s390 + $0xb58] sm:$0xff]
        %v887 = vld [vmem:[%s390 + $0xb60] sm:$0xff]
        %v888 = vld [vmem:[%s390 + $0xb68] sm:$0xff]
        %v889 = vld [vmem:[%s390 + $0xb70] sm:$0xff]
        %v890 = vld [vmem:[%s390 + $0xb78] sm:$0xff]
        %v891 = vld [vmem:[%s390 + $0xb80] sm:$0xff]
        %v892 = vld [vmem:[%s390 + $0xb88] sm:$0xff]
        %v893 = vld [vmem:[%s390 + $0xb90] sm:$0xff]
        %v894 = vld [vmem:[%s390 + $0xb98] sm:$0xff]
        %v895 = vld [vmem:[%s390 + $0xba0] sm:$0xff]
        %v896 = vld [vmem:[%s390 + $0xba8] sm:$0xff]
        %v897 = vld [vmem:[%s390 + $0xbb0] sm:$0xff]
        %v898 = vld [vmem:[%s390 + $0xbb8] sm:$0xff]
        %v899 = vld [vmem:[%s390 + $0xbc0] sm:$0xff]
        %v900 = vld [vmem:[%s390 + $0xbc8] sm:$0xff]
        %v901 = vld [vmem:[%s390 + $0xbd0] sm:$0xff]
        %v902 = vld [vmem:[%s390 + $0xbd8] sm:$0xff]
        %v903 = vld [vmem:[%s390 + $0xbe0] sm:$0xff]
        %v904 = vld [vmem:[%s390 + $0xbe8] sm:$0xff]
        %v905 = vld [vmem:[%s390 + $0xbf0] sm:$0xff]
        %v906 = vld [vmem:[%s390 + $0xbf8] sm:$0xff]
        %v907 = vld [vmem:[%s390 + $0xc00] sm:$0xff]
        %v908 = vld [vmem:[%s390 + $0xc08] sm:$0xff]
        %v909 = vld [vmem:[%s390 + $0xc10] sm:$0xff]
        %v910 = vld [vmem:[%s390 + $0xc18] sm:$0xff]
        %v911 = vld [vmem:[%s390 + $0xc20] sm:$0xff]
        %v912 = vld [vmem:[%s390 + $0xc28] sm:$0xff]
        %v913 = vld [vmem:[%s390 + $0xc30] sm:$0xff]
        %v914 = vld [vmem:[%s390 + $0xc38] sm:$0xff]
        %v915 = vld [vmem:[%s390 + $0xc40] sm:$0xff]
        %v916 = vld [vmem:[%s390 + $0xc48] sm:$0xff]
        %v917 = vld [vmem:[%s390 + $0xc50] sm:$0xff]
        %v918 = vld [vmem:[%s390 + $0xc58] sm:$0xff]
        %v919 = vld [vmem:[%s390 + $0xc60] sm:$0xff]
        %v920 = vld [vmem:[%s390 + $0xc68] sm:$0xff]
        %v921 = vld [vmem:[%s390 + $0xc70] sm:$0xff]
        %v922 = vld [vmem:[%s390 + $0xc78] sm:$0xff]
        %v923 = vld [vmem:[%s390 + $0xc80] sm:$0xff]
        %v924 = vld [vmem:[%s390 + $0xc88] sm:$0xff]
        %v925 = vld [vmem:[%s390 + $0xc90] sm:$0xff]
        %v926 = vld [vmem:[%s390 + $0xc98] sm:$0xff]
        %v927 = vld [vmem:[%s390 + $0xca0] sm:$0xff]
        %v928 = vld [vmem:[%s390 + $0xca8] sm:$0xff]
        %v929 = vld [vmem:[%s390 + $0xcb0] sm:$0xff]
        %v930 = vld [vmem:[%s390 + $0xcb8] sm:$0xff]
        %v931 = vld [vmem:[%s390 + $0xcc0] sm:$0xff]
        %v932 = vld [vmem:[%s390 + $0xcc8] sm:$0xff]
        %v933 = vld [vmem:[%s390 + $0xcd0] sm:$0xff]
        %v934 = vld [vmem:[%s390 + $0xcd8] sm:$0xff]
        %v935 = vld [vmem:[%s390 + $0xce0] sm:$0xff]
        %v936 = vld [vmem:[%s390 + $0xce8] sm:$0xff]
        %v937 = vld [vmem:[%s390 + $0xcf0] sm:$0xff]
        %v938 = vld [vmem:[%s390 + $0xcf8] sm:$0xff]
        %v939 = vld [vmem:[%s390 + $0xd00] sm:$0xff]
        %v940 = vld [vmem:[%s390 + $0xd08] sm:$0xff]
        %v941 = vld [vmem:[%s390 + $0xd10] sm:$0xff]
        %v942 = vld [vmem:[%s390 + $0xd18] sm:$0xff]
        %v943 = vld [vmem:[%s390 + $0xd20] sm:$0xff]
        %v944 = vld [vmem:[%s390 + $0xd28] sm:$0xff]
        %v945 = vld [vmem:[%s390 + $0xd30] sm:$0xff]
        %v946 = vld [vmem:[%s390 + $0xd38] sm:$0xff]
        %v947 = vld [vmem:[%s390 + $0xd40] sm:$0xff]
        %v948 = vld [vmem:[%s390 + $0xd48] sm:$0xff]
        %v949 = vld [vmem:[%s390 + $0xd50] sm:$0xff]
        %v950 = vld [vmem:[%s390 + $0xd58] sm:$0xff]
        %v951 = vld [vmem:[%s390 + $0xd60] sm:$0xff]
        %v952 = vld [vmem:[%s390 + $0xd68] sm:$0xff]
        %v953 = vld [vmem:[%s390 + $0xd70] sm:$0xff]
        %v954 = vld [vmem:[%s390 + $0xd78] sm:$0xff]
        %v955 = vld [vmem:[%s390 + $0xd80] sm:$0xff]
        %v956 = vld [vmem:[%s390 + $0xd88] sm:$0xff]
        %v957 = vld [vmem:[%s390 + $0xd90] sm:$0xff]
        %v958 = vld [vmem:[%s390 + $0xd98] sm:$0xff]
        %v959 = vld [vmem:[%s390 + $0xda0] sm:$0xff]
        %v960 = vld [vmem:[%s390 + $0xda8] sm:$0xff]
        %v961 = vld [vmem:[%s390 + $0xdb0] sm:$0xff]
        %v962 = vld [vmem:[%s390 + $0xdb8] sm:$0xff]
        %v963 = vld [vmem:[%s390 + $0xdc0] sm:$0xff]
        %v964 = vld [vmem:[%s390 + $0xdc8] sm:$0xff]
        %v965 = vld [vmem:[%s390 + $0xdd0] sm:$0xff]
        %v966 = vld [vmem:[%s390 + $0xdd8] sm:$0xff]
        %v967 = vld [vmem:[%s390 + $0xde0] sm:$0xff]
        %v968 = vld [vmem:[%s390 + $0xde8] sm:$0xff]
        %v969 = vld [vmem:[%s390 + $0xdf0] sm:$0xff]
        %v970 = vld [vmem:[%s390 + $0xdf8] sm:$0xff]
        %v971 = vld [vmem:[%s390 + $0xe00] sm:$0xff]
        %v972 = vld [vmem:[%s390 + $0xe08] sm:$0xff]
        %v973 = vld [vmem:[%s390 + $0xe10] sm:$0xff]
        %v974 = vld [vmem:[%s390 + $0xe18] sm:$0xff]
        %v975 = vld [vmem:[%s390 + $0xe20] sm:$0xff]
        %v976 = vld [vmem:[%s390 + $0xe28] sm:$0xff]
        %v977 = vld [vmem:[%s390 + $0xe30] sm:$0xff]
        %v978 = vld [vmem:[%s390 + $0xe38] sm:$0xff]
        %v979 = vld [vmem:[%s390 + $0xe40] sm:$0xff]
        %v980 = vld [vmem:[%s390 + $0xe48] sm:$0xff]
        %v981 = vld [vmem:[%s390 + $0xe50] sm:$0xff]
        %v982 = vld [vmem:[%s390 + $0xe58] sm:$0xff]
        %v983 = vld [vmem:[%s390 + $0xe60] sm:$0xff]
        %v984 = vld [vmem:[%s390 + $0xe68] sm:$0xff]
        %v985 = vld [vmem:[%s390 + $0xe70] sm:$0xff]
        %v986 = vld [vmem:[%s390 + $0xe78] sm:$0xff]
        %v987 = vld [vmem:[%s390 + $0xe80] sm:$0xff]
        %v988 = vld [vmem:[%s390 + $0xe88] sm:$0xff]
        %v989 = vld [vmem:[%s390 + $0xe90] sm:$0xff]
        %v990 = vld [vmem:[%s390 + $0xe98] sm:$0xff]
        %v991 = vld [vmem:[%s390 + $0xea0] sm:$0xff]
        %v992 = vld [vmem:[%s390 + $0xea8] sm:$0xff]
        %v993 = vld [vmem:[%s390 + $0xeb0] sm:$0xff]
        %v994 = vld [vmem:[%s390 + $0xeb8] sm:$0xff]
        %v995 = vld [vmem:[%s390 + $0xec0] sm:$0xff]
        %v996 = vld [vmem:[%s390 + $0xec8] sm:$0xff]
        %v997 = vld [vmem:[%s390 + $0xed0] sm:$0xff]
        %v998 = vld [vmem:[%s390 + $0xed8] sm:$0xff]
        %v999 = vld [vmem:[%s390 + $0xee0] sm:$0xff]
        %v1000 = vld [vmem:[%s390 + $0xee8] sm:$0xff]
        %v1001 = vld [vmem:[%s390 + $0xef0] sm:$0xff]
        %v1002 = vld [vmem:[%s390 + $0xef8] sm:$0xff]
        %v1003 = vld [vmem:[%s390 + $0xf00] sm:$0xff]
        %v1004 = vld [vmem:[%s390 + $0xf08] sm:$0xff]
        %v1005 = vld [vmem:[%s390 + $0xf10] sm:$0xff]
        %v1006 = vld [vmem:[%s390 + $0xf18] sm:$0xff]
        %v1007 = vld [vmem:[%s390 + $0xf20] sm:$0xff]
        %v1008 = vld [vmem:[%s390 + $0xf28] sm:$0xff]
        %v1009 = vld [vmem:[%s390 + $0xf30] sm:$0xff]
        %v1010 = vld [vmem:[%s390 + $0xf38] sm:$0xff]
        %v1011 = vld [vmem:[%s390 + $0xf40] sm:$0xff]
        %v1012 = vld [vmem:[%s390 + $0xf48] sm:$0xff]
        %v1013 = vld [vmem:[%s390 + $0xf50] sm:$0xff]
        %v1014 = vld [vmem:[%s390 + $0xf58] sm:$0xff]
        %v1015 = vld [vmem:[%s390 + $0xf60] sm:$0xff]
        %v1016 = vld [vmem:[%s390 + $0xf68] sm:$0xff]
        %v1017 = vld [vmem:[%s390 + $0xf70] sm:$0xff]
        %v1018 = vld [vmem:[%s390 + $0xf78] sm:$0xff]
        %v1019 = vld [vmem:[%s390 + $0xf80] sm:$0xff]
        %v1020 = vld [vmem:[%s390 + $0xf88] sm:$0xff]
        %v1021 = vld [vmem:[%s390 + $0xf90] sm:$0xff]
        %v1022 = vld [vmem:[%s390 + $0xf98] sm:$0xff]
        %v1023 = vld [vmem:[%s390 + $0xfa0] sm:$0xff]
        %v1024 = vld [vmem:[%s390 + $0xfa8] sm:$0xff]
        %v1025 = vld [vmem:[%s390 + $0xfb0] sm:$0xff]
        %v1026 = vld [vmem:[%s390 + $0xfb8] sm:$0xff]
        %v1027 = vld [vmem:[%s390 + $0xfc0] sm:$0xff]
        %v1028 = vld [vmem:[%s390 + $0xfc8] sm:$0xff]
        %v1029 = vld [vmem:[%s390 + $0xfd0] sm:$0xff]
        %v1030 = vld [vmem:[%s390 + $0xfd8] sm:$0xff]
        %v1031 = vld [vmem:[%s390 + $0xfe0] sm:$0xff]
        %v1032 = vld [vmem:[%s390 + $0xfe8] sm:$0xff]
        %v1033 = vld [vmem:[%s390 + $0xff0] sm:$0xff]
        %v1034 = vld [vmem:[%s390 + $0xff8] sm:$0xff]
        %v1035 = vld [vmem:[%s390 + $0x1000] sm:$0xff]
        %v1036 = vld [vmem:[%s390 + $0x1008] sm:$0xff]
        %v1037 = vld [vmem:[%s390 + $0x1010] sm:$0xff]
        %v1038 = vld [vmem:[%s390 + $0x1018] sm:$0xff]
        %v1039 = vld [vmem:[%s390 + $0x1020] sm:$0xff]
        %v1040 = vld [vmem:[%s390 + $0x1028] sm:$0xff]
        %v1041 = vld [vmem:[%s390 + $0x1030] sm:$0xff]
        %v1042 = vld [vmem:[%s390 + $0x1038] sm:$0xff]
        %v1043 = vld [vmem:[%s390 + $0x1040] sm:$0xff]
        %v1044 = vld [vmem:[%s390 + $0x1048] sm:$0xff]
        %v1045 = vld [vmem:[%s390 + $0x1050] sm:$0xff]
        %v1046 = vld [vmem:[%s390 + $0x1058] sm:$0xff]
        %v1047 = vld [vmem:[%s390 + $0x1060] sm:$0xff]
        %v1048 = vld [vmem:[%s390 + $0x1068] sm:$0xff]
        %v1049 = vld [vmem:[%s390 + $0x1070] sm:$0xff]
        %v1050 = vld [vmem:[%s390 + $0x1078] sm:$0xff]
        %v1051 = vld [vmem:[%s390 + $0x1080] sm:$0xff]
        %v1052 = vld [vmem:[%s390 + $0x1088] sm:$0xff]
        %v1053 = vld [vmem:[%s390 + $0x1090] sm:$0xff]
        %v1054 = vld [vmem:[%s390 + $0x1098] sm:$0xff]
        %v1055 = vld [vmem:[%s390 + $0x10a0] sm:$0xff]
        %v1056 = vld [vmem:[%s390 + $0x10a8] sm:$0xff]
        %v1057 = vld [vmem:[%s390 + $0x10b0] sm:$0xff]
        %v1058 = vld [vmem:[%s390 + $0x10b8] sm:$0xff]
        %v1059 = vld [vmem:[%s390 + $0x10c0] sm:$0xff]
        %v1060 = vld [vmem:[%s390 + $0x10c8] sm:$0xff]
        %v1061 = vld [vmem:[%s390 + $0x10d0] sm:$0xff]
        %v1062 = vld [vmem:[%s390 + $0x10d8] sm:$0xff]
        %v1063 = vld [vmem:[%s390 + $0x10e0] sm:$0xff]
        %v1064 = vld [vmem:[%s390 + $0x10e8] sm:$0xff]
        %v1065 = vld [vmem:[%s390 + $0x10f0] sm:$0xff]
        %v1066 = vld [vmem:[%s390 + $0x10f8] sm:$0xff]
        %v1067 = vld [vmem:[%s390 + $0x1100] sm:$0xff]
        %v1068 = vld [vmem:[%s390 + $0x1108] sm:$0xff]
        %v1069 = vld [vmem:[%s390 + $0x1110] sm:$0xff]
        %v1070 = vld [vmem:[%s390 + $0x1118] sm:$0xff]
        %v1071 = vld [vmem:[%s390 + $0x1120] sm:$0xff]
        %v1072 = vld [vmem:[%s390 + $0x1128] sm:$0xff]
        %v1073 = vld [vmem:[%s390 + $0x1130] sm:$0xff]
        %v1074 = vld [vmem:[%s390 + $0x1138] sm:$0xff]
        %v1075 = vld [vmem:[%s390 + $0x1140] sm:$0xff]
        %v1076 = vld [vmem:[%s390 + $0x1148] sm:$0xff]
        %v1077 = vld [vmem:[%s390 + $0x1150] sm:$0xff]
        %v1078 = vld [vmem:[%s390 + $0x1158] sm:$0xff]
        %v1079 = vld [vmem:[%s390 + $0x1160] sm:$0xff]
        %v1080 = vld [vmem:[%s390 + $0x1168] sm:$0xff]
        %v1081 = vld [vmem:[%s390 + $0x1170] sm:$0xff]
        %v1082 = vld [vmem:[%s390 + $0x1178] sm:$0xff]
        %v1083 = vld [vmem:[%s390 + $0x1180] sm:$0xff]
        %v1084 = vld [vmem:[%s390 + $0x1188] sm:$0xff]
        %v1085 = vld [vmem:[%s390 + $0x1190] sm:$0xff]
        %v1086 = vld [vmem:[%s390 + $0x1198] sm:$0xff]
        %v1087 = vld [vmem:[%s390 + $0x11a0] sm:$0xff]
        %v1088 = vld [vmem:[%s390 + $0x11a8] sm:$0xff]
        %v1089 = vld [vmem:[%s390 + $0x11b0] sm:$0xff]
        %v1090 = vld [vmem:[%s390 + $0x11b8] sm:$0xff]
        %v1091 = vld [vmem:[%s390 + $0x11c0] sm:$0xff]
        %v1092 = vld [vmem:[%s390 + $0x11c8] sm:$0xff]
        %v1093 = vld [vmem:[%s390 + $0x11d0] sm:$0xff]
        %v1094 = vld [vmem:[%s390 + $0x11d8] sm:$0xff]
        %v1095 = vld [vmem:[%s390 + $0x11e0] sm:$0xff]
        %v1096 = vld [vmem:[%s390 + $0x11e8] sm:$0xff]
        %v1097 = vld [vmem:[%s390 + $0x11f0] sm:$0xff]
        %v1098 = vld [vmem:[%s390 + $0x11f8] sm:$0xff]
        %v1099 = vld [vmem:[%s390 + $0x1200] sm:$0xff]
        %v1100 = vld [vmem:[%s390 + $0x1208] sm:$0xff]
        %v1101 = vld [vmem:[%s390 + $0x1210] sm:$0xff]
        %v1102 = vld [vmem:[%s390 + $0x1218] sm:$0xff]
        %v1103 = vld [vmem:[%s390 + $0x1220] sm:$0xff]
        %v1104 = vld [vmem:[%s390 + $0x1228] sm:$0xff]
        %v1105 = vld [vmem:[%s390 + $0x1230] sm:$0xff]
        %v1106 = vld [vmem:[%s390 + $0x1238] sm:$0xff]
        %v1107 = vld [vmem:[%s390 + $0x1240] sm:$0xff]
        %v1108 = vld [vmem:[%s390 + $0x1248] sm:$0xff]
        %v1109 = vld [vmem:[%s390 + $0x1250] sm:$0xff]
        %v1110 = vld [vmem:[%s390 + $0x1258] sm:$0xff]
        %v1111 = vld [vmem:[%s390 + $0x1260] sm:$0xff]
        %v1112 = vld [vmem:[%s390 + $0x1268] sm:$0xff]
        %v1113 = vld [vmem:[%s390 + $0x1270] sm:$0xff]
        %v1114 = vld [vmem:[%s390 + $0x1278] sm:$0xff]
        %v1115 = vld [vmem:[%s390 + $0x1280] sm:$0xff]
        %v1116 = vld [vmem:[%s390 + $0x1288] sm:$0xff]
        %v1117 = vld [vmem:[%s390 + $0x1290] sm:$0xff]
        %v1118 = vld [vmem:[%s390 + $0x1298] sm:$0xff]
        %v1119 = vld [vmem:[%s390 + $0x12a0] sm:$0xff]
        %v1120 = vld [vmem:[%s390 + $0x12a8] sm:$0xff]
        %v1121 = vld [vmem:[%s390 + $0x12b0] sm:$0xff]
        %v1122 = vld [vmem:[%s390 + $0x12b8] sm:$0xff]
        %v1123 = vld [vmem:[%s390 + $0x12c0] sm:$0xff]
        %v1124 = vld [vmem:[%s390 + $0x12c8] sm:$0xff]
        %v1125 = vld [vmem:[%s390 + $0x12d0] sm:$0xff]
        %v1126 = vld [vmem:[%s390 + $0x12d8] sm:$0xff]
        %v1127 = vld [vmem:[%s390 + $0x12e0] sm:$0xff]
        %v1128 = vld [vmem:[%s390 + $0x12e8] sm:$0xff]
        %v1129 = vld [vmem:[%s390 + $0x12f0] sm:$0xff]
        %v1130 = vld [vmem:[%s390 + $0x12f8] sm:$0xff]
        %v1131 = vld [vmem:[%s390 + $0x1300] sm:$0xff]
        %v1132 = vld [vmem:[%s390 + $0x1308] sm:$0xff]
        %v1133 = vld [vmem:[%s390 + $0x1310] sm:$0xff]
        %v1134 = vld [vmem:[%s390 + $0x1318] sm:$0xff]
        %v1135 = vld [vmem:[%s390 + $0x1320] sm:$0xff]
        %v1136 = vld [vmem:[%s390 + $0x1328] sm:$0xff]
        %v1137 = vld [vmem:[%s390 + $0x1330] sm:$0xff]
        %v1138 = vld [vmem:[%s390 + $0x1338] sm:$0xff]
        %v1139 = vld [vmem:[%s390 + $0x1340] sm:$0xff]
        %v1140 = vld [vmem:[%s390 + $0x1348] sm:$0xff]
        %v1141 = vld [vmem:[%s390 + $0x1350] sm:$0xff]
        %v1142 = vld [vmem:[%s390 + $0x1358] sm:$0xff]
        %v1143 = vld [vmem:[%s390 + $0x1360] sm:$0xff]
        %v1144 = vld [vmem:[%s390 + $0x1368] sm:$0xff]
        %v1145 = vld [vmem:[%s390 + $0x1370] sm:$0xff]
        %v1146 = vld [vmem:[%s390 + $0x1378] sm:$0xff]
        %v1147 = vld [vmem:[%s390 + $0x1380] sm:$0xff]
        %v1148 = vld [vmem:[%s390 + $0x1388] sm:$0xff]
        %v1149 = vld [vmem:[%s390 + $0x1390] sm:$0xff]
        %v1150 = vld [vmem:[%s390 + $0x1398] sm:$0xff]
        %v1151 = vld [vmem:[%s390 + $0x13a0] sm:$0xff]
        %v1152 = vld [vmem:[%s390 + $0x13a8] sm:$0xff]
        %v1153 = vld [vmem:[%s390 + $0x13b0] sm:$0xff]
        %v1154 = vld [vmem:[%s390 + $0x13b8] sm:$0xff]
        %v1155 = vld [vmem:[%s390 + $0x13c0] sm:$0xff]
        %v1156 = vld [vmem:[%s390 + $0x13c8] sm:$0xff]
        %v1157 = vld [vmem:[%s390 + $0x13d0] sm:$0xff]
        %v1158 = vld [vmem:[%s390 + $0x13d8] sm:$0xff]
        %v1159 = vld [vmem:[%s390 + $0x13e0] sm:$0xff]
        %v1160 = vld [vmem:[%s390 + $0x13e8] sm:$0xff]
        %v1161 = vld [vmem:[%s390 + $0x13f0] sm:$0xff]
        %v1162 = vld [vmem:[%s390 + $0x13f8] sm:$0xff]
        %v1163 = vld [vmem:[%s390 + $0x1400] sm:$0xff]
        %v1164 = vld [vmem:[%s390 + $0x1408] sm:$0xff]
        %v1165 = vld [vmem:[%s390 + $0x1410] sm:$0xff]
        %v1166 = vld [vmem:[%s390 + $0x1418] sm:$0xff]
        %v1167 = vld [vmem:[%s390 + $0x1420] sm:$0xff]
        %v1168 = vld [vmem:[%s390 + $0x1428] sm:$0xff]
        %v1169 = vld [vmem:[%s390 + $0x1430] sm:$0xff]
        %v1170 = vld [vmem:[%s390 + $0x1438] sm:$0xff]
        %v1171 = vld [vmem:[%s390 + $0x1440] sm:$0xff]
        %v1172 = vld [vmem:[%s390 + $0x1448] sm:$0xff]
        %v1173 = vld [vmem:[%s390 + $0x1450] sm:$0xff]
        %v1174 = vld [vmem:[%s390 + $0x1458] sm:$0xff]
        %v1175 = vld [vmem:[%s390 + $0x1460] sm:$0xff]
        %v1176 = vld [vmem:[%s390 + $0x1468] sm:$0xff]
        %v1177 = vld [vmem:[%s390 + $0x1470] sm:$0xff]
        %v1178 = vld [vmem:[%s390 + $0x1478] sm:$0xff]
        %v1179 = vld [vmem:[%s390 + $0x1480] sm:$0xff]
        %v1180 = vld [vmem:[%s390 + $0x1488] sm:$0xff]
        %v1181 = vld [vmem:[%s390 + $0x1490] sm:$0xff]
        %v1182 = vld [vmem:[%s390 + $0x1498] sm:$0xff]
        %v1183 = vld [vmem:[%s390 + $0x14a0] sm:$0xff]
        %v1184 = vld [vmem:[%s390 + $0x14a8] sm:$0xff]
        %v1185 = vld [vmem:[%s390 + $0x14b0] sm:$0xff]
        %v1186 = vld [vmem:[%s390 + $0x14b8] sm:$0xff]
        %v1187 = vld [vmem:[%s390 + $0x14c0] sm:$0xff]
        %v1188 = vld [vmem:[%s390 + $0x14c8] sm:$0xff]
        %v1189 = vld [vmem:[%s390 + $0x14d0] sm:$0xff]
        %v1190 = vld [vmem:[%s390 + $0x14d8] sm:$0xff]
        %v1191 = vld [vmem:[%s390 + $0x14e0] sm:$0xff]
        %v1192 = vld [vmem:[%s390 + $0x14e8] sm:$0xff]
        %v1193 = vld [vmem:[%s390 + $0x14f0] sm:$0xff]
        %v1194 = vld [vmem:[%s390 + $0x14f8] sm:$0xff]
        %v1195 = vld [vmem:[%s390 + $0x1500] sm:$0xff]
        %v1196 = vld [vmem:[%s390 + $0x1508] sm:$0xff]
        %v1197 = vld [vmem:[%s390 + $0x1510] sm:$0xff]
        %v1198 = vld [vmem:[%s390 + $0x1518] sm:$0xff]
        %v1199 = vld [vmem:[%s390 + $0x1520] sm:$0xff]
        %v1200 = vld [vmem:[%s390 + $0x1528] sm:$0xff]
        %v1201 = vld [vmem:[%s390 + $0x1530] sm:$0xff]
        %v1202 = vld [vmem:[%s390 + $0x1538] sm:$0xff]
        %v1203 = vld [vmem:[%s390 + $0x1540] sm:$0xff]
        %v1204 = vld [vmem:[%s390 + $0x1548] sm:$0xff]
        %v1205 = vld [vmem:[%s390 + $0x1550] sm:$0xff]
        %v1206 = vld [vmem:[%s390 + $0x1558] sm:$0xff]
        %v1207 = vld [vmem:[%s390 + $0x1560] sm:$0xff]
        %v1208 = vld [vmem:[%s390 + $0x1568] sm:$0xff]
        %v1209 = vld [vmem:[%s390 + $0x1570] sm:$0xff]
        %v1210 = vld [vmem:[%s390 + $0x1578] sm:$0xff]
        %v1211 = vld [vmem:[%s390 + $0x1580] sm:$0xff]
        %v1212 = vld [vmem:[%s390 + $0x1588] sm:$0xff]
        %v1213 = vld [vmem:[%s390 + $0x1590] sm:$0xff]
        %v1214 = vld [vmem:[%s390 + $0x1598] sm:$0xff]
        %v1215 = vld [vmem:[%s390 + $0x15a0] sm:$0xff]
        %v1216 = vld [vmem:[%s390 + $0x15a8] sm:$0xff]
        %v1217 = vld [vmem:[%s390 + $0x15b0] sm:$0xff]
        %v1218 = vld [vmem:[%s390 + $0x15b8] sm:$0xff]
        %v1219 = vld [vmem:[%s390 + $0x15c0] sm:$0xff]
        %v1220 = vld [vmem:[%s390 + $0x15c8] sm:$0xff]
        %v1221 = vld [vmem:[%s390 + $0x15d0] sm:$0xff]
        %v1222 = vld [vmem:[%s390 + $0x15d8] sm:$0xff]
        %v1223 = vld [vmem:[%s390 + $0x15e0] sm:$0xff]
        %v1224 = vld [vmem:[%s390 + $0x15e8] sm:$0xff]
        %v1225 = vld [vmem:[%s390 + $0x15f0] sm:$0xff]
        %v1226 = vld [vmem:[%s390 + $0x15f8] sm:$0xff]
        %v1227 = vld [vmem:[%s390 + $0x1600] sm:$0xff]
        %v1228 = vld [vmem:[%s390 + $0x1608] sm:$0xff]
        %v1229 = vld [vmem:[%s390 + $0x1610] sm:$0xff]
        %v1230 = vld [vmem:[%s390 + $0x1618] sm:$0xff]
        %v1231 = vld [vmem:[%s390 + $0x1620] sm:$0xff]
        %v1232 = vld [vmem:[%s390 + $0x1628] sm:$0xff]
        %v1233 = vld [vmem:[%s390 + $0x1630] sm:$0xff]
        %v1234 = vld [vmem:[%s390 + $0x1638] sm:$0xff]
        %v1235 = vld [vmem:[%s390 + $0x1640] sm:$0xff]
        %v1236 = vld [vmem:[%s390 + $0x1648] sm:$0xff]
        %v1237 = vld [vmem:[%s390 + $0x1650] sm:$0xff]
        %v1238 = vld [vmem:[%s390 + $0x1658] sm:$0xff]
        %v1239 = vld [vmem:[%s390 + $0x1660] sm:$0xff]
        %v1240 = vld [vmem:[%s390 + $0x1668] sm:$0xff]
        %v1241 = vld [vmem:[%s390 + $0x1670] sm:$0xff]
        %v1242 = vld [vmem:[%s390 + $0x1678] sm:$0xff]
        %v1243 = vld [vmem:[%s390 + $0x1680] sm:$0xff]
        %v1244 = vld [vmem:[%s390 + $0x1688] sm:$0xff]
        %v1245 = vld [vmem:[%s390 + $0x1690] sm:$0xff]
        %v1246 = vld [vmem:[%s390 + $0x1698] sm:$0xff]
        %v1247 = vld [vmem:[%s390 + $0x16a0] sm:$0xff]
        %v1248 = vld [vmem:[%s390 + $0x16a8] sm:$0xff]
        %v1249 = vld [vmem:[%s390 + $0x16b0] sm:$0xff]
        %v1250 = vld [vmem:[%s390 + $0x16b8] sm:$0xff]
        %v1251 = vld [vmem:[%s390 + $0x16c0] sm:$0xff]
        %v1252 = vld [vmem:[%s390 + $0x16c8] sm:$0xff]
        %v1253 = vld [vmem:[%s390 + $0x16d0] sm:$0xff]
        %v1254 = vld [vmem:[%s390 + $0x16d8] sm:$0xff]
        %v1255 = vld [vmem:[%s390 + $0x16e0] sm:$0xff]
        %v1256 = vld [vmem:[%s390 + $0x16e8] sm:$0xff]
        %v1257 = vld [vmem:[%s390 + $0x16f0] sm:$0xff]
        %v1258 = vld [vmem:[%s390 + $0x16f8] sm:$0xff]
        %v1259 = vld [vmem:[%s390 + $0x1700] sm:$0xff]
        %v1260 = vld [vmem:[%s390 + $0x1708] sm:$0xff]
        %v1261 = vld [vmem:[%s390 + $0x1710] sm:$0xff]
        %v1262 = vld [vmem:[%s390 + $0x1718] sm:$0xff]
        %v1263 = vld [vmem:[%s390 + $0x1720] sm:$0xff]
        %v1264 = vld [vmem:[%s390 + $0x1728] sm:$0xff]
        %v1265 = vld [vmem:[%s390 + $0x1730] sm:$0xff]
        %v1266 = vld [vmem:[%s390 + $0x1738] sm:$0xff]
        %v1267 = vld [vmem:[%s390 + $0x1740] sm:$0xff]
        %v1268 = vld [vmem:[%s390 + $0x1748] sm:$0xff]
        %v1269 = vld [vmem:[%s390 + $0x1750] sm:$0xff]
        %v1270 = vld [vmem:[%s390 + $0x1758] sm:$0xff]
        %v1271 = vld [vmem:[%s390 + $0x1760] sm:$0xff]
        %v1272 = vld [vmem:[%s390 + $0x1768] sm:$0xff]
        %v1273 = vld [vmem:[%s390 + $0x1770] sm:$0xff]
        %v1274 = vld [vmem:[%s390 + $0x1778] sm:$0xff]
        %v1275 = vld [vmem:[%s390 + $0x1780] sm:$0xff]
        %v1276 = vld [vmem:[%s390 + $0x1788] sm:$0xff]
        %v1277 = vld [vmem:[%s390 + $0x1790] sm:$0xff]
        %v1278 = vld [vmem:[%s390 + $0x1798] sm:$0xff]
        %v1279 = vld [vmem:[%s390 + $0x17a0] sm:$0xff]
        %v1280 = vld [vmem:[%s390 + $0x17a8] sm:$0xff]
        %v1281 = vld [vmem:[%s390 + $0x17b0] sm:$0xff]
        %v1282 = vld [vmem:[%s390 + $0x17b8] sm:$0xff]
        %v1283 = vld [vmem:[%s390 + $0x17c0] sm:$0xff]
        %v1284 = vld [vmem:[%s390 + $0x17c8] sm:$0xff]
        %v1285 = vld [vmem:[%s390 + $0x17d0] sm:$0xff]
        %v1286 = vld [vmem:[%s390 + $0x17d8] sm:$0xff]
        %v1287 = vld [vmem:[%s390 + $0x17e0] sm:$0xff]
        %v1288 = vld [vmem:[%s390 + $0x17e8] sm:$0xff]
        %v1289 = vld [vmem:[%s390 + $0x17f0] sm:$0xff]
        %v1290 = vld [vmem:[%s390 + $0x17f8] sm:$0xff]
        %v1291 = vld [vmem:[%s390 + $0x1800] sm:$0xff]
        %v1292 = vld [vmem:[%s390 + $0x1808] sm:$0xff]
        %v1293 = vld [vmem:[%s390 + $0x1810] sm:$0xff]
        %v1294 = vld [vmem:[%s390 + $0x1818] sm:$0xff]
        %v1295 = vld [vmem:[%s390 + $0x1820] sm:$0xff]
        %v1296 = vld [vmem:[%s390 + $0x1828] sm:$0xff]
        %v1297 = vld [vmem:[%s390 + $0x1830] sm:$0xff]
        %v1298 = vld [vmem:[%s390 + $0x1838] sm:$0xff]
        %v1299 = vld [vmem:[%s390 + $0x1840] sm:$0xff]
        %v1300 = vld [vmem:[%s390 + $0x1848] sm:$0xff]
        %v1301 = vld [vmem:[%s390 + $0x1850] sm:$0xff]
        %v1302 = vld [vmem:[%s390 + $0x1858] sm:$0xff]
        %v1303 = vld [vmem:[%s390 + $0x1860] sm:$0xff]
        %v1304 = vld [vmem:[%s390 + $0x1868] sm:$0xff]
        %v1305 = vld [vmem:[%s390 + $0x1870] sm:$0xff]
        %v1306 = vld [vmem:[%s390 + $0x1878] sm:$0xff]
        %v1307 = vld [vmem:[%s390 + $0x1880] sm:$0xff]
        %v1308 = vld [vmem:[%s390 + $0x1888] sm:$0xff]
        %v1309 = vld [vmem:[%s390 + $0x1890] sm:$0xff]
        %v1310 = vld [vmem:[%s390 + $0x1898] sm:$0xff]
        %v1311 = vld [vmem:[%s390 + $0x18a0] sm:$0xff]
        %v1312 = vld [vmem:[%s390 + $0x18a8] sm:$0xff]
        %v1313 = vld [vmem:[%s390 + $0x18b0] sm:$0xff]
        %v1314 = vld [vmem:[%s390 + $0x18b8] sm:$0xff]
        %v1315 = vld [vmem:[%s390 + $0x18c0] sm:$0xff]
        %v1316 = vld [vmem:[%s390 + $0x18c8] sm:$0xff]
        %v1317 = vld [vmem:[%s390 + $0x18d0] sm:$0xff]
        %v1318 = vld [vmem:[%s390 + $0x18d8] sm:$0xff]
        %v1319 = vld [vmem:[%s390 + $0x18e0] sm:$0xff]
        %v1320 = vld [vmem:[%s390 + $0x18e8] sm:$0xff]
        %v1321 = vld [vmem:[%s390 + $0x18f0] sm:$0xff]
        %v1322 = vld [vmem:[%s390 + $0x18f8] sm:$0xff]
        %v1323 = vld [vmem:[%s390 + $0x1900] sm:$0xff]
        %v1324 = vld [vmem:[%s390 + $0x1908] sm:$0xff]
        %v1325 = vld [vmem:[%s390 + $0x1910] sm:$0xff]
        %v1326 = vld [vmem:[%s390 + $0x1918] sm:$0xff]
        %v1327 = vld [vmem:[%s390 + $0x1920] sm:$0xff]
        %v1328 = vld [vmem:[%s390 + $0x1928] sm:$0xff]
        %v1329 = vld [vmem:[%s390 + $0x1930] sm:$0xff]
        %v1330 = vld [vmem:[%s390 + $0x1938] sm:$0xff]
        %v1331 = vld [vmem:[%s390 + $0x1940] sm:$0xff]
        %v1332 = vld [vmem:[%s390 + $0x1948] sm:$0xff]
        %v1333 = vld [vmem:[%s390 + $0x1950] sm:$0xff]
        %v1334 = vld [vmem:[%s390 + $0x1958] sm:$0xff]
        %v1335 = vld [vmem:[%s390 + $0x1960] sm:$0xff]
        %v1336 = vld [vmem:[%s390 + $0x1968] sm:$0xff]
        %v1337 = vld [vmem:[%s390 + $0x1970] sm:$0xff]
        %v1338 = vld [vmem:[%s390 + $0x1978] sm:$0xff]
        %v1339 = vld [vmem:[%s390 + $0x1980] sm:$0xff]
        %v1340 = vld [vmem:[%s390 + $0x1988] sm:$0xff]
        %v1341 = vld [vmem:[%s390 + $0x1990] sm:$0xff]
        %v1342 = vld [vmem:[%s390 + $0x1998] sm:$0xff]
        %v1343 = vld [vmem:[%s390 + $0x19a0] sm:$0xff]
        %v1344 = vld [vmem:[%s390 + $0x19a8] sm:$0xff]
        %v1345 = vld [vmem:[%s390 + $0x19b0] sm:$0xff]
        %v1346 = vld [vmem:[%s390 + $0x19b8] sm:$0xff]
        %v1347 = vld [vmem:[%s390 + $0x19c0] sm:$0xff]
        %v1348 = vld [vmem:[%s390 + $0x19c8] sm:$0xff]
        %v1349 = vld [vmem:[%s390 + $0x19d0] sm:$0xff]
        %v1350 = vld [vmem:[%s390 + $0x19d8] sm:$0xff]
        %v1351 = vld [vmem:[%s390 + $0x19e0] sm:$0xff]
        %v1352 = vld [vmem:[%s390 + $0x19e8] sm:$0xff]
        %v1353 = vld [vmem:[%s390 + $0x19f0] sm:$0xff]
        %v1354 = vld [vmem:[%s390 + $0x19f8] sm:$0xff]
        %v1355 = vld [vmem:[%s390 + $0x1a00] sm:$0xff]
        %v1356 = vld [vmem:[%s390 + $0x1a08] sm:$0xff]
        %v1357 = vld [vmem:[%s390 + $0x1a10] sm:$0xff]
        %v1358 = vld [vmem:[%s390 + $0x1a18] sm:$0xff]
        %v1359 = vld [vmem:[%s390 + $0x1a20] sm:$0xff]
        %v1360 = vld [vmem:[%s390 + $0x1a28] sm:$0xff]
        %v1361 = vld [vmem:[%s390 + $0x1a30] sm:$0xff]
        %v1362 = vld [vmem:[%s390 + $0x1a38] sm:$0xff]
        %v1363 = vld [vmem:[%s390 + $0x1a40] sm:$0xff]
        %v1364 = vld [vmem:[%s390 + $0x1a48] sm:$0xff]
        %v1365 = vld [vmem:[%s390 + $0x1a50] sm:$0xff]
        %v1366 = vld [vmem:[%s390 + $0x1a58] sm:$0xff]
        %v1367 = vld [vmem:[%s390 + $0x1a60] sm:$0xff]
        %v1368 = vld [vmem:[%s390 + $0x1a68] sm:$0xff]
        %v1369 = vld [vmem:[%s390 + $0x1a70] sm:$0xff]
        %v1370 = vld [vmem:[%s390 + $0x1a78] sm:$0xff]
        %v1371 = vld [vmem:[%s390 + $0x1a80] sm:$0xff]
        %v1372 = vld [vmem:[%s390 + $0x1a88] sm:$0xff]
        %v1373 = vld [vmem:[%s390 + $0x1a90] sm:$0xff]
        %v1374 = vld [vmem:[%s390 + $0x1a98] sm:$0xff]
        %v1375 = vld [vmem:[%s390 + $0x1aa0] sm:$0xff]
        %v1376 = vld [vmem:[%s390 + $0x1aa8] sm:$0xff]
        %v1377 = vld [vmem:[%s390 + $0x1ab0] sm:$0xff]
        %v1378 = vld [vmem:[%s390 + $0x1ab8] sm:$0xff]
        %v1379 = vld [vmem:[%s390 + $0x1ac0] sm:$0xff]
        %v1380 = vld [vmem:[%s390 + $0x1ac8] sm:$0xff]
        %v1381 = vld [vmem:[%s390 + $0x1ad0] sm:$0xff]
        %v1382 = vld [vmem:[%s390 + $0x1ad8] sm:$0xff]
        %v1383 = vld [vmem:[%s390 + $0x1ae0] sm:$0xff]
        %v1384 = vld [vmem:[%s390 + $0x1ae8] sm:$0xff]
        %v1385 = vld [vmem:[%s390 + $0x1af0] sm:$0xff]
        %v1386 = vld [vmem:[%s390 + $0x1af8] sm:$0xff]
        %v1387 = vld [vmem:[%s390 + $0x1b00] sm:$0xff]
        %v1388 = vld [vmem:[%s390 + $0x1b08] sm:$0xff]
        %v1389 = vld [vmem:[%s390 + $0x1b10] sm:$0xff]
        %v1390 = vld [vmem:[%s390 + $0x1b18] sm:$0xff]
        %v1391 = vld [vmem:[%s390 + $0x1b20] sm:$0xff]
        %v1392 = vld [vmem:[%s390 + $0x1b28] sm:$0xff]
        %v1393 = vld [vmem:[%s390 + $0x1b30] sm:$0xff]
        %v1394 = vld [vmem:[%s390 + $0x1b38] sm:$0xff]
        %v1395 = vld [vmem:[%s390 + $0x1b40] sm:$0xff]
        %v1396 = vld [vmem:[%s390 + $0x1b48] sm:$0xff]
        %v1397 = vld [vmem:[%s390 + $0x1b50] sm:$0xff]
        %v1398 = vld [vmem:[%s390 + $0x1b58] sm:$0xff]
        %v1399 = vld [vmem:[%s390 + $0x1b60] sm:$0xff]
        %v1400 = vld [vmem:[%s390 + $0x1b68] sm:$0xff]
        %v1401 = vld [vmem:[%s390 + $0x1b70] sm:$0xff]
        %v1402 = vld [vmem:[%s390 + $0x1b78] sm:$0xff]
        %v1403 = vld [vmem:[%s390 + $0x1b80] sm:$0xff]
        %v1404 = vld [vmem:[%s390 + $0x1b88] sm:$0xff]
        %v1405 = vld [vmem:[%s390 + $0x1b90] sm:$0xff]
        %v1406 = vld [vmem:[%s390 + $0x1b98] sm:$0xff]
        %v1407 = vld [vmem:[%s390 + $0x1ba0] sm:$0xff]
        %v1408 = vld [vmem:[%s390 + $0x1ba8] sm:$0xff]
        %v1409 = vld [vmem:[%s390 + $0x1bb0] sm:$0xff]
        %v1410 = vld [vmem:[%s390 + $0x1bb8] sm:$0xff]
        %v1411 = vld [vmem:[%s390 + $0x1bc0] sm:$0xff]
        %v1412 = vld [vmem:[%s390 + $0x1bc8] sm:$0xff]
        %v1413 = vld [vmem:[%s390 + $0x1bd0] sm:$0xff]
        %v1414 = vld [vmem:[%s390 + $0x1bd8] sm:$0xff]
        %v1415 = vld [vmem:[%s390 + $0x1be0] sm:$0xff]
        %v1416 = vld [vmem:[%s390 + $0x1be8] sm:$0xff]
        %v1417 = vld [vmem:[%s390 + $0x1bf0] sm:$0xff]
        %v1418 = vld [vmem:[%s390 + $0x1bf8] sm:$0xff]
        %v1419 = vld [vmem:[%s390 + $0x1c00] sm:$0xff]
        %v1420 = vld [vmem:[%s390 + $0x1c08] sm:$0xff]
        %v1421 = vld [vmem:[%s390 + $0x1c10] sm:$0xff]
        %v1422 = vld [vmem:[%s390 + $0x1c18] sm:$0xff]
        %v1423 = vld [vmem:[%s390 + $0x1c20] sm:$0xff]
        %v1424 = vld [vmem:[%s390 + $0x1c28] sm:$0xff]
        %v1425 = vld [vmem:[%s390 + $0x1c30] sm:$0xff]
        %v1426 = vld [vmem:[%s390 + $0x1c38] sm:$0xff]
        %v1427 = vld [vmem:[%s390 + $0x1c40] sm:$0xff]
        %v1428 = vld [vmem:[%s390 + $0x1c48] sm:$0xff]
        %v1429 = vld [vmem:[%s390 + $0x1c50] sm:$0xff]
        %v1430 = vld [vmem:[%s390 + $0x1c58] sm:$0xff]
        %v1431 = vld [vmem:[%s390 + $0x1c60] sm:$0xff]
        %v1432 = vld [vmem:[%s390 + $0x1c68] sm:$0xff]
        %v1433 = vld [vmem:[%s390 + $0x1c70] sm:$0xff]
        %v1434 = vld [vmem:[%s390 + $0x1c78] sm:$0xff]
        %v1435 = vld [vmem:[%s390 + $0x1c80] sm:$0xff]
        %v1436 = vld [vmem:[%s390 + $0x1c88] sm:$0xff]
        %v1437 = vld [vmem:[%s390 + $0x1c90] sm:$0xff]
        %v1438 = vld [vmem:[%s390 + $0x1c98] sm:$0xff]
        %v1439 = vld [vmem:[%s390 + $0x1ca0] sm:$0xff]
        %v1440 = vld [vmem:[%s390 + $0x1ca8] sm:$0xff]
        %v1441 = vld [vmem:[%s390 + $0x1cb0] sm:$0xff]
        %v1442 = vld [vmem:[%s390 + $0x1cb8] sm:$0xff]
        %v1443 = vld [vmem:[%s390 + $0x1cc0] sm:$0xff]
        %v1444 = vld [vmem:[%s390 + $0x1cc8] sm:$0xff]
        %v1445 = vld [vmem:[%s390 + $0x1cd0] sm:$0xff]
        %v1446 = vld [vmem:[%s390 + $0x1cd8] sm:$0xff]
        %v1447 = vld [vmem:[%s390 + $0x1ce0] sm:$0xff]
        %v1448 = vld [vmem:[%s390 + $0x1ce8] sm:$0xff]
        %v1449 = vld [vmem:[%s390 + $0x1cf0] sm:$0xff]
        %v1450 = vld [vmem:[%s390 + $0x1cf8] sm:$0xff]
        %v1451 = vld [vmem:[%s390 + $0x1d00] sm:$0xff]
        %v1452 = vld [vmem:[%s390 + $0x1d08] sm:$0xff]
        %v1453 = vld [vmem:[%s390 + $0x1d10] sm:$0xff]
        %v1454 = vld [vmem:[%s390 + $0x1d18] sm:$0xff]
        %v1455 = vld [vmem:[%s390 + $0x1d20] sm:$0xff]
        %v1456 = vld [vmem:[%s390 + $0x1d28] sm:$0xff]
        %v1457 = vld [vmem:[%s390 + $0x1d30] sm:$0xff]
        %v1458 = vld [vmem:[%s390 + $0x1d38] sm:$0xff]
        %v1459 = vld [vmem:[%s390 + $0x1d40] sm:$0xff]
        %v1460 = vld [vmem:[%s390 + $0x1d48] sm:$0xff]
        %v1461 = vld [vmem:[%s390 + $0x1d50] sm:$0xff]
        %v1462 = vld [vmem:[%s390 + $0x1d58] sm:$0xff]
        %v1463 = vld [vmem:[%s390 + $0x1d60] sm:$0xff]
        %v1464 = vld [vmem:[%s390 + $0x1d68] sm:$0xff]
        %v1465 = vld [vmem:[%s390 + $0x1d70] sm:$0xff]
        %v1466 = vld [vmem:[%s390 + $0x1d78] sm:$0xff]
        %v1467 = vld [vmem:[%s390 + $0x1d80] sm:$0xff]
        %v1468 = vld [vmem:[%s390 + $0x1d88] sm:$0xff]
        %v1469 = vld [vmem:[%s390 + $0x1d90] sm:$0xff]
        %v1470 = vld [vmem:[%s390 + $0x1d98] sm:$0xff]
        %v1471 = vld [vmem:[%s390 + $0x1da0] sm:$0xff]
        %v1472 = vld [vmem:[%s390 + $0x1da8] sm:$0xff]
        %v1473 = vld [vmem:[%s390 + $0x1db0] sm:$0xff]
        %v1474 = vld [vmem:[%s390 + $0x1db8] sm:$0xff]
        %v1475 = vld [vmem:[%s390 + $0x1dc0] sm:$0xff]
        %v1476 = vld [vmem:[%s390 + $0x1dc8] sm:$0xff]
        %v1477 = vld [vmem:[%s390 + $0x1dd0] sm:$0xff]
        %v1478 = vld [vmem:[%s390 + $0x1dd8] sm:$0xff]
        %v1479 = vld [vmem:[%s390 + $0x1de0] sm:$0xff]
        %v1480 = vld [vmem:[%s390 + $0x1de8] sm:$0xff]
        %v1481 = vld [vmem:[%s390 + $0x1df0] sm:$0xff]
        %v1482 = vld [vmem:[%s390 + $0x1df8] sm:$0xff]
        %v1483 = vld [vmem:[%s390 + $0x1e00] sm:$0xff]
        %v1484 = vld [vmem:[%s390 + $0x1e08] sm:$0xff]
        %v1485 = vld [vmem:[%s390 + $0x1e10] sm:$0xff]
        %v1486 = vld [vmem:[%s390 + $0x1e18] sm:$0xff]
        %v1487 = vld [vmem:[%s390 + $0x1e20] sm:$0xff]
        %v1488 = vld [vmem:[%s390 + $0x1e28] sm:$0xff]
        %v1489 = vld [vmem:[%s390 + $0x1e30] sm:$0xff]
        %v1490 = vld [vmem:[%s390 + $0x1e38] sm:$0xff]
        %v1491 = vld [vmem:[%s390 + $0x1e40] sm:$0xff]
        %v1492 = vld [vmem:[%s390 + $0x1e48] sm:$0xff]
        %v1493 = vld [vmem:[%s390 + $0x1e50] sm:$0xff]
        %v1494 = vld [vmem:[%s390 + $0x1e58] sm:$0xff]
        %v1495 = vld [vmem:[%s390 + $0x1e60] sm:$0xff]
        %v1496 = vld [vmem:[%s390 + $0x1e68] sm:$0xff]
        %v1497 = vld [vmem:[%s390 + $0x1e70] sm:$0xff]
        %v1498 = vld [vmem:[%s390 + $0x1e78] sm:$0xff]
        %v1499 = vld [vmem:[%s390 + $0x1e80] sm:$0xff]
        %v1500 = vld [vmem:[%s390 + $0x1e88] sm:$0xff]
        %v1501 = vld [vmem:[%s390 + $0x1e90] sm:$0xff]
        %v1502 = vld [vmem:[%s390 + $0x1e98] sm:$0xff]
        %v1503 = vunpack.c.l.s8.bf16 %v523
        %v1504 = vunpack.c.l.s8.bf16 %v524
        %v1505 = vunpack.c.l.s8.bf16 %v525
        %v1506 = vunpack.c.l.s8.bf16 %v526
        %v1507 = vunpack.c.l.s8.bf16 %v527
        %v1508 = vunpack.c.h.s8.bf16 %v523
        %v1509 = vunpack.c.h.s8.bf16 %v524
        %v1510 = vunpack.c.h.s8.bf16 %v525
        %v1511 = vunpack.c.h.s8.bf16 %v526
        %v1512 = vunpack.c.h.s8.bf16 %v527
        %v1513 = vunpack.c.l.s8.bf16 %v528
        %v1514 = vunpack.c.l.s8.bf16 %v529
        %v1515 = vunpack.c.l.s8.bf16 %v530
        %v1516 = vunpack.c.l.s8.bf16 %v531
        %v1517 = vunpack.c.l.s8.bf16 %v532
        %v1518 = vunpack.c.h.s8.bf16 %v528
        %v1519 = vunpack.c.h.s8.bf16 %v529
        %v1520 = vunpack.c.h.s8.bf16 %v530
        %v1521 = vunpack.c.h.s8.bf16 %v531
        %v1522 = vunpack.c.h.s8.bf16 %v532
        %v1523 = vunpack.c.l.s8.bf16 %v533
        %v1524 = vunpack.c.l.s8.bf16 %v534
        %v1525 = vunpack.c.l.s8.bf16 %v535
        %v1526 = vunpack.c.l.s8.bf16 %v536
        %v1527 = vunpack.c.l.s8.bf16 %v537
        %v1528 = vunpack.c.h.s8.bf16 %v533
        %v1529 = vunpack.c.h.s8.bf16 %v534
        %v1530 = vunpack.c.h.s8.bf16 %v535
        %v1531 = vunpack.c.h.s8.bf16 %v536
        %v1532 = vunpack.c.h.s8.bf16 %v537
        %v1533 = vunpack.c.l.s8.bf16 %v538
        %v1534 = vunpack.c.l.s8.bf16 %v539
        %v1535 = vunpack.c.l.s8.bf16 %v540
        %v1536 = vunpack.c.l.s8.bf16 %v541
        %v1537 = vunpack.c.l.s8.bf16 %v542
        %v1538 = vunpack.c.h.s8.bf16 %v538
        %v1539 = vunpack.c.h.s8.bf16 %v539
        %v1540 = vunpack.c.h.s8.bf16 %v540
        %v1541 = vunpack.c.h.s8.bf16 %v541
        %v1542 = vunpack.c.h.s8.bf16 %v542
        %v1543 = vunpack.c.l.s8.bf16 %v543
        %v1544 = vunpack.c.l.s8.bf16 %v544
        %v1545 = vunpack.c.l.s8.bf16 %v545
        %v1546 = vunpack.c.l.s8.bf16 %v546
        %v1547 = vunpack.c.l.s8.bf16 %v547
        %v1548 = vunpack.c.h.s8.bf16 %v543
        %v1549 = vunpack.c.h.s8.bf16 %v544
        %v1550 = vunpack.c.h.s8.bf16 %v545
        %v1551 = vunpack.c.h.s8.bf16 %v546
        %v1552 = vunpack.c.h.s8.bf16 %v547
        %v1553 = vunpack.c.l.s8.bf16 %v548
        %v1554 = vunpack.c.l.s8.bf16 %v549
        %v1555 = vunpack.c.l.s8.bf16 %v550
        %v1556 = vunpack.c.l.s8.bf16 %v551
        %v1557 = vunpack.c.l.s8.bf16 %v552
        %v1558 = vunpack.c.h.s8.bf16 %v548
        %v1559 = vunpack.c.h.s8.bf16 %v549
        %v1560 = vunpack.c.h.s8.bf16 %v550
        %v1561 = vunpack.c.h.s8.bf16 %v551
        %v1562 = vunpack.c.h.s8.bf16 %v552
        %v1563 = vunpack.c.l.s8.bf16 %v553
        %v1564 = vunpack.c.l.s8.bf16 %v554
        %v1565 = vunpack.c.l.s8.bf16 %v555
        %v1566 = vunpack.c.l.s8.bf16 %v556
        %v1567 = vunpack.c.l.s8.bf16 %v557
        %v1568 = vunpack.c.h.s8.bf16 %v553
        %v1569 = vunpack.c.h.s8.bf16 %v554
        %v1570 = vunpack.c.h.s8.bf16 %v555
        %v1571 = vunpack.c.h.s8.bf16 %v556
        %v1572 = vunpack.c.h.s8.bf16 %v557
        %v1573 = vunpack.c.l.s8.bf16 %v558
        %v1574 = vunpack.c.l.s8.bf16 %v559
        %v1575 = vunpack.c.l.s8.bf16 %v560
        %v1576 = vunpack.c.l.s8.bf16 %v561
        %v1577 = vunpack.c.l.s8.bf16 %v562
        %v1578 = vunpack.c.h.s8.bf16 %v558
        %v1579 = vunpack.c.h.s8.bf16 %v559
        %v1580 = vunpack.c.h.s8.bf16 %v560
        %v1581 = vunpack.c.h.s8.bf16 %v561
        %v1582 = vunpack.c.h.s8.bf16 %v562
        %v1583 = vunpack.c.l.s8.bf16 %v563
        %v1584 = vunpack.c.l.s8.bf16 %v564
        %v1585 = vunpack.c.l.s8.bf16 %v565
        %v1586 = vunpack.c.l.s8.bf16 %v566
        %v1587 = vunpack.c.l.s8.bf16 %v567
        %v1588 = vunpack.c.h.s8.bf16 %v563
        %v1589 = vunpack.c.h.s8.bf16 %v564
        %v1590 = vunpack.c.h.s8.bf16 %v565
        %v1591 = vunpack.c.h.s8.bf16 %v566
        %v1592 = vunpack.c.h.s8.bf16 %v567
        %v1593 = vunpack.c.l.s8.bf16 %v568
        %v1594 = vunpack.c.l.s8.bf16 %v569
        %v1595 = vunpack.c.l.s8.bf16 %v570
        %v1596 = vunpack.c.l.s8.bf16 %v571
        %v1597 = vunpack.c.l.s8.bf16 %v572
        %v1598 = vunpack.c.h.s8.bf16 %v568
        %v1599 = vunpack.c.h.s8.bf16 %v569
        %v1600 = vunpack.c.h.s8.bf16 %v570
        %v1601 = vunpack.c.h.s8.bf16 %v571
        %v1602 = vunpack.c.h.s8.bf16 %v572
        %v1603 = vunpack.c.l.s8.bf16 %v573
        %v1604 = vunpack.c.l.s8.bf16 %v574
        %v1605 = vunpack.c.l.s8.bf16 %v575
        %v1606 = vunpack.c.l.s8.bf16 %v576
        %v1607 = vunpack.c.l.s8.bf16 %v577
        %v1608 = vunpack.c.h.s8.bf16 %v573
        %v1609 = vunpack.c.h.s8.bf16 %v574
        %v1610 = vunpack.c.h.s8.bf16 %v575
        %v1611 = vunpack.c.h.s8.bf16 %v576
        %v1612 = vunpack.c.h.s8.bf16 %v577
        %v1613 = vunpack.c.l.s8.bf16 %v578
        %v1614 = vunpack.c.l.s8.bf16 %v579
        %v1615 = vunpack.c.l.s8.bf16 %v580
        %v1616 = vunpack.c.l.s8.bf16 %v581
        %v1617 = vunpack.c.l.s8.bf16 %v582
        %v1618 = vunpack.c.h.s8.bf16 %v578
        %v1619 = vunpack.c.h.s8.bf16 %v579
        %v1620 = vunpack.c.h.s8.bf16 %v580
        %v1621 = vunpack.c.h.s8.bf16 %v581
        %v1622 = vunpack.c.h.s8.bf16 %v582
        %v1623 = vunpack.c.l.s8.bf16 %v583
        %v1624 = vunpack.c.l.s8.bf16 %v584
        %v1625 = vunpack.c.l.s8.bf16 %v585
        %v1626 = vunpack.c.l.s8.bf16 %v586
        %v1627 = vunpack.c.l.s8.bf16 %v587
        %v1628 = vunpack.c.h.s8.bf16 %v583
        %v1629 = vunpack.c.h.s8.bf16 %v584
        %v1630 = vunpack.c.h.s8.bf16 %v585
        %v1631 = vunpack.c.h.s8.bf16 %v586
        %v1632 = vunpack.c.h.s8.bf16 %v587
        %v1633 = vunpack.c.l.s8.bf16 %v588
        %v1634 = vunpack.c.l.s8.bf16 %v589
        %v1635 = vunpack.c.l.s8.bf16 %v590
        %v1636 = vunpack.c.l.s8.bf16 %v591
        %v1637 = vunpack.c.l.s8.bf16 %v592
        %v1638 = vunpack.c.h.s8.bf16 %v588
        %v1639 = vunpack.c.h.s8.bf16 %v589
        %v1640 = vunpack.c.h.s8.bf16 %v590
        %v1641 = vunpack.c.h.s8.bf16 %v591
        %v1642 = vunpack.c.h.s8.bf16 %v592
        %v1643 = vunpack.c.l.s8.bf16 %v593
        %v1644 = vunpack.c.l.s8.bf16 %v594
        %v1645 = vunpack.c.l.s8.bf16 %v595
        %v1646 = vunpack.c.l.s8.bf16 %v596
        %v1647 = vunpack.c.l.s8.bf16 %v597
        %v1648 = vunpack.c.h.s8.bf16 %v593
        %v1649 = vunpack.c.h.s8.bf16 %v594
        %v1650 = vunpack.c.h.s8.bf16 %v595
        %v1651 = vunpack.c.h.s8.bf16 %v596
        %v1652 = vunpack.c.h.s8.bf16 %v597
        %v1653 = vunpack.c.l.s8.bf16 %v598
        %v1654 = vunpack.c.l.s8.bf16 %v599
        %v1655 = vunpack.c.l.s8.bf16 %v600
        %v1656 = vunpack.c.l.s8.bf16 %v601
        %v1657 = vunpack.c.l.s8.bf16 %v602
        %v1658 = vunpack.c.h.s8.bf16 %v598
        %v1659 = vunpack.c.h.s8.bf16 %v599
        %v1660 = vunpack.c.h.s8.bf16 %v600
        %v1661 = vunpack.c.h.s8.bf16 %v601
        %v1662 = vunpack.c.h.s8.bf16 %v602
        %v1663 = vunpack.c.l.s8.bf16 %v603
        %v1664 = vunpack.c.l.s8.bf16 %v604
        %v1665 = vunpack.c.l.s8.bf16 %v605
        %v1666 = vunpack.c.l.s8.bf16 %v606
        %v1667 = vunpack.c.l.s8.bf16 %v607
        %v1668 = vunpack.c.h.s8.bf16 %v603
        %v1669 = vunpack.c.h.s8.bf16 %v604
        %v1670 = vunpack.c.h.s8.bf16 %v605
        %v1671 = vunpack.c.h.s8.bf16 %v606
        %v1672 = vunpack.c.h.s8.bf16 %v607
        %v1673 = vunpack.c.l.s8.bf16 %v608
        %v1674 = vunpack.c.l.s8.bf16 %v609
        %v1675 = vunpack.c.l.s8.bf16 %v610
        %v1676 = vunpack.c.l.s8.bf16 %v611
        %v1677 = vunpack.c.l.s8.bf16 %v612
        %v1678 = vunpack.c.h.s8.bf16 %v608
        %v1679 = vunpack.c.h.s8.bf16 %v609
        %v1680 = vunpack.c.h.s8.bf16 %v610
        %v1681 = vunpack.c.h.s8.bf16 %v611
        %v1682 = vunpack.c.h.s8.bf16 %v612
        %v1683 = vunpack.c.l.s8.bf16 %v613
        %v1684 = vunpack.c.l.s8.bf16 %v614
        %v1685 = vunpack.c.l.s8.bf16 %v615
        %v1686 = vunpack.c.l.s8.bf16 %v616
        %v1687 = vunpack.c.l.s8.bf16 %v617
        %v1688 = vunpack.c.h.s8.bf16 %v613
        %v1689 = vunpack.c.h.s8.bf16 %v614
        %v1690 = vunpack.c.h.s8.bf16 %v615
        %v1691 = vunpack.c.h.s8.bf16 %v616
        %v1692 = vunpack.c.h.s8.bf16 %v617
        %v1693 = vunpack.c.l.s8.bf16 %v618
        %v1694 = vunpack.c.l.s8.bf16 %v619
        %v1695 = vunpack.c.l.s8.bf16 %v620
        %v1696 = vunpack.c.l.s8.bf16 %v621
        %v1697 = vunpack.c.l.s8.bf16 %v622
        %v1698 = vunpack.c.h.s8.bf16 %v618
        %v1699 = vunpack.c.h.s8.bf16 %v619
        %v1700 = vunpack.c.h.s8.bf16 %v620
        %v1701 = vunpack.c.h.s8.bf16 %v621
        %v1702 = vunpack.c.h.s8.bf16 %v622
        %v1703 = vunpack.c.l.s8.bf16 %v623
        %v1704 = vunpack.c.l.s8.bf16 %v624
        %v1705 = vunpack.c.l.s8.bf16 %v625
        %v1706 = vunpack.c.l.s8.bf16 %v626
        %v1707 = vunpack.c.l.s8.bf16 %v627
        %v1708 = vunpack.c.h.s8.bf16 %v623
        %v1709 = vunpack.c.h.s8.bf16 %v624
        %v1710 = vunpack.c.h.s8.bf16 %v625
        %v1711 = vunpack.c.h.s8.bf16 %v626
        %v1712 = vunpack.c.h.s8.bf16 %v627
        %v1713 = vunpack.c.l.s8.bf16 %v628
        %v1714 = vunpack.c.l.s8.bf16 %v629
        %v1715 = vunpack.c.l.s8.bf16 %v630
        %v1716 = vunpack.c.l.s8.bf16 %v631
        %v1717 = vunpack.c.l.s8.bf16 %v632
        %v1718 = vunpack.c.h.s8.bf16 %v628
        %v1719 = vunpack.c.h.s8.bf16 %v629
        %v1720 = vunpack.c.h.s8.bf16 %v630
        %v1721 = vunpack.c.h.s8.bf16 %v631
        %v1722 = vunpack.c.h.s8.bf16 %v632
        %v1723 = vunpack.c.l.s8.bf16 %v633
        %v1724 = vunpack.c.l.s8.bf16 %v634
        %v1725 = vunpack.c.l.s8.bf16 %v635
        %v1726 = vunpack.c.l.s8.bf16 %v636
        %v1727 = vunpack.c.l.s8.bf16 %v637
        %v1728 = vunpack.c.h.s8.bf16 %v633
        %v1729 = vunpack.c.h.s8.bf16 %v634
        %v1730 = vunpack.c.h.s8.bf16 %v635
        %v1731 = vunpack.c.h.s8.bf16 %v636
        %v1732 = vunpack.c.h.s8.bf16 %v637
        %v1733 = vunpack.c.l.s8.bf16 %v638
        %v1734 = vunpack.c.l.s8.bf16 %v639
        %v1735 = vunpack.c.l.s8.bf16 %v640
        %v1736 = vunpack.c.l.s8.bf16 %v641
        %v1737 = vunpack.c.l.s8.bf16 %v642
        %v1738 = vunpack.c.h.s8.bf16 %v638
        %v1739 = vunpack.c.h.s8.bf16 %v639
        %v1740 = vunpack.c.h.s8.bf16 %v640
        %v1741 = vunpack.c.h.s8.bf16 %v641
        %v1742 = vunpack.c.h.s8.bf16 %v642
        %v1743 = vunpack.c.l.s8.bf16 %v643
        %v1744 = vunpack.c.l.s8.bf16 %v644
        %v1745 = vunpack.c.l.s8.bf16 %v645
        %v1746 = vunpack.c.l.s8.bf16 %v646
        %v1747 = vunpack.c.l.s8.bf16 %v647
        %v1748 = vunpack.c.h.s8.bf16 %v643
        %v1749 = vunpack.c.h.s8.bf16 %v644
        %v1750 = vunpack.c.h.s8.bf16 %v645
        %v1751 = vunpack.c.h.s8.bf16 %v646
        %v1752 = vunpack.c.h.s8.bf16 %v647
        %v1753 = vunpack.c.l.s8.bf16 %v648
        %v1754 = vunpack.c.l.s8.bf16 %v649
        %v1755 = vunpack.c.l.s8.bf16 %v650
        %v1756 = vunpack.c.l.s8.bf16 %v651
        %v1757 = vunpack.c.l.s8.bf16 %v652
        %v1758 = vunpack.c.h.s8.bf16 %v648
        %v1759 = vunpack.c.h.s8.bf16 %v649
        %v1760 = vunpack.c.h.s8.bf16 %v650
        %v1761 = vunpack.c.h.s8.bf16 %v651
        %v1762 = vunpack.c.h.s8.bf16 %v652
        %v1763 = vunpack.c.l.s8.bf16 %v653
        %v1764 = vunpack.c.l.s8.bf16 %v654
        %v1765 = vunpack.c.l.s8.bf16 %v655
        %v1766 = vunpack.c.l.s8.bf16 %v656
        %v1767 = vunpack.c.l.s8.bf16 %v657
        %v1768 = vunpack.c.h.s8.bf16 %v653
        %v1769 = vunpack.c.h.s8.bf16 %v654
        %v1770 = vunpack.c.h.s8.bf16 %v655
        %v1771 = vunpack.c.h.s8.bf16 %v656
        %v1772 = vunpack.c.h.s8.bf16 %v657
        %v1773 = vunpack.c.l.s8.bf16 %v658
        %v1774 = vunpack.c.l.s8.bf16 %v659
        %v1775 = vunpack.c.l.s8.bf16 %v660
        %v1776 = vunpack.c.l.s8.bf16 %v661
        %v1777 = vunpack.c.l.s8.bf16 %v662
        %v1778 = vunpack.c.h.s8.bf16 %v658
        %v1779 = vunpack.c.h.s8.bf16 %v659
        %v1780 = vunpack.c.h.s8.bf16 %v660
        %v1781 = vunpack.c.h.s8.bf16 %v661
        %v1782 = vunpack.c.h.s8.bf16 %v662
        %v1783 = vunpack.c.l.s8.bf16 %v663
        %v1784 = vunpack.c.l.s8.bf16 %v664
        %v1785 = vunpack.c.l.s8.bf16 %v665
        %v1786 = vunpack.c.l.s8.bf16 %v666
        %v1787 = vunpack.c.l.s8.bf16 %v667
        %v1788 = vunpack.c.h.s8.bf16 %v663
        %v1789 = vunpack.c.h.s8.bf16 %v664
        %v1790 = vunpack.c.h.s8.bf16 %v665
        %v1791 = vunpack.c.h.s8.bf16 %v666
        %v1792 = vunpack.c.h.s8.bf16 %v667
        %v1793 = vunpack.c.l.s8.bf16 %v668
        %v1794 = vunpack.c.l.s8.bf16 %v669
        %v1795 = vunpack.c.l.s8.bf16 %v670
        %v1796 = vunpack.c.l.s8.bf16 %v671
        %v1797 = vunpack.c.l.s8.bf16 %v672
        %v1798 = vunpack.c.h.s8.bf16 %v668
        %v1799 = vunpack.c.h.s8.bf16 %v669
        %v1800 = vunpack.c.h.s8.bf16 %v670
        %v1801 = vunpack.c.h.s8.bf16 %v671
        %v1802 = vunpack.c.h.s8.bf16 %v672
        %v1803 = vunpack.c.l.s8.bf16 %v673
        %v1804 = vunpack.c.l.s8.bf16 %v674
        %v1805 = vunpack.c.l.s8.bf16 %v675
        %v1806 = vunpack.c.l.s8.bf16 %v676
        %v1807 = vunpack.c.l.s8.bf16 %v677
        %v1808 = vunpack.c.h.s8.bf16 %v673
        %v1809 = vunpack.c.h.s8.bf16 %v674
        %v1810 = vunpack.c.h.s8.bf16 %v675
        %v1811 = vunpack.c.h.s8.bf16 %v676
        %v1812 = vunpack.c.h.s8.bf16 %v677
        %v1813 = vunpack.c.l.s8.bf16 %v678
        %v1814 = vunpack.c.l.s8.bf16 %v679
        %v1815 = vunpack.c.l.s8.bf16 %v680
        %v1816 = vunpack.c.l.s8.bf16 %v681
        %v1817 = vunpack.c.l.s8.bf16 %v682
        %v1818 = vunpack.c.h.s8.bf16 %v678
        %v1819 = vunpack.c.h.s8.bf16 %v679
        %v1820 = vunpack.c.h.s8.bf16 %v680
        %v1821 = vunpack.c.h.s8.bf16 %v681
        %v1822 = vunpack.c.h.s8.bf16 %v682
        %v1823 = vunpack.c.l.s8.bf16 %v683
        %v1824 = vunpack.c.l.s8.bf16 %v684
        %v1825 = vunpack.c.l.s8.bf16 %v685
        %v1826 = vunpack.c.l.s8.bf16 %v686
        %v1827 = vunpack.c.l.s8.bf16 %v687
        %v1828 = vunpack.c.h.s8.bf16 %v683
        %v1829 = vunpack.c.h.s8.bf16 %v684
        %v1830 = vunpack.c.h.s8.bf16 %v685
        %v1831 = vunpack.c.h.s8.bf16 %v686
        %v1832 = vunpack.c.h.s8.bf16 %v687
        %v1833 = vunpack.c.l.s8.bf16 %v688
        %v1834 = vunpack.c.l.s8.bf16 %v689
        %v1835 = vunpack.c.l.s8.bf16 %v690
        %v1836 = vunpack.c.l.s8.bf16 %v691
        %v1837 = vunpack.c.l.s8.bf16 %v692
        %v1838 = vunpack.c.h.s8.bf16 %v688
        %v1839 = vunpack.c.h.s8.bf16 %v689
        %v1840 = vunpack.c.h.s8.bf16 %v690
        %v1841 = vunpack.c.h.s8.bf16 %v691
        %v1842 = vunpack.c.h.s8.bf16 %v692
        %v1843 = vunpack.c.l.s8.bf16 %v693
        %v1844 = vunpack.c.l.s8.bf16 %v694
        %v1845 = vunpack.c.l.s8.bf16 %v695
        %v1846 = vunpack.c.l.s8.bf16 %v696
        %v1847 = vunpack.c.l.s8.bf16 %v697
        %v1848 = vunpack.c.h.s8.bf16 %v693
        %v1849 = vunpack.c.h.s8.bf16 %v694
        %v1850 = vunpack.c.h.s8.bf16 %v695
        %v1851 = vunpack.c.h.s8.bf16 %v696
        %v1852 = vunpack.c.h.s8.bf16 %v697
        %v1853 = vunpack.c.l.s8.bf16 %v698
        %v1854 = vunpack.c.l.s8.bf16 %v699
        %v1855 = vunpack.c.l.s8.bf16 %v700
        %v1856 = vunpack.c.l.s8.bf16 %v701
        %v1857 = vunpack.c.l.s8.bf16 %v702
        %v1858 = vunpack.c.h.s8.bf16 %v698
        %v1859 = vunpack.c.h.s8.bf16 %v699
        %v1860 = vunpack.c.h.s8.bf16 %v700
        %v1861 = vunpack.c.h.s8.bf16 %v701
        %v1862 = vunpack.c.h.s8.bf16 %v702
        %v1863 = vunpack.c.l.s8.bf16 %v703
        %v1864 = vunpack.c.l.s8.bf16 %v704
        %v1865 = vunpack.c.l.s8.bf16 %v705
        %v1866 = vunpack.c.l.s8.bf16 %v706
        %v1867 = vunpack.c.l.s8.bf16 %v707
        %v1868 = vunpack.c.h.s8.bf16 %v703
        %v1869 = vunpack.c.h.s8.bf16 %v704
        %v1870 = vunpack.c.h.s8.bf16 %v705
        %v1871 = vunpack.c.h.s8.bf16 %v706
        %v1872 = vunpack.c.h.s8.bf16 %v707
        %v1873 = vunpack.c.l.s8.bf16 %v708
        %v1874 = vunpack.c.l.s8.bf16 %v709
        %v1875 = vunpack.c.l.s8.bf16 %v710
        %v1876 = vunpack.c.l.s8.bf16 %v711
        %v1877 = vunpack.c.l.s8.bf16 %v712
        %v1878 = vunpack.c.h.s8.bf16 %v708
        %v1879 = vunpack.c.h.s8.bf16 %v709
        %v1880 = vunpack.c.h.s8.bf16 %v710
        %v1881 = vunpack.c.h.s8.bf16 %v711
        %v1882 = vunpack.c.h.s8.bf16 %v712
        %v1883 = vunpack.c.l.s8.bf16 %v713
        %v1884 = vunpack.c.l.s8.bf16 %v714
        %v1885 = vunpack.c.l.s8.bf16 %v715
        %v1886 = vunpack.c.l.s8.bf16 %v716
        %v1887 = vunpack.c.l.s8.bf16 %v717
        %v1888 = vunpack.c.h.s8.bf16 %v713
        %v1889 = vunpack.c.h.s8.bf16 %v714
        %v1890 = vunpack.c.h.s8.bf16 %v715
        %v1891 = vunpack.c.h.s8.bf16 %v716
        %v1892 = vunpack.c.h.s8.bf16 %v717
        %v1893 = vunpack.c.l.s8.bf16 %v718
        %v1894 = vunpack.c.l.s8.bf16 %v719
        %v1895 = vunpack.c.l.s8.bf16 %v720
        %v1896 = vunpack.c.l.s8.bf16 %v721
        %v1897 = vunpack.c.l.s8.bf16 %v722
        %v1898 = vunpack.c.h.s8.bf16 %v718
        %v1899 = vunpack.c.h.s8.bf16 %v719
        %v1900 = vunpack.c.h.s8.bf16 %v720
        %v1901 = vunpack.c.h.s8.bf16 %v721
        %v1902 = vunpack.c.h.s8.bf16 %v722
        %v1903 = vunpack.c.l.s8.bf16 %v723
        %v1904 = vunpack.c.l.s8.bf16 %v724
        %v1905 = vunpack.c.l.s8.bf16 %v725
        %v1906 = vunpack.c.l.s8.bf16 %v726
        %v1907 = vunpack.c.l.s8.bf16 %v727
        %v1908 = vunpack.c.h.s8.bf16 %v723
        %v1909 = vunpack.c.h.s8.bf16 %v724
        %v1910 = vunpack.c.h.s8.bf16 %v725
        %v1911 = vunpack.c.h.s8.bf16 %v726
        %v1912 = vunpack.c.h.s8.bf16 %v727
        %v1913 = vunpack.c.l.s8.bf16 %v728
        %v1914 = vunpack.c.l.s8.bf16 %v729
        %v1915 = vunpack.c.l.s8.bf16 %v730
        %v1916 = vunpack.c.l.s8.bf16 %v731
        %v1917 = vunpack.c.l.s8.bf16 %v732
        %v1918 = vunpack.c.h.s8.bf16 %v728
        %v1919 = vunpack.c.h.s8.bf16 %v729
        %v1920 = vunpack.c.h.s8.bf16 %v730
        %v1921 = vunpack.c.h.s8.bf16 %v731
        %v1922 = vunpack.c.h.s8.bf16 %v732
        %v1923 = vunpack.c.l.s8.bf16 %v733
        %v1924 = vunpack.c.l.s8.bf16 %v734
        %v1925 = vunpack.c.l.s8.bf16 %v735
        %v1926 = vunpack.c.l.s8.bf16 %v736
        %v1927 = vunpack.c.l.s8.bf16 %v737
        %v1928 = vunpack.c.h.s8.bf16 %v733
        %v1929 = vunpack.c.h.s8.bf16 %v734
        %v1930 = vunpack.c.h.s8.bf16 %v735
        %v1931 = vunpack.c.h.s8.bf16 %v736
        %v1932 = vunpack.c.h.s8.bf16 %v737
        %v1933 = vunpack.c.l.s8.bf16 %v738
        %v1934 = vunpack.c.l.s8.bf16 %v739
        %v1935 = vunpack.c.l.s8.bf16 %v740
        %v1936 = vunpack.c.l.s8.bf16 %v741
        %v1937 = vunpack.c.l.s8.bf16 %v742
        %v1938 = vunpack.c.h.s8.bf16 %v738
        %v1939 = vunpack.c.h.s8.bf16 %v739
        %v1940 = vunpack.c.h.s8.bf16 %v740
        %v1941 = vunpack.c.h.s8.bf16 %v741
        %v1942 = vunpack.c.h.s8.bf16 %v742
        %v1943 = vunpack.c.l.s8.bf16 %v743
        %v1944 = vunpack.c.l.s8.bf16 %v744
        %v1945 = vunpack.c.l.s8.bf16 %v745
        %v1946 = vunpack.c.l.s8.bf16 %v746
        %v1947 = vunpack.c.l.s8.bf16 %v747
        %v1948 = vunpack.c.h.s8.bf16 %v743
        %v1949 = vunpack.c.h.s8.bf16 %v744
        %v1950 = vunpack.c.h.s8.bf16 %v745
        %v1951 = vunpack.c.h.s8.bf16 %v746
        %v1952 = vunpack.c.h.s8.bf16 %v747
        %v1953 = vunpack.c.l.s8.bf16 %v748
        %v1954 = vunpack.c.l.s8.bf16 %v749
        %v1955 = vunpack.c.l.s8.bf16 %v750
        %v1956 = vunpack.c.l.s8.bf16 %v751
        %v1957 = vunpack.c.l.s8.bf16 %v752
        %v1958 = vunpack.c.h.s8.bf16 %v748
        %v1959 = vunpack.c.h.s8.bf16 %v749
        %v1960 = vunpack.c.h.s8.bf16 %v750
        %v1961 = vunpack.c.h.s8.bf16 %v751
        %v1962 = vunpack.c.h.s8.bf16 %v752
        %v1963 = vunpack.c.l.s8.bf16 %v753
        %v1964 = vunpack.c.l.s8.bf16 %v754
        %v1965 = vunpack.c.l.s8.bf16 %v755
        %v1966 = vunpack.c.l.s8.bf16 %v756
        %v1967 = vunpack.c.l.s8.bf16 %v757
        %v1968 = vunpack.c.h.s8.bf16 %v753
        %v1969 = vunpack.c.h.s8.bf16 %v754
        %v1970 = vunpack.c.h.s8.bf16 %v755
        %v1971 = vunpack.c.h.s8.bf16 %v756
        %v1972 = vunpack.c.h.s8.bf16 %v757
        %v1973 = vunpack.c.l.s8.bf16 %v758
        %v1974 = vunpack.c.l.s8.bf16 %v759
        %v1975 = vunpack.c.l.s8.bf16 %v760
        %v1976 = vunpack.c.l.s8.bf16 %v761
        %v1977 = vunpack.c.l.s8.bf16 %v762
        %v1978 = vunpack.c.h.s8.bf16 %v758
        %v1979 = vunpack.c.h.s8.bf16 %v759
        %v1980 = vunpack.c.h.s8.bf16 %v760
        %v1981 = vunpack.c.h.s8.bf16 %v761
        %v1982 = vunpack.c.h.s8.bf16 %v762
        %v1983 = vunpack.c.l.s8.bf16 %v763
        %v1984 = vunpack.c.l.s8.bf16 %v764
        %v1985 = vunpack.c.l.s8.bf16 %v765
        %v1986 = vunpack.c.l.s8.bf16 %v766
        %v1987 = vunpack.c.l.s8.bf16 %v767
        %v1988 = vunpack.c.h.s8.bf16 %v763
        %v1989 = vunpack.c.h.s8.bf16 %v764
        %v1990 = vunpack.c.h.s8.bf16 %v765
        %v1991 = vunpack.c.h.s8.bf16 %v766
        %v1992 = vunpack.c.h.s8.bf16 %v767
        %v1993 = vunpack.c.l.s8.bf16 %v768
        %v1994 = vunpack.c.l.s8.bf16 %v769
        %v1995 = vunpack.c.l.s8.bf16 %v770
        %v1996 = vunpack.c.l.s8.bf16 %v771
        %v1997 = vunpack.c.l.s8.bf16 %v772
        %v1998 = vunpack.c.h.s8.bf16 %v768
        %v1999 = vunpack.c.h.s8.bf16 %v769
        %v2000 = vunpack.c.h.s8.bf16 %v770
        %v2001 = vunpack.c.h.s8.bf16 %v771
        %v2002 = vunpack.c.h.s8.bf16 %v772
        %v2003 = vunpack.c.l.s8.bf16 %v773
        %v2004 = vunpack.c.l.s8.bf16 %v774
        %v2005 = vunpack.c.l.s8.bf16 %v775
        %v2006 = vunpack.c.l.s8.bf16 %v776
        %v2007 = vunpack.c.l.s8.bf16 %v777
        %v2008 = vunpack.c.h.s8.bf16 %v773
        %v2009 = vunpack.c.h.s8.bf16 %v774
        %v2010 = vunpack.c.h.s8.bf16 %v775
        %v2011 = vunpack.c.h.s8.bf16 %v776
        %v2012 = vunpack.c.h.s8.bf16 %v777
        %v2013 = vunpack.c.l.s8.bf16 %v778
        %v2014 = vunpack.c.l.s8.bf16 %v779
        %v2015 = vunpack.c.l.s8.bf16 %v780
        %v2016 = vunpack.c.l.s8.bf16 %v781
        %v2017 = vunpack.c.l.s8.bf16 %v782
        %v2018 = vunpack.c.h.s8.bf16 %v778
        %v2019 = vunpack.c.h.s8.bf16 %v779
        %v2020 = vunpack.c.h.s8.bf16 %v780
        %v2021 = vunpack.c.h.s8.bf16 %v781
        %v2022 = vunpack.c.h.s8.bf16 %v782
        %v2023 = vunpack.c.l.s8.bf16 %v783
        %v2024 = vunpack.c.l.s8.bf16 %v784
        %v2025 = vunpack.c.l.s8.bf16 %v785
        %v2026 = vunpack.c.l.s8.bf16 %v786
        %v2027 = vunpack.c.l.s8.bf16 %v787
        %v2028 = vunpack.c.h.s8.bf16 %v783
        %v2029 = vunpack.c.h.s8.bf16 %v784
        %v2030 = vunpack.c.h.s8.bf16 %v785
        %v2031 = vunpack.c.h.s8.bf16 %v786
        %v2032 = vunpack.c.h.s8.bf16 %v787
        %v2033 = vunpack.c.l.s8.bf16 %v788
        %v2034 = vunpack.c.l.s8.bf16 %v789
        %v2035 = vunpack.c.l.s8.bf16 %v790
        %v2036 = vunpack.c.l.s8.bf16 %v791
        %v2037 = vunpack.c.l.s8.bf16 %v792
        %v2038 = vunpack.c.h.s8.bf16 %v788
        %v2039 = vunpack.c.h.s8.bf16 %v789
        %v2040 = vunpack.c.h.s8.bf16 %v790
        %v2041 = vunpack.c.h.s8.bf16 %v791
        %v2042 = vunpack.c.h.s8.bf16 %v792
        %v2043 = vunpack.c.l.s8.bf16 %v793
        %v2044 = vunpack.c.l.s8.bf16 %v794
        %v2045 = vunpack.c.l.s8.bf16 %v795
        %v2046 = vunpack.c.l.s8.bf16 %v796
        %v2047 = vunpack.c.l.s8.bf16 %v797
        %v2048 = vunpack.c.h.s8.bf16 %v793
        %v2049 = vunpack.c.h.s8.bf16 %v794
        %v2050 = vunpack.c.h.s8.bf16 %v795
        %v2051 = vunpack.c.h.s8.bf16 %v796
        %v2052 = vunpack.c.h.s8.bf16 %v797
        %v2053 = vunpack.c.l.s8.bf16 %v798
        %v2054 = vunpack.c.l.s8.bf16 %v799
        %v2055 = vunpack.c.l.s8.bf16 %v800
        %v2056 = vunpack.c.l.s8.bf16 %v801
        %v2057 = vunpack.c.l.s8.bf16 %v802
        %v2058 = vunpack.c.h.s8.bf16 %v798
        %v2059 = vunpack.c.h.s8.bf16 %v799
        %v2060 = vunpack.c.h.s8.bf16 %v800
        %v2061 = vunpack.c.h.s8.bf16 %v801
        %v2062 = vunpack.c.h.s8.bf16 %v802
        %v2063 = vunpack.c.l.s8.bf16 %v803
        %v2064 = vunpack.c.l.s8.bf16 %v804
        %v2065 = vunpack.c.l.s8.bf16 %v805
        %v2066 = vunpack.c.l.s8.bf16 %v806
        %v2067 = vunpack.c.l.s8.bf16 %v807
        %v2068 = vunpack.c.h.s8.bf16 %v803
        %v2069 = vunpack.c.h.s8.bf16 %v804
        %v2070 = vunpack.c.h.s8.bf16 %v805
        %v2071 = vunpack.c.h.s8.bf16 %v806
        %v2072 = vunpack.c.h.s8.bf16 %v807
        %v2073 = vunpack.c.l.s8.bf16 %v808
        %v2074 = vunpack.c.l.s8.bf16 %v809
        %v2075 = vunpack.c.l.s8.bf16 %v810
        %v2076 = vunpack.c.l.s8.bf16 %v811
        %v2077 = vunpack.c.l.s8.bf16 %v812
        %v2078 = vunpack.c.h.s8.bf16 %v808
        %v2079 = vunpack.c.h.s8.bf16 %v809
        %v2080 = vunpack.c.h.s8.bf16 %v810
        %v2081 = vunpack.c.h.s8.bf16 %v811
        %v2082 = vunpack.c.h.s8.bf16 %v812
        %v2083 = vunpack.c.l.s8.bf16 %v813
        %v2084 = vunpack.c.l.s8.bf16 %v814
        %v2085 = vunpack.c.l.s8.bf16 %v815
        %v2086 = vunpack.c.l.s8.bf16 %v816
        %v2087 = vunpack.c.l.s8.bf16 %v817
        %v2088 = vunpack.c.h.s8.bf16 %v813
        %v2089 = vunpack.c.h.s8.bf16 %v814
        %v2090 = vunpack.c.h.s8.bf16 %v815
        %v2091 = vunpack.c.h.s8.bf16 %v816
        %v2092 = vunpack.c.h.s8.bf16 %v817
        %v2093 = vunpack.c.l.s8.bf16 %v818
        %v2094 = vunpack.c.l.s8.bf16 %v819
        %v2095 = vunpack.c.l.s8.bf16 %v820
        %v2096 = vunpack.c.l.s8.bf16 %v821
        %v2097 = vunpack.c.l.s8.bf16 %v822
        %v2098 = vunpack.c.h.s8.bf16 %v818
        %v2099 = vunpack.c.h.s8.bf16 %v819
        %v2100 = vunpack.c.h.s8.bf16 %v820
        %v2101 = vunpack.c.h.s8.bf16 %v821
        %v2102 = vunpack.c.h.s8.bf16 %v822
        %v2103 = vunpack.c.l.s8.bf16 %v823
        %v2104 = vunpack.c.l.s8.bf16 %v824
        %v2105 = vunpack.c.l.s8.bf16 %v825
        %v2106 = vunpack.c.l.s8.bf16 %v826
        %v2107 = vunpack.c.l.s8.bf16 %v827
        %v2108 = vunpack.c.h.s8.bf16 %v823
        %v2109 = vunpack.c.h.s8.bf16 %v824
        %v2110 = vunpack.c.h.s8.bf16 %v825
        %v2111 = vunpack.c.h.s8.bf16 %v826
        %v2112 = vunpack.c.h.s8.bf16 %v827
        %v2113 = vunpack.c.l.s8.bf16 %v828
        %v2114 = vunpack.c.l.s8.bf16 %v829
        %v2115 = vunpack.c.l.s8.bf16 %v830
        %v2116 = vunpack.c.l.s8.bf16 %v831
        %v2117 = vunpack.c.l.s8.bf16 %v832
        %v2118 = vunpack.c.h.s8.bf16 %v828
        %v2119 = vunpack.c.h.s8.bf16 %v829
        %v2120 = vunpack.c.h.s8.bf16 %v830
        %v2121 = vunpack.c.h.s8.bf16 %v831
        %v2122 = vunpack.c.h.s8.bf16 %v832
        %v2123 = vunpack.c.l.s8.bf16 %v833
        %v2124 = vunpack.c.l.s8.bf16 %v834
        %v2125 = vunpack.c.l.s8.bf16 %v835
        %v2126 = vunpack.c.l.s8.bf16 %v836
        %v2127 = vunpack.c.l.s8.bf16 %v837
        %v2128 = vunpack.c.h.s8.bf16 %v833
        %v2129 = vunpack.c.h.s8.bf16 %v834
        %v2130 = vunpack.c.h.s8.bf16 %v835
        %v2131 = vunpack.c.h.s8.bf16 %v836
        %v2132 = vunpack.c.h.s8.bf16 %v837
        %v2133 = vunpack.c.l.s8.bf16 %v838
        %v2134 = vunpack.c.l.s8.bf16 %v839
        %v2135 = vunpack.c.l.s8.bf16 %v840
        %v2136 = vunpack.c.l.s8.bf16 %v841
        %v2137 = vunpack.c.l.s8.bf16 %v842
        %v2138 = vunpack.c.h.s8.bf16 %v838
        %v2139 = vunpack.c.h.s8.bf16 %v839
        %v2140 = vunpack.c.h.s8.bf16 %v840
        %v2141 = vunpack.c.h.s8.bf16 %v841
        %v2142 = vunpack.c.h.s8.bf16 %v842
        %v2143 = vunpack.c.l.s8.bf16 %v843
        %v2144 = vunpack.c.l.s8.bf16 %v844
        %v2145 = vunpack.c.l.s8.bf16 %v845
        %v2146 = vunpack.c.l.s8.bf16 %v846
        %v2147 = vunpack.c.l.s8.bf16 %v847
        %v2148 = vunpack.c.h.s8.bf16 %v843
        %v2149 = vunpack.c.h.s8.bf16 %v844
        %v2150 = vunpack.c.h.s8.bf16 %v845
        %v2151 = vunpack.c.h.s8.bf16 %v846
        %v2152 = vunpack.c.h.s8.bf16 %v847
        %v2153 = vunpack.c.l.s8.bf16 %v848
        %v2154 = vunpack.c.l.s8.bf16 %v849
        %v2155 = vunpack.c.l.s8.bf16 %v850
        %v2156 = vunpack.c.l.s8.bf16 %v851
        %v2157 = vunpack.c.l.s8.bf16 %v852
        %v2158 = vunpack.c.h.s8.bf16 %v848
        %v2159 = vunpack.c.h.s8.bf16 %v849
        %v2160 = vunpack.c.h.s8.bf16 %v850
        %v2161 = vunpack.c.h.s8.bf16 %v851
        %v2162 = vunpack.c.h.s8.bf16 %v852
        %v2163 = vunpack.c.l.s8.bf16 %v853
        %v2164 = vunpack.c.l.s8.bf16 %v854
        %v2165 = vunpack.c.l.s8.bf16 %v855
        %v2166 = vunpack.c.l.s8.bf16 %v856
        %v2167 = vunpack.c.l.s8.bf16 %v857
        %v2168 = vunpack.c.h.s8.bf16 %v853
        %v2169 = vunpack.c.h.s8.bf16 %v854
        %v2170 = vunpack.c.h.s8.bf16 %v855
        %v2171 = vunpack.c.h.s8.bf16 %v856
        %v2172 = vunpack.c.h.s8.bf16 %v857
        %v2173 = vunpack.c.l.s8.bf16 %v858
        %v2174 = vunpack.c.l.s8.bf16 %v859
        %v2175 = vunpack.c.l.s8.bf16 %v860
        %v2176 = vunpack.c.l.s8.bf16 %v861
        %v2177 = vunpack.c.l.s8.bf16 %v862
        %v2178 = vunpack.c.h.s8.bf16 %v858
        %v2179 = vunpack.c.h.s8.bf16 %v859
        %v2180 = vunpack.c.h.s8.bf16 %v860
        %v2181 = vunpack.c.h.s8.bf16 %v861
        %v2182 = vunpack.c.h.s8.bf16 %v862
        %v2183 = vunpack.c.l.s8.bf16 %v863
        %v2184 = vunpack.c.l.s8.bf16 %v864
        %v2185 = vunpack.c.l.s8.bf16 %v865
        %v2186 = vunpack.c.l.s8.bf16 %v866
        %v2187 = vunpack.c.l.s8.bf16 %v867
        %v2188 = vunpack.c.h.s8.bf16 %v863
        %v2189 = vunpack.c.h.s8.bf16 %v864
        %v2190 = vunpack.c.h.s8.bf16 %v865
        %v2191 = vunpack.c.h.s8.bf16 %v866
        %v2192 = vunpack.c.h.s8.bf16 %v867
        %v2193 = vunpack.c.l.s8.bf16 %v868
        %v2194 = vunpack.c.l.s8.bf16 %v869
        %v2195 = vunpack.c.l.s8.bf16 %v870
        %v2196 = vunpack.c.l.s8.bf16 %v871
        %v2197 = vunpack.c.l.s8.bf16 %v872
        %v2198 = vunpack.c.h.s8.bf16 %v868
        %v2199 = vunpack.c.h.s8.bf16 %v869
        %v2200 = vunpack.c.h.s8.bf16 %v870
        %v2201 = vunpack.c.h.s8.bf16 %v871
        %v2202 = vunpack.c.h.s8.bf16 %v872
        %v2203 = vunpack.c.l.s8.bf16 %v873
        %v2204 = vunpack.c.l.s8.bf16 %v874
        %v2205 = vunpack.c.l.s8.bf16 %v875
        %v2206 = vunpack.c.l.s8.bf16 %v876
        %v2207 = vunpack.c.l.s8.bf16 %v877
        %v2208 = vunpack.c.h.s8.bf16 %v873
        %v2209 = vunpack.c.h.s8.bf16 %v874
        %v2210 = vunpack.c.h.s8.bf16 %v875
        %v2211 = vunpack.c.h.s8.bf16 %v876
        %v2212 = vunpack.c.h.s8.bf16 %v877
        %v2213 = vunpack.c.l.s8.bf16 %v878
        %v2214 = vunpack.c.l.s8.bf16 %v879
        %v2215 = vunpack.c.l.s8.bf16 %v880
        %v2216 = vunpack.c.l.s8.bf16 %v881
        %v2217 = vunpack.c.l.s8.bf16 %v882
        %v2218 = vunpack.c.h.s8.bf16 %v878
        %v2219 = vunpack.c.h.s8.bf16 %v879
        %v2220 = vunpack.c.h.s8.bf16 %v880
        %v2221 = vunpack.c.h.s8.bf16 %v881
        %v2222 = vunpack.c.h.s8.bf16 %v882
        %v2223 = vunpack.c.l.s8.bf16 %v883
        %v2224 = vunpack.c.l.s8.bf16 %v884
        %v2225 = vunpack.c.l.s8.bf16 %v885
        %v2226 = vunpack.c.l.s8.bf16 %v886
        %v2227 = vunpack.c.l.s8.bf16 %v887
        %v2228 = vunpack.c.h.s8.bf16 %v883
        %v2229 = vunpack.c.h.s8.bf16 %v884
        %v2230 = vunpack.c.h.s8.bf16 %v885
        %v2231 = vunpack.c.h.s8.bf16 %v886
        %v2232 = vunpack.c.h.s8.bf16 %v887
        %v2233 = vunpack.c.l.s8.bf16 %v888
        %v2234 = vunpack.c.l.s8.bf16 %v889
        %v2235 = vunpack.c.l.s8.bf16 %v890
        %v2236 = vunpack.c.l.s8.bf16 %v891
        %v2237 = vunpack.c.l.s8.bf16 %v892
        %v2238 = vunpack.c.h.s8.bf16 %v888
        %v2239 = vunpack.c.h.s8.bf16 %v889
        %v2240 = vunpack.c.h.s8.bf16 %v890
        %v2241 = vunpack.c.h.s8.bf16 %v891
        %v2242 = vunpack.c.h.s8.bf16 %v892
        %v2243 = vunpack.c.l.s8.bf16 %v893
        %v2244 = vunpack.c.l.s8.bf16 %v894
        %v2245 = vunpack.c.l.s8.bf16 %v895
        %v2246 = vunpack.c.l.s8.bf16 %v896
        %v2247 = vunpack.c.l.s8.bf16 %v897
        %v2248 = vunpack.c.h.s8.bf16 %v893
        %v2249 = vunpack.c.h.s8.bf16 %v894
        %v2250 = vunpack.c.h.s8.bf16 %v895
        %v2251 = vunpack.c.h.s8.bf16 %v896
        %v2252 = vunpack.c.h.s8.bf16 %v897
        %v2253 = vunpack.c.l.s8.bf16 %v898
        %v2254 = vunpack.c.l.s8.bf16 %v899
        %v2255 = vunpack.c.l.s8.bf16 %v900
        %v2256 = vunpack.c.l.s8.bf16 %v901
        %v2257 = vunpack.c.l.s8.bf16 %v902
        %v2258 = vunpack.c.h.s8.bf16 %v898
        %v2259 = vunpack.c.h.s8.bf16 %v899
        %v2260 = vunpack.c.h.s8.bf16 %v900
        %v2261 = vunpack.c.h.s8.bf16 %v901
        %v2262 = vunpack.c.h.s8.bf16 %v902
        %v2263 = vunpack.c.l.s8.bf16 %v903
        %v2264 = vunpack.c.l.s8.bf16 %v904
        %v2265 = vunpack.c.l.s8.bf16 %v905
        %v2266 = vunpack.c.l.s8.bf16 %v906
        %v2267 = vunpack.c.l.s8.bf16 %v907
        %v2268 = vunpack.c.h.s8.bf16 %v903
        %v2269 = vunpack.c.h.s8.bf16 %v904
        %v2270 = vunpack.c.h.s8.bf16 %v905
        %v2271 = vunpack.c.h.s8.bf16 %v906
        %v2272 = vunpack.c.h.s8.bf16 %v907
        %v2273 = vunpack.c.l.s8.bf16 %v908
        %v2274 = vunpack.c.l.s8.bf16 %v909
        %v2275 = vunpack.c.l.s8.bf16 %v910
        %v2276 = vunpack.c.l.s8.bf16 %v911
        %v2277 = vunpack.c.l.s8.bf16 %v912
        %v2278 = vunpack.c.h.s8.bf16 %v908
        %v2279 = vunpack.c.h.s8.bf16 %v909
        %v2280 = vunpack.c.h.s8.bf16 %v910
        %v2281 = vunpack.c.h.s8.bf16 %v911
        %v2282 = vunpack.c.h.s8.bf16 %v912
        %v2283 = vunpack.c.l.s8.bf16 %v913
        %v2284 = vunpack.c.l.s8.bf16 %v914
        %v2285 = vunpack.c.l.s8.bf16 %v915
        %v2286 = vunpack.c.l.s8.bf16 %v916
        %v2287 = vunpack.c.l.s8.bf16 %v917
        %v2288 = vunpack.c.h.s8.bf16 %v913
        %v2289 = vunpack.c.h.s8.bf16 %v914
        %v2290 = vunpack.c.h.s8.bf16 %v915
        %v2291 = vunpack.c.h.s8.bf16 %v916
        %v2292 = vunpack.c.h.s8.bf16 %v917
        %v2293 = vunpack.c.l.s8.bf16 %v918
        %v2294 = vunpack.c.l.s8.bf16 %v919
        %v2295 = vunpack.c.l.s8.bf16 %v920
        %v2296 = vunpack.c.l.s8.bf16 %v921
        %v2297 = vunpack.c.l.s8.bf16 %v922
        %v2298 = vunpack.c.h.s8.bf16 %v918
        %v2299 = vunpack.c.h.s8.bf16 %v919
        %v2300 = vunpack.c.h.s8.bf16 %v920
        %v2301 = vunpack.c.h.s8.bf16 %v921
        %v2302 = vunpack.c.h.s8.bf16 %v922
        %v2303 = vunpack.c.l.s8.bf16 %v923
        %v2304 = vunpack.c.l.s8.bf16 %v924
        %v2305 = vunpack.c.l.s8.bf16 %v925
        %v2306 = vunpack.c.l.s8.bf16 %v926
        %v2307 = vunpack.c.l.s8.bf16 %v927
        %v2308 = vunpack.c.h.s8.bf16 %v923
        %v2309 = vunpack.c.h.s8.bf16 %v924
        %v2310 = vunpack.c.h.s8.bf16 %v925
        %v2311 = vunpack.c.h.s8.bf16 %v926
        %v2312 = vunpack.c.h.s8.bf16 %v927
        %v2313 = vunpack.c.l.s8.bf16 %v928
        %v2314 = vunpack.c.l.s8.bf16 %v929
        %v2315 = vunpack.c.l.s8.bf16 %v930
        %v2316 = vunpack.c.l.s8.bf16 %v931
        %v2317 = vunpack.c.l.s8.bf16 %v932
        %v2318 = vunpack.c.h.s8.bf16 %v928
        %v2319 = vunpack.c.h.s8.bf16 %v929
        %v2320 = vunpack.c.h.s8.bf16 %v930
        %v2321 = vunpack.c.h.s8.bf16 %v931
        %v2322 = vunpack.c.h.s8.bf16 %v932
        %v2323 = vunpack.c.l.s8.bf16 %v933
        %v2324 = vunpack.c.l.s8.bf16 %v934
        %v2325 = vunpack.c.l.s8.bf16 %v935
        %v2326 = vunpack.c.l.s8.bf16 %v936
        %v2327 = vunpack.c.l.s8.bf16 %v937
        %v2328 = vunpack.c.h.s8.bf16 %v933
        %v2329 = vunpack.c.h.s8.bf16 %v934
        %v2330 = vunpack.c.h.s8.bf16 %v935
        %v2331 = vunpack.c.h.s8.bf16 %v936
        %v2332 = vunpack.c.h.s8.bf16 %v937
        %v2333 = vunpack.c.l.s8.bf16 %v938
        %v2334 = vunpack.c.l.s8.bf16 %v939
        %v2335 = vunpack.c.l.s8.bf16 %v940
        %v2336 = vunpack.c.l.s8.bf16 %v941
        %v2337 = vunpack.c.l.s8.bf16 %v942
        %v2338 = vunpack.c.h.s8.bf16 %v938
        %v2339 = vunpack.c.h.s8.bf16 %v939
        %v2340 = vunpack.c.h.s8.bf16 %v940
        %v2341 = vunpack.c.h.s8.bf16 %v941
        %v2342 = vunpack.c.h.s8.bf16 %v942
        %v2343 = vunpack.c.l.s8.bf16 %v943
        %v2344 = vunpack.c.l.s8.bf16 %v944
        %v2345 = vunpack.c.l.s8.bf16 %v945
        %v2346 = vunpack.c.l.s8.bf16 %v946
        %v2347 = vunpack.c.l.s8.bf16 %v947
        %v2348 = vunpack.c.h.s8.bf16 %v943
        %v2349 = vunpack.c.h.s8.bf16 %v944
        %v2350 = vunpack.c.h.s8.bf16 %v945
        %v2351 = vunpack.c.h.s8.bf16 %v946
        %v2352 = vunpack.c.h.s8.bf16 %v947
        %v2353 = vunpack.c.l.s8.bf16 %v948
        %v2354 = vunpack.c.l.s8.bf16 %v949
        %v2355 = vunpack.c.l.s8.bf16 %v950
        %v2356 = vunpack.c.l.s8.bf16 %v951
        %v2357 = vunpack.c.l.s8.bf16 %v952
        %v2358 = vunpack.c.h.s8.bf16 %v948
        %v2359 = vunpack.c.h.s8.bf16 %v949
        %v2360 = vunpack.c.h.s8.bf16 %v950
        %v2361 = vunpack.c.h.s8.bf16 %v951
        %v2362 = vunpack.c.h.s8.bf16 %v952
        %v2363 = vunpack.c.l.s8.bf16 %v953
        %v2364 = vunpack.c.l.s8.bf16 %v954
        %v2365 = vunpack.c.l.s8.bf16 %v955
        %v2366 = vunpack.c.l.s8.bf16 %v956
        %v2367 = vunpack.c.l.s8.bf16 %v957
        %v2368 = vunpack.c.h.s8.bf16 %v953
        %v2369 = vunpack.c.h.s8.bf16 %v954
        %v2370 = vunpack.c.h.s8.bf16 %v955
        %v2371 = vunpack.c.h.s8.bf16 %v956
        %v2372 = vunpack.c.h.s8.bf16 %v957
        %v2373 = vunpack.c.l.s8.bf16 %v958
        %v2374 = vunpack.c.l.s8.bf16 %v959
        %v2375 = vunpack.c.l.s8.bf16 %v960
        %v2376 = vunpack.c.l.s8.bf16 %v961
        %v2377 = vunpack.c.l.s8.bf16 %v962
        %v2378 = vunpack.c.h.s8.bf16 %v958
        %v2379 = vunpack.c.h.s8.bf16 %v959
        %v2380 = vunpack.c.h.s8.bf16 %v960
        %v2381 = vunpack.c.h.s8.bf16 %v961
        %v2382 = vunpack.c.h.s8.bf16 %v962
        %v2383 = vunpack.c.l.s8.bf16 %v963
        %v2384 = vunpack.c.l.s8.bf16 %v964
        %v2385 = vunpack.c.l.s8.bf16 %v965
        %v2386 = vunpack.c.l.s8.bf16 %v966
        %v2387 = vunpack.c.l.s8.bf16 %v967
        %v2388 = vunpack.c.h.s8.bf16 %v963
        %v2389 = vunpack.c.h.s8.bf16 %v964
        %v2390 = vunpack.c.h.s8.bf16 %v965
        %v2391 = vunpack.c.h.s8.bf16 %v966
        %v2392 = vunpack.c.h.s8.bf16 %v967
        %v2393 = vunpack.c.l.s8.bf16 %v968
        %v2394 = vunpack.c.l.s8.bf16 %v969
        %v2395 = vunpack.c.l.s8.bf16 %v970
        %v2396 = vunpack.c.l.s8.bf16 %v971
        %v2397 = vunpack.c.l.s8.bf16 %v972
        %v2398 = vunpack.c.h.s8.bf16 %v968
        %v2399 = vunpack.c.h.s8.bf16 %v969
        %v2400 = vunpack.c.h.s8.bf16 %v970
        %v2401 = vunpack.c.h.s8.bf16 %v971
        %v2402 = vunpack.c.h.s8.bf16 %v972
        %v2403 = vunpack.c.l.s8.bf16 %v973
        %v2404 = vunpack.c.l.s8.bf16 %v974
        %v2405 = vunpack.c.l.s8.bf16 %v975
        %v2406 = vunpack.c.l.s8.bf16 %v976
        %v2407 = vunpack.c.l.s8.bf16 %v977
        %v2408 = vunpack.c.h.s8.bf16 %v973
        %v2409 = vunpack.c.h.s8.bf16 %v974
        %v2410 = vunpack.c.h.s8.bf16 %v975
        %v2411 = vunpack.c.h.s8.bf16 %v976
        %v2412 = vunpack.c.h.s8.bf16 %v977
        %v2413 = vunpack.c.l.s8.bf16 %v978
        %v2414 = vunpack.c.l.s8.bf16 %v979
        %v2415 = vunpack.c.l.s8.bf16 %v980
        %v2416 = vunpack.c.l.s8.bf16 %v981
        %v2417 = vunpack.c.l.s8.bf16 %v982
        %v2418 = vunpack.c.h.s8.bf16 %v978
        %v2419 = vunpack.c.h.s8.bf16 %v979
        %v2420 = vunpack.c.h.s8.bf16 %v980
        %v2421 = vunpack.c.h.s8.bf16 %v981
        %v2422 = vunpack.c.h.s8.bf16 %v982
        %v2423 = vunpack.c.l.s8.bf16 %v983
        %v2424 = vunpack.c.l.s8.bf16 %v984
        %v2425 = vunpack.c.l.s8.bf16 %v985
        %v2426 = vunpack.c.l.s8.bf16 %v986
        %v2427 = vunpack.c.l.s8.bf16 %v987
        %v2428 = vunpack.c.h.s8.bf16 %v983
        %v2429 = vunpack.c.h.s8.bf16 %v984
        %v2430 = vunpack.c.h.s8.bf16 %v985
        %v2431 = vunpack.c.h.s8.bf16 %v986
        %v2432 = vunpack.c.h.s8.bf16 %v987
        %v2433 = vunpack.c.l.s8.bf16 %v988
        %v2434 = vunpack.c.l.s8.bf16 %v989
        %v2435 = vunpack.c.l.s8.bf16 %v990
        %v2436 = vunpack.c.l.s8.bf16 %v991
        %v2437 = vunpack.c.l.s8.bf16 %v992
        %v2438 = vunpack.c.h.s8.bf16 %v988
        %v2439 = vunpack.c.h.s8.bf16 %v989
        %v2440 = vunpack.c.h.s8.bf16 %v990
        %v2441 = vunpack.c.h.s8.bf16 %v991
        %v2442 = vunpack.c.h.s8.bf16 %v992
        %v2443 = vunpack.c.l.s8.bf16 %v993
        %v2444 = vunpack.c.l.s8.bf16 %v994
        %v2445 = vunpack.c.l.s8.bf16 %v995
        %v2446 = vunpack.c.l.s8.bf16 %v996
        %v2447 = vunpack.c.l.s8.bf16 %v997
        %v2448 = vunpack.c.h.s8.bf16 %v993
        %v2449 = vunpack.c.h.s8.bf16 %v994
        %v2450 = vunpack.c.h.s8.bf16 %v995
        %v2451 = vunpack.c.h.s8.bf16 %v996
        %v2452 = vunpack.c.h.s8.bf16 %v997
        %v2453 = vunpack.c.l.s8.bf16 %v998
        %v2454 = vunpack.c.l.s8.bf16 %v999
        %v2455 = vunpack.c.l.s8.bf16 %v1000
        %v2456 = vunpack.c.l.s8.bf16 %v1001
        %v2457 = vunpack.c.l.s8.bf16 %v1002
        %v2458 = vunpack.c.h.s8.bf16 %v998
        %v2459 = vunpack.c.h.s8.bf16 %v999
        %v2460 = vunpack.c.h.s8.bf16 %v1000
        %v2461 = vunpack.c.h.s8.bf16 %v1001
        %v2462 = vunpack.c.h.s8.bf16 %v1002
        %v2463 = vunpack.c.l.s8.bf16 %v1003
        %v2464 = vunpack.c.l.s8.bf16 %v1004
        %v2465 = vunpack.c.l.s8.bf16 %v1005
        %v2466 = vunpack.c.l.s8.bf16 %v1006
        %v2467 = vunpack.c.l.s8.bf16 %v1007
        %v2468 = vunpack.c.h.s8.bf16 %v1003
        %v2469 = vunpack.c.h.s8.bf16 %v1004
        %v2470 = vunpack.c.h.s8.bf16 %v1005
        %v2471 = vunpack.c.h.s8.bf16 %v1006
        %v2472 = vunpack.c.h.s8.bf16 %v1007
        %v2473 = vunpack.c.l.s8.bf16 %v1008
        %v2474 = vunpack.c.l.s8.bf16 %v1009
        %v2475 = vunpack.c.l.s8.bf16 %v1010
        %v2476 = vunpack.c.l.s8.bf16 %v1011
        %v2477 = vunpack.c.l.s8.bf16 %v1012
        %v2478 = vunpack.c.h.s8.bf16 %v1008
        %v2479 = vunpack.c.h.s8.bf16 %v1009
        %v2480 = vunpack.c.h.s8.bf16 %v1010
        %v2481 = vunpack.c.h.s8.bf16 %v1011
        %v2482 = vunpack.c.h.s8.bf16 %v1012
        %v2483 = vunpack.c.l.s8.bf16 %v1013
        %v2484 = vunpack.c.l.s8.bf16 %v1014
        %v2485 = vunpack.c.l.s8.bf16 %v1015
        %v2486 = vunpack.c.l.s8.bf16 %v1016
        %v2487 = vunpack.c.l.s8.bf16 %v1017
        %v2488 = vunpack.c.h.s8.bf16 %v1013
        %v2489 = vunpack.c.h.s8.bf16 %v1014
        %v2490 = vunpack.c.h.s8.bf16 %v1015
        %v2491 = vunpack.c.h.s8.bf16 %v1016
        %v2492 = vunpack.c.h.s8.bf16 %v1017
        %v2493 = vunpack.c.l.s8.bf16 %v1018
        %v2494 = vunpack.c.l.s8.bf16 %v1019
        %v2495 = vunpack.c.l.s8.bf16 %v1020
        %v2496 = vunpack.c.l.s8.bf16 %v1021
        %v2497 = vunpack.c.l.s8.bf16 %v1022
        %v2498 = vunpack.c.h.s8.bf16 %v1018
        %v2499 = vunpack.c.h.s8.bf16 %v1019
        %v2500 = vunpack.c.h.s8.bf16 %v1020
        %v2501 = vunpack.c.h.s8.bf16 %v1021
        %v2502 = vunpack.c.h.s8.bf16 %v1022
        %v2503 = vunpack.c.l.s8.bf16 %v1023
        %v2504 = vunpack.c.l.s8.bf16 %v1024
        %v2505 = vunpack.c.l.s8.bf16 %v1025
        %v2506 = vunpack.c.l.s8.bf16 %v1026
        %v2507 = vunpack.c.l.s8.bf16 %v1027
        %v2508 = vunpack.c.h.s8.bf16 %v1023
        %v2509 = vunpack.c.h.s8.bf16 %v1024
        %v2510 = vunpack.c.h.s8.bf16 %v1025
        %v2511 = vunpack.c.h.s8.bf16 %v1026
        %v2512 = vunpack.c.h.s8.bf16 %v1027
        %v2513 = vunpack.c.l.s8.bf16 %v1028
        %v2514 = vunpack.c.l.s8.bf16 %v1029
        %v2515 = vunpack.c.l.s8.bf16 %v1030
        %v2516 = vunpack.c.l.s8.bf16 %v1031
        %v2517 = vunpack.c.l.s8.bf16 %v1032
        %v2518 = vunpack.c.h.s8.bf16 %v1028
        %v2519 = vunpack.c.h.s8.bf16 %v1029
        %v2520 = vunpack.c.h.s8.bf16 %v1030
        %v2521 = vunpack.c.h.s8.bf16 %v1031
        %v2522 = vunpack.c.h.s8.bf16 %v1032
        %v2523 = vunpack.c.l.s8.bf16 %v1033
        %v2524 = vunpack.c.l.s8.bf16 %v1034
        %v2525 = vunpack.c.l.s8.bf16 %v1035
        %v2526 = vunpack.c.l.s8.bf16 %v1036
        %v2527 = vunpack.c.l.s8.bf16 %v1037
        %v2528 = vunpack.c.h.s8.bf16 %v1033
        %v2529 = vunpack.c.h.s8.bf16 %v1034
        %v2530 = vunpack.c.h.s8.bf16 %v1035
        %v2531 = vunpack.c.h.s8.bf16 %v1036
        %v2532 = vunpack.c.h.s8.bf16 %v1037
        %v2533 = vunpack.c.l.s8.bf16 %v1038
        %v2534 = vunpack.c.l.s8.bf16 %v1039
        %v2535 = vunpack.c.l.s8.bf16 %v1040
        %v2536 = vunpack.c.l.s8.bf16 %v1041
        %v2537 = vunpack.c.l.s8.bf16 %v1042
        %v2538 = vunpack.c.h.s8.bf16 %v1038
        %v2539 = vunpack.c.h.s8.bf16 %v1039
        %v2540 = vunpack.c.h.s8.bf16 %v1040
        %v2541 = vunpack.c.h.s8.bf16 %v1041
        %v2542 = vunpack.c.h.s8.bf16 %v1042
        %v2543 = vunpack.c.l.s8.bf16 %v1043
        %v2544 = vunpack.c.l.s8.bf16 %v1044
        %v2545 = vunpack.c.l.s8.bf16 %v1045
        %v2546 = vunpack.c.l.s8.bf16 %v1046
        %v2547 = vunpack.c.l.s8.bf16 %v1047
        %v2548 = vunpack.c.h.s8.bf16 %v1043
        %v2549 = vunpack.c.h.s8.bf16 %v1044
        %v2550 = vunpack.c.h.s8.bf16 %v1045
        %v2551 = vunpack.c.h.s8.bf16 %v1046
        %v2552 = vunpack.c.h.s8.bf16 %v1047
        %v2553 = vunpack.c.l.s8.bf16 %v1048
        %v2554 = vunpack.c.l.s8.bf16 %v1049
        %v2555 = vunpack.c.l.s8.bf16 %v1050
        %v2556 = vunpack.c.l.s8.bf16 %v1051
        %v2557 = vunpack.c.l.s8.bf16 %v1052
        %v2558 = vunpack.c.h.s8.bf16 %v1048
        %v2559 = vunpack.c.h.s8.bf16 %v1049
        %v2560 = vunpack.c.h.s8.bf16 %v1050
        %v2561 = vunpack.c.h.s8.bf16 %v1051
        %v2562 = vunpack.c.h.s8.bf16 %v1052
        %v2563 = vunpack.c.l.s8.bf16 %v1053
        %v2564 = vunpack.c.l.s8.bf16 %v1054
        %v2565 = vunpack.c.l.s8.bf16 %v1055
        %v2566 = vunpack.c.l.s8.bf16 %v1056
        %v2567 = vunpack.c.l.s8.bf16 %v1057
        %v2568 = vunpack.c.h.s8.bf16 %v1053
        %v2569 = vunpack.c.h.s8.bf16 %v1054
        %v2570 = vunpack.c.h.s8.bf16 %v1055
        %v2571 = vunpack.c.h.s8.bf16 %v1056
        %v2572 = vunpack.c.h.s8.bf16 %v1057
        %v2573 = vunpack.c.l.s8.bf16 %v1058
        %v2574 = vunpack.c.l.s8.bf16 %v1059
        %v2575 = vunpack.c.l.s8.bf16 %v1060
        %v2576 = vunpack.c.l.s8.bf16 %v1061
        %v2577 = vunpack.c.l.s8.bf16 %v1062
        %v2578 = vunpack.c.h.s8.bf16 %v1058
        %v2579 = vunpack.c.h.s8.bf16 %v1059
        %v2580 = vunpack.c.h.s8.bf16 %v1060
        %v2581 = vunpack.c.h.s8.bf16 %v1061
        %v2582 = vunpack.c.h.s8.bf16 %v1062
        %v2583 = vunpack.c.l.s8.bf16 %v1063
        %v2584 = vunpack.c.l.s8.bf16 %v1064
        %v2585 = vunpack.c.l.s8.bf16 %v1065
        %v2586 = vunpack.c.l.s8.bf16 %v1066
        %v2587 = vunpack.c.l.s8.bf16 %v1067
        %v2588 = vunpack.c.h.s8.bf16 %v1063
        %v2589 = vunpack.c.h.s8.bf16 %v1064
        %v2590 = vunpack.c.h.s8.bf16 %v1065
        %v2591 = vunpack.c.h.s8.bf16 %v1066
        %v2592 = vunpack.c.h.s8.bf16 %v1067
        %v2593 = vunpack.c.l.s8.bf16 %v1068
        %v2594 = vunpack.c.l.s8.bf16 %v1069
        %v2595 = vunpack.c.l.s8.bf16 %v1070
        %v2596 = vunpack.c.l.s8.bf16 %v1071
        %v2597 = vunpack.c.l.s8.bf16 %v1072
        %v2598 = vunpack.c.h.s8.bf16 %v1068
        %v2599 = vunpack.c.h.s8.bf16 %v1069
        %v2600 = vunpack.c.h.s8.bf16 %v1070
        %v2601 = vunpack.c.h.s8.bf16 %v1071
        %v2602 = vunpack.c.h.s8.bf16 %v1072
        %v2603 = vunpack.c.l.s8.bf16 %v1073
        %v2604 = vunpack.c.l.s8.bf16 %v1074
        %v2605 = vunpack.c.l.s8.bf16 %v1075
        %v2606 = vunpack.c.l.s8.bf16 %v1076
        %v2607 = vunpack.c.l.s8.bf16 %v1077
        %v2608 = vunpack.c.h.s8.bf16 %v1073
        %v2609 = vunpack.c.h.s8.bf16 %v1074
        %v2610 = vunpack.c.h.s8.bf16 %v1075
        %v2611 = vunpack.c.h.s8.bf16 %v1076
        %v2612 = vunpack.c.h.s8.bf16 %v1077
        %v2613 = vunpack.c.l.s8.bf16 %v1078
        %v2614 = vunpack.c.l.s8.bf16 %v1079
        %v2615 = vunpack.c.l.s8.bf16 %v1080
        %v2616 = vunpack.c.l.s8.bf16 %v1081
        %v2617 = vunpack.c.l.s8.bf16 %v1082
        %v2618 = vunpack.c.h.s8.bf16 %v1078
        %v2619 = vunpack.c.h.s8.bf16 %v1079
        %v2620 = vunpack.c.h.s8.bf16 %v1080
        %v2621 = vunpack.c.h.s8.bf16 %v1081
        %v2622 = vunpack.c.h.s8.bf16 %v1082
        %v2623 = vunpack.c.l.s8.bf16 %v1083
        %v2624 = vunpack.c.l.s8.bf16 %v1084
        %v2625 = vunpack.c.l.s8.bf16 %v1085
        %v2626 = vunpack.c.l.s8.bf16 %v1086
        %v2627 = vunpack.c.l.s8.bf16 %v1087
        %v2628 = vunpack.c.h.s8.bf16 %v1083
        %v2629 = vunpack.c.h.s8.bf16 %v1084
        %v2630 = vunpack.c.h.s8.bf16 %v1085
        %v2631 = vunpack.c.h.s8.bf16 %v1086
        %v2632 = vunpack.c.h.s8.bf16 %v1087
        %v2633 = vunpack.c.l.s8.bf16 %v1088
        %v2634 = vunpack.c.l.s8.bf16 %v1089
        %v2635 = vunpack.c.l.s8.bf16 %v1090
        %v2636 = vunpack.c.l.s8.bf16 %v1091
        %v2637 = vunpack.c.l.s8.bf16 %v1092
        %v2638 = vunpack.c.h.s8.bf16 %v1088
        %v2639 = vunpack.c.h.s8.bf16 %v1089
        %v2640 = vunpack.c.h.s8.bf16 %v1090
        %v2641 = vunpack.c.h.s8.bf16 %v1091
        %v2642 = vunpack.c.h.s8.bf16 %v1092
        %v2643 = vunpack.c.l.s8.bf16 %v1093
        %v2644 = vunpack.c.l.s8.bf16 %v1094
        %v2645 = vunpack.c.l.s8.bf16 %v1095
        %v2646 = vunpack.c.l.s8.bf16 %v1096
        %v2647 = vunpack.c.l.s8.bf16 %v1097
        %v2648 = vunpack.c.h.s8.bf16 %v1093
        %v2649 = vunpack.c.h.s8.bf16 %v1094
        %v2650 = vunpack.c.h.s8.bf16 %v1095
        %v2651 = vunpack.c.h.s8.bf16 %v1096
        %v2652 = vunpack.c.h.s8.bf16 %v1097
        %v2653 = vunpack.c.l.s8.bf16 %v1098
        %v2654 = vunpack.c.l.s8.bf16 %v1099
        %v2655 = vunpack.c.l.s8.bf16 %v1100
        %v2656 = vunpack.c.l.s8.bf16 %v1101
        %v2657 = vunpack.c.l.s8.bf16 %v1102
        %v2658 = vunpack.c.h.s8.bf16 %v1098
        %v2659 = vunpack.c.h.s8.bf16 %v1099
        %v2660 = vunpack.c.h.s8.bf16 %v1100
        %v2661 = vunpack.c.h.s8.bf16 %v1101
        %v2662 = vunpack.c.h.s8.bf16 %v1102
        %v2663 = vunpack.c.l.s8.bf16 %v1103
        %v2664 = vunpack.c.l.s8.bf16 %v1104
        %v2665 = vunpack.c.l.s8.bf16 %v1105
        %v2666 = vunpack.c.l.s8.bf16 %v1106
        %v2667 = vunpack.c.l.s8.bf16 %v1107
        %v2668 = vunpack.c.h.s8.bf16 %v1103
        %v2669 = vunpack.c.h.s8.bf16 %v1104
        %v2670 = vunpack.c.h.s8.bf16 %v1105
        %v2671 = vunpack.c.h.s8.bf16 %v1106
        %v2672 = vunpack.c.h.s8.bf16 %v1107
        %v2673 = vunpack.c.l.s8.bf16 %v1108
        %v2674 = vunpack.c.l.s8.bf16 %v1109
        %v2675 = vunpack.c.l.s8.bf16 %v1110
        %v2676 = vunpack.c.l.s8.bf16 %v1111
        %v2677 = vunpack.c.l.s8.bf16 %v1112
        %v2678 = vunpack.c.h.s8.bf16 %v1108
        %v2679 = vunpack.c.h.s8.bf16 %v1109
        %v2680 = vunpack.c.h.s8.bf16 %v1110
        %v2681 = vunpack.c.h.s8.bf16 %v1111
        %v2682 = vunpack.c.h.s8.bf16 %v1112
        %v2683 = vunpack.c.l.s8.bf16 %v1113
        %v2684 = vunpack.c.l.s8.bf16 %v1114
        %v2685 = vunpack.c.l.s8.bf16 %v1115
        %v2686 = vunpack.c.l.s8.bf16 %v1116
        %v2687 = vunpack.c.l.s8.bf16 %v1117
        %v2688 = vunpack.c.h.s8.bf16 %v1113
        %v2689 = vunpack.c.h.s8.bf16 %v1114
        %v2690 = vunpack.c.h.s8.bf16 %v1115
        %v2691 = vunpack.c.h.s8.bf16 %v1116
        %v2692 = vunpack.c.h.s8.bf16 %v1117
        %v2693 = vunpack.c.l.s8.bf16 %v1118
        %v2694 = vunpack.c.l.s8.bf16 %v1119
        %v2695 = vunpack.c.l.s8.bf16 %v1120
        %v2696 = vunpack.c.l.s8.bf16 %v1121
        %v2697 = vunpack.c.l.s8.bf16 %v1122
        %v2698 = vunpack.c.h.s8.bf16 %v1118
        %v2699 = vunpack.c.h.s8.bf16 %v1119
        %v2700 = vunpack.c.h.s8.bf16 %v1120
        %v2701 = vunpack.c.h.s8.bf16 %v1121
        %v2702 = vunpack.c.h.s8.bf16 %v1122
        %v2703 = vunpack.c.l.s8.bf16 %v1123
        %v2704 = vunpack.c.l.s8.bf16 %v1124
        %v2705 = vunpack.c.l.s8.bf16 %v1125
        %v2706 = vunpack.c.l.s8.bf16 %v1126
        %v2707 = vunpack.c.l.s8.bf16 %v1127
        %v2708 = vunpack.c.h.s8.bf16 %v1123
        %v2709 = vunpack.c.h.s8.bf16 %v1124
        %v2710 = vunpack.c.h.s8.bf16 %v1125
        %v2711 = vunpack.c.h.s8.bf16 %v1126
        %v2712 = vunpack.c.h.s8.bf16 %v1127
        %v2713 = vunpack.c.l.s8.bf16 %v1128
        %v2714 = vunpack.c.l.s8.bf16 %v1129
        %v2715 = vunpack.c.l.s8.bf16 %v1130
        %v2716 = vunpack.c.l.s8.bf16 %v1131
        %v2717 = vunpack.c.l.s8.bf16 %v1132
        %v2718 = vunpack.c.h.s8.bf16 %v1128
        %v2719 = vunpack.c.h.s8.bf16 %v1129
        %v2720 = vunpack.c.h.s8.bf16 %v1130
        %v2721 = vunpack.c.h.s8.bf16 %v1131
        %v2722 = vunpack.c.h.s8.bf16 %v1132
        %v2723 = vunpack.c.l.s8.bf16 %v1133
        %v2724 = vunpack.c.l.s8.bf16 %v1134
        %v2725 = vunpack.c.l.s8.bf16 %v1135
        %v2726 = vunpack.c.l.s8.bf16 %v1136
        %v2727 = vunpack.c.l.s8.bf16 %v1137
        %v2728 = vunpack.c.h.s8.bf16 %v1133
        %v2729 = vunpack.c.h.s8.bf16 %v1134
        %v2730 = vunpack.c.h.s8.bf16 %v1135
        %v2731 = vunpack.c.h.s8.bf16 %v1136
        %v2732 = vunpack.c.h.s8.bf16 %v1137
        %v2733 = vunpack.c.l.s8.bf16 %v1138
        %v2734 = vunpack.c.l.s8.bf16 %v1139
        %v2735 = vunpack.c.l.s8.bf16 %v1140
        %v2736 = vunpack.c.l.s8.bf16 %v1141
        %v2737 = vunpack.c.l.s8.bf16 %v1142
        %v2738 = vunpack.c.h.s8.bf16 %v1138
        %v2739 = vunpack.c.h.s8.bf16 %v1139
        %v2740 = vunpack.c.h.s8.bf16 %v1140
        %v2741 = vunpack.c.h.s8.bf16 %v1141
        %v2742 = vunpack.c.h.s8.bf16 %v1142
        %v2743 = vunpack.c.l.s8.bf16 %v1143
        %v2744 = vunpack.c.l.s8.bf16 %v1144
        %v2745 = vunpack.c.l.s8.bf16 %v1145
        %v2746 = vunpack.c.l.s8.bf16 %v1146
        %v2747 = vunpack.c.l.s8.bf16 %v1147
        %v2748 = vunpack.c.h.s8.bf16 %v1143
        %v2749 = vunpack.c.h.s8.bf16 %v1144
        %v2750 = vunpack.c.h.s8.bf16 %v1145
        %v2751 = vunpack.c.h.s8.bf16 %v1146
        %v2752 = vunpack.c.h.s8.bf16 %v1147
        %v2753 = vunpack.c.l.s8.bf16 %v1148
        %v2754 = vunpack.c.l.s8.bf16 %v1149
        %v2755 = vunpack.c.l.s8.bf16 %v1150
        %v2756 = vunpack.c.l.s8.bf16 %v1151
        %v2757 = vunpack.c.l.s8.bf16 %v1152
        %v2758 = vunpack.c.h.s8.bf16 %v1148
        %v2759 = vunpack.c.h.s8.bf16 %v1149
        %v2760 = vunpack.c.h.s8.bf16 %v1150
        %v2761 = vunpack.c.h.s8.bf16 %v1151
        %v2762 = vunpack.c.h.s8.bf16 %v1152
        %v2763 = vunpack.c.l.s8.bf16 %v1153
        %v2764 = vunpack.c.l.s8.bf16 %v1154
        %v2765 = vunpack.c.l.s8.bf16 %v1155
        %v2766 = vunpack.c.l.s8.bf16 %v1156
        %v2767 = vunpack.c.l.s8.bf16 %v1157
        %v2768 = vunpack.c.h.s8.bf16 %v1153
        %v2769 = vunpack.c.h.s8.bf16 %v1154
        %v2770 = vunpack.c.h.s8.bf16 %v1155
        %v2771 = vunpack.c.h.s8.bf16 %v1156
        %v2772 = vunpack.c.h.s8.bf16 %v1157
        %v2773 = vunpack.c.l.s8.bf16 %v1158
        %v2774 = vunpack.c.l.s8.bf16 %v1159
        %v2775 = vunpack.c.l.s8.bf16 %v1160
        %v2776 = vunpack.c.l.s8.bf16 %v1161
        %v2777 = vunpack.c.l.s8.bf16 %v1162
        %v2778 = vunpack.c.h.s8.bf16 %v1158
        %v2779 = vunpack.c.h.s8.bf16 %v1159
        %v2780 = vunpack.c.h.s8.bf16 %v1160
        %v2781 = vunpack.c.h.s8.bf16 %v1161
        %v2782 = vunpack.c.h.s8.bf16 %v1162
        %v2783 = vunpack.c.l.s8.bf16 %v1163
        %v2784 = vunpack.c.l.s8.bf16 %v1164
        %v2785 = vunpack.c.l.s8.bf16 %v1165
        %v2786 = vunpack.c.l.s8.bf16 %v1166
        %v2787 = vunpack.c.l.s8.bf16 %v1167
        %v2788 = vunpack.c.h.s8.bf16 %v1163
        %v2789 = vunpack.c.h.s8.bf16 %v1164
        %v2790 = vunpack.c.h.s8.bf16 %v1165
        %v2791 = vunpack.c.h.s8.bf16 %v1166
        %v2792 = vunpack.c.h.s8.bf16 %v1167
        %v2793 = vunpack.c.l.s8.bf16 %v1168
        %v2794 = vunpack.c.l.s8.bf16 %v1169
        %v2795 = vunpack.c.l.s8.bf16 %v1170
        %v2796 = vunpack.c.l.s8.bf16 %v1171
        %v2797 = vunpack.c.l.s8.bf16 %v1172
        %v2798 = vunpack.c.h.s8.bf16 %v1168
        %v2799 = vunpack.c.h.s8.bf16 %v1169
        %v2800 = vunpack.c.h.s8.bf16 %v1170
        %v2801 = vunpack.c.h.s8.bf16 %v1171
        %v2802 = vunpack.c.h.s8.bf16 %v1172
        %v2803 = vunpack.c.l.s8.bf16 %v1173
        %v2804 = vunpack.c.l.s8.bf16 %v1174
        %v2805 = vunpack.c.l.s8.bf16 %v1175
        %v2806 = vunpack.c.l.s8.bf16 %v1176
        %v2807 = vunpack.c.l.s8.bf16 %v1177
        %v2808 = vunpack.c.h.s8.bf16 %v1173
        %v2809 = vunpack.c.h.s8.bf16 %v1174
        %v2810 = vunpack.c.h.s8.bf16 %v1175
        %v2811 = vunpack.c.h.s8.bf16 %v1176
        %v2812 = vunpack.c.h.s8.bf16 %v1177
        %v2813 = vunpack.c.l.s8.bf16 %v1178
        %v2814 = vunpack.c.l.s8.bf16 %v1179
        %v2815 = vunpack.c.l.s8.bf16 %v1180
        %v2816 = vunpack.c.l.s8.bf16 %v1181
        %v2817 = vunpack.c.l.s8.bf16 %v1182
        %v2818 = vunpack.c.h.s8.bf16 %v1178
        %v2819 = vunpack.c.h.s8.bf16 %v1179
        %v2820 = vunpack.c.h.s8.bf16 %v1180
        %v2821 = vunpack.c.h.s8.bf16 %v1181
        %v2822 = vunpack.c.h.s8.bf16 %v1182
        %v2823 = vunpack.c.l.s8.bf16 %v1183
        %v2824 = vunpack.c.l.s8.bf16 %v1184
        %v2825 = vunpack.c.l.s8.bf16 %v1185
        %v2826 = vunpack.c.l.s8.bf16 %v1186
        %v2827 = vunpack.c.l.s8.bf16 %v1187
        %v2828 = vunpack.c.h.s8.bf16 %v1183
        %v2829 = vunpack.c.h.s8.bf16 %v1184
        %v2830 = vunpack.c.h.s8.bf16 %v1185
        %v2831 = vunpack.c.h.s8.bf16 %v1186
        %v2832 = vunpack.c.h.s8.bf16 %v1187
        %v2833 = vunpack.c.l.s8.bf16 %v1188
        %v2834 = vunpack.c.l.s8.bf16 %v1189
        %v2835 = vunpack.c.l.s8.bf16 %v1190
        %v2836 = vunpack.c.l.s8.bf16 %v1191
        %v2837 = vunpack.c.l.s8.bf16 %v1192
        %v2838 = vunpack.c.h.s8.bf16 %v1188
        %v2839 = vunpack.c.h.s8.bf16 %v1189
        %v2840 = vunpack.c.h.s8.bf16 %v1190
        %v2841 = vunpack.c.h.s8.bf16 %v1191
        %v2842 = vunpack.c.h.s8.bf16 %v1192
        %v2843 = vunpack.c.l.s8.bf16 %v1193
        %v2844 = vunpack.c.l.s8.bf16 %v1194
        %v2845 = vunpack.c.l.s8.bf16 %v1195
        %v2846 = vunpack.c.l.s8.bf16 %v1196
        %v2847 = vunpack.c.l.s8.bf16 %v1197
        %v2848 = vunpack.c.h.s8.bf16 %v1193
        %v2849 = vunpack.c.h.s8.bf16 %v1194
        %v2850 = vunpack.c.h.s8.bf16 %v1195
        %v2851 = vunpack.c.h.s8.bf16 %v1196
        %v2852 = vunpack.c.h.s8.bf16 %v1197
        %v2853 = vunpack.c.l.s8.bf16 %v1198
        %v2854 = vunpack.c.l.s8.bf16 %v1199
        %v2855 = vunpack.c.l.s8.bf16 %v1200
        %v2856 = vunpack.c.l.s8.bf16 %v1201
        %v2857 = vunpack.c.l.s8.bf16 %v1202
        %v2858 = vunpack.c.h.s8.bf16 %v1198
        %v2859 = vunpack.c.h.s8.bf16 %v1199
        %v2860 = vunpack.c.h.s8.bf16 %v1200
        %v2861 = vunpack.c.h.s8.bf16 %v1201
        %v2862 = vunpack.c.h.s8.bf16 %v1202
        %v2863 = vunpack.c.l.s8.bf16 %v1203
        %v2864 = vunpack.c.l.s8.bf16 %v1204
        %v2865 = vunpack.c.l.s8.bf16 %v1205
        %v2866 = vunpack.c.l.s8.bf16 %v1206
        %v2867 = vunpack.c.l.s8.bf16 %v1207
        %v2868 = vunpack.c.h.s8.bf16 %v1203
        %v2869 = vunpack.c.h.s8.bf16 %v1204
        %v2870 = vunpack.c.h.s8.bf16 %v1205
        %v2871 = vunpack.c.h.s8.bf16 %v1206
        %v2872 = vunpack.c.h.s8.bf16 %v1207
        %v2873 = vunpack.c.l.s8.bf16 %v1208
        %v2874 = vunpack.c.l.s8.bf16 %v1209
        %v2875 = vunpack.c.l.s8.bf16 %v1210
        %v2876 = vunpack.c.l.s8.bf16 %v1211
        %v2877 = vunpack.c.l.s8.bf16 %v1212
        %v2878 = vunpack.c.h.s8.bf16 %v1208
        %v2879 = vunpack.c.h.s8.bf16 %v1209
        %v2880 = vunpack.c.h.s8.bf16 %v1210
        %v2881 = vunpack.c.h.s8.bf16 %v1211
        %v2882 = vunpack.c.h.s8.bf16 %v1212
        %v2883 = vunpack.c.l.s8.bf16 %v1213
        %v2884 = vunpack.c.l.s8.bf16 %v1214
        %v2885 = vunpack.c.l.s8.bf16 %v1215
        %v2886 = vunpack.c.l.s8.bf16 %v1216
        %v2887 = vunpack.c.l.s8.bf16 %v1217
        %v2888 = vunpack.c.h.s8.bf16 %v1213
        %v2889 = vunpack.c.h.s8.bf16 %v1214
        %v2890 = vunpack.c.h.s8.bf16 %v1215
        %v2891 = vunpack.c.h.s8.bf16 %v1216
        %v2892 = vunpack.c.h.s8.bf16 %v1217
        %v2893 = vunpack.c.l.s8.bf16 %v1218
        %v2894 = vunpack.c.l.s8.bf16 %v1219
        %v2895 = vunpack.c.l.s8.bf16 %v1220
        %v2896 = vunpack.c.l.s8.bf16 %v1221
        %v2897 = vunpack.c.l.s8.bf16 %v1222
        %v2898 = vunpack.c.h.s8.bf16 %v1218
        %v2899 = vunpack.c.h.s8.bf16 %v1219
        %v2900 = vunpack.c.h.s8.bf16 %v1220
        %v2901 = vunpack.c.h.s8.bf16 %v1221
        %v2902 = vunpack.c.h.s8.bf16 %v1222
        %v2903 = vunpack.c.l.s8.bf16 %v1223
        %v2904 = vunpack.c.l.s8.bf16 %v1224
        %v2905 = vunpack.c.l.s8.bf16 %v1225
        %v2906 = vunpack.c.l.s8.bf16 %v1226
        %v2907 = vunpack.c.l.s8.bf16 %v1227
        %v2908 = vunpack.c.h.s8.bf16 %v1223
        %v2909 = vunpack.c.h.s8.bf16 %v1224
        %v2910 = vunpack.c.h.s8.bf16 %v1225
        %v2911 = vunpack.c.h.s8.bf16 %v1226
        %v2912 = vunpack.c.h.s8.bf16 %v1227
        %v2913 = vunpack.c.l.s8.bf16 %v1228
        %v2914 = vunpack.c.l.s8.bf16 %v1229
        %v2915 = vunpack.c.l.s8.bf16 %v1230
        %v2916 = vunpack.c.l.s8.bf16 %v1231
        %v2917 = vunpack.c.l.s8.bf16 %v1232
        %v2918 = vunpack.c.h.s8.bf16 %v1228
        %v2919 = vunpack.c.h.s8.bf16 %v1229
        %v2920 = vunpack.c.h.s8.bf16 %v1230
        %v2921 = vunpack.c.h.s8.bf16 %v1231
        %v2922 = vunpack.c.h.s8.bf16 %v1232
        %v2923 = vunpack.c.l.s8.bf16 %v1233
        %v2924 = vunpack.c.l.s8.bf16 %v1234
        %v2925 = vunpack.c.l.s8.bf16 %v1235
        %v2926 = vunpack.c.l.s8.bf16 %v1236
        %v2927 = vunpack.c.l.s8.bf16 %v1237
        %v2928 = vunpack.c.h.s8.bf16 %v1233
        %v2929 = vunpack.c.h.s8.bf16 %v1234
        %v2930 = vunpack.c.h.s8.bf16 %v1235
        %v2931 = vunpack.c.h.s8.bf16 %v1236
        %v2932 = vunpack.c.h.s8.bf16 %v1237
        %v2933 = vunpack.c.l.s8.bf16 %v1238
        %v2934 = vunpack.c.l.s8.bf16 %v1239
        %v2935 = vunpack.c.l.s8.bf16 %v1240
        %v2936 = vunpack.c.l.s8.bf16 %v1241
        %v2937 = vunpack.c.l.s8.bf16 %v1242
        %v2938 = vunpack.c.h.s8.bf16 %v1238
        %v2939 = vunpack.c.h.s8.bf16 %v1239
        %v2940 = vunpack.c.h.s8.bf16 %v1240
        %v2941 = vunpack.c.h.s8.bf16 %v1241
        %v2942 = vunpack.c.h.s8.bf16 %v1242
        %v2943 = vunpack.c.l.s8.bf16 %v1243
        %v2944 = vunpack.c.l.s8.bf16 %v1244
        %v2945 = vunpack.c.l.s8.bf16 %v1245
        %v2946 = vunpack.c.l.s8.bf16 %v1246
        %v2947 = vunpack.c.l.s8.bf16 %v1247
        %v2948 = vunpack.c.h.s8.bf16 %v1243
        %v2949 = vunpack.c.h.s8.bf16 %v1244
        %v2950 = vunpack.c.h.s8.bf16 %v1245
        %v2951 = vunpack.c.h.s8.bf16 %v1246
        %v2952 = vunpack.c.h.s8.bf16 %v1247
        %v2953 = vunpack.c.l.s8.bf16 %v1248
        %v2954 = vunpack.c.l.s8.bf16 %v1249
        %v2955 = vunpack.c.l.s8.bf16 %v1250
        %v2956 = vunpack.c.l.s8.bf16 %v1251
        %v2957 = vunpack.c.l.s8.bf16 %v1252
        %v2958 = vunpack.c.h.s8.bf16 %v1248
        %v2959 = vunpack.c.h.s8.bf16 %v1249
        %v2960 = vunpack.c.h.s8.bf16 %v1250
        %v2961 = vunpack.c.h.s8.bf16 %v1251
        %v2962 = vunpack.c.h.s8.bf16 %v1252
        %v2963 = vunpack.c.l.s8.bf16 %v1253
        %v2964 = vunpack.c.l.s8.bf16 %v1254
        %v2965 = vunpack.c.l.s8.bf16 %v1255
        %v2966 = vunpack.c.l.s8.bf16 %v1256
        %v2967 = vunpack.c.l.s8.bf16 %v1257
        %v2968 = vunpack.c.h.s8.bf16 %v1253
        %v2969 = vunpack.c.h.s8.bf16 %v1254
        %v2970 = vunpack.c.h.s8.bf16 %v1255
        %v2971 = vunpack.c.h.s8.bf16 %v1256
        %v2972 = vunpack.c.h.s8.bf16 %v1257
        %v2973 = vunpack.c.l.s8.bf16 %v1258
        %v2974 = vunpack.c.l.s8.bf16 %v1259
        %v2975 = vunpack.c.l.s8.bf16 %v1260
        %v2976 = vunpack.c.l.s8.bf16 %v1261
        %v2977 = vunpack.c.l.s8.bf16 %v1262
        %v2978 = vunpack.c.h.s8.bf16 %v1258
        %v2979 = vunpack.c.h.s8.bf16 %v1259
        %v2980 = vunpack.c.h.s8.bf16 %v1260
        %v2981 = vunpack.c.h.s8.bf16 %v1261
        %v2982 = vunpack.c.h.s8.bf16 %v1262
        %v2983 = vunpack.c.l.s8.bf16 %v1263
        %v2984 = vunpack.c.l.s8.bf16 %v1264
        %v2985 = vunpack.c.l.s8.bf16 %v1265
        %v2986 = vunpack.c.l.s8.bf16 %v1266
        %v2987 = vunpack.c.l.s8.bf16 %v1267
        %v2988 = vunpack.c.h.s8.bf16 %v1263
        %v2989 = vunpack.c.h.s8.bf16 %v1264
        %v2990 = vunpack.c.h.s8.bf16 %v1265
        %v2991 = vunpack.c.h.s8.bf16 %v1266
        %v2992 = vunpack.c.h.s8.bf16 %v1267
        %v2993 = vunpack.c.l.s8.bf16 %v1268
        %v2994 = vunpack.c.l.s8.bf16 %v1269
        %v2995 = vunpack.c.l.s8.bf16 %v1270
        %v2996 = vunpack.c.l.s8.bf16 %v1271
        %v2997 = vunpack.c.l.s8.bf16 %v1272
        %v2998 = vunpack.c.h.s8.bf16 %v1268
        %v2999 = vunpack.c.h.s8.bf16 %v1269
        %v3000 = vunpack.c.h.s8.bf16 %v1270
        %v3001 = vunpack.c.h.s8.bf16 %v1271
        %v3002 = vunpack.c.h.s8.bf16 %v1272
        %v3003 = vunpack.c.l.s8.bf16 %v1273
        %v3004 = vunpack.c.l.s8.bf16 %v1274
        %v3005 = vunpack.c.l.s8.bf16 %v1275
        %v3006 = vunpack.c.l.s8.bf16 %v1276
        %v3007 = vunpack.c.l.s8.bf16 %v1277
        %v3008 = vunpack.c.h.s8.bf16 %v1273
        %v3009 = vunpack.c.h.s8.bf16 %v1274
        %v3010 = vunpack.c.h.s8.bf16 %v1275
        %v3011 = vunpack.c.h.s8.bf16 %v1276
        %v3012 = vunpack.c.h.s8.bf16 %v1277
        %v3013 = vunpack.c.l.s8.bf16 %v1278
        %v3014 = vunpack.c.l.s8.bf16 %v1279
        %v3015 = vunpack.c.l.s8.bf16 %v1280
        %v3016 = vunpack.c.l.s8.bf16 %v1281
        %v3017 = vunpack.c.l.s8.bf16 %v1282
        %v3018 = vunpack.c.h.s8.bf16 %v1278
        %v3019 = vunpack.c.h.s8.bf16 %v1279
        %v3020 = vunpack.c.h.s8.bf16 %v1280
        %v3021 = vunpack.c.h.s8.bf16 %v1281
        %v3022 = vunpack.c.h.s8.bf16 %v1282
        %v3023 = vunpack.c.l.s8.bf16 %v1283
        %v3024 = vunpack.c.l.s8.bf16 %v1284
        %v3025 = vunpack.c.l.s8.bf16 %v1285
        %v3026 = vunpack.c.l.s8.bf16 %v1286
        %v3027 = vunpack.c.l.s8.bf16 %v1287
        %v3028 = vunpack.c.h.s8.bf16 %v1283
        %v3029 = vunpack.c.h.s8.bf16 %v1284
        %v3030 = vunpack.c.h.s8.bf16 %v1285
        %v3031 = vunpack.c.h.s8.bf16 %v1286
        %v3032 = vunpack.c.h.s8.bf16 %v1287
        %v3033 = vunpack.c.l.s8.bf16 %v1288
        %v3034 = vunpack.c.l.s8.bf16 %v1289
        %v3035 = vunpack.c.l.s8.bf16 %v1290
        %v3036 = vunpack.c.l.s8.bf16 %v1291
        %v3037 = vunpack.c.l.s8.bf16 %v1292
        %v3038 = vunpack.c.h.s8.bf16 %v1288
        %v3039 = vunpack.c.h.s8.bf16 %v1289
        %v3040 = vunpack.c.h.s8.bf16 %v1290
        %v3041 = vunpack.c.h.s8.bf16 %v1291
        %v3042 = vunpack.c.h.s8.bf16 %v1292
        %v3043 = vunpack.c.l.s8.bf16 %v1293
        %v3044 = vunpack.c.l.s8.bf16 %v1294
        %v3045 = vunpack.c.l.s8.bf16 %v1295
        %v3046 = vunpack.c.l.s8.bf16 %v1296
        %v3047 = vunpack.c.l.s8.bf16 %v1297
        %v3048 = vunpack.c.h.s8.bf16 %v1293
        %v3049 = vunpack.c.h.s8.bf16 %v1294
        %v3050 = vunpack.c.h.s8.bf16 %v1295
        %v3051 = vunpack.c.h.s8.bf16 %v1296
        %v3052 = vunpack.c.h.s8.bf16 %v1297
        %v3053 = vunpack.c.l.s8.bf16 %v1298
        %v3054 = vunpack.c.l.s8.bf16 %v1299
        %v3055 = vunpack.c.l.s8.bf16 %v1300
        %v3056 = vunpack.c.l.s8.bf16 %v1301
        %v3057 = vunpack.c.l.s8.bf16 %v1302
        %v3058 = vunpack.c.h.s8.bf16 %v1298
        %v3059 = vunpack.c.h.s8.bf16 %v1299
        %v3060 = vunpack.c.h.s8.bf16 %v1300
        %v3061 = vunpack.c.h.s8.bf16 %v1301
        %v3062 = vunpack.c.h.s8.bf16 %v1302
        %v3063 = vunpack.c.l.s8.bf16 %v1303
        %v3064 = vunpack.c.l.s8.bf16 %v1304
        %v3065 = vunpack.c.l.s8.bf16 %v1305
        %v3066 = vunpack.c.l.s8.bf16 %v1306
        %v3067 = vunpack.c.l.s8.bf16 %v1307
        %v3068 = vunpack.c.h.s8.bf16 %v1303
        %v3069 = vunpack.c.h.s8.bf16 %v1304
        %v3070 = vunpack.c.h.s8.bf16 %v1305
        %v3071 = vunpack.c.h.s8.bf16 %v1306
        %v3072 = vunpack.c.h.s8.bf16 %v1307
        %v3073 = vunpack.c.l.s8.bf16 %v1308
        %v3074 = vunpack.c.l.s8.bf16 %v1309
        %v3075 = vunpack.c.l.s8.bf16 %v1310
        %v3076 = vunpack.c.l.s8.bf16 %v1311
        %v3077 = vunpack.c.l.s8.bf16 %v1312
        %v3078 = vunpack.c.h.s8.bf16 %v1308
        %v3079 = vunpack.c.h.s8.bf16 %v1309
        %v3080 = vunpack.c.h.s8.bf16 %v1310
        %v3081 = vunpack.c.h.s8.bf16 %v1311
        %v3082 = vunpack.c.h.s8.bf16 %v1312
        %v3083 = vunpack.c.l.s8.bf16 %v1313
        %v3084 = vunpack.c.l.s8.bf16 %v1314
        %v3085 = vunpack.c.l.s8.bf16 %v1315
        %v3086 = vunpack.c.l.s8.bf16 %v1316
        %v3087 = vunpack.c.l.s8.bf16 %v1317
        %v3088 = vunpack.c.h.s8.bf16 %v1313
        %v3089 = vunpack.c.h.s8.bf16 %v1314
        %v3090 = vunpack.c.h.s8.bf16 %v1315
        %v3091 = vunpack.c.h.s8.bf16 %v1316
        %v3092 = vunpack.c.h.s8.bf16 %v1317
        %v3093 = vunpack.c.l.s8.bf16 %v1318
        %v3094 = vunpack.c.l.s8.bf16 %v1319
        %v3095 = vunpack.c.l.s8.bf16 %v1320
        %v3096 = vunpack.c.l.s8.bf16 %v1321
        %v3097 = vunpack.c.l.s8.bf16 %v1322
        %v3098 = vunpack.c.h.s8.bf16 %v1318
        %v3099 = vunpack.c.h.s8.bf16 %v1319
        %v3100 = vunpack.c.h.s8.bf16 %v1320
        %v3101 = vunpack.c.h.s8.bf16 %v1321
        %v3102 = vunpack.c.h.s8.bf16 %v1322
        %v3103 = vunpack.c.l.s8.bf16 %v1323
        %v3104 = vunpack.c.l.s8.bf16 %v1324
        %v3105 = vunpack.c.l.s8.bf16 %v1325
        %v3106 = vunpack.c.l.s8.bf16 %v1326
        %v3107 = vunpack.c.l.s8.bf16 %v1327
        %v3108 = vunpack.c.h.s8.bf16 %v1323
        %v3109 = vunpack.c.h.s8.bf16 %v1324
        %v3110 = vunpack.c.h.s8.bf16 %v1325
        %v3111 = vunpack.c.h.s8.bf16 %v1326
        %v3112 = vunpack.c.h.s8.bf16 %v1327
        %v3113 = vunpack.c.l.s8.bf16 %v1328
        %v3114 = vunpack.c.l.s8.bf16 %v1329
        %v3115 = vunpack.c.l.s8.bf16 %v1330
        %v3116 = vunpack.c.l.s8.bf16 %v1331
        %v3117 = vunpack.c.l.s8.bf16 %v1332
        %v3118 = vunpack.c.h.s8.bf16 %v1328
        %v3119 = vunpack.c.h.s8.bf16 %v1329
        %v3120 = vunpack.c.h.s8.bf16 %v1330
        %v3121 = vunpack.c.h.s8.bf16 %v1331
        %v3122 = vunpack.c.h.s8.bf16 %v1332
        %v3123 = vunpack.c.l.s8.bf16 %v1333
        %v3124 = vunpack.c.l.s8.bf16 %v1334
        %v3125 = vunpack.c.l.s8.bf16 %v1335
        %v3126 = vunpack.c.l.s8.bf16 %v1336
        %v3127 = vunpack.c.l.s8.bf16 %v1337
        %v3128 = vunpack.c.h.s8.bf16 %v1333
        %v3129 = vunpack.c.h.s8.bf16 %v1334
        %v3130 = vunpack.c.h.s8.bf16 %v1335
        %v3131 = vunpack.c.h.s8.bf16 %v1336
        %v3132 = vunpack.c.h.s8.bf16 %v1337
        %v3133 = vunpack.c.l.s8.bf16 %v1338
        %v3134 = vunpack.c.l.s8.bf16 %v1339
        %v3135 = vunpack.c.l.s8.bf16 %v1340
        %v3136 = vunpack.c.l.s8.bf16 %v1341
        %v3137 = vunpack.c.l.s8.bf16 %v1342
        %v3138 = vunpack.c.h.s8.bf16 %v1338
        %v3139 = vunpack.c.h.s8.bf16 %v1339
        %v3140 = vunpack.c.h.s8.bf16 %v1340
        %v3141 = vunpack.c.h.s8.bf16 %v1341
        %v3142 = vunpack.c.h.s8.bf16 %v1342
        %v3143 = vunpack.c.l.s8.bf16 %v1343
        %v3144 = vunpack.c.l.s8.bf16 %v1344
        %v3145 = vunpack.c.l.s8.bf16 %v1345
        %v3146 = vunpack.c.l.s8.bf16 %v1346
        %v3147 = vunpack.c.l.s8.bf16 %v1347
        %v3148 = vunpack.c.h.s8.bf16 %v1343
        %v3149 = vunpack.c.h.s8.bf16 %v1344
        %v3150 = vunpack.c.h.s8.bf16 %v1345
        %v3151 = vunpack.c.h.s8.bf16 %v1346
        %v3152 = vunpack.c.h.s8.bf16 %v1347
        %v3153 = vunpack.c.l.s8.bf16 %v1348
        %v3154 = vunpack.c.l.s8.bf16 %v1349
        %v3155 = vunpack.c.l.s8.bf16 %v1350
        %v3156 = vunpack.c.l.s8.bf16 %v1351
        %v3157 = vunpack.c.l.s8.bf16 %v1352
        %v3158 = vunpack.c.h.s8.bf16 %v1348
        %v3159 = vunpack.c.h.s8.bf16 %v1349
        %v3160 = vunpack.c.h.s8.bf16 %v1350
        %v3161 = vunpack.c.h.s8.bf16 %v1351
        %v3162 = vunpack.c.h.s8.bf16 %v1352
        %v3163 = vunpack.c.l.s8.bf16 %v1353
        %v3164 = vunpack.c.l.s8.bf16 %v1354
        %v3165 = vunpack.c.l.s8.bf16 %v1355
        %v3166 = vunpack.c.l.s8.bf16 %v1356
        %v3167 = vunpack.c.l.s8.bf16 %v1357
        %v3168 = vunpack.c.h.s8.bf16 %v1353
        %v3169 = vunpack.c.h.s8.bf16 %v1354
        %v3170 = vunpack.c.h.s8.bf16 %v1355
        %v3171 = vunpack.c.h.s8.bf16 %v1356
        %v3172 = vunpack.c.h.s8.bf16 %v1357
        %v3173 = vunpack.c.l.s8.bf16 %v1358
        %v3174 = vunpack.c.l.s8.bf16 %v1359
        %v3175 = vunpack.c.l.s8.bf16 %v1360
        %v3176 = vunpack.c.l.s8.bf16 %v1361
        %v3177 = vunpack.c.l.s8.bf16 %v1362
        %v3178 = vunpack.c.h.s8.bf16 %v1358
        %v3179 = vunpack.c.h.s8.bf16 %v1359
        %v3180 = vunpack.c.h.s8.bf16 %v1360
        %v3181 = vunpack.c.h.s8.bf16 %v1361
        %v3182 = vunpack.c.h.s8.bf16 %v1362
        %v3183 = vunpack.c.l.s8.bf16 %v1363
        %v3184 = vunpack.c.l.s8.bf16 %v1364
        %v3185 = vunpack.c.l.s8.bf16 %v1365
        %v3186 = vunpack.c.l.s8.bf16 %v1366
        %v3187 = vunpack.c.l.s8.bf16 %v1367
        %v3188 = vunpack.c.h.s8.bf16 %v1363
        %v3189 = vunpack.c.h.s8.bf16 %v1364
        %v3190 = vunpack.c.h.s8.bf16 %v1365
        %v3191 = vunpack.c.h.s8.bf16 %v1366
        %v3192 = vunpack.c.h.s8.bf16 %v1367
        %v3193 = vunpack.c.l.s8.bf16 %v1368
        %v3194 = vunpack.c.l.s8.bf16 %v1369
        %v3195 = vunpack.c.l.s8.bf16 %v1370
        %v3196 = vunpack.c.l.s8.bf16 %v1371
        %v3197 = vunpack.c.l.s8.bf16 %v1372
        %v3198 = vunpack.c.h.s8.bf16 %v1368
        %v3199 = vunpack.c.h.s8.bf16 %v1369
        %v3200 = vunpack.c.h.s8.bf16 %v1370
        %v3201 = vunpack.c.h.s8.bf16 %v1371
        %v3202 = vunpack.c.h.s8.bf16 %v1372
        %v3203 = vunpack.c.l.s8.bf16 %v1373
        %v3204 = vunpack.c.l.s8.bf16 %v1374
        %v3205 = vunpack.c.l.s8.bf16 %v1375
        %v3206 = vunpack.c.l.s8.bf16 %v1376
        %v3207 = vunpack.c.l.s8.bf16 %v1377
        %v3208 = vunpack.c.h.s8.bf16 %v1373
        %v3209 = vunpack.c.h.s8.bf16 %v1374
        %v3210 = vunpack.c.h.s8.bf16 %v1375
        %v3211 = vunpack.c.h.s8.bf16 %v1376
        %v3212 = vunpack.c.h.s8.bf16 %v1377
        %v3213 = vunpack.c.l.s8.bf16 %v1378
        %v3214 = vunpack.c.l.s8.bf16 %v1379
        %v3215 = vunpack.c.l.s8.bf16 %v1380
        %v3216 = vunpack.c.l.s8.bf16 %v1381
        %v3217 = vunpack.c.l.s8.bf16 %v1382
        %v3218 = vunpack.c.h.s8.bf16 %v1378
        %v3219 = vunpack.c.h.s8.bf16 %v1379
        %v3220 = vunpack.c.h.s8.bf16 %v1380
        %v3221 = vunpack.c.h.s8.bf16 %v1381
        %v3222 = vunpack.c.h.s8.bf16 %v1382
        %v3223 = vunpack.c.l.s8.bf16 %v1383
        %v3224 = vunpack.c.l.s8.bf16 %v1384
        %v3225 = vunpack.c.l.s8.bf16 %v1385
        %v3226 = vunpack.c.l.s8.bf16 %v1386
        %v3227 = vunpack.c.l.s8.bf16 %v1387
        %v3228 = vunpack.c.h.s8.bf16 %v1383
        %v3229 = vunpack.c.h.s8.bf16 %v1384
        %v3230 = vunpack.c.h.s8.bf16 %v1385
        %v3231 = vunpack.c.h.s8.bf16 %v1386
        %v3232 = vunpack.c.h.s8.bf16 %v1387
        %v3233 = vunpack.c.l.s8.bf16 %v1388
        %v3234 = vunpack.c.l.s8.bf16 %v1389
        %v3235 = vunpack.c.l.s8.bf16 %v1390
        %v3236 = vunpack.c.l.s8.bf16 %v1391
        %v3237 = vunpack.c.l.s8.bf16 %v1392
        %v3238 = vunpack.c.h.s8.bf16 %v1388
        %v3239 = vunpack.c.h.s8.bf16 %v1389
        %v3240 = vunpack.c.h.s8.bf16 %v1390
        %v3241 = vunpack.c.h.s8.bf16 %v1391
        %v3242 = vunpack.c.h.s8.bf16 %v1392
        %v3243 = vunpack.c.l.s8.bf16 %v1393
        %v3244 = vunpack.c.l.s8.bf16 %v1394
        %v3245 = vunpack.c.l.s8.bf16 %v1395
        %v3246 = vunpack.c.l.s8.bf16 %v1396
        %v3247 = vunpack.c.l.s8.bf16 %v1397
        %v3248 = vunpack.c.h.s8.bf16 %v1393
        %v3249 = vunpack.c.h.s8.bf16 %v1394
        %v3250 = vunpack.c.h.s8.bf16 %v1395
        %v3251 = vunpack.c.h.s8.bf16 %v1396
        %v3252 = vunpack.c.h.s8.bf16 %v1397
        %v3253 = vunpack.c.l.s8.bf16 %v1398
        %v3254 = vunpack.c.l.s8.bf16 %v1399
        %v3255 = vunpack.c.l.s8.bf16 %v1400
        %v3256 = vunpack.c.l.s8.bf16 %v1401
        %v3257 = vunpack.c.l.s8.bf16 %v1402
        %v3258 = vunpack.c.h.s8.bf16 %v1398
        %v3259 = vunpack.c.h.s8.bf16 %v1399
        %v3260 = vunpack.c.h.s8.bf16 %v1400
        %v3261 = vunpack.c.h.s8.bf16 %v1401
        %v3262 = vunpack.c.h.s8.bf16 %v1402
        %v3263 = vunpack.c.l.s8.bf16 %v1403
        %v3264 = vunpack.c.l.s8.bf16 %v1404
        %v3265 = vunpack.c.l.s8.bf16 %v1405
        %v3266 = vunpack.c.l.s8.bf16 %v1406
        %v3267 = vunpack.c.l.s8.bf16 %v1407
        %v3268 = vunpack.c.h.s8.bf16 %v1403
        %v3269 = vunpack.c.h.s8.bf16 %v1404
        %v3270 = vunpack.c.h.s8.bf16 %v1405
        %v3271 = vunpack.c.h.s8.bf16 %v1406
        %v3272 = vunpack.c.h.s8.bf16 %v1407
        %v3273 = vunpack.c.l.s8.bf16 %v1408
        %v3274 = vunpack.c.l.s8.bf16 %v1409
        %v3275 = vunpack.c.l.s8.bf16 %v1410
        %v3276 = vunpack.c.l.s8.bf16 %v1411
        %v3277 = vunpack.c.l.s8.bf16 %v1412
        %v3278 = vunpack.c.h.s8.bf16 %v1408
        %v3279 = vunpack.c.h.s8.bf16 %v1409
        %v3280 = vunpack.c.h.s8.bf16 %v1410
        %v3281 = vunpack.c.h.s8.bf16 %v1411
        %v3282 = vunpack.c.h.s8.bf16 %v1412
        %v3283 = vunpack.c.l.s8.bf16 %v1413
        %v3284 = vunpack.c.l.s8.bf16 %v1414
        %v3285 = vunpack.c.l.s8.bf16 %v1415
        %v3286 = vunpack.c.l.s8.bf16 %v1416
        %v3287 = vunpack.c.l.s8.bf16 %v1417
        %v3288 = vunpack.c.h.s8.bf16 %v1413
        %v3289 = vunpack.c.h.s8.bf16 %v1414
        %v3290 = vunpack.c.h.s8.bf16 %v1415
        %v3291 = vunpack.c.h.s8.bf16 %v1416
        %v3292 = vunpack.c.h.s8.bf16 %v1417
        %v3293 = vunpack.c.l.s8.bf16 %v1418
        %v3294 = vunpack.c.l.s8.bf16 %v1419
        %v3295 = vunpack.c.l.s8.bf16 %v1420
        %v3296 = vunpack.c.l.s8.bf16 %v1421
        %v3297 = vunpack.c.l.s8.bf16 %v1422
        %v3298 = vunpack.c.h.s8.bf16 %v1418
        %v3299 = vunpack.c.h.s8.bf16 %v1419
        %v3300 = vunpack.c.h.s8.bf16 %v1420
        %v3301 = vunpack.c.h.s8.bf16 %v1421
        %v3302 = vunpack.c.h.s8.bf16 %v1422
        %v3303 = vunpack.c.l.s8.bf16 %v1423
        %v3304 = vunpack.c.l.s8.bf16 %v1424
        %v3305 = vunpack.c.l.s8.bf16 %v1425
        %v3306 = vunpack.c.l.s8.bf16 %v1426
        %v3307 = vunpack.c.l.s8.bf16 %v1427
        %v3308 = vunpack.c.h.s8.bf16 %v1423
        %v3309 = vunpack.c.h.s8.bf16 %v1424
        %v3310 = vunpack.c.h.s8.bf16 %v1425
        %v3311 = vunpack.c.h.s8.bf16 %v1426
        %v3312 = vunpack.c.h.s8.bf16 %v1427
        %v3313 = vunpack.c.l.s8.bf16 %v1428
        %v3314 = vunpack.c.l.s8.bf16 %v1429
        %v3315 = vunpack.c.l.s8.bf16 %v1430
        %v3316 = vunpack.c.l.s8.bf16 %v1431
        %v3317 = vunpack.c.l.s8.bf16 %v1432
        %v3318 = vunpack.c.h.s8.bf16 %v1428
        %v3319 = vunpack.c.h.s8.bf16 %v1429
        %v3320 = vunpack.c.h.s8.bf16 %v1430
        %v3321 = vunpack.c.h.s8.bf16 %v1431
        %v3322 = vunpack.c.h.s8.bf16 %v1432
        %v3323 = vunpack.c.l.s8.bf16 %v1433
        %v3324 = vunpack.c.l.s8.bf16 %v1434
        %v3325 = vunpack.c.l.s8.bf16 %v1435
        %v3326 = vunpack.c.l.s8.bf16 %v1436
        %v3327 = vunpack.c.l.s8.bf16 %v1437
        %v3328 = vunpack.c.h.s8.bf16 %v1433
        %v3329 = vunpack.c.h.s8.bf16 %v1434
        %v3330 = vunpack.c.h.s8.bf16 %v1435
        %v3331 = vunpack.c.h.s8.bf16 %v1436
        %v3332 = vunpack.c.h.s8.bf16 %v1437
        %v3333 = vunpack.c.l.s8.bf16 %v1438
        %v3334 = vunpack.c.l.s8.bf16 %v1439
        %v3335 = vunpack.c.l.s8.bf16 %v1440
        %v3336 = vunpack.c.l.s8.bf16 %v1441
        %v3337 = vunpack.c.l.s8.bf16 %v1442
        %v3338 = vunpack.c.h.s8.bf16 %v1438
        %v3339 = vunpack.c.h.s8.bf16 %v1439
        %v3340 = vunpack.c.h.s8.bf16 %v1440
        %v3341 = vunpack.c.h.s8.bf16 %v1441
        %v3342 = vunpack.c.h.s8.bf16 %v1442
        %v3343 = vunpack.c.l.s8.bf16 %v1443
        %v3344 = vunpack.c.l.s8.bf16 %v1444
        %v3345 = vunpack.c.l.s8.bf16 %v1445
        %v3346 = vunpack.c.l.s8.bf16 %v1446
        %v3347 = vunpack.c.l.s8.bf16 %v1447
        %v3348 = vunpack.c.h.s8.bf16 %v1443
        %v3349 = vunpack.c.h.s8.bf16 %v1444
        %v3350 = vunpack.c.h.s8.bf16 %v1445
        %v3351 = vunpack.c.h.s8.bf16 %v1446
        %v3352 = vunpack.c.h.s8.bf16 %v1447
        %v3353 = vunpack.c.l.s8.bf16 %v1448
        %v3354 = vunpack.c.l.s8.bf16 %v1449
        %v3355 = vunpack.c.l.s8.bf16 %v1450
        %v3356 = vunpack.c.l.s8.bf16 %v1451
        %v3357 = vunpack.c.l.s8.bf16 %v1452
        %v3358 = vunpack.c.h.s8.bf16 %v1448
        %v3359 = vunpack.c.h.s8.bf16 %v1449
        %v3360 = vunpack.c.h.s8.bf16 %v1450
        %v3361 = vunpack.c.h.s8.bf16 %v1451
        %v3362 = vunpack.c.h.s8.bf16 %v1452
        %v3363 = vunpack.c.l.s8.bf16 %v1453
        %v3364 = vunpack.c.l.s8.bf16 %v1454
        %v3365 = vunpack.c.l.s8.bf16 %v1455
        %v3366 = vunpack.c.l.s8.bf16 %v1456
        %v3367 = vunpack.c.l.s8.bf16 %v1457
        %v3368 = vunpack.c.h.s8.bf16 %v1453
        %v3369 = vunpack.c.h.s8.bf16 %v1454
        %v3370 = vunpack.c.h.s8.bf16 %v1455
        %v3371 = vunpack.c.h.s8.bf16 %v1456
        %v3372 = vunpack.c.h.s8.bf16 %v1457
        %v3373 = vunpack.c.l.s8.bf16 %v1458
        %v3374 = vunpack.c.l.s8.bf16 %v1459
        %v3375 = vunpack.c.l.s8.bf16 %v1460
        %v3376 = vunpack.c.l.s8.bf16 %v1461
        %v3377 = vunpack.c.l.s8.bf16 %v1462
        %v3378 = vunpack.c.h.s8.bf16 %v1458
        %v3379 = vunpack.c.h.s8.bf16 %v1459
        %v3380 = vunpack.c.h.s8.bf16 %v1460
        %v3381 = vunpack.c.h.s8.bf16 %v1461
        %v3382 = vunpack.c.h.s8.bf16 %v1462
        %v3383 = vunpack.c.l.s8.bf16 %v1463
        %v3384 = vunpack.c.l.s8.bf16 %v1464
        %v3385 = vunpack.c.l.s8.bf16 %v1465
        %v3386 = vunpack.c.l.s8.bf16 %v1466
        %v3387 = vunpack.c.l.s8.bf16 %v1467
        %v3388 = vunpack.c.h.s8.bf16 %v1463
        %v3389 = vunpack.c.h.s8.bf16 %v1464
        %v3390 = vunpack.c.h.s8.bf16 %v1465
        %v3391 = vunpack.c.h.s8.bf16 %v1466
        %v3392 = vunpack.c.h.s8.bf16 %v1467
        %v3393 = vunpack.c.l.s8.bf16 %v1468
        %v3394 = vunpack.c.l.s8.bf16 %v1469
        %v3395 = vunpack.c.l.s8.bf16 %v1470
        %v3396 = vunpack.c.l.s8.bf16 %v1471
        %v3397 = vunpack.c.l.s8.bf16 %v1472
        %v3398 = vunpack.c.h.s8.bf16 %v1468
        %v3399 = vunpack.c.h.s8.bf16 %v1469
        %v3400 = vunpack.c.h.s8.bf16 %v1470
        %v3401 = vunpack.c.h.s8.bf16 %v1471
        %v3402 = vunpack.c.h.s8.bf16 %v1472
        %v3403 = vunpack.c.l.s8.bf16 %v1473
        %v3404 = vunpack.c.l.s8.bf16 %v1474
        %v3405 = vunpack.c.l.s8.bf16 %v1475
        %v3406 = vunpack.c.l.s8.bf16 %v1476
        %v3407 = vunpack.c.l.s8.bf16 %v1477
        %v3408 = vunpack.c.h.s8.bf16 %v1473
        %v3409 = vunpack.c.h.s8.bf16 %v1474
        %v3410 = vunpack.c.h.s8.bf16 %v1475
        %v3411 = vunpack.c.h.s8.bf16 %v1476
        %v3412 = vunpack.c.h.s8.bf16 %v1477
        %v3413 = vunpack.c.l.s8.bf16 %v1478
        %v3414 = vunpack.c.l.s8.bf16 %v1479
        %v3415 = vunpack.c.l.s8.bf16 %v1480
        %v3416 = vunpack.c.l.s8.bf16 %v1481
        %v3417 = vunpack.c.l.s8.bf16 %v1482
        %v3418 = vunpack.c.h.s8.bf16 %v1478
        %v3419 = vunpack.c.h.s8.bf16 %v1479
        %v3420 = vunpack.c.h.s8.bf16 %v1480
        %v3421 = vunpack.c.h.s8.bf16 %v1481
        %v3422 = vunpack.c.h.s8.bf16 %v1482
        %v3423 = vunpack.c.l.s8.bf16 %v1483
        %v3424 = vunpack.c.l.s8.bf16 %v1484
        %v3425 = vunpack.c.l.s8.bf16 %v1485
        %v3426 = vunpack.c.l.s8.bf16 %v1486
        %v3427 = vunpack.c.l.s8.bf16 %v1487
        %v3428 = vunpack.c.h.s8.bf16 %v1483
        %v3429 = vunpack.c.h.s8.bf16 %v1484
        %v3430 = vunpack.c.h.s8.bf16 %v1485
        %v3431 = vunpack.c.h.s8.bf16 %v1486
        %v3432 = vunpack.c.h.s8.bf16 %v1487
        %v3433 = vunpack.c.l.s8.bf16 %v1488
        %v3434 = vunpack.c.l.s8.bf16 %v1489
        %v3435 = vunpack.c.l.s8.bf16 %v1490
        %v3436 = vunpack.c.l.s8.bf16 %v1491
        %v3437 = vunpack.c.l.s8.bf16 %v1492
        %v3438 = vunpack.c.h.s8.bf16 %v1488
        %v3439 = vunpack.c.h.s8.bf16 %v1489
        %v3440 = vunpack.c.h.s8.bf16 %v1490
        %v3441 = vunpack.c.h.s8.bf16 %v1491
        %v3442 = vunpack.c.h.s8.bf16 %v1492
        %v3443 = vunpack.c.l.s8.bf16 %v1493
        %v3444 = vunpack.c.l.s8.bf16 %v1494
        %v3445 = vunpack.c.l.s8.bf16 %v1495
        %v3446 = vunpack.c.l.s8.bf16 %v1496
        %v3447 = vunpack.c.l.s8.bf16 %v1497
        %v3448 = vunpack.c.h.s8.bf16 %v1493
        %v3449 = vunpack.c.h.s8.bf16 %v1494
        %v3450 = vunpack.c.h.s8.bf16 %v1495
        %v3451 = vunpack.c.h.s8.bf16 %v1496
        %v3452 = vunpack.c.h.s8.bf16 %v1497
        %v3453 = vunpack.c.l.s8.bf16 %v1498
        %v3454 = vunpack.c.l.s8.bf16 %v1499
        %v3455 = vunpack.c.l.s8.bf16 %v1500
        %v3456 = vunpack.c.l.s8.bf16 %v1501
        %v3457 = vunpack.c.l.s8.bf16 %v1502
        %v3458 = vunpack.c.h.s8.bf16 %v1498
        %v3459 = vunpack.c.h.s8.bf16 %v1499
        %v3460 = vunpack.c.h.s8.bf16 %v1500
        %v3461 = vunpack.c.h.s8.bf16 %v1501
        %v3462 = vunpack.c.h.s8.bf16 %v1502
        %v3513 = vunpack.c.l.b16 %v473
        %v3514 = vunpack.c.h.b16 %v473
        %v3515 = vunpack.c.l.b16 %v474
        %v3516 = vunpack.c.h.b16 %v474
        %v3517 = vunpack.c.l.b16 %v475
        %v3518 = vunpack.c.h.b16 %v475
        %v3519 = vunpack.c.l.b16 %v476
        %v3520 = vunpack.c.h.b16 %v476
        %v3521 = vunpack.c.l.b16 %v477
        %v3522 = vunpack.c.h.b16 %v477
        %v3523 = vunpack.c.l.b16 %v478
        %v3524 = vunpack.c.h.b16 %v478
        %v3525 = vunpack.c.l.b16 %v479
        %v3526 = vunpack.c.h.b16 %v479
        %v3527 = vunpack.c.l.b16 %v480
        %v3528 = vunpack.c.h.b16 %v480
        %v3529 = vunpack.c.l.b16 %v481
        %v3530 = vunpack.c.h.b16 %v481
        %v3531 = vunpack.c.l.b16 %v482
        %v3532 = vunpack.c.h.b16 %v482
        %v3533 = vunpack.c.l.b16 %v483
        %v3534 = vunpack.c.h.b16 %v483
        %v3535 = vunpack.c.l.b16 %v484
        %v3536 = vunpack.c.h.b16 %v484
        %v3537 = vunpack.c.l.b16 %v485
        %v3538 = vunpack.c.h.b16 %v485
        %v3539 = vunpack.c.l.b16 %v486
        %v3540 = vunpack.c.h.b16 %v486
        %v3541 = vunpack.c.l.b16 %v487
        %v3542 = vunpack.c.h.b16 %v487
        %v3543 = vunpack.c.l.b16 %v488
        %v3544 = vunpack.c.h.b16 %v488
        %v3545 = vunpack.c.l.b16 %v489
        %v3546 = vunpack.c.h.b16 %v489
        %v3547 = vunpack.c.l.b16 %v490
        %v3548 = vunpack.c.h.b16 %v490
        %v3549 = vunpack.c.l.b16 %v491
        %v3550 = vunpack.c.h.b16 %v491
        %v3551 = vunpack.c.l.b16 %v492
        %v3552 = vunpack.c.h.b16 %v492
        %v3553 = vunpack.c.l.b16 %v493
        %v3554 = vunpack.c.h.b16 %v493
        %v3555 = vunpack.c.l.b16 %v494
        %v3556 = vunpack.c.h.b16 %v494
        %v3557 = vunpack.c.l.b16 %v495
        %v3558 = vunpack.c.h.b16 %v495
        %v3559 = vunpack.c.l.b16 %v496
        %v3560 = vunpack.c.h.b16 %v496
        %v3561 = vunpack.c.l.b16 %v497
        %v3562 = vunpack.c.l.b16 %v498
        %v3563 = vunpack.c.h.b16 %v498
        %v3564 = vunpack.c.l.b16 %v499
        %v3565 = vunpack.c.h.b16 %v499
        %v3566 = vunpack.c.l.b16 %v500
        %v3567 = vunpack.c.h.b16 %v500
        %v3568 = vunpack.c.l.b16 %v501
        %v3569 = vunpack.c.h.b16 %v501
        %v3570 = vunpack.c.l.b16 %v502
        %v3571 = vunpack.c.h.b16 %v502
        %v3572 = vunpack.c.l.b16 %v503
        %v3573 = vunpack.c.h.b16 %v503
        %v3574 = vunpack.c.l.b16 %v504
        %v3575 = vunpack.c.h.b16 %v504
        %v3576 = vunpack.c.l.b16 %v505
        %v3577 = vunpack.c.h.b16 %v505
        %v3578 = vunpack.c.l.b16 %v506
        %v3579 = vunpack.c.h.b16 %v506
        %v3580 = vunpack.c.l.b16 %v507
        %v3581 = vunpack.c.h.b16 %v507
        %v3582 = vunpack.c.l.b16 %v508
        %v3583 = vunpack.c.h.b16 %v508
        %v3584 = vunpack.c.l.b16 %v509
        %v3585 = vunpack.c.h.b16 %v509
        %v3586 = vunpack.c.l.b16 %v510
        %v3587 = vunpack.c.h.b16 %v510
        %v3588 = vunpack.c.l.b16 %v511
        %v3589 = vunpack.c.h.b16 %v511
        %v3590 = vunpack.c.l.b16 %v512
        %v3591 = vunpack.c.h.b16 %v512
        %v3592 = vunpack.c.l.b16 %v513
        %v3593 = vunpack.c.h.b16 %v513
        %v3594 = vunpack.c.l.b16 %v514
        %v3595 = vunpack.c.h.b16 %v514
        %v3596 = vunpack.c.l.b16 %v515
        %v3597 = vunpack.c.h.b16 %v515
        %v3598 = vunpack.c.l.b16 %v516
        %v3599 = vunpack.c.h.b16 %v516
        %v3600 = vunpack.c.l.b16 %v517
        %v3601 = vunpack.c.h.b16 %v517
        %v3602 = vunpack.c.l.b16 %v518
        %v3603 = vunpack.c.h.b16 %v518
        %v3604 = vunpack.c.l.b16 %v519
        %v3605 = vunpack.c.h.b16 %v519
        %v3606 = vunpack.c.l.b16 %v520
        %v3607 = vunpack.c.h.b16 %v520
        %v3608 = vunpack.c.l.b16 %v521
        %v3609 = vunpack.c.h.b16 %v521
        %v3610 = vunpack.c.l.b16 %v522
        %v3611 = vpack.c.b16 %v3562, %v3513
        %v3612 = vpack.c.b16 %v3563, %v3514
        %v3613 = vpack.c.b16 %v3564, %v3515
        %v3614 = vpack.c.b16 %v3565, %v3516
        %v3615 = vpack.c.b16 %v3566, %v3517
        %v3616 = vpack.c.b16 %v3567, %v3518
        %v3617 = vpack.c.b16 %v3568, %v3519
        %v3618 = vpack.c.b16 %v3569, %v3520
        %v3619 = vpack.c.b16 %v3570, %v3521
        %v3620 = vpack.c.b16 %v3571, %v3522
        %v3621 = vpack.c.b16 %v3572, %v3523
        %v3622 = vpack.c.b16 %v3573, %v3524
        %v3623 = vpack.c.b16 %v3574, %v3525
        %v3624 = vpack.c.b16 %v3575, %v3526
        %v3625 = vpack.c.b16 %v3576, %v3527
        %v3626 = vpack.c.b16 %v3577, %v3528
        %v3627 = vpack.c.b16 %v3578, %v3529
        %v3628 = vpack.c.b16 %v3579, %v3530
        %v3629 = vpack.c.b16 %v3580, %v3531
        %v3630 = vpack.c.b16 %v3581, %v3532
        %v3631 = vpack.c.b16 %v3582, %v3533
        %v3632 = vpack.c.b16 %v3583, %v3534
        %v3633 = vpack.c.b16 %v3584, %v3535
        %v3634 = vpack.c.b16 %v3585, %v3536
        %v3635 = vpack.c.b16 %v3586, %v3537
        %v3636 = vpack.c.b16 %v3587, %v3538
        %v3637 = vpack.c.b16 %v3588, %v3539
        %v3638 = vpack.c.b16 %v3589, %v3540
        %v3639 = vpack.c.b16 %v3590, %v3541
        %v3640 = vpack.c.b16 %v3591, %v3542
        %v3641 = vpack.c.b16 %v3592, %v3543
        %v3642 = vpack.c.b16 %v3593, %v3544
        %v3643 = vpack.c.b16 %v3594, %v3545
        %v3644 = vpack.c.b16 %v3595, %v3546
        %v3645 = vpack.c.b16 %v3596, %v3547
        %v3646 = vpack.c.b16 %v3597, %v3548
        %v3647 = vpack.c.b16 %v3598, %v3549
        %v3648 = vpack.c.b16 %v3599, %v3550
        %v3649 = vpack.c.b16 %v3600, %v3551
        %v3650 = vpack.c.b16 %v3601, %v3552
        %v3651 = vpack.c.b16 %v3602, %v3553
        %v3652 = vpack.c.b16 %v3603, %v3554
        %v3653 = vpack.c.b16 %v3604, %v3555
        %v3654 = vpack.c.b16 %v3605, %v3556
        %v3655 = vpack.c.b16 %v3606, %v3557
        %v3656 = vpack.c.b16 %v3607, %v3558
        %v3657 = vpack.c.b16 %v3608, %v3559
        %v3658 = vpack.c.b16 %v3609, %v3560
        %v3659 = vpack.c.b16 %v3610, %v3561
        %3709 = vmatprep.subr.bf16.mxu0 %v1504
        %3710 = vmatpush1.bf16.msra.mxu0 %v1503
        %3711 = vmatprep.subr.bf16.mxu0 %v1509
        %3712 = vmatpush1.bf16.msra.mxu0 %v1508
        %3713 = vmatprep.subr.bf16.mxu0 %v1514
        %3714 = vmatpush1.bf16.msra.mxu0 %v1513
        %3715 = vmatprep.subr.bf16.mxu0 %v1519
        %3716 = vmatpush1.bf16.msra.mxu0 %v1518
        %3717 = vmatprep.subr.bf16.mxu0 %v1524
        %3718 = vmatpush1.bf16.msra.mxu0 %v1523
        %3719 = vmatprep.subr.bf16.mxu0 %v1529
        %3720 = vmatpush1.bf16.msra.mxu0 %v1528
        %3721 = vmatprep.subr.bf16.mxu0 %v1534
        %3722 = vmatpush1.bf16.msra.mxu0 %v1533
        %3723 = vmatprep.subr.bf16.mxu0 %v1539
        %3724 = vmatpush1.bf16.msra.mxu0 %v1538
        %3725 = vmatprep.subr.bf16.mxu0 %v1544
        %3726 = vmatpush1.bf16.msra.mxu0 %v1543
        %3727 = vmatprep.subr.bf16.mxu0 %v1549
        %3728 = vmatpush1.bf16.msra.mxu0 %v1548
        %3729 = vmatprep.subr.bf16.mxu0 %v1554
        %3730 = vmatpush1.bf16.msra.mxu0 %v1553
        %3731 = vmatprep.subr.bf16.mxu0 %v1559
        %3732 = vmatpush1.bf16.msra.mxu0 %v1558
        %3733 = vmatprep.subr.bf16.mxu0 %v1564
        %3734 = vmatpush1.bf16.msra.mxu0 %v1563
        %3735 = vmatprep.subr.bf16.mxu0 %v1569
        %3736 = vmatpush1.bf16.msra.mxu0 %v1568
        %3737 = vmatprep.subr.bf16.mxu0 %v1574
        %3738 = vmatpush1.bf16.msra.mxu0 %v1573
        %3739 = vmatprep.subr.bf16.mxu0 %v1579
        %3740 = vmatpush1.bf16.msra.mxu0 %v1578
        %3741 = vmatprep.mubr.bf16.mxu0 %v3612
        %3742 = vmatmul.mubr.bf16.gmra.mrb[0].mxu0 %v3611
        %v3743 = vpop.f32.mrb[0].mxu0
        %v3744 = vadd.f32 0.0, %v3743
        %v3745 = vpop.f32.mrb[0].mxu0
        %v3746 = vadd.f32 0.0, %v3745
        %v3747 = vpop.f32.mrb[0].mxu0
        %v3748 = vadd.f32 0.0, %v3747
        %v3749 = vpop.f32.mrb[0].mxu0
        %v3750 = vadd.f32 0.0, %v3749
        %3751 = vdwg.mxu0
        %3752 = vmatprep.subr.bf16.mxu0 %v1584
        %3753 = vmatpush1.bf16.msra.mxu0 %v1583
        %3754 = vmatprep.subr.bf16.mxu0 %v1589
        %3755 = vmatpush1.bf16.msra.mxu0 %v1588
        %3756 = vmatprep.subr.bf16.mxu0 %v1594
        %3757 = vmatpush1.bf16.msra.mxu0 %v1593
        %3758 = vmatprep.subr.bf16.mxu0 %v1599
        %3759 = vmatpush1.bf16.msra.mxu0 %v1598
        %3760 = vmatprep.subr.bf16.mxu0 %v1604
        %3761 = vmatpush1.bf16.msra.mxu0 %v1603
        %3762 = vmatprep.subr.bf16.mxu0 %v1609
        %3763 = vmatpush1.bf16.msra.mxu0 %v1608
        %3764 = vmatprep.subr.bf16.mxu0 %v1614
        %3765 = vmatpush1.bf16.msra.mxu0 %v1613
        %3766 = vmatprep.subr.bf16.mxu0 %v1619
        %3767 = vmatpush1.bf16.msra.mxu0 %v1618
        %3768 = vmatprep.subr.bf16.mxu0 %v1624
        %3769 = vmatpush1.bf16.msra.mxu0 %v1623
        %3770 = vmatprep.subr.bf16.mxu0 %v1629
        %3771 = vmatpush1.bf16.msra.mxu0 %v1628
        %3772 = vmatprep.subr.bf16.mxu0 %v1634
        %3773 = vmatpush1.bf16.msra.mxu0 %v1633
        %3774 = vmatprep.subr.bf16.mxu0 %v1639
        %3775 = vmatpush1.bf16.msra.mxu0 %v1638
        %3776 = vmatprep.subr.bf16.mxu0 %v1644
        %3777 = vmatpush1.bf16.msra.mxu0 %v1643
        %3778 = vmatprep.subr.bf16.mxu0 %v1649
        %3779 = vmatpush1.bf16.msra.mxu0 %v1648
        %3780 = vmatprep.subr.bf16.mxu0 %v1654
        %3781 = vmatpush1.bf16.msra.mxu0 %v1653
        %3782 = vmatprep.subr.bf16.mxu0 %v1659
        %3783 = vmatpush1.bf16.msra.mxu0 %v1658
        %3784 = vmatprep.mubr.bf16.mxu0 %v3614
        %3785 = vmatmul.mubr.bf16.gmra.mrb[0].mxu0 %v3613
        %v3786 = vpop.f32.mrb[0].mxu0
        %v3787 = vadd.f32 %v3744, %v3786
        %v3788 = vpop.f32.mrb[0].mxu0
        %v3789 = vadd.f32 %v3746, %v3788
        %v3790 = vpop.f32.mrb[0].mxu0
        %v3791 = vadd.f32 %v3748, %v3790
        %v3792 = vpop.f32.mrb[0].mxu0
        %v3793 = vadd.f32 %v3750, %v3792
        %3794 = vdwg.mxu0
        %3795 = vmatprep.subr.bf16.mxu0 %v1664
        %3796 = vmatpush1.bf16.msra.mxu0 %v1663
        %3797 = vmatprep.subr.bf16.mxu0 %v1669
        %3798 = vmatpush1.bf16.msra.mxu0 %v1668
        %3799 = vmatprep.subr.bf16.mxu0 %v1674
        %3800 = vmatpush1.bf16.msra.mxu0 %v1673
        %3801 = vmatprep.subr.bf16.mxu0 %v1679
        %3802 = vmatpush1.bf16.msra.mxu0 %v1678
        %3803 = vmatprep.subr.bf16.mxu0 %v1684
        %3804 = vmatpush1.bf16.msra.mxu0 %v1683
        %3805 = vmatprep.subr.bf16.mxu0 %v1689
        %3806 = vmatpush1.bf16.msra.mxu0 %v1688
        %3807 = vmatprep.subr.bf16.mxu0 %v1694
        %3808 = vmatpush1.bf16.msra.mxu0 %v1693
        %3809 = vmatprep.subr.bf16.mxu0 %v1699
        %3810 = vmatpush1.bf16.msra.mxu0 %v1698
        %3811 = vmatprep.subr.bf16.mxu0 %v1704
        %3812 = vmatpush1.bf16.msra.mxu0 %v1703
        %3813 = vmatprep.subr.bf16.mxu0 %v1709
        %3814 = vmatpush1.bf16.msra.mxu0 %v1708
        %3815 = vmatprep.subr.bf16.mxu0 %v1714
        %3816 = vmatpush1.bf16.msra.mxu0 %v1713
        %3817 = vmatprep.subr.bf16.mxu0 %v1719
        %3818 = vmatpush1.bf16.msra.mxu0 %v1718
        %3819 = vmatprep.subr.bf16.mxu0 %v1724
        %3820 = vmatpush1.bf16.msra.mxu0 %v1723
        %3821 = vmatprep.subr.bf16.mxu0 %v1729
        %3822 = vmatpush1.bf16.msra.mxu0 %v1728
        %3823 = vmatprep.subr.bf16.mxu0 %v1734
        %3824 = vmatpush1.bf16.msra.mxu0 %v1733
        %3825 = vmatprep.subr.bf16.mxu0 %v1739
        %3826 = vmatpush1.bf16.msra.mxu0 %v1738
        %3827 = vmatprep.mubr.bf16.mxu0 %v3616
        %3828 = vmatmul.mubr.bf16.gmra.mrb[0].mxu0 %v3615
        %v3829 = vpop.f32.mrb[0].mxu0
        %v3830 = vadd.f32 %v3787, %v3829
        %v3831 = vpop.f32.mrb[0].mxu0
        %v3832 = vadd.f32 %v3789, %v3831
        %v3833 = vpop.f32.mrb[0].mxu0
        %v3834 = vadd.f32 %v3791, %v3833
        %v3835 = vpop.f32.mrb[0].mxu0
        %v3836 = vadd.f32 %v3793, %v3835
        %3837 = vdwg.mxu0
        %3838 = vmatprep.subr.bf16.mxu0 %v1744
        %3839 = vmatpush1.bf16.msra.mxu0 %v1743
        %3840 = vmatprep.subr.bf16.mxu0 %v1749
        %3841 = vmatpush1.bf16.msra.mxu0 %v1748
        %3842 = vmatprep.subr.bf16.mxu0 %v1754
        %3843 = vmatpush1.bf16.msra.mxu0 %v1753
        %3844 = vmatprep.subr.bf16.mxu0 %v1759
        %3845 = vmatpush1.bf16.msra.mxu0 %v1758
        %3846 = vmatprep.subr.bf16.mxu0 %v1764
        %3847 = vmatpush1.bf16.msra.mxu0 %v1763
        %3848 = vmatprep.subr.bf16.mxu0 %v1769
        %3849 = vmatpush1.bf16.msra.mxu0 %v1768
        %3850 = vmatprep.subr.bf16.mxu0 %v1774
        %3851 = vmatpush1.bf16.msra.mxu0 %v1773
        %3852 = vmatprep.subr.bf16.mxu0 %v1779
        %3853 = vmatpush1.bf16.msra.mxu0 %v1778
        %3854 = vmatprep.subr.bf16.mxu0 %v1784
        %3855 = vmatpush1.bf16.msra.mxu0 %v1783
        %3856 = vmatprep.subr.bf16.mxu0 %v1789
        %3857 = vmatpush1.bf16.msra.mxu0 %v1788
        %3858 = vmatprep.subr.bf16.mxu0 %v1794
        %3859 = vmatpush1.bf16.msra.mxu0 %v1793
        %3860 = vmatprep.subr.bf16.mxu0 %v1799
        %3861 = vmatpush1.bf16.msra.mxu0 %v1798
        %3862 = vmatprep.subr.bf16.mxu0 %v1804
        %3863 = vmatpush1.bf16.msra.mxu0 %v1803
        %3864 = vmatprep.subr.bf16.mxu0 %v1809
        %3865 = vmatpush1.bf16.msra.mxu0 %v1808
        %3866 = vmatprep.subr.bf16.mxu0 %v1814
        %3867 = vmatpush1.bf16.msra.mxu0 %v1813
        %3868 = vmatprep.subr.bf16.mxu0 %v1819
        %3869 = vmatpush1.bf16.msra.mxu0 %v1818
        %3870 = vmatprep.mubr.bf16.mxu0 %v3618
        %3871 = vmatmul.mubr.bf16.gmra.mrb[0].mxu0 %v3617
        %v3872 = vpop.f32.mrb[0].mxu0
        %v3873 = vadd.f32 %v3830, %v3872
        %v3874 = vpop.f32.mrb[0].mxu0
        %v3875 = vadd.f32 %v3832, %v3874
        %v3876 = vpop.f32.mrb[0].mxu0
        %v3877 = vadd.f32 %v3834, %v3876
        %v3878 = vpop.f32.mrb[0].mxu0
        %v3879 = vadd.f32 %v3836, %v3878
        %3880 = vdwg.mxu0
        %3881 = vmatprep.subr.bf16.mxu0 %v1824
        %3882 = vmatpush1.bf16.msra.mxu0 %v1823
        %3883 = vmatprep.subr.bf16.mxu0 %v1829
        %3884 = vmatpush1.bf16.msra.mxu0 %v1828
        %3885 = vmatprep.subr.bf16.mxu0 %v1834
        %3886 = vmatpush1.bf16.msra.mxu0 %v1833
        %3887 = vmatprep.subr.bf16.mxu0 %v1839
        %3888 = vmatpush1.bf16.msra.mxu0 %v1838
        %3889 = vmatprep.subr.bf16.mxu0 %v1844
        %3890 = vmatpush1.bf16.msra.mxu0 %v1843
        %3891 = vmatprep.subr.bf16.mxu0 %v1849
        %3892 = vmatpush1.bf16.msra.mxu0 %v1848
        %3893 = vmatprep.subr.bf16.mxu0 %v1854
        %3894 = vmatpush1.bf16.msra.mxu0 %v1853
        %3895 = vmatprep.subr.bf16.mxu0 %v1859
        %3896 = vmatpush1.bf16.msra.mxu0 %v1858
        %3897 = vmatprep.subr.bf16.mxu0 %v1864
        %3898 = vmatpush1.bf16.msra.mxu0 %v1863
        %3899 = vmatprep.subr.bf16.mxu0 %v1869
        %3900 = vmatpush1.bf16.msra.mxu0 %v1868
        %3901 = vmatprep.subr.bf16.mxu0 %v1874
        %3902 = vmatpush1.bf16.msra.mxu0 %v1873
        %3903 = vmatprep.subr.bf16.mxu0 %v1879
        %3904 = vmatpush1.bf16.msra.mxu0 %v1878
        %3905 = vmatprep.subr.bf16.mxu0 %v1884
        %3906 = vmatpush1.bf16.msra.mxu0 %v1883
        %3907 = vmatprep.subr.bf16.mxu0 %v1889
        %3908 = vmatpush1.bf16.msra.mxu0 %v1888
        %3909 = vmatprep.subr.bf16.mxu0 %v1894
        %3910 = vmatpush1.bf16.msra.mxu0 %v1893
        %3911 = vmatprep.subr.bf16.mxu0 %v1899
        %3912 = vmatpush1.bf16.msra.mxu0 %v1898
        %3913 = vmatprep.mubr.bf16.mxu0 %v3620
        %3914 = vmatmul.mubr.bf16.gmra.mrb[0].mxu0 %v3619
        %v3915 = vpop.f32.mrb[0].mxu0
        %v3916 = vadd.f32 %v3873, %v3915
        %v3917 = vpop.f32.mrb[0].mxu0
        %v3918 = vadd.f32 %v3875, %v3917
        %v3919 = vpop.f32.mrb[0].mxu0
        %v3920 = vadd.f32 %v3877, %v3919
        %v3921 = vpop.f32.mrb[0].mxu0
        %v3922 = vadd.f32 %v3879, %v3921
        %3923 = vdwg.mxu0
        %3924 = vmatprep.subr.bf16.mxu0 %v1904
        %3925 = vmatpush1.bf16.msra.mxu0 %v1903
        %3926 = vmatprep.subr.bf16.mxu0 %v1909
        %3927 = vmatpush1.bf16.msra.mxu0 %v1908
        %3928 = vmatprep.subr.bf16.mxu0 %v1914
        %3929 = vmatpush1.bf16.msra.mxu0 %v1913
        %3930 = vmatprep.subr.bf16.mxu0 %v1919
        %3931 = vmatpush1.bf16.msra.mxu0 %v1918
        %3932 = vmatprep.subr.bf16.mxu0 %v1924
        %3933 = vmatpush1.bf16.msra.mxu0 %v1923
        %3934 = vmatprep.subr.bf16.mxu0 %v1929
        %3935 = vmatpush1.bf16.msra.mxu0 %v1928
        %3936 = vmatprep.subr.bf16.mxu0 %v1934
        %3937 = vmatpush1.bf16.msra.mxu0 %v1933
        %3938 = vmatprep.subr.bf16.mxu0 %v1939
        %3939 = vmatpush1.bf16.msra.mxu0 %v1938
        %3940 = vmatprep.subr.bf16.mxu0 %v1944
        %3941 = vmatpush1.bf16.msra.mxu0 %v1943
        %3942 = vmatprep.subr.bf16.mxu0 %v1949
        %3943 = vmatpush1.bf16.msra.mxu0 %v1948
        %3944 = vmatprep.subr.bf16.mxu0 %v1954
        %3945 = vmatpush1.bf16.msra.mxu0 %v1953
        %3946 = vmatprep.subr.bf16.mxu0 %v1959
        %3947 = vmatpush1.bf16.msra.mxu0 %v1958
        %3948 = vmatprep.subr.bf16.mxu0 %v1964
        %3949 = vmatpush1.bf16.msra.mxu0 %v1963
        %3950 = vmatprep.subr.bf16.mxu0 %v1969
        %3951 = vmatpush1.bf16.msra.mxu0 %v1968
        %3952 = vmatprep.subr.bf16.mxu0 %v1974
        %3953 = vmatpush1.bf16.msra.mxu0 %v1973
        %3954 = vmatprep.subr.bf16.mxu0 %v1979
        %3955 = vmatpush1.bf16.msra.mxu0 %v1978
        %3956 = vmatprep.mubr.bf16.mxu0 %v3622
        %3957 = vmatmul.mubr.bf16.gmra.mrb[0].mxu0 %v3621
        %v3958 = vpop.f32.mrb[0].mxu0
        %v3959 = vadd.f32 %v3916, %v3958
        %v3960 = vpop.f32.mrb[0].mxu0
        %v3961 = vadd.f32 %v3918, %v3960
        %v3962 = vpop.f32.mrb[0].mxu0
        %v3963 = vadd.f32 %v3920, %v3962
        %v3964 = vpop.f32.mrb[0].mxu0
        %v3965 = vadd.f32 %v3922, %v3964
        %3966 = vdwg.mxu0
        %3967 = vmatprep.subr.bf16.mxu0 %v1984
        %3968 = vmatpush1.bf16.msra.mxu0 %v1983
        %3969 = vmatprep.subr.bf16.mxu0 %v1989
        %3970 = vmatpush1.bf16.msra.mxu0 %v1988
        %3971 = vmatprep.subr.bf16.mxu0 %v1994
        %3972 = vmatpush1.bf16.msra.mxu0 %v1993
        %3973 = vmatprep.subr.bf16.mxu0 %v1999
        %3974 = vmatpush1.bf16.msra.mxu0 %v1998
        %3975 = vmatprep.subr.bf16.mxu0 %v2004
        %3976 = vmatpush1.bf16.msra.mxu0 %v2003
        %3977 = vmatprep.subr.bf16.mxu0 %v2009
        %3978 = vmatpush1.bf16.msra.mxu0 %v2008
        %3979 = vmatprep.subr.bf16.mxu0 %v2014
        %3980 = vmatpush1.bf16.msra.mxu0 %v2013
        %3981 = vmatprep.subr.bf16.mxu0 %v2019
        %3982 = vmatpush1.bf16.msra.mxu0 %v2018
        %3983 = vmatprep.subr.bf16.mxu0 %v2024
        %3984 = vmatpush1.bf16.msra.mxu0 %v2023
        %3985 = vmatprep.subr.bf16.mxu0 %v2029
        %3986 = vmatpush1.bf16.msra.mxu0 %v2028
        %3987 = vmatprep.subr.bf16.mxu0 %v2034
        %3988 = vmatpush1.bf16.msra.mxu0 %v2033
        %3989 = vmatprep.subr.bf16.mxu0 %v2039
        %3990 = vmatpush1.bf16.msra.mxu0 %v2038
        %3991 = vmatprep.subr.bf16.mxu0 %v2044
        %3992 = vmatpush1.bf16.msra.mxu0 %v2043
        %3993 = vmatprep.subr.bf16.mxu0 %v2049
        %3994 = vmatpush1.bf16.msra.mxu0 %v2048
        %3995 = vmatprep.subr.bf16.mxu0 %v2054
        %3996 = vmatpush1.bf16.msra.mxu0 %v2053
        %3997 = vmatprep.subr.bf16.mxu0 %v2059
        %3998 = vmatpush1.bf16.msra.mxu0 %v2058
        %3999 = vmatprep.mubr.bf16.mxu0 %v3624
        %4000 = vmatmul.mubr.bf16.gmra.mrb[0].mxu0 %v3623
        %v4001 = vpop.f32.mrb[0].mxu0
        %v4002 = vadd.f32 %v3959, %v4001
        %v4003 = vpop.f32.mrb[0].mxu0
        %v4004 = vadd.f32 %v3961, %v4003
        %v4005 = vpop.f32.mrb[0].mxu0
        %v4006 = vadd.f32 %v3963, %v4005
        %v4007 = vpop.f32.mrb[0].mxu0
        %v4008 = vadd.f32 %v3965, %v4007
        %4009 = vdwg.mxu0
        %4010 = vmatprep.subr.bf16.mxu0 %v2064
        %4011 = vmatpush1.bf16.msra.mxu0 %v2063
        %4012 = vmatprep.subr.bf16.mxu0 %v2069
        %4013 = vmatpush1.bf16.msra.mxu0 %v2068
        %4014 = vmatprep.subr.bf16.mxu0 %v2074
        %4015 = vmatpush1.bf16.msra.mxu0 %v2073
        %4016 = vmatprep.subr.bf16.mxu0 %v2079
        %4017 = vmatpush1.bf16.msra.mxu0 %v2078
        %4018 = vmatprep.subr.bf16.mxu0 %v2084
        %4019 = vmatpush1.bf16.msra.mxu0 %v2083
        %4020 = vmatprep.subr.bf16.mxu0 %v2089
        %4021 = vmatpush1.bf16.msra.mxu0 %v2088
        %4022 = vmatprep.subr.bf16.mxu0 %v2094
        %4023 = vmatpush1.bf16.msra.mxu0 %v2093
        %4024 = vmatprep.subr.bf16.mxu0 %v2099
        %4025 = vmatpush1.bf16.msra.mxu0 %v2098
        %4026 = vmatprep.subr.bf16.mxu0 %v2104
        %4027 = vmatpush1.bf16.msra.mxu0 %v2103
        %4028 = vmatprep.subr.bf16.mxu0 %v2109
        %4029 = vmatpush1.bf16.msra.mxu0 %v2108
        %4030 = vmatprep.subr.bf16.mxu0 %v2114
        %4031 = vmatpush1.bf16.msra.mxu0 %v2113
        %4032 = vmatprep.subr.bf16.mxu0 %v2119
        %4033 = vmatpush1.bf16.msra.mxu0 %v2118
        %4034 = vmatprep.subr.bf16.mxu0 %v2124
        %4035 = vmatpush1.bf16.msra.mxu0 %v2123
        %4036 = vmatprep.subr.bf16.mxu0 %v2129
        %4037 = vmatpush1.bf16.msra.mxu0 %v2128
        %4038 = vmatprep.subr.bf16.mxu0 %v2134
        %4039 = vmatpush1.bf16.msra.mxu0 %v2133
        %4040 = vmatprep.subr.bf16.mxu0 %v2139
        %4041 = vmatpush1.bf16.msra.mxu0 %v2138
        %4042 = vmatprep.mubr.bf16.mxu0 %v3626
        %4043 = vmatmul.mubr.bf16.gmra.mrb[0].mxu0 %v3625
        %v4044 = vpop.f32.mrb[0].mxu0
        %v4045 = vadd.f32 %v4002, %v4044
        %v4046 = vpop.f32.mrb[0].mxu0
        %v4047 = vadd.f32 %v4004, %v4046
        %v4048 = vpop.f32.mrb[0].mxu0
        %v4049 = vadd.f32 %v4006, %v4048
        %v4050 = vpop.f32.mrb[0].mxu0
        %v4051 = vadd.f32 %v4008, %v4050
        %4052 = vdwg.mxu0
        %4053 = vmatprep.subr.bf16.mxu0 %v2144
        %4054 = vmatpush1.bf16.msra.mxu0 %v2143
        %4055 = vmatprep.subr.bf16.mxu0 %v2149
        %4056 = vmatpush1.bf16.msra.mxu0 %v2148
        %4057 = vmatprep.subr.bf16.mxu0 %v2154
        %4058 = vmatpush1.bf16.msra.mxu0 %v2153
        %4059 = vmatprep.subr.bf16.mxu0 %v2159
        %4060 = vmatpush1.bf16.msra.mxu0 %v2158
        %4061 = vmatprep.subr.bf16.mxu0 %v2164
        %4062 = vmatpush1.bf16.msra.mxu0 %v2163
        %4063 = vmatprep.subr.bf16.mxu0 %v2169
        %4064 = vmatpush1.bf16.msra.mxu0 %v2168
        %4065 = vmatprep.subr.bf16.mxu0 %v2174
        %4066 = vmatpush1.bf16.msra.mxu0 %v2173
        %4067 = vmatprep.subr.bf16.mxu0 %v2179
        %4068 = vmatpush1.bf16.msra.mxu0 %v2178
        %4069 = vmatprep.subr.bf16.mxu0 %v2184
        %4070 = vmatpush1.bf16.msra.mxu0 %v2183
        %4071 = vmatprep.subr.bf16.mxu0 %v2189
        %4072 = vmatpush1.bf16.msra.mxu0 %v2188
        %4073 = vmatprep.subr.bf16.mxu0 %v2194
        %4074 = vmatpush1.bf16.msra.mxu0 %v2193
        %4075 = vmatprep.subr.bf16.mxu0 %v2199
        %4076 = vmatpush1.bf16.msra.mxu0 %v2198
        %4077 = vmatprep.subr.bf16.mxu0 %v2204
        %4078 = vmatpush1.bf16.msra.mxu0 %v2203
        %4079 = vmatprep.subr.bf16.mxu0 %v2209
        %4080 = vmatpush1.bf16.msra.mxu0 %v2208
        %4081 = vmatprep.subr.bf16.mxu0 %v2214
        %4082 = vmatpush1.bf16.msra.mxu0 %v2213
        %4083 = vmatprep.subr.bf16.mxu0 %v2219
        %4084 = vmatpush1.bf16.msra.mxu0 %v2218
        %4085 = vmatprep.mubr.bf16.mxu0 %v3628
        %4086 = vmatmul.mubr.bf16.gmra.mrb[0].mxu0 %v3627
        %v4087 = vpop.f32.mrb[0].mxu0
        %v4088 = vadd.f32 %v4045, %v4087
        %v4089 = vpop.f32.mrb[0].mxu0
        %v4090 = vadd.f32 %v4047, %v4089
        %v4091 = vpop.f32.mrb[0].mxu0
        %v4092 = vadd.f32 %v4049, %v4091
        %v4093 = vpop.f32.mrb[0].mxu0
        %v4094 = vadd.f32 %v4051, %v4093
        %4095 = vdwg.mxu0
        %4096 = vmatprep.subr.bf16.mxu0 %v2224
        %4097 = vmatpush1.bf16.msra.mxu0 %v2223
        %4098 = vmatprep.subr.bf16.mxu0 %v2229
        %4099 = vmatpush1.bf16.msra.mxu0 %v2228
        %4100 = vmatprep.subr.bf16.mxu0 %v2234
        %4101 = vmatpush1.bf16.msra.mxu0 %v2233
        %4102 = vmatprep.subr.bf16.mxu0 %v2239
        %4103 = vmatpush1.bf16.msra.mxu0 %v2238
        %4104 = vmatprep.subr.bf16.mxu0 %v2244
        %4105 = vmatpush1.bf16.msra.mxu0 %v2243
        %4106 = vmatprep.subr.bf16.mxu0 %v2249
        %4107 = vmatpush1.bf16.msra.mxu0 %v2248
        %4108 = vmatprep.subr.bf16.mxu0 %v2254
        %4109 = vmatpush1.bf16.msra.mxu0 %v2253
        %4110 = vmatprep.subr.bf16.mxu0 %v2259
        %4111 = vmatpush1.bf16.msra.mxu0 %v2258
        %4112 = vmatprep.subr.bf16.mxu0 %v2264
        %4113 = vmatpush1.bf16.msra.mxu0 %v2263
        %4114 = vmatprep.subr.bf16.mxu0 %v2269
        %4115 = vmatpush1.bf16.msra.mxu0 %v2268
        %4116 = vmatprep.subr.bf16.mxu0 %v2274
        %4117 = vmatpush1.bf16.msra.mxu0 %v2273
        %4118 = vmatprep.subr.bf16.mxu0 %v2279
        %4119 = vmatpush1.bf16.msra.mxu0 %v2278
        %4120 = vmatprep.subr.bf16.mxu0 %v2284
        %4121 = vmatpush1.bf16.msra.mxu0 %v2283
        %4122 = vmatprep.subr.bf16.mxu0 %v2289
        %4123 = vmatpush1.bf16.msra.mxu0 %v2288
        %4124 = vmatprep.subr.bf16.mxu0 %v2294
        %4125 = vmatpush1.bf16.msra.mxu0 %v2293
        %4126 = vmatprep.subr.bf16.mxu0 %v2299
        %4127 = vmatpush1.bf16.msra.mxu0 %v2298
        %4128 = vmatprep.mubr.bf16.mxu0 %v3630
        %4129 = vmatmul.mubr.bf16.gmra.mrb[0].mxu0 %v3629
        %v4130 = vpop.f32.mrb[0].mxu0
        %v4131 = vadd.f32 %v4088, %v4130
        %v4132 = vpop.f32.mrb[0].mxu0
        %v4133 = vadd.f32 %v4090, %v4132
        %v4134 = vpop.f32.mrb[0].mxu0
        %v4135 = vadd.f32 %v4092, %v4134
        %v4136 = vpop.f32.mrb[0].mxu0
        %v4137 = vadd.f32 %v4094, %v4136
        %4138 = vdwg.mxu0
        %4139 = vmatprep.subr.bf16.mxu0 %v2304
        %4140 = vmatpush1.bf16.msra.mxu0 %v2303
        %4141 = vmatprep.subr.bf16.mxu0 %v2309
        %4142 = vmatpush1.bf16.msra.mxu0 %v2308
        %4143 = vmatprep.subr.bf16.mxu0 %v2314
        %4144 = vmatpush1.bf16.msra.mxu0 %v2313
        %4145 = vmatprep.subr.bf16.mxu0 %v2319
        %4146 = vmatpush1.bf16.msra.mxu0 %v2318
        %4147 = vmatprep.subr.bf16.mxu0 %v2324
        %4148 = vmatpush1.bf16.msra.mxu0 %v2323
        %4149 = vmatprep.subr.bf16.mxu0 %v2329
        %4150 = vmatpush1.bf16.msra.mxu0 %v2328
        %4151 = vmatprep.subr.bf16.mxu0 %v2334
        %4152 = vmatpush1.bf16.msra.mxu0 %v2333
        %4153 = vmatprep.subr.bf16.mxu0 %v2339
        %4154 = vmatpush1.bf16.msra.mxu0 %v2338
        %4155 = vmatprep.subr.bf16.mxu0 %v2344
        %4156 = vmatpush1.bf16.msra.mxu0 %v2343
        %4157 = vmatprep.subr.bf16.mxu0 %v2349
        %4158 = vmatpush1.bf16.msra.mxu0 %v2348
        %4159 = vmatprep.subr.bf16.mxu0 %v2354
        %4160 = vmatpush1.bf16.msra.mxu0 %v2353
        %4161 = vmatprep.subr.bf16.mxu0 %v2359
        %4162 = vmatpush1.bf16.msra.mxu0 %v2358
        %4163 = vmatprep.subr.bf16.mxu0 %v2364
        %4164 = vmatpush1.bf16.msra.mxu0 %v2363
        %4165 = vmatprep.subr.bf16.mxu0 %v2369
        %4166 = vmatpush1.bf16.msra.mxu0 %v2368
        %4167 = vmatprep.subr.bf16.mxu0 %v2374
        %4168 = vmatpush1.bf16.msra.mxu0 %v2373
        %4169 = vmatprep.subr.bf16.mxu0 %v2379
        %4170 = vmatpush1.bf16.msra.mxu0 %v2378
        %4171 = vmatprep.mubr.bf16.mxu0 %v3632
        %4172 = vmatmul.mubr.bf16.gmra.mrb[0].mxu0 %v3631
        %v4173 = vpop.f32.mrb[0].mxu0
        %v4174 = vadd.f32 %v4131, %v4173
        %v4175 = vpop.f32.mrb[0].mxu0
        %v4176 = vadd.f32 %v4133, %v4175
        %v4177 = vpop.f32.mrb[0].mxu0
        %v4178 = vadd.f32 %v4135, %v4177
        %v4179 = vpop.f32.mrb[0].mxu0
        %v4180 = vadd.f32 %v4137, %v4179
        %4181 = vdwg.mxu0
        %4182 = vmatprep.subr.bf16.mxu0 %v2384
        %4183 = vmatpush1.bf16.msra.mxu0 %v2383
        %4184 = vmatprep.subr.bf16.mxu0 %v2389
        %4185 = vmatpush1.bf16.msra.mxu0 %v2388
        %4186 = vmatprep.subr.bf16.mxu0 %v2394
        %4187 = vmatpush1.bf16.msra.mxu0 %v2393
        %4188 = vmatprep.subr.bf16.mxu0 %v2399
        %4189 = vmatpush1.bf16.msra.mxu0 %v2398
        %4190 = vmatprep.subr.bf16.mxu0 %v2404
        %4191 = vmatpush1.bf16.msra.mxu0 %v2403
        %4192 = vmatprep.subr.bf16.mxu0 %v2409
        %4193 = vmatpush1.bf16.msra.mxu0 %v2408
        %4194 = vmatprep.subr.bf16.mxu0 %v2414
        %4195 = vmatpush1.bf16.msra.mxu0 %v2413
        %4196 = vmatprep.subr.bf16.mxu0 %v2419
        %4197 = vmatpush1.bf16.msra.mxu0 %v2418
        %4198 = vmatprep.subr.bf16.mxu0 %v2424
        %4199 = vmatpush1.bf16.msra.mxu0 %v2423
        %4200 = vmatprep.subr.bf16.mxu0 %v2429
        %4201 = vmatpush1.bf16.msra.mxu0 %v2428
        %4202 = vmatprep.subr.bf16.mxu0 %v2434
        %4203 = vmatpush1.bf16.msra.mxu0 %v2433
        %4204 = vmatprep.subr.bf16.mxu0 %v2439
        %4205 = vmatpush1.bf16.msra.mxu0 %v2438
        %4206 = vmatprep.subr.bf16.mxu0 %v2444
        %4207 = vmatpush1.bf16.msra.mxu0 %v2443
        %4208 = vmatprep.subr.bf16.mxu0 %v2449
        %4209 = vmatpush1.bf16.msra.mxu0 %v2448
        %4210 = vmatprep.subr.bf16.mxu0 %v2454
        %4211 = vmatpush1.bf16.msra.mxu0 %v2453
        %4212 = vmatprep.subr.bf16.mxu0 %v2459
        %4213 = vmatpush1.bf16.msra.mxu0 %v2458
        %4214 = vmatprep.mubr.bf16.mxu0 %v3634
        %4215 = vmatmul.mubr.bf16.gmra.mrb[0].mxu0 %v3633
        %v4216 = vpop.f32.mrb[0].mxu0
        %v4217 = vadd.f32 %v4174, %v4216
        %v4218 = vpop.f32.mrb[0].mxu0
        %v4219 = vadd.f32 %v4176, %v4218
        %v4220 = vpop.f32.mrb[0].mxu0
        %v4221 = vadd.f32 %v4178, %v4220
        %v4222 = vpop.f32.mrb[0].mxu0
        %v4223 = vadd.f32 %v4180, %v4222
        %4224 = vdwg.mxu0
        %4225 = vmatprep.subr.bf16.mxu0 %v2464
        %4226 = vmatpush1.bf16.msra.mxu0 %v2463
        %4227 = vmatprep.subr.bf16.mxu0 %v2469
        %4228 = vmatpush1.bf16.msra.mxu0 %v2468
        %4229 = vmatprep.subr.bf16.mxu0 %v2474
        %4230 = vmatpush1.bf16.msra.mxu0 %v2473
        %4231 = vmatprep.subr.bf16.mxu0 %v2479
        %4232 = vmatpush1.bf16.msra.mxu0 %v2478
        %4233 = vmatprep.subr.bf16.mxu0 %v2484
        %4234 = vmatpush1.bf16.msra.mxu0 %v2483
        %4235 = vmatprep.subr.bf16.mxu0 %v2489
        %4236 = vmatpush1.bf16.msra.mxu0 %v2488
        %4237 = vmatprep.subr.bf16.mxu0 %v2494
        %4238 = vmatpush1.bf16.msra.mxu0 %v2493
        %4239 = vmatprep.subr.bf16.mxu0 %v2499
        %4240 = vmatpush1.bf16.msra.mxu0 %v2498
        %4241 = vmatprep.subr.bf16.mxu0 %v2504
        %4242 = vmatpush1.bf16.msra.mxu0 %v2503
        %4243 = vmatprep.subr.bf16.mxu0 %v2509
        %4244 = vmatpush1.bf16.msra.mxu0 %v2508
        %4245 = vmatprep.subr.bf16.mxu0 %v2514
        %4246 = vmatpush1.bf16.msra.mxu0 %v2513
        %4247 = vmatprep.subr.bf16.mxu0 %v2519
        %4248 = vmatpush1.bf16.msra.mxu0 %v2518
        %4249 = vmatprep.subr.bf16.mxu0 %v2524
        %4250 = vmatpush1.bf16.msra.mxu0 %v2523
        %4251 = vmatprep.subr.bf16.mxu0 %v2529
        %4252 = vmatpush1.bf16.msra.mxu0 %v2528
        %4253 = vmatprep.subr.bf16.mxu0 %v2534
        %4254 = vmatpush1.bf16.msra.mxu0 %v2533
        %4255 = vmatprep.subr.bf16.mxu0 %v2539
        %4256 = vmatpush1.bf16.msra.mxu0 %v2538
        %4257 = vmatprep.mubr.bf16.mxu0 %v3636
        %4258 = vmatmul.mubr.bf16.gmra.mrb[0].mxu0 %v3635
        %v4259 = vpop.f32.mrb[0].mxu0
        %v4260 = vadd.f32 %v4217, %v4259
        %v4261 = vpop.f32.mrb[0].mxu0
        %v4262 = vadd.f32 %v4219, %v4261
        %v4263 = vpop.f32.mrb[0].mxu0
        %v4264 = vadd.f32 %v4221, %v4263
        %v4265 = vpop.f32.mrb[0].mxu0
        %v4266 = vadd.f32 %v4223, %v4265
        %4267 = vdwg.mxu0
        %4268 = vmatprep.subr.bf16.mxu0 %v2544
        %4269 = vmatpush1.bf16.msra.mxu0 %v2543
        %4270 = vmatprep.subr.bf16.mxu0 %v2549
        %4271 = vmatpush1.bf16.msra.mxu0 %v2548
        %4272 = vmatprep.subr.bf16.mxu0 %v2554
        %4273 = vmatpush1.bf16.msra.mxu0 %v2553
        %4274 = vmatprep.subr.bf16.mxu0 %v2559
        %4275 = vmatpush1.bf16.msra.mxu0 %v2558
        %4276 = vmatprep.subr.bf16.mxu0 %v2564
        %4277 = vmatpush1.bf16.msra.mxu0 %v2563
        %4278 = vmatprep.subr.bf16.mxu0 %v2569
        %4279 = vmatpush1.bf16.msra.mxu0 %v2568
        %4280 = vmatprep.subr.bf16.mxu0 %v2574
        %4281 = vmatpush1.bf16.msra.mxu0 %v2573
        %4282 = vmatprep.subr.bf16.mxu0 %v2579
        %4283 = vmatpush1.bf16.msra.mxu0 %v2578
        %4284 = vmatprep.subr.bf16.mxu0 %v2584
        %4285 = vmatpush1.bf16.msra.mxu0 %v2583
        %4286 = vmatprep.subr.bf16.mxu0 %v2589
        %4287 = vmatpush1.bf16.msra.mxu0 %v2588
        %4288 = vmatprep.subr.bf16.mxu0 %v2594
        %4289 = vmatpush1.bf16.msra.mxu0 %v2593
        %4290 = vmatprep.subr.bf16.mxu0 %v2599
        %4291 = vmatpush1.bf16.msra.mxu0 %v2598
        %4292 = vmatprep.subr.bf16.mxu0 %v2604
        %4293 = vmatpush1.bf16.msra.mxu0 %v2603
        %4294 = vmatprep.subr.bf16.mxu0 %v2609
        %4295 = vmatpush1.bf16.msra.mxu0 %v2608
        %4296 = vmatprep.subr.bf16.mxu0 %v2614
        %4297 = vmatpush1.bf16.msra.mxu0 %v2613
        %4298 = vmatprep.subr.bf16.mxu0 %v2619
        %4299 = vmatpush1.bf16.msra.mxu0 %v2618
        %4300 = vmatprep.mubr.bf16.mxu0 %v3638
        %4301 = vmatmul.mubr.bf16.gmra.mrb[0].mxu0 %v3637
        %v4302 = vpop.f32.mrb[0].mxu0
        %v4303 = vadd.f32 %v4260, %v4302
        %v4304 = vpop.f32.mrb[0].mxu0
        %v4305 = vadd.f32 %v4262, %v4304
        %v4306 = vpop.f32.mrb[0].mxu0
        %v4307 = vadd.f32 %v4264, %v4306
        %v4308 = vpop.f32.mrb[0].mxu0
        %v4309 = vadd.f32 %v4266, %v4308
        %4310 = vdwg.mxu0
        %4311 = vmatprep.subr.bf16.mxu0 %v2624
        %4312 = vmatpush1.bf16.msra.mxu0 %v2623
        %4313 = vmatprep.subr.bf16.mxu0 %v2629
        %4314 = vmatpush1.bf16.msra.mxu0 %v2628
        %4315 = vmatprep.subr.bf16.mxu0 %v2634
        %4316 = vmatpush1.bf16.msra.mxu0 %v2633
        %4317 = vmatprep.subr.bf16.mxu0 %v2639
        %4318 = vmatpush1.bf16.msra.mxu0 %v2638
        %4319 = vmatprep.subr.bf16.mxu0 %v2644
        %4320 = vmatpush1.bf16.msra.mxu0 %v2643
        %4321 = vmatprep.subr.bf16.mxu0 %v2649
        %4322 = vmatpush1.bf16.msra.mxu0 %v2648
        %4323 = vmatprep.subr.bf16.mxu0 %v2654
        %4324 = vmatpush1.bf16.msra.mxu0 %v2653
        %4325 = vmatprep.subr.bf16.mxu0 %v2659
        %4326 = vmatpush1.bf16.msra.mxu0 %v2658
        %4327 = vmatprep.subr.bf16.mxu0 %v2664
        %4328 = vmatpush1.bf16.msra.mxu0 %v2663
        %4329 = vmatprep.subr.bf16.mxu0 %v2669
        %4330 = vmatpush1.bf16.msra.mxu0 %v2668
        %4331 = vmatprep.subr.bf16.mxu0 %v2674
        %4332 = vmatpush1.bf16.msra.mxu0 %v2673
        %4333 = vmatprep.subr.bf16.mxu0 %v2679
        %4334 = vmatpush1.bf16.msra.mxu0 %v2678
        %4335 = vmatprep.subr.bf16.mxu0 %v2684
        %4336 = vmatpush1.bf16.msra.mxu0 %v2683
        %4337 = vmatprep.subr.bf16.mxu0 %v2689
        %4338 = vmatpush1.bf16.msra.mxu0 %v2688
        %4339 = vmatprep.subr.bf16.mxu0 %v2694
        %4340 = vmatpush1.bf16.msra.mxu0 %v2693
        %4341 = vmatprep.subr.bf16.mxu0 %v2699
        %4342 = vmatpush1.bf16.msra.mxu0 %v2698
        %4343 = vmatprep.mubr.bf16.mxu0 %v3640
        %4344 = vmatmul.mubr.bf16.gmra.mrb[0].mxu0 %v3639
        %v4345 = vpop.f32.mrb[0].mxu0
        %v4346 = vadd.f32 %v4303, %v4345
        %v4347 = vpop.f32.mrb[0].mxu0
        %v4348 = vadd.f32 %v4305, %v4347
        %v4349 = vpop.f32.mrb[0].mxu0
        %v4350 = vadd.f32 %v4307, %v4349
        %v4351 = vpop.f32.mrb[0].mxu0
        %v4352 = vadd.f32 %v4309, %v4351
        %4353 = vdwg.mxu0
        %4354 = vmatprep.subr.bf16.mxu0 %v2704
        %4355 = vmatpush1.bf16.msra.mxu0 %v2703
        %4356 = vmatprep.subr.bf16.mxu0 %v2709
        %4357 = vmatpush1.bf16.msra.mxu0 %v2708
        %4358 = vmatprep.subr.bf16.mxu0 %v2714
        %4359 = vmatpush1.bf16.msra.mxu0 %v2713
        %4360 = vmatprep.subr.bf16.mxu0 %v2719
        %4361 = vmatpush1.bf16.msra.mxu0 %v2718
        %4362 = vmatprep.subr.bf16.mxu0 %v2724
        %4363 = vmatpush1.bf16.msra.mxu0 %v2723
        %4364 = vmatprep.subr.bf16.mxu0 %v2729
        %4365 = vmatpush1.bf16.msra.mxu0 %v2728
        %4366 = vmatprep.subr.bf16.mxu0 %v2734
        %4367 = vmatpush1.bf16.msra.mxu0 %v2733
        %4368 = vmatprep.subr.bf16.mxu0 %v2739
        %4369 = vmatpush1.bf16.msra.mxu0 %v2738
        %4370 = vmatprep.subr.bf16.mxu0 %v2744
        %4371 = vmatpush1.bf16.msra.mxu0 %v2743
        %4372 = vmatprep.subr.bf16.mxu0 %v2749
        %4373 = vmatpush1.bf16.msra.mxu0 %v2748
        %4374 = vmatprep.subr.bf16.mxu0 %v2754
        %4375 = vmatpush1.bf16.msra.mxu0 %v2753
        %4376 = vmatprep.subr.bf16.mxu0 %v2759
        %4377 = vmatpush1.bf16.msra.mxu0 %v2758
        %4378 = vmatprep.subr.bf16.mxu0 %v2764
        %4379 = vmatpush1.bf16.msra.mxu0 %v2763
        %4380 = vmatprep.subr.bf16.mxu0 %v2769
        %4381 = vmatpush1.bf16.msra.mxu0 %v2768
        %4382 = vmatprep.subr.bf16.mxu0 %v2774
        %4383 = vmatpush1.bf16.msra.mxu0 %v2773
        %4384 = vmatprep.subr.bf16.mxu0 %v2779
        %4385 = vmatpush1.bf16.msra.mxu0 %v2778
        %4386 = vmatprep.mubr.bf16.mxu0 %v3642
        %4387 = vmatmul.mubr.bf16.gmra.mrb[0].mxu0 %v3641
        %v4388 = vpop.f32.mrb[0].mxu0
        %v4389 = vadd.f32 %v4346, %v4388
        %v4390 = vpop.f32.mrb[0].mxu0
        %v4391 = vadd.f32 %v4348, %v4390
        %v4392 = vpop.f32.mrb[0].mxu0
        %v4393 = vadd.f32 %v4350, %v4392
        %v4394 = vpop.f32.mrb[0].mxu0
        %v4395 = vadd.f32 %v4352, %v4394
        %4396 = vdwg.mxu0
        %4397 = vmatprep.subr.bf16.mxu0 %v2784
        %4398 = vmatpush1.bf16.msra.mxu0 %v2783
        %4399 = vmatprep.subr.bf16.mxu0 %v2789
        %4400 = vmatpush1.bf16.msra.mxu0 %v2788
        %4401 = vmatprep.subr.bf16.mxu0 %v2794
        %4402 = vmatpush1.bf16.msra.mxu0 %v2793
        %4403 = vmatprep.subr.bf16.mxu0 %v2799
        %4404 = vmatpush1.bf16.msra.mxu0 %v2798
        %4405 = vmatprep.subr.bf16.mxu0 %v2804
        %4406 = vmatpush1.bf16.msra.mxu0 %v2803
        %4407 = vmatprep.subr.bf16.mxu0 %v2809
        %4408 = vmatpush1.bf16.msra.mxu0 %v2808
        %4409 = vmatprep.subr.bf16.mxu0 %v2814
        %4410 = vmatpush1.bf16.msra.mxu0 %v2813
        %4411 = vmatprep.subr.bf16.mxu0 %v2819
        %4412 = vmatpush1.bf16.msra.mxu0 %v2818
        %4413 = vmatprep.subr.bf16.mxu0 %v2824
        %4414 = vmatpush1.bf16.msra.mxu0 %v2823
        %4415 = vmatprep.subr.bf16.mxu0 %v2829
        %4416 = vmatpush1.bf16.msra.mxu0 %v2828
        %4417 = vmatprep.subr.bf16.mxu0 %v2834
        %4418 = vmatpush1.bf16.msra.mxu0 %v2833
        %4419 = vmatprep.subr.bf16.mxu0 %v2839
        %4420 = vmatpush1.bf16.msra.mxu0 %v2838
        %4421 = vmatprep.subr.bf16.mxu0 %v2844
        %4422 = vmatpush1.bf16.msra.mxu0 %v2843
        %4423 = vmatprep.subr.bf16.mxu0 %v2849
        %4424 = vmatpush1.bf16.msra.mxu0 %v2848
        %4425 = vmatprep.subr.bf16.mxu0 %v2854
        %4426 = vmatpush1.bf16.msra.mxu0 %v2853
        %4427 = vmatprep.subr.bf16.mxu0 %v2859
        %4428 = vmatpush1.bf16.msra.mxu0 %v2858
        %4429 = vmatprep.mubr.bf16.mxu0 %v3644
        %4430 = vmatmul.mubr.bf16.gmra.mrb[0].mxu0 %v3643
        %v4431 = vpop.f32.mrb[0].mxu0
        %v4432 = vadd.f32 %v4389, %v4431
        %v4433 = vpop.f32.mrb[0].mxu0
        %v4434 = vadd.f32 %v4391, %v4433
        %v4435 = vpop.f32.mrb[0].mxu0
        %v4436 = vadd.f32 %v4393, %v4435
        %v4437 = vpop.f32.mrb[0].mxu0
        %v4438 = vadd.f32 %v4395, %v4437
        %4439 = vdwg.mxu0
        %4440 = vmatprep.subr.bf16.mxu0 %v2864
        %4441 = vmatpush1.bf16.msra.mxu0 %v2863
        %4442 = vmatprep.subr.bf16.mxu0 %v2869
        %4443 = vmatpush1.bf16.msra.mxu0 %v2868
        %4444 = vmatprep.subr.bf16.mxu0 %v2874
        %4445 = vmatpush1.bf16.msra.mxu0 %v2873
        %4446 = vmatprep.subr.bf16.mxu0 %v2879
        %4447 = vmatpush1.bf16.msra.mxu0 %v2878
        %4448 = vmatprep.subr.bf16.mxu0 %v2884
        %4449 = vmatpush1.bf16.msra.mxu0 %v2883
        %4450 = vmatprep.subr.bf16.mxu0 %v2889
        %4451 = vmatpush1.bf16.msra.mxu0 %v2888
        %4452 = vmatprep.subr.bf16.mxu0 %v2894
        %4453 = vmatpush1.bf16.msra.mxu0 %v2893
        %4454 = vmatprep.subr.bf16.mxu0 %v2899
        %4455 = vmatpush1.bf16.msra.mxu0 %v2898
        %4456 = vmatprep.subr.bf16.mxu0 %v2904
        %4457 = vmatpush1.bf16.msra.mxu0 %v2903
        %4458 = vmatprep.subr.bf16.mxu0 %v2909
        %4459 = vmatpush1.bf16.msra.mxu0 %v2908
        %4460 = vmatprep.subr.bf16.mxu0 %v2914
        %4461 = vmatpush1.bf16.msra.mxu0 %v2913
        %4462 = vmatprep.subr.bf16.mxu0 %v2919
        %4463 = vmatpush1.bf16.msra.mxu0 %v2918
        %4464 = vmatprep.subr.bf16.mxu0 %v2924
        %4465 = vmatpush1.bf16.msra.mxu0 %v2923
        %4466 = vmatprep.subr.bf16.mxu0 %v2929
        %4467 = vmatpush1.bf16.msra.mxu0 %v2928
        %4468 = vmatprep.subr.bf16.mxu0 %v2934
        %4469 = vmatpush1.bf16.msra.mxu0 %v2933
        %4470 = vmatprep.subr.bf16.mxu0 %v2939
        %4471 = vmatpush1.bf16.msra.mxu0 %v2938
        %4472 = vmatprep.mubr.bf16.mxu0 %v3646
        %4473 = vmatmul.mubr.bf16.gmra.mrb[0].mxu0 %v3645
        %v4474 = vpop.f32.mrb[0].mxu0
        %v4475 = vadd.f32 %v4432, %v4474
        %v4476 = vpop.f32.mrb[0].mxu0
        %v4477 = vadd.f32 %v4434, %v4476
        %v4478 = vpop.f32.mrb[0].mxu0
        %v4479 = vadd.f32 %v4436, %v4478
        %v4480 = vpop.f32.mrb[0].mxu0
        %v4481 = vadd.f32 %v4438, %v4480
        %4482 = vdwg.mxu0
        %4483 = vmatprep.subr.bf16.mxu0 %v2944
        %4484 = vmatpush1.bf16.msra.mxu0 %v2943
        %4485 = vmatprep.subr.bf16.mxu0 %v2949
        %4486 = vmatpush1.bf16.msra.mxu0 %v2948
        %4487 = vmatprep.subr.bf16.mxu0 %v2954
        %4488 = vmatpush1.bf16.msra.mxu0 %v2953
        %4489 = vmatprep.subr.bf16.mxu0 %v2959
        %4490 = vmatpush1.bf16.msra.mxu0 %v2958
        %4491 = vmatprep.subr.bf16.mxu0 %v2964
        %4492 = vmatpush1.bf16.msra.mxu0 %v2963
        %4493 = vmatprep.subr.bf16.mxu0 %v2969
        %4494 = vmatpush1.bf16.msra.mxu0 %v2968
        %4495 = vmatprep.subr.bf16.mxu0 %v2974
        %4496 = vmatpush1.bf16.msra.mxu0 %v2973
        %4497 = vmatprep.subr.bf16.mxu0 %v2979
        %4498 = vmatpush1.bf16.msra.mxu0 %v2978
        %4499 = vmatprep.subr.bf16.mxu0 %v2984
        %4500 = vmatpush1.bf16.msra.mxu0 %v2983
        %4501 = vmatprep.subr.bf16.mxu0 %v2989
        %4502 = vmatpush1.bf16.msra.mxu0 %v2988
        %4503 = vmatprep.subr.bf16.mxu0 %v2994
        %4504 = vmatpush1.bf16.msra.mxu0 %v2993
        %4505 = vmatprep.subr.bf16.mxu0 %v2999
        %4506 = vmatpush1.bf16.msra.mxu0 %v2998
        %4507 = vmatprep.subr.bf16.mxu0 %v3004
        %4508 = vmatpush1.bf16.msra.mxu0 %v3003
        %4509 = vmatprep.subr.bf16.mxu0 %v3009
        %4510 = vmatpush1.bf16.msra.mxu0 %v3008
        %4511 = vmatprep.subr.bf16.mxu0 %v3014
        %4512 = vmatpush1.bf16.msra.mxu0 %v3013
        %4513 = vmatprep.subr.bf16.mxu0 %v3019
        %4514 = vmatpush1.bf16.msra.mxu0 %v3018
        %4515 = vmatprep.mubr.bf16.mxu0 %v3648
        %4516 = vmatmul.mubr.bf16.gmra.mrb[0].mxu0 %v3647
        %v4517 = vpop.f32.mrb[0].mxu0
        %v4518 = vadd.f32 %v4475, %v4517
        %v4519 = vpop.f32.mrb[0].mxu0
        %v4520 = vadd.f32 %v4477, %v4519
        %v4521 = vpop.f32.mrb[0].mxu0
        %v4522 = vadd.f32 %v4479, %v4521
        %v4523 = vpop.f32.mrb[0].mxu0
        %v4524 = vadd.f32 %v4481, %v4523
        %4525 = vdwg.mxu0
        %4526 = vmatprep.subr.bf16.mxu0 %v3024
        %4527 = vmatpush1.bf16.msra.mxu0 %v3023
        %4528 = vmatprep.subr.bf16.mxu0 %v3029
        %4529 = vmatpush1.bf16.msra.mxu0 %v3028
        %4530 = vmatprep.subr.bf16.mxu0 %v3034
        %4531 = vmatpush1.bf16.msra.mxu0 %v3033
        %4532 = vmatprep.subr.bf16.mxu0 %v3039
        %4533 = vmatpush1.bf16.msra.mxu0 %v3038
        %4534 = vmatprep.subr.bf16.mxu0 %v3044
        %4535 = vmatpush1.bf16.msra.mxu0 %v3043
        %4536 = vmatprep.subr.bf16.mxu0 %v3049
        %4537 = vmatpush1.bf16.msra.mxu0 %v3048
        %4538 = vmatprep.subr.bf16.mxu0 %v3054
        %4539 = vmatpush1.bf16.msra.mxu0 %v3053
        %4540 = vmatprep.subr.bf16.mxu0 %v3059
        %4541 = vmatpush1.bf16.msra.mxu0 %v3058
        %4542 = vmatprep.subr.bf16.mxu0 %v3064
        %4543 = vmatpush1.bf16.msra.mxu0 %v3063
        %4544 = vmatprep.subr.bf16.mxu0 %v3069
        %4545 = vmatpush1.bf16.msra.mxu0 %v3068
        %4546 = vmatprep.subr.bf16.mxu0 %v3074
        %4547 = vmatpush1.bf16.msra.mxu0 %v3073
        %4548 = vmatprep.subr.bf16.mxu0 %v3079
        %4549 = vmatpush1.bf16.msra.mxu0 %v3078
        %4550 = vmatprep.subr.bf16.mxu0 %v3084
        %4551 = vmatpush1.bf16.msra.mxu0 %v3083
        %4552 = vmatprep.subr.bf16.mxu0 %v3089
        %4553 = vmatpush1.bf16.msra.mxu0 %v3088
        %4554 = vmatprep.subr.bf16.mxu0 %v3094
        %4555 = vmatpush1.bf16.msra.mxu0 %v3093
        %4556 = vmatprep.subr.bf16.mxu0 %v3099
        %4557 = vmatpush1.bf16.msra.mxu0 %v3098
        %4558 = vmatprep.mubr.bf16.mxu0 %v3650
        %4559 = vmatmul.mubr.bf16.gmra.mrb[0].mxu0 %v3649
        %v4560 = vpop.f32.mrb[0].mxu0
        %v4561 = vadd.f32 %v4518, %v4560
        %v4562 = vpop.f32.mrb[0].mxu0
        %v4563 = vadd.f32 %v4520, %v4562
        %v4564 = vpop.f32.mrb[0].mxu0
        %v4565 = vadd.f32 %v4522, %v4564
        %v4566 = vpop.f32.mrb[0].mxu0
        %v4567 = vadd.f32 %v4524, %v4566
        %4568 = vdwg.mxu0
        %4569 = vmatprep.subr.bf16.mxu0 %v3104
        %4570 = vmatpush1.bf16.msra.mxu0 %v3103
        %4571 = vmatprep.subr.bf16.mxu0 %v3109
        %4572 = vmatpush1.bf16.msra.mxu0 %v3108
        %4573 = vmatprep.subr.bf16.mxu0 %v3114
        %4574 = vmatpush1.bf16.msra.mxu0 %v3113
        %4575 = vmatprep.subr.bf16.mxu0 %v3119
        %4576 = vmatpush1.bf16.msra.mxu0 %v3118
        %4577 = vmatprep.subr.bf16.mxu0 %v3124
        %4578 = vmatpush1.bf16.msra.mxu0 %v3123
        %4579 = vmatprep.subr.bf16.mxu0 %v3129
        %4580 = vmatpush1.bf16.msra.mxu0 %v3128
        %4581 = vmatprep.subr.bf16.mxu0 %v3134
        %4582 = vmatpush1.bf16.msra.mxu0 %v3133
        %4583 = vmatprep.subr.bf16.mxu0 %v3139
        %4584 = vmatpush1.bf16.msra.mxu0 %v3138
        %4585 = vmatprep.subr.bf16.mxu0 %v3144
        %4586 = vmatpush1.bf16.msra.mxu0 %v3143
        %4587 = vmatprep.subr.bf16.mxu0 %v3149
        %4588 = vmatpush1.bf16.msra.mxu0 %v3148
        %4589 = vmatprep.subr.bf16.mxu0 %v3154
        %4590 = vmatpush1.bf16.msra.mxu0 %v3153
        %4591 = vmatprep.subr.bf16.mxu0 %v3159
        %4592 = vmatpush1.bf16.msra.mxu0 %v3158
        %4593 = vmatprep.subr.bf16.mxu0 %v3164
        %4594 = vmatpush1.bf16.msra.mxu0 %v3163
        %4595 = vmatprep.subr.bf16.mxu0 %v3169
        %4596 = vmatpush1.bf16.msra.mxu0 %v3168
        %4597 = vmatprep.subr.bf16.mxu0 %v3174
        %4598 = vmatpush1.bf16.msra.mxu0 %v3173
        %4599 = vmatprep.subr.bf16.mxu0 %v3179
        %4600 = vmatpush1.bf16.msra.mxu0 %v3178
        %4601 = vmatprep.mubr.bf16.mxu0 %v3652
        %4602 = vmatmul.mubr.bf16.gmra.mrb[0].mxu0 %v3651
        %v4603 = vpop.f32.mrb[0].mxu0
        %v4604 = vadd.f32 %v4561, %v4603
        %v4605 = vpop.f32.mrb[0].mxu0
        %v4606 = vadd.f32 %v4563, %v4605
        %v4607 = vpop.f32.mrb[0].mxu0
        %v4608 = vadd.f32 %v4565, %v4607
        %v4609 = vpop.f32.mrb[0].mxu0
        %v4610 = vadd.f32 %v4567, %v4609
        %4611 = vdwg.mxu0
        %4612 = vmatprep.subr.bf16.mxu0 %v3184
        %4613 = vmatpush1.bf16.msra.mxu0 %v3183
        %4614 = vmatprep.subr.bf16.mxu0 %v3189
        %4615 = vmatpush1.bf16.msra.mxu0 %v3188
        %4616 = vmatprep.subr.bf16.mxu0 %v3194
        %4617 = vmatpush1.bf16.msra.mxu0 %v3193
        %4618 = vmatprep.subr.bf16.mxu0 %v3199
        %4619 = vmatpush1.bf16.msra.mxu0 %v3198
        %4620 = vmatprep.subr.bf16.mxu0 %v3204
        %4621 = vmatpush1.bf16.msra.mxu0 %v3203
        %4622 = vmatprep.subr.bf16.mxu0 %v3209
        %4623 = vmatpush1.bf16.msra.mxu0 %v3208
        %4624 = vmatprep.subr.bf16.mxu0 %v3214
        %4625 = vmatpush1.bf16.msra.mxu0 %v3213
        %4626 = vmatprep.subr.bf16.mxu0 %v3219
        %4627 = vmatpush1.bf16.msra.mxu0 %v3218
        %4628 = vmatprep.subr.bf16.mxu0 %v3224
        %4629 = vmatpush1.bf16.msra.mxu0 %v3223
        %4630 = vmatprep.subr.bf16.mxu0 %v3229
        %4631 = vmatpush1.bf16.msra.mxu0 %v3228
        %4632 = vmatprep.subr.bf16.mxu0 %v3234
        %4633 = vmatpush1.bf16.msra.mxu0 %v3233
        %4634 = vmatprep.subr.bf16.mxu0 %v3239
        %4635 = vmatpush1.bf16.msra.mxu0 %v3238
        %4636 = vmatprep.subr.bf16.mxu0 %v3244
        %4637 = vmatpush1.bf16.msra.mxu0 %v3243
        %4638 = vmatprep.subr.bf16.mxu0 %v3249
        %4639 = vmatpush1.bf16.msra.mxu0 %v3248
        %4640 = vmatprep.subr.bf16.mxu0 %v3254
        %4641 = vmatpush1.bf16.msra.mxu0 %v3253
        %4642 = vmatprep.subr.bf16.mxu0 %v3259
        %4643 = vmatpush1.bf16.msra.mxu0 %v3258
        %4644 = vmatprep.mubr.bf16.mxu0 %v3654
        %4645 = vmatmul.mubr.bf16.gmra.mrb[0].mxu0 %v3653
        %v4646 = vpop.f32.mrb[0].mxu0
        %v4647 = vadd.f32 %v4604, %v4646
        %v4648 = vpop.f32.mrb[0].mxu0
        %v4649 = vadd.f32 %v4606, %v4648
        %v4650 = vpop.f32.mrb[0].mxu0
        %v4651 = vadd.f32 %v4608, %v4650
        %v4652 = vpop.f32.mrb[0].mxu0
        %v4653 = vadd.f32 %v4610, %v4652
        %4654 = vdwg.mxu0
        %4655 = vmatprep.subr.bf16.mxu0 %v3264
        %4656 = vmatpush1.bf16.msra.mxu0 %v3263
        %4657 = vmatprep.subr.bf16.mxu0 %v3269
        %4658 = vmatpush1.bf16.msra.mxu0 %v3268
        %4659 = vmatprep.subr.bf16.mxu0 %v3274
        %4660 = vmatpush1.bf16.msra.mxu0 %v3273
        %4661 = vmatprep.subr.bf16.mxu0 %v3279
        %4662 = vmatpush1.bf16.msra.mxu0 %v3278
        %4663 = vmatprep.subr.bf16.mxu0 %v3284
        %4664 = vmatpush1.bf16.msra.mxu0 %v3283
        %4665 = vmatprep.subr.bf16.mxu0 %v3289
        %4666 = vmatpush1.bf16.msra.mxu0 %v3288
        %4667 = vmatprep.subr.bf16.mxu0 %v3294
        %4668 = vmatpush1.bf16.msra.mxu0 %v3293
        %4669 = vmatprep.subr.bf16.mxu0 %v3299
        %4670 = vmatpush1.bf16.msra.mxu0 %v3298
        %4671 = vmatprep.subr.bf16.mxu0 %v3304
        %4672 = vmatpush1.bf16.msra.mxu0 %v3303
        %4673 = vmatprep.subr.bf16.mxu0 %v3309
        %4674 = vmatpush1.bf16.msra.mxu0 %v3308
        %4675 = vmatprep.subr.bf16.mxu0 %v3314
        %4676 = vmatpush1.bf16.msra.mxu0 %v3313
        %4677 = vmatprep.subr.bf16.mxu0 %v3319
        %4678 = vmatpush1.bf16.msra.mxu0 %v3318
        %4679 = vmatprep.subr.bf16.mxu0 %v3324
        %4680 = vmatpush1.bf16.msra.mxu0 %v3323
        %4681 = vmatprep.subr.bf16.mxu0 %v3329
        %4682 = vmatpush1.bf16.msra.mxu0 %v3328
        %4683 = vmatprep.subr.bf16.mxu0 %v3334
        %4684 = vmatpush1.bf16.msra.mxu0 %v3333
        %4685 = vmatprep.subr.bf16.mxu0 %v3339
        %4686 = vmatpush1.bf16.msra.mxu0 %v3338
        %4687 = vmatprep.mubr.bf16.mxu0 %v3656
        %4688 = vmatmul.mubr.bf16.gmra.mrb[0].mxu0 %v3655
        %v4689 = vpop.f32.mrb[0].mxu0
        %v4690 = vadd.f32 %v4647, %v4689
        %v4691 = vpop.f32.mrb[0].mxu0
        %v4692 = vadd.f32 %v4649, %v4691
        %v4693 = vpop.f32.mrb[0].mxu0
        %v4694 = vadd.f32 %v4651, %v4693
        %v4695 = vpop.f32.mrb[0].mxu0
        %v4696 = vadd.f32 %v4653, %v4695
        %4697 = vdwg.mxu0
        %4698 = vmatprep.subr.bf16.mxu0 %v3344
        %4699 = vmatpush1.bf16.msra.mxu0 %v3343
        %4700 = vmatprep.subr.bf16.mxu0 %v3349
        %4701 = vmatpush1.bf16.msra.mxu0 %v3348
        %4702 = vmatprep.subr.bf16.mxu0 %v3354
        %4703 = vmatpush1.bf16.msra.mxu0 %v3353
        %4704 = vmatprep.subr.bf16.mxu0 %v3359
        %4705 = vmatpush1.bf16.msra.mxu0 %v3358
        %4706 = vmatprep.subr.bf16.mxu0 %v3364
        %4707 = vmatpush1.bf16.msra.mxu0 %v3363
        %4708 = vmatprep.subr.bf16.mxu0 %v3369
        %4709 = vmatpush1.bf16.msra.mxu0 %v3368
        %4710 = vmatprep.subr.bf16.mxu0 %v3374
        %4711 = vmatpush1.bf16.msra.mxu0 %v3373
        %4712 = vmatprep.subr.bf16.mxu0 %v3379
        %4713 = vmatpush1.bf16.msra.mxu0 %v3378
        %4714 = vmatprep.subr.bf16.mxu0 %v3384
        %4715 = vmatpush1.bf16.msra.mxu0 %v3383
        %4716 = vmatprep.subr.bf16.mxu0 %v3389
        %4717 = vmatpush1.bf16.msra.mxu0 %v3388
        %4718 = vmatprep.subr.bf16.mxu0 %v3394
        %4719 = vmatpush1.bf16.msra.mxu0 %v3393
        %4720 = vmatprep.subr.bf16.mxu0 %v3399
        %4721 = vmatpush1.bf16.msra.mxu0 %v3398
        %4722 = vmatprep.subr.bf16.mxu0 %v3404
        %4723 = vmatpush1.bf16.msra.mxu0 %v3403
        %4724 = vmatprep.subr.bf16.mxu0 %v3409
        %4725 = vmatpush1.bf16.msra.mxu0 %v3408
        %4726 = vmatprep.subr.bf16.mxu0 %v3414
        %4727 = vmatpush1.bf16.msra.mxu0 %v3413
        %4728 = vmatprep.subr.bf16.mxu0 %v3419
        %4729 = vmatpush1.bf16.msra.mxu0 %v3418
        %4730 = vmatprep.mubr.bf16.mxu0 %v3658
        %4731 = vmatmul.mubr.bf16.gmra.mrb[0].mxu0 %v3657
        %v4732 = vpop.f32.mrb[0].mxu0
        %v4733 = vadd.f32 %v4690, %v4732
        %v4734 = vpop.f32.mrb[0].mxu0
        %v4735 = vadd.f32 %v4692, %v4734
        %v4736 = vpop.f32.mrb[0].mxu0
        %v4737 = vadd.f32 %v4694, %v4736
        %v4738 = vpop.f32.mrb[0].mxu0
        %v4739 = vadd.f32 %v4696, %v4738
        %4740 = vdwg.mxu0
        %4741 = vmatprep.subr.bf16.mxu0 %v3424
        %4742 = vmatpush1.bf16.msra.mxu0 %v3423
        %4743 = vmatprep.subr.bf16.mxu0 %v3429
        %4744 = vmatpush1.bf16.msra.mxu0 %v3428
        %4745 = vmatprep.subr.bf16.mxu0 %v3434
        %4746 = vmatpush1.bf16.msra.mxu0 %v3433
        %4747 = vmatprep.subr.bf16.mxu0 %v3439
        %4748 = vmatpush1.bf16.msra.mxu0 %v3438
        %4749 = vmatprep.subr.bf16.mxu0 %v3444
        %4750 = vmatpush1.bf16.msra.mxu0 %v3443
        %4751 = vmatprep.subr.bf16.mxu0 %v3449
        %4752 = vmatpush1.bf16.msra.mxu0 %v3448
        %4753 = vmatprep.subr.bf16.mxu0 %v3454
        %4754 = vmatpush1.bf16.msra.mxu0 %v3453
        %4755 = vmatprep.subr.bf16.mxu0 %v3459
        %4756 = vmatpush1.bf16.msra.mxu0 %v3458
        %4757 = vmatprep.subr.bf16.mxu0 0
        %4758 = vmatpush1.bf16.msra.mxu0 0
        %4759 = vmatprep.subr.bf16.mxu0 0
        %4760 = vmatpush1.bf16.msra.mxu0 0
        %4761 = vmatprep.subr.bf16.mxu0 0
        %4762 = vmatpush1.bf16.msra.mxu0 0
        %4763 = vmatprep.subr.bf16.mxu0 0
        %4764 = vmatpush1.bf16.msra.mxu0 0
        %4765 = vmatprep.subr.bf16.mxu0 0
        %4766 = vmatpush1.bf16.msra.mxu0 0
        %4767 = vmatprep.subr.bf16.mxu0 0
        %4768 = vmatpush1.bf16.msra.mxu0 0
        %4769 = vmatprep.subr.bf16.mxu0 0
        %4770 = vmatpush1.bf16.msra.mxu0 0
        %4771 = vmatprep.subr.bf16.mxu0 0
        %4772 = vmatpush1.bf16.msra.mxu0 0
        %4773 = vmatprep.mubr.bf16.mxu0 0
        %4774 = vmatmul.mubr.bf16.gmra.mrb[0].mxu0 %v3659
        %v4775 = vpop.f32.mrb[0].mxu0
        %v4776 = vadd.f32 %v4733, %v4775
        %v4777 = vpop.f32.mrb[0].mxu0
        %v4778 = vadd.f32 %v4735, %v4777
        %v4779 = vpop.f32.mrb[0].mxu0
        %v4780 = vadd.f32 %v4737, %v4779
        %v4781 = vpop.f32.mrb[0].mxu0
        %v4782 = vadd.f32 %v4739, %v4781
        %4783 = vdwg.mxu0
        %4784 = vmatprep.subr.bf16.mxu0 %v1506
        %4785 = vmatpush1.bf16.msra.mxu0 %v1505
        %4786 = vmatprep.subr.bf16.mxu0 %v1511
        %4787 = vmatpush1.bf16.msra.mxu0 %v1510
        %4788 = vmatprep.subr.bf16.mxu0 %v1516
        %4789 = vmatpush1.bf16.msra.mxu0 %v1515
        %4790 = vmatprep.subr.bf16.mxu0 %v1521
        %4791 = vmatpush1.bf16.msra.mxu0 %v1520
        %4792 = vmatprep.subr.bf16.mxu0 %v1526
        %4793 = vmatpush1.bf16.msra.mxu0 %v1525
        %4794 = vmatprep.subr.bf16.mxu0 %v1531
        %4795 = vmatpush1.bf16.msra.mxu0 %v1530
        %4796 = vmatprep.subr.bf16.mxu0 %v1536
        %4797 = vmatpush1.bf16.msra.mxu0 %v1535
        %4798 = vmatprep.subr.bf16.mxu0 %v1541
        %4799 = vmatpush1.bf16.msra.mxu0 %v1540
        %4800 = vmatprep.subr.bf16.mxu0 %v1546
        %4801 = vmatpush1.bf16.msra.mxu0 %v1545
        %4802 = vmatprep.subr.bf16.mxu0 %v1551
        %4803 = vmatpush1.bf16.msra.mxu0 %v1550
        %4804 = vmatprep.subr.bf16.mxu0 %v1556
        %4805 = vmatpush1.bf16.msra.mxu0 %v1555
        %4806 = vmatprep.subr.bf16.mxu0 %v1561
        %4807 = vmatpush1.bf16.msra.mxu0 %v1560
        %4808 = vmatprep.subr.bf16.mxu0 %v1566
        %4809 = vmatpush1.bf16.msra.mxu0 %v1565
        %4810 = vmatprep.subr.bf16.mxu0 %v1571
        %4811 = vmatpush1.bf16.msra.mxu0 %v1570
        %4812 = vmatprep.subr.bf16.mxu0 %v1576
        %4813 = vmatpush1.bf16.msra.mxu0 %v1575
        %4814 = vmatprep.subr.bf16.mxu0 %v1581
        %4815 = vmatpush1.bf16.msra.mxu0 %v1580
        %4816 = vmatprep.mubr.bf16.mxu0 %v3612
        %4817 = vmatmul.mubr.bf16.gmra.mrb[0].mxu0 %v3611
        %v4818 = vpop.f32.mrb[0].mxu0
        %v4819 = vadd.f32 0.0, %v4818
        %v4820 = vpop.f32.mrb[0].mxu0
        %v4821 = vadd.f32 0.0, %v4820
        %v4822 = vpop.f32.mrb[0].mxu0
        %v4823 = vadd.f32 0.0, %v4822
        %v4824 = vpop.f32.mrb[0].mxu0
        %v4825 = vadd.f32 0.0, %v4824
        %4826 = vdwg.mxu0
        %4827 = vmatprep.subr.bf16.mxu0 %v1586
        %4828 = vmatpush1.bf16.msra.mxu0 %v1585
        %4829 = vmatprep.subr.bf16.mxu0 %v1591
        %4830 = vmatpush1.bf16.msra.mxu0 %v1590
        %4831 = vmatprep.subr.bf16.mxu0 %v1596
        %4832 = vmatpush1.bf16.msra.mxu0 %v1595
        %4833 = vmatprep.subr.bf16.mxu0 %v1601
        %4834 = vmatpush1.bf16.msra.mxu0 %v1600
        %4835 = vmatprep.subr.bf16.mxu0 %v1606
        %4836 = vmatpush1.bf16.msra.mxu0 %v1605
        %4837 = vmatprep.subr.bf16.mxu0 %v1611
        %4838 = vmatpush1.bf16.msra.mxu0 %v1610
        %4839 = vmatprep.subr.bf16.mxu0 %v1616
        %4840 = vmatpush1.bf16.msra.mxu0 %v1615
        %4841 = vmatprep.subr.bf16.mxu0 %v1621
        %4842 = vmatpush1.bf16.msra.mxu0 %v1620
        %4843 = vmatprep.subr.bf16.mxu0 %v1626
        %4844 = vmatpush1.bf16.msra.mxu0 %v1625
        %4845 = vmatprep.subr.bf16.mxu0 %v1631
        %4846 = vmatpush1.bf16.msra.mxu0 %v1630
        %4847 = vmatprep.subr.bf16.mxu0 %v1636
        %4848 = vmatpush1.bf16.msra.mxu0 %v1635
        %4849 = vmatprep.subr.bf16.mxu0 %v1641
        %4850 = vmatpush1.bf16.msra.mxu0 %v1640
        %4851 = vmatprep.subr.bf16.mxu0 %v1646
        %4852 = vmatpush1.bf16.msra.mxu0 %v1645
        %4853 = vmatprep.subr.bf16.mxu0 %v1651
        %4854 = vmatpush1.bf16.msra.mxu0 %v1650
        %4855 = vmatprep.subr.bf16.mxu0 %v1656
        %4856 = vmatpush1.bf16.msra.mxu0 %v1655
        %4857 = vmatprep.subr.bf16.mxu0 %v1661
        %4858 = vmatpush1.bf16.msra.mxu0 %v1660
        %4859 = vmatprep.mubr.bf16.mxu0 %v3614
        %4860 = vmatmul.mubr.bf16.gmra.mrb[0].mxu0 %v3613
        %v4861 = vpop.f32.mrb[0].mxu0
        %v4862 = vadd.f32 %v4819, %v4861
        %v4863 = vpop.f32.mrb[0].mxu0
        %v4864 = vadd.f32 %v4821, %v4863
        %v4865 = vpop.f32.mrb[0].mxu0
        %v4866 = vadd.f32 %v4823, %v4865
        %v4867 = vpop.f32.mrb[0].mxu0
        %v4868 = vadd.f32 %v4825, %v4867
        %4869 = vdwg.mxu0
        %4870 = vmatprep.subr.bf16.mxu0 %v1666
        %4871 = vmatpush1.bf16.msra.mxu0 %v1665
        %4872 = vmatprep.subr.bf16.mxu0 %v1671
        %4873 = vmatpush1.bf16.msra.mxu0 %v1670
        %4874 = vmatprep.subr.bf16.mxu0 %v1676
        %4875 = vmatpush1.bf16.msra.mxu0 %v1675
        %4876 = vmatprep.subr.bf16.mxu0 %v1681
        %4877 = vmatpush1.bf16.msra.mxu0 %v1680
        %4878 = vmatprep.subr.bf16.mxu0 %v1686
        %4879 = vmatpush1.bf16.msra.mxu0 %v1685
        %4880 = vmatprep.subr.bf16.mxu0 %v1691
        %4881 = vmatpush1.bf16.msra.mxu0 %v1690
        %4882 = vmatprep.subr.bf16.mxu0 %v1696
        %4883 = vmatpush1.bf16.msra.mxu0 %v1695
        %4884 = vmatprep.subr.bf16.mxu0 %v1701
        %4885 = vmatpush1.bf16.msra.mxu0 %v1700
        %4886 = vmatprep.subr.bf16.mxu0 %v1706
        %4887 = vmatpush1.bf16.msra.mxu0 %v1705
        %4888 = vmatprep.subr.bf16.mxu0 %v1711
        %4889 = vmatpush1.bf16.msra.mxu0 %v1710
        %4890 = vmatprep.subr.bf16.mxu0 %v1716
        %4891 = vmatpush1.bf16.msra.mxu0 %v1715
        %4892 = vmatprep.subr.bf16.mxu0 %v1721
        %4893 = vmatpush1.bf16.msra.mxu0 %v1720
        %4894 = vmatprep.subr.bf16.mxu0 %v1726
        %4895 = vmatpush1.bf16.msra.mxu0 %v1725
        %4896 = vmatprep.subr.bf16.mxu0 %v1731
        %4897 = vmatpush1.bf16.msra.mxu0 %v1730
        %4898 = vmatprep.subr.bf16.mxu0 %v1736
        %4899 = vmatpush1.bf16.msra.mxu0 %v1735
        %4900 = vmatprep.subr.bf16.mxu0 %v1741
        %4901 = vmatpush1.bf16.msra.mxu0 %v1740
        %4902 = vmatprep.mubr.bf16.mxu0 %v3616
        %4903 = vmatmul.mubr.bf16.gmra.mrb[0].mxu0 %v3615
        %v4904 = vpop.f32.mrb[0].mxu0
        %v4905 = vadd.f32 %v4862, %v4904
        %v4906 = vpop.f32.mrb[0].mxu0
        %v4907 = vadd.f32 %v4864, %v4906
        %v4908 = vpop.f32.mrb[0].mxu0
        %v4909 = vadd.f32 %v4866, %v4908
        %v4910 = vpop.f32.mrb[0].mxu0
        %v4911 = vadd.f32 %v4868, %v4910
        %4912 = vdwg.mxu0
        %4913 = vmatprep.subr.bf16.mxu0 %v1746
        %4914 = vmatpush1.bf16.msra.mxu0 %v1745
        %4915 = vmatprep.subr.bf16.mxu0 %v1751
        %4916 = vmatpush1.bf16.msra.mxu0 %v1750
        %4917 = vmatprep.subr.bf16.mxu0 %v1756
        %4918 = vmatpush1.bf16.msra.mxu0 %v1755
        %4919 = vmatprep.subr.bf16.mxu0 %v1761
        %4920 = vmatpush1.bf16.msra.mxu0 %v1760
        %4921 = vmatprep.subr.bf16.mxu0 %v1766
        %4922 = vmatpush1.bf16.msra.mxu0 %v1765
        %4923 = vmatprep.subr.bf16.mxu0 %v1771
        %4924 = vmatpush1.bf16.msra.mxu0 %v1770
        %4925 = vmatprep.subr.bf16.mxu0 %v1776
        %4926 = vmatpush1.bf16.msra.mxu0 %v1775
        %4927 = vmatprep.subr.bf16.mxu0 %v1781
        %4928 = vmatpush1.bf16.msra.mxu0 %v1780
        %4929 = vmatprep.subr.bf16.mxu0 %v1786
        %4930 = vmatpush1.bf16.msra.mxu0 %v1785
        %4931 = vmatprep.subr.bf16.mxu0 %v1791
        %4932 = vmatpush1.bf16.msra.mxu0 %v1790
        %4933 = vmatprep.subr.bf16.mxu0 %v1796
        %4934 = vmatpush1.bf16.msra.mxu0 %v1795
        %4935 = vmatprep.subr.bf16.mxu0 %v1801
        %4936 = vmatpush1.bf16.msra.mxu0 %v1800
        %4937 = vmatprep.subr.bf16.mxu0 %v1806
        %4938 = vmatpush1.bf16.msra.mxu0 %v1805
        %4939 = vmatprep.subr.bf16.mxu0 %v1811
        %4940 = vmatpush1.bf16.msra.mxu0 %v1810
        %4941 = vmatprep.subr.bf16.mxu0 %v1816
        %4942 = vmatpush1.bf16.msra.mxu0 %v1815
        %4943 = vmatprep.subr.bf16.mxu0 %v1821
        %4944 = vmatpush1.bf16.msra.mxu0 %v1820
        %4945 = vmatprep.mubr.bf16.mxu0 %v3618
        %4946 = vmatmul.mubr.bf16.gmra.mrb[0].mxu0 %v3617
        %v4947 = vpop.f32.mrb[0].mxu0
        %v4948 = vadd.f32 %v4905, %v4947
        %v4949 = vpop.f32.mrb[0].mxu0
        %v4950 = vadd.f32 %v4907, %v4949
        %v4951 = vpop.f32.mrb[0].mxu0
        %v4952 = vadd.f32 %v4909, %v4951
        %v4953 = vpop.f32.mrb[0].mxu0
        %v4954 = vadd.f32 %v4911, %v4953
        %4955 = vdwg.mxu0
        %4956 = vmatprep.subr.bf16.mxu0 %v1826
        %4957 = vmatpush1.bf16.msra.mxu0 %v1825
        %4958 = vmatprep.subr.bf16.mxu0 %v1831
        %4959 = vmatpush1.bf16.msra.mxu0 %v1830
        %4960 = vmatprep.subr.bf16.mxu0 %v1836
        %4961 = vmatpush1.bf16.msra.mxu0 %v1835
        %4962 = vmatprep.subr.bf16.mxu0 %v1841
        %4963 = vmatpush1.bf16.msra.mxu0 %v1840
        %4964 = vmatprep.subr.bf16.mxu0 %v1846
        %4965 = vmatpush1.bf16.msra.mxu0 %v1845
        %4966 = vmatprep.subr.bf16.mxu0 %v1851
        %4967 = vmatpush1.bf16.msra.mxu0 %v1850
        %4968 = vmatprep.subr.bf16.mxu0 %v1856
        %4969 = vmatpush1.bf16.msra.mxu0 %v1855
        %4970 = vmatprep.subr.bf16.mxu0 %v1861
        %4971 = vmatpush1.bf16.msra.mxu0 %v1860
        %4972 = vmatprep.subr.bf16.mxu0 %v1866
        %4973 = vmatpush1.bf16.msra.mxu0 %v1865
        %4974 = vmatprep.subr.bf16.mxu0 %v1871
        %4975 = vmatpush1.bf16.msra.mxu0 %v1870
        %4976 = vmatprep.subr.bf16.mxu0 %v1876
        %4977 = vmatpush1.bf16.msra.mxu0 %v1875
        %4978 = vmatprep.subr.bf16.mxu0 %v1881
        %4979 = vmatpush1.bf16.msra.mxu0 %v1880
        %4980 = vmatprep.subr.bf16.mxu0 %v1886
        %4981 = vmatpush1.bf16.msra.mxu0 %v1885
        %4982 = vmatprep.subr.bf16.mxu0 %v1891
        %4983 = vmatpush1.bf16.msra.mxu0 %v1890
        %4984 = vmatprep.subr.bf16.mxu0 %v1896
        %4985 = vmatpush1.bf16.msra.mxu0 %v1895
        %4986 = vmatprep.subr.bf16.mxu0 %v1901
        %4987 = vmatpush1.bf16.msra.mxu0 %v1900
        %4988 = vmatprep.mubr.bf16.mxu0 %v3620
        %4989 = vmatmul.mubr.bf16.gmra.mrb[0].mxu0 %v3619
        %v4990 = vpop.f32.mrb[0].mxu0
        %v4991 = vadd.f32 %v4948, %v4990
        %v4992 = vpop.f32.mrb[0].mxu0
        %v4993 = vadd.f32 %v4950, %v4992
        %v4994 = vpop.f32.mrb[0].mxu0
        %v4995 = vadd.f32 %v4952, %v4994
        %v4996 = vpop.f32.mrb[0].mxu0
        %v4997 = vadd.f32 %v4954, %v4996
        %4998 = vdwg.mxu0
        %4999 = vmatprep.subr.bf16.mxu0 %v1906
        %5000 = vmatpush1.bf16.msra.mxu0 %v1905
        %5001 = vmatprep.subr.bf16.mxu0 %v1911
        %5002 = vmatpush1.bf16.msra.mxu0 %v1910
        %5003 = vmatprep.subr.bf16.mxu0 %v1916
        %5004 = vmatpush1.bf16.msra.mxu0 %v1915
        %5005 = vmatprep.subr.bf16.mxu0 %v1921
        %5006 = vmatpush1.bf16.msra.mxu0 %v1920
        %5007 = vmatprep.subr.bf16.mxu0 %v1926
        %5008 = vmatpush1.bf16.msra.mxu0 %v1925
        %5009 = vmatprep.subr.bf16.mxu0 %v1931
        %5010 = vmatpush1.bf16.msra.mxu0 %v1930
        %5011 = vmatprep.subr.bf16.mxu0 %v1936
        %5012 = vmatpush1.bf16.msra.mxu0 %v1935
        %5013 = vmatprep.subr.bf16.mxu0 %v1941
        %5014 = vmatpush1.bf16.msra.mxu0 %v1940
        %5015 = vmatprep.subr.bf16.mxu0 %v1946
        %5016 = vmatpush1.bf16.msra.mxu0 %v1945
        %5017 = vmatprep.subr.bf16.mxu0 %v1951
        %5018 = vmatpush1.bf16.msra.mxu0 %v1950
        %5019 = vmatprep.subr.bf16.mxu0 %v1956
        %5020 = vmatpush1.bf16.msra.mxu0 %v1955
        %5021 = vmatprep.subr.bf16.mxu0 %v1961
        %5022 = vmatpush1.bf16.msra.mxu0 %v1960
        %5023 = vmatprep.subr.bf16.mxu0 %v1966
        %5024 = vmatpush1.bf16.msra.mxu0 %v1965
        %5025 = vmatprep.subr.bf16.mxu0 %v1971
        %5026 = vmatpush1.bf16.msra.mxu0 %v1970
        %5027 = vmatprep.subr.bf16.mxu0 %v1976
        %5028 = vmatpush1.bf16.msra.mxu0 %v1975
        %5029 = vmatprep.subr.bf16.mxu0 %v1981
        %5030 = vmatpush1.bf16.msra.mxu0 %v1980
        %5031 = vmatprep.mubr.bf16.mxu0 %v3622
        %5032 = vmatmul.mubr.bf16.gmra.mrb[0].mxu0 %v3621
        %v5033 = vpop.f32.mrb[0].mxu0
        %v5034 = vadd.f32 %v4991, %v5033
        %v5035 = vpop.f32.mrb[0].mxu0
        %v5036 = vadd.f32 %v4993, %v5035
        %v5037 = vpop.f32.mrb[0].mxu0
        %v5038 = vadd.f32 %v4995, %v5037
        %v5039 = vpop.f32.mrb[0].mxu0
        %v5040 = vadd.f32 %v4997, %v5039
        %5041 = vdwg.mxu0
        %5042 = vmatprep.subr.bf16.mxu0 %v1986
        %5043 = vmatpush1.bf16.msra.mxu0 %v1985
        %5044 = vmatprep.subr.bf16.mxu0 %v1991
        %5045 = vmatpush1.bf16.msra.mxu0 %v1990
        %5046 = vmatprep.subr.bf16.mxu0 %v1996
        %5047 = vmatpush1.bf16.msra.mxu0 %v1995
        %5048 = vmatprep.subr.bf16.mxu0 %v2001
        %5049 = vmatpush1.bf16.msra.mxu0 %v2000
        %5050 = vmatprep.subr.bf16.mxu0 %v2006
        %5051 = vmatpush1.bf16.msra.mxu0 %v2005
        %5052 = vmatprep.subr.bf16.mxu0 %v2011
        %5053 = vmatpush1.bf16.msra.mxu0 %v2010
        %5054 = vmatprep.subr.bf16.mxu0 %v2016
        %5055 = vmatpush1.bf16.msra.mxu0 %v2015
        %5056 = vmatprep.subr.bf16.mxu0 %v2021
        %5057 = vmatpush1.bf16.msra.mxu0 %v2020
        %5058 = vmatprep.subr.bf16.mxu0 %v2026
        %5059 = vmatpush1.bf16.msra.mxu0 %v2025
        %5060 = vmatprep.subr.bf16.mxu0 %v2031
        %5061 = vmatpush1.bf16.msra.mxu0 %v2030
        %5062 = vmatprep.subr.bf16.mxu0 %v2036
        %5063 = vmatpush1.bf16.msra.mxu0 %v2035
        %5064 = vmatprep.subr.bf16.mxu0 %v2041
        %5065 = vmatpush1.bf16.msra.mxu0 %v2040
        %5066 = vmatprep.subr.bf16.mxu0 %v2046
        %5067 = vmatpush1.bf16.msra.mxu0 %v2045
        %5068 = vmatprep.subr.bf16.mxu0 %v2051
        %5069 = vmatpush1.bf16.msra.mxu0 %v2050
        %5070 = vmatprep.subr.bf16.mxu0 %v2056
        %5071 = vmatpush1.bf16.msra.mxu0 %v2055
        %5072 = vmatprep.subr.bf16.mxu0 %v2061
        %5073 = vmatpush1.bf16.msra.mxu0 %v2060
        %5074 = vmatprep.mubr.bf16.mxu0 %v3624
        %5075 = vmatmul.mubr.bf16.gmra.mrb[0].mxu0 %v3623
        %v5076 = vpop.f32.mrb[0].mxu0
        %v5077 = vadd.f32 %v5034, %v5076
        %v5078 = vpop.f32.mrb[0].mxu0
        %v5079 = vadd.f32 %v5036, %v5078
        %v5080 = vpop.f32.mrb[0].mxu0
        %v5081 = vadd.f32 %v5038, %v5080
        %v5082 = vpop.f32.mrb[0].mxu0
        %v5083 = vadd.f32 %v5040, %v5082
        %5084 = vdwg.mxu0
        %5085 = vmatprep.subr.bf16.mxu0 %v2066
        %5086 = vmatpush1.bf16.msra.mxu0 %v2065
        %5087 = vmatprep.subr.bf16.mxu0 %v2071
        %5088 = vmatpush1.bf16.msra.mxu0 %v2070
        %5089 = vmatprep.subr.bf16.mxu0 %v2076
        %5090 = vmatpush1.bf16.msra.mxu0 %v2075
        %5091 = vmatprep.subr.bf16.mxu0 %v2081
        %5092 = vmatpush1.bf16.msra.mxu0 %v2080
        %5093 = vmatprep.subr.bf16.mxu0 %v2086
        %5094 = vmatpush1.bf16.msra.mxu0 %v2085
        %5095 = vmatprep.subr.bf16.mxu0 %v2091
        %5096 = vmatpush1.bf16.msra.mxu0 %v2090
        %5097 = vmatprep.subr.bf16.mxu0 %v2096
        %5098 = vmatpush1.bf16.msra.mxu0 %v2095
        %5099 = vmatprep.subr.bf16.mxu0 %v2101
        %5100 = vmatpush1.bf16.msra.mxu0 %v2100
        %5101 = vmatprep.subr.bf16.mxu0 %v2106
        %5102 = vmatpush1.bf16.msra.mxu0 %v2105
        %5103 = vmatprep.subr.bf16.mxu0 %v2111
        %5104 = vmatpush1.bf16.msra.mxu0 %v2110
        %5105 = vmatprep.subr.bf16.mxu0 %v2116
        %5106 = vmatpush1.bf16.msra.mxu0 %v2115
        %5107 = vmatprep.subr.bf16.mxu0 %v2121
        %5108 = vmatpush1.bf16.msra.mxu0 %v2120
        %5109 = vmatprep.subr.bf16.mxu0 %v2126
        %5110 = vmatpush1.bf16.msra.mxu0 %v2125
        %5111 = vmatprep.subr.bf16.mxu0 %v2131
        %5112 = vmatpush1.bf16.msra.mxu0 %v2130
        %5113 = vmatprep.subr.bf16.mxu0 %v2136
        %5114 = vmatpush1.bf16.msra.mxu0 %v2135
        %5115 = vmatprep.subr.bf16.mxu0 %v2141
        %5116 = vmatpush1.bf16.msra.mxu0 %v2140
        %5117 = vmatprep.mubr.bf16.mxu0 %v3626
        %5118 = vmatmul.mubr.bf16.gmra.mrb[0].mxu0 %v3625
        %v5119 = vpop.f32.mrb[0].mxu0
        %v5120 = vadd.f32 %v5077, %v5119
        %v5121 = vpop.f32.mrb[0].mxu0
        %v5122 = vadd.f32 %v5079, %v5121
        %v5123 = vpop.f32.mrb[0].mxu0
        %v5124 = vadd.f32 %v5081, %v5123
        %v5125 = vpop.f32.mrb[0].mxu0
        %v5126 = vadd.f32 %v5083, %v5125
        %5127 = vdwg.mxu0
        %5128 = vmatprep.subr.bf16.mxu0 %v2146
        %5129 = vmatpush1.bf16.msra.mxu0 %v2145
        %5130 = vmatprep.subr.bf16.mxu0 %v2151
        %5131 = vmatpush1.bf16.msra.mxu0 %v2150
        %5132 = vmatprep.subr.bf16.mxu0 %v2156
        %5133 = vmatpush1.bf16.msra.mxu0 %v2155
        %5134 = vmatprep.subr.bf16.mxu0 %v2161
        %5135 = vmatpush1.bf16.msra.mxu0 %v2160
        %5136 = vmatprep.subr.bf16.mxu0 %v2166
        %5137 = vmatpush1.bf16.msra.mxu0 %v2165
        %5138 = vmatprep.subr.bf16.mxu0 %v2171
        %5139 = vmatpush1.bf16.msra.mxu0 %v2170
        %5140 = vmatprep.subr.bf16.mxu0 %v2176
        %5141 = vmatpush1.bf16.msra.mxu0 %v2175
        %5142 = vmatprep.subr.bf16.mxu0 %v2181
        %5143 = vmatpush1.bf16.msra.mxu0 %v2180
        %5144 = vmatprep.subr.bf16.mxu0 %v2186
        %5145 = vmatpush1.bf16.msra.mxu0 %v2185
        %5146 = vmatprep.subr.bf16.mxu0 %v2191
        %5147 = vmatpush1.bf16.msra.mxu0 %v2190
        %5148 = vmatprep.subr.bf16.mxu0 %v2196
        %5149 = vmatpush1.bf16.msra.mxu0 %v2195
        %5150 = vmatprep.subr.bf16.mxu0 %v2201
        %5151 = vmatpush1.bf16.msra.mxu0 %v2200
        %5152 = vmatprep.subr.bf16.mxu0 %v2206
        %5153 = vmatpush1.bf16.msra.mxu0 %v2205
        %5154 = vmatprep.subr.bf16.mxu0 %v2211
        %5155 = vmatpush1.bf16.msra.mxu0 %v2210
        %5156 = vmatprep.subr.bf16.mxu0 %v2216
        %5157 = vmatpush1.bf16.msra.mxu0 %v2215
        %5158 = vmatprep.subr.bf16.mxu0 %v2221
        %5159 = vmatpush1.bf16.msra.mxu0 %v2220
        %5160 = vmatprep.mubr.bf16.mxu0 %v3628
        %5161 = vmatmul.mubr.bf16.gmra.mrb[0].mxu0 %v3627
        %v5162 = vpop.f32.mrb[0].mxu0
        %v5163 = vadd.f32 %v5120, %v5162
        %v5164 = vpop.f32.mrb[0].mxu0
        %v5165 = vadd.f32 %v5122, %v5164
        %v5166 = vpop.f32.mrb[0].mxu0
        %v5167 = vadd.f32 %v5124, %v5166
        %v5168 = vpop.f32.mrb[0].mxu0
        %v5169 = vadd.f32 %v5126, %v5168
        %5170 = vdwg.mxu0
        %5171 = vmatprep.subr.bf16.mxu0 %v2226
        %5172 = vmatpush1.bf16.msra.mxu0 %v2225
        %5173 = vmatprep.subr.bf16.mxu0 %v2231
        %5174 = vmatpush1.bf16.msra.mxu0 %v2230
        %5175 = vmatprep.subr.bf16.mxu0 %v2236
        %5176 = vmatpush1.bf16.msra.mxu0 %v2235
        %5177 = vmatprep.subr.bf16.mxu0 %v2241
        %5178 = vmatpush1.bf16.msra.mxu0 %v2240
        %5179 = vmatprep.subr.bf16.mxu0 %v2246
        %5180 = vmatpush1.bf16.msra.mxu0 %v2245
        %5181 = vmatprep.subr.bf16.mxu0 %v2251
        %5182 = vmatpush1.bf16.msra.mxu0 %v2250
        %5183 = vmatprep.subr.bf16.mxu0 %v2256
        %5184 = vmatpush1.bf16.msra.mxu0 %v2255
        %5185 = vmatprep.subr.bf16.mxu0 %v2261
        %5186 = vmatpush1.bf16.msra.mxu0 %v2260
        %5187 = vmatprep.subr.bf16.mxu0 %v2266
        %5188 = vmatpush1.bf16.msra.mxu0 %v2265
        %5189 = vmatprep.subr.bf16.mxu0 %v2271
        %5190 = vmatpush1.bf16.msra.mxu0 %v2270
        %5191 = vmatprep.subr.bf16.mxu0 %v2276
        %5192 = vmatpush1.bf16.msra.mxu0 %v2275
        %5193 = vmatprep.subr.bf16.mxu0 %v2281
        %5194 = vmatpush1.bf16.msra.mxu0 %v2280
        %5195 = vmatprep.subr.bf16.mxu0 %v2286
        %5196 = vmatpush1.bf16.msra.mxu0 %v2285
        %5197 = vmatprep.subr.bf16.mxu0 %v2291
        %5198 = vmatpush1.bf16.msra.mxu0 %v2290
        %5199 = vmatprep.subr.bf16.mxu0 %v2296
        %5200 = vmatpush1.bf16.msra.mxu0 %v2295
        %5201 = vmatprep.subr.bf16.mxu0 %v2301
        %5202 = vmatpush1.bf16.msra.mxu0 %v2300
        %5203 = vmatprep.mubr.bf16.mxu0 %v3630
        %5204 = vmatmul.mubr.bf16.gmra.mrb[0].mxu0 %v3629
        %v5205 = vpop.f32.mrb[0].mxu0
        %v5206 = vadd.f32 %v5163, %v5205
        %v5207 = vpop.f32.mrb[0].mxu0
        %v5208 = vadd.f32 %v5165, %v5207
        %v5209 = vpop.f32.mrb[0].mxu0
        %v5210 = vadd.f32 %v5167, %v5209
        %v5211 = vpop.f32.mrb[0].mxu0
        %v5212 = vadd.f32 %v5169, %v5211
        %5213 = vdwg.mxu0
        %5214 = vmatprep.subr.bf16.mxu0 %v2306
        %5215 = vmatpush1.bf16.msra.mxu0 %v2305
        %5216 = vmatprep.subr.bf16.mxu0 %v2311
        %5217 = vmatpush1.bf16.msra.mxu0 %v2310
        %5218 = vmatprep.subr.bf16.mxu0 %v2316
        %5219 = vmatpush1.bf16.msra.mxu0 %v2315
        %5220 = vmatprep.subr.bf16.mxu0 %v2321
        %5221 = vmatpush1.bf16.msra.mxu0 %v2320
        %5222 = vmatprep.subr.bf16.mxu0 %v2326
        %5223 = vmatpush1.bf16.msra.mxu0 %v2325
        %5224 = vmatprep.subr.bf16.mxu0 %v2331
        %5225 = vmatpush1.bf16.msra.mxu0 %v2330
        %5226 = vmatprep.subr.bf16.mxu0 %v2336
        %5227 = vmatpush1.bf16.msra.mxu0 %v2335
        %5228 = vmatprep.subr.bf16.mxu0 %v2341
        %5229 = vmatpush1.bf16.msra.mxu0 %v2340
        %5230 = vmatprep.subr.bf16.mxu0 %v2346
        %5231 = vmatpush1.bf16.msra.mxu0 %v2345
        %5232 = vmatprep.subr.bf16.mxu0 %v2351
        %5233 = vmatpush1.bf16.msra.mxu0 %v2350
        %5234 = vmatprep.subr.bf16.mxu0 %v2356
        %5235 = vmatpush1.bf16.msra.mxu0 %v2355
        %5236 = vmatprep.subr.bf16.mxu0 %v2361
        %5237 = vmatpush1.bf16.msra.mxu0 %v2360
        %5238 = vmatprep.subr.bf16.mxu0 %v2366
        %5239 = vmatpush1.bf16.msra.mxu0 %v2365
        %5240 = vmatprep.subr.bf16.mxu0 %v2371
        %5241 = vmatpush1.bf16.msra.mxu0 %v2370
        %5242 = vmatprep.subr.bf16.mxu0 %v2376
        %5243 = vmatpush1.bf16.msra.mxu0 %v2375
        %5244 = vmatprep.subr.bf16.mxu0 %v2381
        %5245 = vmatpush1.bf16.msra.mxu0 %v2380
        %5246 = vmatprep.mubr.bf16.mxu0 %v3632
        %5247 = vmatmul.mubr.bf16.gmra.mrb[0].mxu0 %v3631
        %v5248 = vpop.f32.mrb[0].mxu0
        %v5249 = vadd.f32 %v5206, %v5248
        %v5250 = vpop.f32.mrb[0].mxu0
        %v5251 = vadd.f32 %v5208, %v5250
        %v5252 = vpop.f32.mrb[0].mxu0
        %v5253 = vadd.f32 %v5210, %v5252
        %v5254 = vpop.f32.mrb[0].mxu0
        %v5255 = vadd.f32 %v5212, %v5254
        %5256 = vdwg.mxu0
        %5257 = vmatprep.subr.bf16.mxu0 %v2386
        %5258 = vmatpush1.bf16.msra.mxu0 %v2385
        %5259 = vmatprep.subr.bf16.mxu0 %v2391
        %5260 = vmatpush1.bf16.msra.mxu0 %v2390
        %5261 = vmatprep.subr.bf16.mxu0 %v2396
        %5262 = vmatpush1.bf16.msra.mxu0 %v2395
        %5263 = vmatprep.subr.bf16.mxu0 %v2401
        %5264 = vmatpush1.bf16.msra.mxu0 %v2400
        %5265 = vmatprep.subr.bf16.mxu0 %v2406
        %5266 = vmatpush1.bf16.msra.mxu0 %v2405
        %5267 = vmatprep.subr.bf16.mxu0 %v2411
        %5268 = vmatpush1.bf16.msra.mxu0 %v2410
        %5269 = vmatprep.subr.bf16.mxu0 %v2416
        %5270 = vmatpush1.bf16.msra.mxu0 %v2415
        %5271 = vmatprep.subr.bf16.mxu0 %v2421
        %5272 = vmatpush1.bf16.msra.mxu0 %v2420
        %5273 = vmatprep.subr.bf16.mxu0 %v2426
        %5274 = vmatpush1.bf16.msra.mxu0 %v2425
        %5275 = vmatprep.subr.bf16.mxu0 %v2431
        %5276 = vmatpush1.bf16.msra.mxu0 %v2430
        %5277 = vmatprep.subr.bf16.mxu0 %v2436
        %5278 = vmatpush1.bf16.msra.mxu0 %v2435
        %5279 = vmatprep.subr.bf16.mxu0 %v2441
        %5280 = vmatpush1.bf16.msra.mxu0 %v2440
        %5281 = vmatprep.subr.bf16.mxu0 %v2446
        %5282 = vmatpush1.bf16.msra.mxu0 %v2445
        %5283 = vmatprep.subr.bf16.mxu0 %v2451
        %5284 = vmatpush1.bf16.msra.mxu0 %v2450
        %5285 = vmatprep.subr.bf16.mxu0 %v2456
        %5286 = vmatpush1.bf16.msra.mxu0 %v2455
        %5287 = vmatprep.subr.bf16.mxu0 %v2461
        %5288 = vmatpush1.bf16.msra.mxu0 %v2460
        %5289 = vmatprep.mubr.bf16.mxu0 %v3634
        %5290 = vmatmul.mubr.bf16.gmra.mrb[0].mxu0 %v3633
        %v5291 = vpop.f32.mrb[0].mxu0
        %v5292 = vadd.f32 %v5249, %v5291
        %v5293 = vpop.f32.mrb[0].mxu0
        %v5294 = vadd.f32 %v5251, %v5293
        %v5295 = vpop.f32.mrb[0].mxu0
        %v5296 = vadd.f32 %v5253, %v5295
        %v5297 = vpop.f32.mrb[0].mxu0
        %v5298 = vadd.f32 %v5255, %v5297
        %5299 = vdwg.mxu0
        %5300 = vmatprep.subr.bf16.mxu0 %v2466
        %5301 = vmatpush1.bf16.msra.mxu0 %v2465
        %5302 = vmatprep.subr.bf16.mxu0 %v2471
        %5303 = vmatpush1.bf16.msra.mxu0 %v2470
        %5304 = vmatprep.subr.bf16.mxu0 %v2476
        %5305 = vmatpush1.bf16.msra.mxu0 %v2475
        %5306 = vmatprep.subr.bf16.mxu0 %v2481
        %5307 = vmatpush1.bf16.msra.mxu0 %v2480
        %5308 = vmatprep.subr.bf16.mxu0 %v2486
        %5309 = vmatpush1.bf16.msra.mxu0 %v2485
        %5310 = vmatprep.subr.bf16.mxu0 %v2491
        %5311 = vmatpush1.bf16.msra.mxu0 %v2490
        %5312 = vmatprep.subr.bf16.mxu0 %v2496
        %5313 = vmatpush1.bf16.msra.mxu0 %v2495
        %5314 = vmatprep.subr.bf16.mxu0 %v2501
        %5315 = vmatpush1.bf16.msra.mxu0 %v2500
        %5316 = vmatprep.subr.bf16.mxu0 %v2506
        %5317 = vmatpush1.bf16.msra.mxu0 %v2505
        %5318 = vmatprep.subr.bf16.mxu0 %v2511
        %5319 = vmatpush1.bf16.msra.mxu0 %v2510
        %5320 = vmatprep.subr.bf16.mxu0 %v2516
        %5321 = vmatpush1.bf16.msra.mxu0 %v2515
        %5322 = vmatprep.subr.bf16.mxu0 %v2521
        %5323 = vmatpush1.bf16.msra.mxu0 %v2520
        %5324 = vmatprep.subr.bf16.mxu0 %v2526
        %5325 = vmatpush1.bf16.msra.mxu0 %v2525
        %5326 = vmatprep.subr.bf16.mxu0 %v2531
        %5327 = vmatpush1.bf16.msra.mxu0 %v2530
        %5328 = vmatprep.subr.bf16.mxu0 %v2536
        %5329 = vmatpush1.bf16.msra.mxu0 %v2535
        %5330 = vmatprep.subr.bf16.mxu0 %v2541
        %5331 = vmatpush1.bf16.msra.mxu0 %v2540
        %5332 = vmatprep.mubr.bf16.mxu0 %v3636
        %5333 = vmatmul.mubr.bf16.gmra.mrb[0].mxu0 %v3635
        %v5334 = vpop.f32.mrb[0].mxu0
        %v5335 = vadd.f32 %v5292, %v5334
        %v5336 = vpop.f32.mrb[0].mxu0
        %v5337 = vadd.f32 %v5294, %v5336
        %v5338 = vpop.f32.mrb[0].mxu0
        %v5339 = vadd.f32 %v5296, %v5338
        %v5340 = vpop.f32.mrb[0].mxu0
        %v5341 = vadd.f32 %v5298, %v5340
        %5342 = vdwg.mxu0
        %5343 = vmatprep.subr.bf16.mxu0 %v2546
        %5344 = vmatpush1.bf16.msra.mxu0 %v2545
        %5345 = vmatprep.subr.bf16.mxu0 %v2551
        %5346 = vmatpush1.bf16.msra.mxu0 %v2550
        %5347 = vmatprep.subr.bf16.mxu0 %v2556
        %5348 = vmatpush1.bf16.msra.mxu0 %v2555
        %5349 = vmatprep.subr.bf16.mxu0 %v2561
        %5350 = vmatpush1.bf16.msra.mxu0 %v2560
        %5351 = vmatprep.subr.bf16.mxu0 %v2566
        %5352 = vmatpush1.bf16.msra.mxu0 %v2565
        %5353 = vmatprep.subr.bf16.mxu0 %v2571
        %5354 = vmatpush1.bf16.msra.mxu0 %v2570
        %5355 = vmatprep.subr.bf16.mxu0 %v2576
        %5356 = vmatpush1.bf16.msra.mxu0 %v2575
        %5357 = vmatprep.subr.bf16.mxu0 %v2581
        %5358 = vmatpush1.bf16.msra.mxu0 %v2580
        %5359 = vmatprep.subr.bf16.mxu0 %v2586
        %5360 = vmatpush1.bf16.msra.mxu0 %v2585
        %5361 = vmatprep.subr.bf16.mxu0 %v2591
        %5362 = vmatpush1.bf16.msra.mxu0 %v2590
        %5363 = vmatprep.subr.bf16.mxu0 %v2596
        %5364 = vmatpush1.bf16.msra.mxu0 %v2595
        %5365 = vmatprep.subr.bf16.mxu0 %v2601
        %5366 = vmatpush1.bf16.msra.mxu0 %v2600
        %5367 = vmatprep.subr.bf16.mxu0 %v2606
        %5368 = vmatpush1.bf16.msra.mxu0 %v2605
        %5369 = vmatprep.subr.bf16.mxu0 %v2611
        %5370 = vmatpush1.bf16.msra.mxu0 %v2610
        %5371 = vmatprep.subr.bf16.mxu0 %v2616
        %5372 = vmatpush1.bf16.msra.mxu0 %v2615
        %5373 = vmatprep.subr.bf16.mxu0 %v2621
        %5374 = vmatpush1.bf16.msra.mxu0 %v2620
        %5375 = vmatprep.mubr.bf16.mxu0 %v3638
        %5376 = vmatmul.mubr.bf16.gmra.mrb[0].mxu0 %v3637
        %v5377 = vpop.f32.mrb[0].mxu0
        %v5378 = vadd.f32 %v5335, %v5377
        %v5379 = vpop.f32.mrb[0].mxu0
        %v5380 = vadd.f32 %v5337, %v5379
        %v5381 = vpop.f32.mrb[0].mxu0
        %v5382 = vadd.f32 %v5339, %v5381
        %v5383 = vpop.f32.mrb[0].mxu0
        %v5384 = vadd.f32 %v5341, %v5383
        %5385 = vdwg.mxu0
        %5386 = vmatprep.subr.bf16.mxu0 %v2626
        %5387 = vmatpush1.bf16.msra.mxu0 %v2625
        %5388 = vmatprep.subr.bf16.mxu0 %v2631
        %5389 = vmatpush1.bf16.msra.mxu0 %v2630
        %5390 = vmatprep.subr.bf16.mxu0 %v2636
        %5391 = vmatpush1.bf16.msra.mxu0 %v2635
        %5392 = vmatprep.subr.bf16.mxu0 %v2641
        %5393 = vmatpush1.bf16.msra.mxu0 %v2640
        %5394 = vmatprep.subr.bf16.mxu0 %v2646
        %5395 = vmatpush1.bf16.msra.mxu0 %v2645
        %5396 = vmatprep.subr.bf16.mxu0 %v2651
        %5397 = vmatpush1.bf16.msra.mxu0 %v2650
        %5398 = vmatprep.subr.bf16.mxu0 %v2656
        %5399 = vmatpush1.bf16.msra.mxu0 %v2655
        %5400 = vmatprep.subr.bf16.mxu0 %v2661
        %5401 = vmatpush1.bf16.msra.mxu0 %v2660
        %5402 = vmatprep.subr.bf16.mxu0 %v2666
        %5403 = vmatpush1.bf16.msra.mxu0 %v2665
        %5404 = vmatprep.subr.bf16.mxu0 %v2671
        %5405 = vmatpush1.bf16.msra.mxu0 %v2670
        %5406 = vmatprep.subr.bf16.mxu0 %v2676
        %5407 = vmatpush1.bf16.msra.mxu0 %v2675
        %5408 = vmatprep.subr.bf16.mxu0 %v2681
        %5409 = vmatpush1.bf16.msra.mxu0 %v2680
        %5410 = vmatprep.subr.bf16.mxu0 %v2686
        %5411 = vmatpush1.bf16.msra.mxu0 %v2685
        %5412 = vmatprep.subr.bf16.mxu0 %v2691
        %5413 = vmatpush1.bf16.msra.mxu0 %v2690
        %5414 = vmatprep.subr.bf16.mxu0 %v2696
        %5415 = vmatpush1.bf16.msra.mxu0 %v2695
        %5416 = vmatprep.subr.bf16.mxu0 %v2701
        %5417 = vmatpush1.bf16.msra.mxu0 %v2700
        %5418 = vmatprep.mubr.bf16.mxu0 %v3640
        %5419 = vmatmul.mubr.bf16.gmra.mrb[0].mxu0 %v3639
        %v5420 = vpop.f32.mrb[0].mxu0
        %v5421 = vadd.f32 %v5378, %v5420
        %v5422 = vpop.f32.mrb[0].mxu0
        %v5423 = vadd.f32 %v5380, %v5422
        %v5424 = vpop.f32.mrb[0].mxu0
        %v5425 = vadd.f32 %v5382, %v5424
        %v5426 = vpop.f32.mrb[0].mxu0
        %v5427 = vadd.f32 %v5384, %v5426
        %5428 = vdwg.mxu0
        %5429 = vmatprep.subr.bf16.mxu0 %v2706
        %5430 = vmatpush1.bf16.msra.mxu0 %v2705
        %5431 = vmatprep.subr.bf16.mxu0 %v2711
        %5432 = vmatpush1.bf16.msra.mxu0 %v2710
        %5433 = vmatprep.subr.bf16.mxu0 %v2716
        %5434 = vmatpush1.bf16.msra.mxu0 %v2715
        %5435 = vmatprep.subr.bf16.mxu0 %v2721
        %5436 = vmatpush1.bf16.msra.mxu0 %v2720
        %5437 = vmatprep.subr.bf16.mxu0 %v2726
        %5438 = vmatpush1.bf16.msra.mxu0 %v2725
        %5439 = vmatprep.subr.bf16.mxu0 %v2731
        %5440 = vmatpush1.bf16.msra.mxu0 %v2730
        %5441 = vmatprep.subr.bf16.mxu0 %v2736
        %5442 = vmatpush1.bf16.msra.mxu0 %v2735
        %5443 = vmatprep.subr.bf16.mxu0 %v2741
        %5444 = vmatpush1.bf16.msra.mxu0 %v2740
        %5445 = vmatprep.subr.bf16.mxu0 %v2746
        %5446 = vmatpush1.bf16.msra.mxu0 %v2745
        %5447 = vmatprep.subr.bf16.mxu0 %v2751
        %5448 = vmatpush1.bf16.msra.mxu0 %v2750
        %5449 = vmatprep.subr.bf16.mxu0 %v2756
        %5450 = vmatpush1.bf16.msra.mxu0 %v2755
        %5451 = vmatprep.subr.bf16.mxu0 %v2761
        %5452 = vmatpush1.bf16.msra.mxu0 %v2760
        %5453 = vmatprep.subr.bf16.mxu0 %v2766
        %5454 = vmatpush1.bf16.msra.mxu0 %v2765
        %5455 = vmatprep.subr.bf16.mxu0 %v2771
        %5456 = vmatpush1.bf16.msra.mxu0 %v2770
        %5457 = vmatprep.subr.bf16.mxu0 %v2776
        %5458 = vmatpush1.bf16.msra.mxu0 %v2775
        %5459 = vmatprep.subr.bf16.mxu0 %v2781
        %5460 = vmatpush1.bf16.msra.mxu0 %v2780
        %5461 = vmatprep.mubr.bf16.mxu0 %v3642
        %5462 = vmatmul.mubr.bf16.gmra.mrb[0].mxu0 %v3641
        %v5463 = vpop.f32.mrb[0].mxu0
        %v5464 = vadd.f32 %v5421, %v5463
        %v5465 = vpop.f32.mrb[0].mxu0
        %v5466 = vadd.f32 %v5423, %v5465
        %v5467 = vpop.f32.mrb[0].mxu0
        %v5468 = vadd.f32 %v5425, %v5467
        %v5469 = vpop.f32.mrb[0].mxu0
        %v5470 = vadd.f32 %v5427, %v5469
        %5471 = vdwg.mxu0
        %5472 = vmatprep.subr.bf16.mxu0 %v2786
        %5473 = vmatpush1.bf16.msra.mxu0 %v2785
        %5474 = vmatprep.subr.bf16.mxu0 %v2791
        %5475 = vmatpush1.bf16.msra.mxu0 %v2790
        %5476 = vmatprep.subr.bf16.mxu0 %v2796
        %5477 = vmatpush1.bf16.msra.mxu0 %v2795
        %5478 = vmatprep.subr.bf16.mxu0 %v2801
        %5479 = vmatpush1.bf16.msra.mxu0 %v2800
        %5480 = vmatprep.subr.bf16.mxu0 %v2806
        %5481 = vmatpush1.bf16.msra.mxu0 %v2805
        %5482 = vmatprep.subr.bf16.mxu0 %v2811
        %5483 = vmatpush1.bf16.msra.mxu0 %v2810
        %5484 = vmatprep.subr.bf16.mxu0 %v2816
        %5485 = vmatpush1.bf16.msra.mxu0 %v2815
        %5486 = vmatprep.subr.bf16.mxu0 %v2821
        %5487 = vmatpush1.bf16.msra.mxu0 %v2820
        %5488 = vmatprep.subr.bf16.mxu0 %v2826
        %5489 = vmatpush1.bf16.msra.mxu0 %v2825
        %5490 = vmatprep.subr.bf16.mxu0 %v2831
        %5491 = vmatpush1.bf16.msra.mxu0 %v2830
        %5492 = vmatprep.subr.bf16.mxu0 %v2836
        %5493 = vmatpush1.bf16.msra.mxu0 %v2835
        %5494 = vmatprep.subr.bf16.mxu0 %v2841
        %5495 = vmatpush1.bf16.msra.mxu0 %v2840
        %5496 = vmatprep.subr.bf16.mxu0 %v2846
        %5497 = vmatpush1.bf16.msra.mxu0 %v2845
        %5498 = vmatprep.subr.bf16.mxu0 %v2851
        %5499 = vmatpush1.bf16.msra.mxu0 %v2850
        %5500 = vmatprep.subr.bf16.mxu0 %v2856
        %5501 = vmatpush1.bf16.msra.mxu0 %v2855
        %5502 = vmatprep.subr.bf16.mxu0 %v2861
        %5503 = vmatpush1.bf16.msra.mxu0 %v2860
        %5504 = vmatprep.mubr.bf16.mxu0 %v3644
        %5505 = vmatmul.mubr.bf16.gmra.mrb[0].mxu0 %v3643
        %v5506 = vpop.f32.mrb[0].mxu0
        %v5507 = vadd.f32 %v5464, %v5506
        %v5508 = vpop.f32.mrb[0].mxu0
        %v5509 = vadd.f32 %v5466, %v5508
        %v5510 = vpop.f32.mrb[0].mxu0
        %v5511 = vadd.f32 %v5468, %v5510
        %v5512 = vpop.f32.mrb[0].mxu0
        %v5513 = vadd.f32 %v5470, %v5512
        %5514 = vdwg.mxu0
        %5515 = vmatprep.subr.bf16.mxu0 %v2866
        %5516 = vmatpush1.bf16.msra.mxu0 %v2865
        %5517 = vmatprep.subr.bf16.mxu0 %v2871
        %5518 = vmatpush1.bf16.msra.mxu0 %v2870
        %5519 = vmatprep.subr.bf16.mxu0 %v2876
        %5520 = vmatpush1.bf16.msra.mxu0 %v2875
        %5521 = vmatprep.subr.bf16.mxu0 %v2881
        %5522 = vmatpush1.bf16.msra.mxu0 %v2880
        %5523 = vmatprep.subr.bf16.mxu0 %v2886
        %5524 = vmatpush1.bf16.msra.mxu0 %v2885
        %5525 = vmatprep.subr.bf16.mxu0 %v2891
        %5526 = vmatpush1.bf16.msra.mxu0 %v2890
        %5527 = vmatprep.subr.bf16.mxu0 %v2896
        %5528 = vmatpush1.bf16.msra.mxu0 %v2895
        %5529 = vmatprep.subr.bf16.mxu0 %v2901
        %5530 = vmatpush1.bf16.msra.mxu0 %v2900
        %5531 = vmatprep.subr.bf16.mxu0 %v2906
        %5532 = vmatpush1.bf16.msra.mxu0 %v2905
        %5533 = vmatprep.subr.bf16.mxu0 %v2911
        %5534 = vmatpush1.bf16.msra.mxu0 %v2910
        %5535 = vmatprep.subr.bf16.mxu0 %v2916
        %5536 = vmatpush1.bf16.msra.mxu0 %v2915
        %5537 = vmatprep.subr.bf16.mxu0 %v2921
        %5538 = vmatpush1.bf16.msra.mxu0 %v2920
        %5539 = vmatprep.subr.bf16.mxu0 %v2926
        %5540 = vmatpush1.bf16.msra.mxu0 %v2925
        %5541 = vmatprep.subr.bf16.mxu0 %v2931
        %5542 = vmatpush1.bf16.msra.mxu0 %v2930
        %5543 = vmatprep.subr.bf16.mxu0 %v2936
        %5544 = vmatpush1.bf16.msra.mxu0 %v2935
        %5545 = vmatprep.subr.bf16.mxu0 %v2941
        %5546 = vmatpush1.bf16.msra.mxu0 %v2940
        %5547 = vmatprep.mubr.bf16.mxu0 %v3646
        %5548 = vmatmul.mubr.bf16.gmra.mrb[0].mxu0 %v3645
        %v5549 = vpop.f32.mrb[0].mxu0
        %v5550 = vadd.f32 %v5507, %v5549
        %v5551 = vpop.f32.mrb[0].mxu0
        %v5552 = vadd.f32 %v5509, %v5551
        %v5553 = vpop.f32.mrb[0].mxu0
        %v5554 = vadd.f32 %v5511, %v5553
        %v5555 = vpop.f32.mrb[0].mxu0
        %v5556 = vadd.f32 %v5513, %v5555
        %5557 = vdwg.mxu0
        %5558 = vmatprep.subr.bf16.mxu0 %v2946
        %5559 = vmatpush1.bf16.msra.mxu0 %v2945
        %5560 = vmatprep.subr.bf16.mxu0 %v2951
        %5561 = vmatpush1.bf16.msra.mxu0 %v2950
        %5562 = vmatprep.subr.bf16.mxu0 %v2956
        %5563 = vmatpush1.bf16.msra.mxu0 %v2955
        %5564 = vmatprep.subr.bf16.mxu0 %v2961
        %5565 = vmatpush1.bf16.msra.mxu0 %v2960
        %5566 = vmatprep.subr.bf16.mxu0 %v2966
        %5567 = vmatpush1.bf16.msra.mxu0 %v2965
        %5568 = vmatprep.subr.bf16.mxu0 %v2971
        %5569 = vmatpush1.bf16.msra.mxu0 %v2970
        %5570 = vmatprep.subr.bf16.mxu0 %v2976
        %5571 = vmatpush1.bf16.msra.mxu0 %v2975
        %5572 = vmatprep.subr.bf16.mxu0 %v2981
        %5573 = vmatpush1.bf16.msra.mxu0 %v2980
        %5574 = vmatprep.subr.bf16.mxu0 %v2986
        %5575 = vmatpush1.bf16.msra.mxu0 %v2985
        %5576 = vmatprep.subr.bf16.mxu0 %v2991
        %5577 = vmatpush1.bf16.msra.mxu0 %v2990
        %5578 = vmatprep.subr.bf16.mxu0 %v2996
        %5579 = vmatpush1.bf16.msra.mxu0 %v2995
        %5580 = vmatprep.subr.bf16.mxu0 %v3001
        %5581 = vmatpush1.bf16.msra.mxu0 %v3000
        %5582 = vmatprep.subr.bf16.mxu0 %v3006
        %5583 = vmatpush1.bf16.msra.mxu0 %v3005
        %5584 = vmatprep.subr.bf16.mxu0 %v3011
        %5585 = vmatpush1.bf16.msra.mxu0 %v3010
        %5586 = vmatprep.subr.bf16.mxu0 %v3016
        %5587 = vmatpush1.bf16.msra.mxu0 %v3015
        %5588 = vmatprep.subr.bf16.mxu0 %v3021
        %5589 = vmatpush1.bf16.msra.mxu0 %v3020
        %5590 = vmatprep.mubr.bf16.mxu0 %v3648
        %5591 = vmatmul.mubr.bf16.gmra.mrb[0].mxu0 %v3647
        %v5592 = vpop.f32.mrb[0].mxu0
        %v5593 = vadd.f32 %v5550, %v5592
        %v5594 = vpop.f32.mrb[0].mxu0
        %v5595 = vadd.f32 %v5552, %v5594
        %v5596 = vpop.f32.mrb[0].mxu0
        %v5597 = vadd.f32 %v5554, %v5596
        %v5598 = vpop.f32.mrb[0].mxu0
        %v5599 = vadd.f32 %v5556, %v5598
        %5600 = vdwg.mxu0
        %5601 = vmatprep.subr.bf16.mxu0 %v3026
        %5602 = vmatpush1.bf16.msra.mxu0 %v3025
        %5603 = vmatprep.subr.bf16.mxu0 %v3031
        %5604 = vmatpush1.bf16.msra.mxu0 %v3030
        %5605 = vmatprep.subr.bf16.mxu0 %v3036
        %5606 = vmatpush1.bf16.msra.mxu0 %v3035
        %5607 = vmatprep.subr.bf16.mxu0 %v3041
        %5608 = vmatpush1.bf16.msra.mxu0 %v3040
        %5609 = vmatprep.subr.bf16.mxu0 %v3046
        %5610 = vmatpush1.bf16.msra.mxu0 %v3045
        %5611 = vmatprep.subr.bf16.mxu0 %v3051
        %5612 = vmatpush1.bf16.msra.mxu0 %v3050
        %5613 = vmatprep.subr.bf16.mxu0 %v3056
        %5614 = vmatpush1.bf16.msra.mxu0 %v3055
        %5615 = vmatprep.subr.bf16.mxu0 %v3061
        %5616 = vmatpush1.bf16.msra.mxu0 %v3060
        %5617 = vmatprep.subr.bf16.mxu0 %v3066
        %5618 = vmatpush1.bf16.msra.mxu0 %v3065
        %5619 = vmatprep.subr.bf16.mxu0 %v3071
        %5620 = vmatpush1.bf16.msra.mxu0 %v3070
        %5621 = vmatprep.subr.bf16.mxu0 %v3076
        %5622 = vmatpush1.bf16.msra.mxu0 %v3075
        %5623 = vmatprep.subr.bf16.mxu0 %v3081
        %5624 = vmatpush1.bf16.msra.mxu0 %v3080
        %5625 = vmatprep.subr.bf16.mxu0 %v3086
        %5626 = vmatpush1.bf16.msra.mxu0 %v3085
        %5627 = vmatprep.subr.bf16.mxu0 %v3091
        %5628 = vmatpush1.bf16.msra.mxu0 %v3090
        %5629 = vmatprep.subr.bf16.mxu0 %v3096
        %5630 = vmatpush1.bf16.msra.mxu0 %v3095
        %5631 = vmatprep.subr.bf16.mxu0 %v3101
        %5632 = vmatpush1.bf16.msra.mxu0 %v3100
        %5633 = vmatprep.mubr.bf16.mxu0 %v3650
        %5634 = vmatmul.mubr.bf16.gmra.mrb[0].mxu0 %v3649
        %v5635 = vpop.f32.mrb[0].mxu0
        %v5636 = vadd.f32 %v5593, %v5635
        %v5637 = vpop.f32.mrb[0].mxu0
        %v5638 = vadd.f32 %v5595, %v5637
        %v5639 = vpop.f32.mrb[0].mxu0
        %v5640 = vadd.f32 %v5597, %v5639
        %v5641 = vpop.f32.mrb[0].mxu0
        %v5642 = vadd.f32 %v5599, %v5641
        %5643 = vdwg.mxu0
        %5644 = vmatprep.subr.bf16.mxu0 %v3106
        %5645 = vmatpush1.bf16.msra.mxu0 %v3105
        %5646 = vmatprep.subr.bf16.mxu0 %v3111
        %5647 = vmatpush1.bf16.msra.mxu0 %v3110
        %5648 = vmatprep.subr.bf16.mxu0 %v3116
        %5649 = vmatpush1.bf16.msra.mxu0 %v3115
        %5650 = vmatprep.subr.bf16.mxu0 %v3121
        %5651 = vmatpush1.bf16.msra.mxu0 %v3120
        %5652 = vmatprep.subr.bf16.mxu0 %v3126
        %5653 = vmatpush1.bf16.msra.mxu0 %v3125
        %5654 = vmatprep.subr.bf16.mxu0 %v3131
        %5655 = vmatpush1.bf16.msra.mxu0 %v3130
        %5656 = vmatprep.subr.bf16.mxu0 %v3136
        %5657 = vmatpush1.bf16.msra.mxu0 %v3135
        %5658 = vmatprep.subr.bf16.mxu0 %v3141
        %5659 = vmatpush1.bf16.msra.mxu0 %v3140
        %5660 = vmatprep.subr.bf16.mxu0 %v3146
        %5661 = vmatpush1.bf16.msra.mxu0 %v3145
        %5662 = vmatprep.subr.bf16.mxu0 %v3151
        %5663 = vmatpush1.bf16.msra.mxu0 %v3150
        %5664 = vmatprep.subr.bf16.mxu0 %v3156
        %5665 = vmatpush1.bf16.msra.mxu0 %v3155
        %5666 = vmatprep.subr.bf16.mxu0 %v3161
        %5667 = vmatpush1.bf16.msra.mxu0 %v3160
        %5668 = vmatprep.subr.bf16.mxu0 %v3166
        %5669 = vmatpush1.bf16.msra.mxu0 %v3165
        %5670 = vmatprep.subr.bf16.mxu0 %v3171
        %5671 = vmatpush1.bf16.msra.mxu0 %v3170
        %5672 = vmatprep.subr.bf16.mxu0 %v3176
        %5673 = vmatpush1.bf16.msra.mxu0 %v3175
        %5674 = vmatprep.subr.bf16.mxu0 %v3181
        %5675 = vmatpush1.bf16.msra.mxu0 %v3180
        %5676 = vmatprep.mubr.bf16.mxu0 %v3652
        %5677 = vmatmul.mubr.bf16.gmra.mrb[0].mxu0 %v3651
        %v5678 = vpop.f32.mrb[0].mxu0
        %v5679 = vadd.f32 %v5636, %v5678
        %v5680 = vpop.f32.mrb[0].mxu0
        %v5681 = vadd.f32 %v5638, %v5680
        %v5682 = vpop.f32.mrb[0].mxu0
        %v5683 = vadd.f32 %v5640, %v5682
        %v5684 = vpop.f32.mrb[0].mxu0
        %v5685 = vadd.f32 %v5642, %v5684
        %5686 = vdwg.mxu0
        %5687 = vmatprep.subr.bf16.mxu0 %v3186
        %5688 = vmatpush1.bf16.msra.mxu0 %v3185
        %5689 = vmatprep.subr.bf16.mxu0 %v3191
        %5690 = vmatpush1.bf16.msra.mxu0 %v3190
        %5691 = vmatprep.subr.bf16.mxu0 %v3196
        %5692 = vmatpush1.bf16.msra.mxu0 %v3195
        %5693 = vmatprep.subr.bf16.mxu0 %v3201
        %5694 = vmatpush1.bf16.msra.mxu0 %v3200
        %5695 = vmatprep.subr.bf16.mxu0 %v3206
        %5696 = vmatpush1.bf16.msra.mxu0 %v3205
        %5697 = vmatprep.subr.bf16.mxu0 %v3211
        %5698 = vmatpush1.bf16.msra.mxu0 %v3210
        %5699 = vmatprep.subr.bf16.mxu0 %v3216
        %5700 = vmatpush1.bf16.msra.mxu0 %v3215
        %5701 = vmatprep.subr.bf16.mxu0 %v3221
        %5702 = vmatpush1.bf16.msra.mxu0 %v3220
        %5703 = vmatprep.subr.bf16.mxu0 %v3226
        %5704 = vmatpush1.bf16.msra.mxu0 %v3225
        %5705 = vmatprep.subr.bf16.mxu0 %v3231
        %5706 = vmatpush1.bf16.msra.mxu0 %v3230
        %5707 = vmatprep.subr.bf16.mxu0 %v3236
        %5708 = vmatpush1.bf16.msra.mxu0 %v3235
        %5709 = vmatprep.subr.bf16.mxu0 %v3241
        %5710 = vmatpush1.bf16.msra.mxu0 %v3240
        %5711 = vmatprep.subr.bf16.mxu0 %v3246
        %5712 = vmatpush1.bf16.msra.mxu0 %v3245
        %5713 = vmatprep.subr.bf16.mxu0 %v3251
        %5714 = vmatpush1.bf16.msra.mxu0 %v3250
        %5715 = vmatprep.subr.bf16.mxu0 %v3256
        %5716 = vmatpush1.bf16.msra.mxu0 %v3255
        %5717 = vmatprep.subr.bf16.mxu0 %v3261
        %5718 = vmatpush1.bf16.msra.mxu0 %v3260
        %5719 = vmatprep.mubr.bf16.mxu0 %v3654
        %5720 = vmatmul.mubr.bf16.gmra.mrb[0].mxu0 %v3653
        %v5721 = vpop.f32.mrb[0].mxu0
        %v5722 = vadd.f32 %v5679, %v5721
        %v5723 = vpop.f32.mrb[0].mxu0
        %v5724 = vadd.f32 %v5681, %v5723
        %v5725 = vpop.f32.mrb[0].mxu0
        %v5726 = vadd.f32 %v5683, %v5725
        %v5727 = vpop.f32.mrb[0].mxu0
        %v5728 = vadd.f32 %v5685, %v5727
        %5729 = vdwg.mxu0
        %5730 = vmatprep.subr.bf16.mxu0 %v3266
        %5731 = vmatpush1.bf16.msra.mxu0 %v3265
        %5732 = vmatprep.subr.bf16.mxu0 %v3271
        %5733 = vmatpush1.bf16.msra.mxu0 %v3270
        %5734 = vmatprep.subr.bf16.mxu0 %v3276
        %5735 = vmatpush1.bf16.msra.mxu0 %v3275
        %5736 = vmatprep.subr.bf16.mxu0 %v3281
        %5737 = vmatpush1.bf16.msra.mxu0 %v3280
        %5738 = vmatprep.subr.bf16.mxu0 %v3286
        %5739 = vmatpush1.bf16.msra.mxu0 %v3285
        %5740 = vmatprep.subr.bf16.mxu0 %v3291
        %5741 = vmatpush1.bf16.msra.mxu0 %v3290
        %5742 = vmatprep.subr.bf16.mxu0 %v3296
        %5743 = vmatpush1.bf16.msra.mxu0 %v3295
        %5744 = vmatprep.subr.bf16.mxu0 %v3301
        %5745 = vmatpush1.bf16.msra.mxu0 %v3300
        %5746 = vmatprep.subr.bf16.mxu0 %v3306
        %5747 = vmatpush1.bf16.msra.mxu0 %v3305
        %5748 = vmatprep.subr.bf16.mxu0 %v3311
        %5749 = vmatpush1.bf16.msra.mxu0 %v3310
        %5750 = vmatprep.subr.bf16.mxu0 %v3316
        %5751 = vmatpush1.bf16.msra.mxu0 %v3315
        %5752 = vmatprep.subr.bf16.mxu0 %v3321
        %5753 = vmatpush1.bf16.msra.mxu0 %v3320
        %5754 = vmatprep.subr.bf16.mxu0 %v3326
        %5755 = vmatpush1.bf16.msra.mxu0 %v3325
        %5756 = vmatprep.subr.bf16.mxu0 %v3331
        %5757 = vmatpush1.bf16.msra.mxu0 %v3330
        %5758 = vmatprep.subr.bf16.mxu0 %v3336
        %5759 = vmatpush1.bf16.msra.mxu0 %v3335
        %5760 = vmatprep.subr.bf16.mxu0 %v3341
        %5761 = vmatpush1.bf16.msra.mxu0 %v3340
        %5762 = vmatprep.mubr.bf16.mxu0 %v3656
        %5763 = vmatmul.mubr.bf16.gmra.mrb[0].mxu0 %v3655
        %v5764 = vpop.f32.mrb[0].mxu0
        %v5765 = vadd.f32 %v5722, %v5764
        %v5766 = vpop.f32.mrb[0].mxu0
        %v5767 = vadd.f32 %v5724, %v5766
        %v5768 = vpop.f32.mrb[0].mxu0
        %v5769 = vadd.f32 %v5726, %v5768
        %v5770 = vpop.f32.mrb[0].mxu0
        %v5771 = vadd.f32 %v5728, %v5770
        %5772 = vdwg.mxu0
        %5773 = vmatprep.subr.bf16.mxu0 %v3346
        %5774 = vmatpush1.bf16.msra.mxu0 %v3345
        %5775 = vmatprep.subr.bf16.mxu0 %v3351
        %5776 = vmatpush1.bf16.msra.mxu0 %v3350
        %5777 = vmatprep.subr.bf16.mxu0 %v3356
        %5778 = vmatpush1.bf16.msra.mxu0 %v3355
        %5779 = vmatprep.subr.bf16.mxu0 %v3361
        %5780 = vmatpush1.bf16.msra.mxu0 %v3360
        %5781 = vmatprep.subr.bf16.mxu0 %v3366
        %5782 = vmatpush1.bf16.msra.mxu0 %v3365
        %5783 = vmatprep.subr.bf16.mxu0 %v3371
        %5784 = vmatpush1.bf16.msra.mxu0 %v3370
        %5785 = vmatprep.subr.bf16.mxu0 %v3376
        %5786 = vmatpush1.bf16.msra.mxu0 %v3375
        %5787 = vmatprep.subr.bf16.mxu0 %v3381
        %5788 = vmatpush1.bf16.msra.mxu0 %v3380
        %5789 = vmatprep.subr.bf16.mxu0 %v3386
        %5790 = vmatpush1.bf16.msra.mxu0 %v3385
        %5791 = vmatprep.subr.bf16.mxu0 %v3391
        %5792 = vmatpush1.bf16.msra.mxu0 %v3390
        %5793 = vmatprep.subr.bf16.mxu0 %v3396
        %5794 = vmatpush1.bf16.msra.mxu0 %v3395
        %5795 = vmatprep.subr.bf16.mxu0 %v3401
        %5796 = vmatpush1.bf16.msra.mxu0 %v3400
        %5797 = vmatprep.subr.bf16.mxu0 %v3406
        %5798 = vmatpush1.bf16.msra.mxu0 %v3405
        %5799 = vmatprep.subr.bf16.mxu0 %v3411
        %5800 = vmatpush1.bf16.msra.mxu0 %v3410
        %5801 = vmatprep.subr.bf16.mxu0 %v3416
        %5802 = vmatpush1.bf16.msra.mxu0 %v3415
        %5803 = vmatprep.subr.bf16.mxu0 %v3421
        %5804 = vmatpush1.bf16.msra.mxu0 %v3420
        %5805 = vmatprep.mubr.bf16.mxu0 %v3658
        %5806 = vmatmul.mubr.bf16.gmra.mrb[0].mxu0 %v3657
        %v5807 = vpop.f32.mrb[0].mxu0
        %v5808 = vadd.f32 %v5765, %v5807
        %v5809 = vpop.f32.mrb[0].mxu0
        %v5810 = vadd.f32 %v5767, %v5809
        %v5811 = vpop.f32.mrb[0].mxu0
        %v5812 = vadd.f32 %v5769, %v5811
        %v5813 = vpop.f32.mrb[0].mxu0
        %v5814 = vadd.f32 %v5771, %v5813
        %5815 = vdwg.mxu0
        %5816 = vmatprep.subr.bf16.mxu0 %v3426
        %5817 = vmatpush1.bf16.msra.mxu0 %v3425
        %5818 = vmatprep.subr.bf16.mxu0 %v3431
        %5819 = vmatpush1.bf16.msra.mxu0 %v3430
        %5820 = vmatprep.subr.bf16.mxu0 %v3436
        %5821 = vmatpush1.bf16.msra.mxu0 %v3435
        %5822 = vmatprep.subr.bf16.mxu0 %v3441
        %5823 = vmatpush1.bf16.msra.mxu0 %v3440
        %5824 = vmatprep.subr.bf16.mxu0 %v3446
        %5825 = vmatpush1.bf16.msra.mxu0 %v3445
        %5826 = vmatprep.subr.bf16.mxu0 %v3451
        %5827 = vmatpush1.bf16.msra.mxu0 %v3450
        %5828 = vmatprep.subr.bf16.mxu0 %v3456
        %5829 = vmatpush1.bf16.msra.mxu0 %v3455
        %5830 = vmatprep.subr.bf16.mxu0 %v3461
        %5831 = vmatpush1.bf16.msra.mxu0 %v3460
        %5832 = vmatprep.subr.bf16.mxu0 0
        %5833 = vmatpush1.bf16.msra.mxu0 0
        %5834 = vmatprep.subr.bf16.mxu0 0
        %5835 = vmatpush1.bf16.msra.mxu0 0
        %5836 = vmatprep.subr.bf16.mxu0 0
        %5837 = vmatpush1.bf16.msra.mxu0 0
        %5838 = vmatprep.subr.bf16.mxu0 0
        %5839 = vmatpush1.bf16.msra.mxu0 0
        %5840 = vmatprep.subr.bf16.mxu0 0
        %5841 = vmatpush1.bf16.msra.mxu0 0
        %5842 = vmatprep.subr.bf16.mxu0 0
        %5843 = vmatpush1.bf16.msra.mxu0 0
        %5844 = vmatprep.subr.bf16.mxu0 0
        %5845 = vmatpush1.bf16.msra.mxu0 0
        %5846 = vmatprep.subr.bf16.mxu0 0
        %5847 = vmatpush1.bf16.msra.mxu0 0
        %5848 = vmatprep.mubr.bf16.mxu0 0
        %5849 = vmatmul.mubr.bf16.gmra.mrb[0].mxu0 %v3659
        %v5850 = vpop.f32.mrb[0].mxu0
        %v5851 = vadd.f32 %v5808, %v5850
        %v5852 = vpop.f32.mrb[0].mxu0
        %v5853 = vadd.f32 %v5810, %v5852
        %v5854 = vpop.f32.mrb[0].mxu0
        %v5855 = vadd.f32 %v5812, %v5854
        %v5856 = vpop.f32.mrb[0].mxu0
        %v5857 = vadd.f32 %v5814, %v5856
        %5858 = vdwg.mxu0
        %5859 = vmatprep.subr.bf16.mxu0 0
        %5860 = vmatpush1.bf16.msra.mxu0 %v1507
        %5861 = vmatprep.subr.bf16.mxu0 0
        %5862 = vmatpush1.bf16.msra.mxu0 %v1512
        %5863 = vmatprep.subr.bf16.mxu0 0
        %5864 = vmatpush1.bf16.msra.mxu0 %v1517
        %5865 = vmatprep.subr.bf16.mxu0 0
        %5866 = vmatpush1.bf16.msra.mxu0 %v1522
        %5867 = vmatprep.subr.bf16.mxu0 0
        %5868 = vmatpush1.bf16.msra.mxu0 %v1527
        %5869 = vmatprep.subr.bf16.mxu0 0
        %5870 = vmatpush1.bf16.msra.mxu0 %v1532
        %5871 = vmatprep.subr.bf16.mxu0 0
        %5872 = vmatpush1.bf16.msra.mxu0 %v1537
        %5873 = vmatprep.subr.bf16.mxu0 0
        %5874 = vmatpush1.bf16.msra.mxu0 %v1542
        %5875 = vmatprep.subr.bf16.mxu0 0
        %5876 = vmatpush1.bf16.msra.mxu0 %v1547
        %5877 = vmatprep.subr.bf16.mxu0 0
        %5878 = vmatpush1.bf16.msra.mxu0 %v1552
        %5879 = vmatprep.subr.bf16.mxu0 0
        %5880 = vmatpush1.bf16.msra.mxu0 %v1557
        %5881 = vmatprep.subr.bf16.mxu0 0
        %5882 = vmatpush1.bf16.msra.mxu0 %v1562
        %5883 = vmatprep.subr.bf16.mxu0 0
        %5884 = vmatpush1.bf16.msra.mxu0 %v1567
        %5885 = vmatprep.subr.bf16.mxu0 0
        %5886 = vmatpush1.bf16.msra.mxu0 %v1572
        %5887 = vmatprep.subr.bf16.mxu0 0
        %5888 = vmatpush1.bf16.msra.mxu0 %v1577
        %5889 = vmatprep.subr.bf16.mxu0 0
        %5890 = vmatpush1.bf16.msra.mxu0 %v1582
        %5891 = vmatprep.mubr.bf16.mxu0 %v3612
        %5892 = vmatmul.mubr.bf16.gmra.mrb[0].mxu0 %v3611
        %v5893 = vpop.f32.mrb[0].mxu0
        %v5894 = vadd.f32 0.0, %v5893
        %v5895 = vpop.f32.mrb[0].mxu0
        %v5896 = vpop.f32.mrb[0].mxu0
        %v5897 = vadd.f32 0.0, %v5896
        %v5898 = vpop.f32.mrb[0].mxu0
        %5899 = vdwg.mxu0
        %5900 = vmatprep.subr.bf16.mxu0 0
        %5901 = vmatpush1.bf16.msra.mxu0 %v1587
        %5902 = vmatprep.subr.bf16.mxu0 0
        %5903 = vmatpush1.bf16.msra.mxu0 %v1592
        %5904 = vmatprep.subr.bf16.mxu0 0
        %5905 = vmatpush1.bf16.msra.mxu0 %v1597
        %5906 = vmatprep.subr.bf16.mxu0 0
        %5907 = vmatpush1.bf16.msra.mxu0 %v1602
        %5908 = vmatprep.subr.bf16.mxu0 0
        %5909 = vmatpush1.bf16.msra.mxu0 %v1607
        %5910 = vmatprep.subr.bf16.mxu0 0
        %5911 = vmatpush1.bf16.msra.mxu0 %v1612
        %5912 = vmatprep.subr.bf16.mxu0 0
        %5913 = vmatpush1.bf16.msra.mxu0 %v1617
        %5914 = vmatprep.subr.bf16.mxu0 0
        %5915 = vmatpush1.bf16.msra.mxu0 %v1622
        %5916 = vmatprep.subr.bf16.mxu0 0
        %5917 = vmatpush1.bf16.msra.mxu0 %v1627
        %5918 = vmatprep.subr.bf16.mxu0 0
        %5919 = vmatpush1.bf16.msra.mxu0 %v1632
        %5920 = vmatprep.subr.bf16.mxu0 0
        %5921 = vmatpush1.bf16.msra.mxu0 %v1637
        %5922 = vmatprep.subr.bf16.mxu0 0
        %5923 = vmatpush1.bf16.msra.mxu0 %v1642
        %5924 = vmatprep.subr.bf16.mxu0 0
        %5925 = vmatpush1.bf16.msra.mxu0 %v1647
        %5926 = vmatprep.subr.bf16.mxu0 0
        %5927 = vmatpush1.bf16.msra.mxu0 %v1652
        %5928 = vmatprep.subr.bf16.mxu0 0
        %5929 = vmatpush1.bf16.msra.mxu0 %v1657
        %5930 = vmatprep.subr.bf16.mxu0 0
        %5931 = vmatpush1.bf16.msra.mxu0 %v1662
        %5932 = vmatprep.mubr.bf16.mxu0 %v3614
        %5933 = vmatmul.mubr.bf16.gmra.mrb[0].mxu0 %v3613
        %v5934 = vpop.f32.mrb[0].mxu0
        %v5935 = vadd.f32 %v5894, %v5934
        %v5936 = vpop.f32.mrb[0].mxu0
        %v5937 = vpop.f32.mrb[0].mxu0
        %v5938 = vadd.f32 %v5897, %v5937
        %v5939 = vpop.f32.mrb[0].mxu0
        %5940 = vdwg.mxu0
        %5941 = vmatprep.subr.bf16.mxu0 0
        %5942 = vmatpush1.bf16.msra.mxu0 %v1667
        %5943 = vmatprep.subr.bf16.mxu0 0
        %5944 = vmatpush1.bf16.msra.mxu0 %v1672
        %5945 = vmatprep.subr.bf16.mxu0 0
        %5946 = vmatpush1.bf16.msra.mxu0 %v1677
        %5947 = vmatprep.subr.bf16.mxu0 0
        %5948 = vmatpush1.bf16.msra.mxu0 %v1682
        %5949 = vmatprep.subr.bf16.mxu0 0
        %5950 = vmatpush1.bf16.msra.mxu0 %v1687
        %5951 = vmatprep.subr.bf16.mxu0 0
        %5952 = vmatpush1.bf16.msra.mxu0 %v1692
        %5953 = vmatprep.subr.bf16.mxu0 0
        %5954 = vmatpush1.bf16.msra.mxu0 %v1697
        %5955 = vmatprep.subr.bf16.mxu0 0
        %5956 = vmatpush1.bf16.msra.mxu0 %v1702
        %5957 = vmatprep.subr.bf16.mxu0 0
        %5958 = vmatpush1.bf16.msra.mxu0 %v1707
        %5959 = vmatprep.subr.bf16.mxu0 0
        %5960 = vmatpush1.bf16.msra.mxu0 %v1712
        %5961 = vmatprep.subr.bf16.mxu0 0
        %5962 = vmatpush1.bf16.msra.mxu0 %v1717
        %5963 = vmatprep.subr.bf16.mxu0 0
        %5964 = vmatpush1.bf16.msra.mxu0 %v1722
        %5965 = vmatprep.subr.bf16.mxu0 0
        %5966 = vmatpush1.bf16.msra.mxu0 %v1727
        %5967 = vmatprep.subr.bf16.mxu0 0
        %5968 = vmatpush1.bf16.msra.mxu0 %v1732
        %5969 = vmatprep.subr.bf16.mxu0 0
        %5970 = vmatpush1.bf16.msra.mxu0 %v1737
        %5971 = vmatprep.subr.bf16.mxu0 0
        %5972 = vmatpush1.bf16.msra.mxu0 %v1742
        %5973 = vmatprep.mubr.bf16.mxu0 %v3616
        %5974 = vmatmul.mubr.bf16.gmra.mrb[0].mxu0 %v3615
        %v5975 = vpop.f32.mrb[0].mxu0
        %v5976 = vadd.f32 %v5935, %v5975
        %v5977 = vpop.f32.mrb[0].mxu0
        %v5978 = vpop.f32.mrb[0].mxu0
        %v5979 = vadd.f32 %v5938, %v5978
        %v5980 = vpop.f32.mrb[0].mxu0
        %5981 = vdwg.mxu0
        %5982 = vmatprep.subr.bf16.mxu0 0
        %5983 = vmatpush1.bf16.msra.mxu0 %v1747
        %5984 = vmatprep.subr.bf16.mxu0 0
        %5985 = vmatpush1.bf16.msra.mxu0 %v1752
        %5986 = vmatprep.subr.bf16.mxu0 0
        %5987 = vmatpush1.bf16.msra.mxu0 %v1757
        %5988 = vmatprep.subr.bf16.mxu0 0
        %5989 = vmatpush1.bf16.msra.mxu0 %v1762
        %5990 = vmatprep.subr.bf16.mxu0 0
        %5991 = vmatpush1.bf16.msra.mxu0 %v1767
        %5992 = vmatprep.subr.bf16.mxu0 0
        %5993 = vmatpush1.bf16.msra.mxu0 %v1772
        %5994 = vmatprep.subr.bf16.mxu0 0
        %5995 = vmatpush1.bf16.msra.mxu0 %v1777
        %5996 = vmatprep.subr.bf16.mxu0 0
        %5997 = vmatpush1.bf16.msra.mxu0 %v1782
        %5998 = vmatprep.subr.bf16.mxu0 0
        %5999 = vmatpush1.bf16.msra.mxu0 %v1787
        %6000 = vmatprep.subr.bf16.mxu0 0
        %6001 = vmatpush1.bf16.msra.mxu0 %v1792
        %6002 = vmatprep.subr.bf16.mxu0 0
        %6003 = vmatpush1.bf16.msra.mxu0 %v1797
        %6004 = vmatprep.subr.bf16.mxu0 0
        %6005 = vmatpush1.bf16.msra.mxu0 %v1802
        %6006 = vmatprep.subr.bf16.mxu0 0
        %6007 = vmatpush1.bf16.msra.mxu0 %v1807
        %6008 = vmatprep.subr.bf16.mxu0 0
        %6009 = vmatpush1.bf16.msra.mxu0 %v1812
        %6010 = vmatprep.subr.bf16.mxu0 0
        %6011 = vmatpush1.bf16.msra.mxu0 %v1817
        %6012 = vmatprep.subr.bf16.mxu0 0
        %6013 = vmatpush1.bf16.msra.mxu0 %v1822
        %6014 = vmatprep.mubr.bf16.mxu0 %v3618
        %6015 = vmatmul.mubr.bf16.gmra.mrb[0].mxu0 %v3617
        %v6016 = vpop.f32.mrb[0].mxu0
        %v6017 = vadd.f32 %v5976, %v6016
        %v6018 = vpop.f32.mrb[0].mxu0
        %v6019 = vpop.f32.mrb[0].mxu0
        %v6020 = vadd.f32 %v5979, %v6019
        %v6021 = vpop.f32.mrb[0].mxu0
        %6022 = vdwg.mxu0
        %6023 = vmatprep.subr.bf16.mxu0 0
        %6024 = vmatpush1.bf16.msra.mxu0 %v1827
        %6025 = vmatprep.subr.bf16.mxu0 0
        %6026 = vmatpush1.bf16.msra.mxu0 %v1832
        %6027 = vmatprep.subr.bf16.mxu0 0
        %6028 = vmatpush1.bf16.msra.mxu0 %v1837
        %6029 = vmatprep.subr.bf16.mxu0 0
        %6030 = vmatpush1.bf16.msra.mxu0 %v1842
        %6031 = vmatprep.subr.bf16.mxu0 0
        %6032 = vmatpush1.bf16.msra.mxu0 %v1847
        %6033 = vmatprep.subr.bf16.mxu0 0
        %6034 = vmatpush1.bf16.msra.mxu0 %v1852
        %6035 = vmatprep.subr.bf16.mxu0 0
        %6036 = vmatpush1.bf16.msra.mxu0 %v1857
        %6037 = vmatprep.subr.bf16.mxu0 0
        %6038 = vmatpush1.bf16.msra.mxu0 %v1862
        %6039 = vmatprep.subr.bf16.mxu0 0
        %6040 = vmatpush1.bf16.msra.mxu0 %v1867
        %6041 = vmatprep.subr.bf16.mxu0 0
        %6042 = vmatpush1.bf16.msra.mxu0 %v1872
        %6043 = vmatprep.subr.bf16.mxu0 0
        %6044 = vmatpush1.bf16.msra.mxu0 %v1877
        %6045 = vmatprep.subr.bf16.mxu0 0
        %6046 = vmatpush1.bf16.msra.mxu0 %v1882
        %6047 = vmatprep.subr.bf16.mxu0 0
        %6048 = vmatpush1.bf16.msra.mxu0 %v1887
        %6049 = vmatprep.subr.bf16.mxu0 0
        %6050 = vmatpush1.bf16.msra.mxu0 %v1892
        %6051 = vmatprep.subr.bf16.mxu0 0
        %6052 = vmatpush1.bf16.msra.mxu0 %v1897
        %6053 = vmatprep.subr.bf16.mxu0 0
        %6054 = vmatpush1.bf16.msra.mxu0 %v1902
        %6055 = vmatprep.mubr.bf16.mxu0 %v3620
        %6056 = vmatmul.mubr.bf16.gmra.mrb[0].mxu0 %v3619
        %v6057 = vpop.f32.mrb[0].mxu0
        %v6058 = vadd.f32 %v6017, %v6057
        %v6059 = vpop.f32.mrb[0].mxu0
        %v6060 = vpop.f32.mrb[0].mxu0
        %v6061 = vadd.f32 %v6020, %v6060
        %v6062 = vpop.f32.mrb[0].mxu0
        %6063 = vdwg.mxu0
        %6064 = vmatprep.subr.bf16.mxu0 0
        %6065 = vmatpush1.bf16.msra.mxu0 %v1907
        %6066 = vmatprep.subr.bf16.mxu0 0
        %6067 = vmatpush1.bf16.msra.mxu0 %v1912
        %6068 = vmatprep.subr.bf16.mxu0 0
        %6069 = vmatpush1.bf16.msra.mxu0 %v1917
        %6070 = vmatprep.subr.bf16.mxu0 0
        %6071 = vmatpush1.bf16.msra.mxu0 %v1922
        %6072 = vmatprep.subr.bf16.mxu0 0
        %6073 = vmatpush1.bf16.msra.mxu0 %v1927
        %6074 = vmatprep.subr.bf16.mxu0 0
        %6075 = vmatpush1.bf16.msra.mxu0 %v1932
        %6076 = vmatprep.subr.bf16.mxu0 0
        %6077 = vmatpush1.bf16.msra.mxu0 %v1937
        %6078 = vmatprep.subr.bf16.mxu0 0
        %6079 = vmatpush1.bf16.msra.mxu0 %v1942
        %6080 = vmatprep.subr.bf16.mxu0 0
        %6081 = vmatpush1.bf16.msra.mxu0 %v1947
        %6082 = vmatprep.subr.bf16.mxu0 0
        %6083 = vmatpush1.bf16.msra.mxu0 %v1952
        %6084 = vmatprep.subr.bf16.mxu0 0
        %6085 = vmatpush1.bf16.msra.mxu0 %v1957
        %6086 = vmatprep.subr.bf16.mxu0 0
        %6087 = vmatpush1.bf16.msra.mxu0 %v1962
        %6088 = vmatprep.subr.bf16.mxu0 0
        %6089 = vmatpush1.bf16.msra.mxu0 %v1967
        %6090 = vmatprep.subr.bf16.mxu0 0
        %6091 = vmatpush1.bf16.msra.mxu0 %v1972
        %6092 = vmatprep.subr.bf16.mxu0 0
        %6093 = vmatpush1.bf16.msra.mxu0 %v1977
        %6094 = vmatprep.subr.bf16.mxu0 0
        %6095 = vmatpush1.bf16.msra.mxu0 %v1982
        %6096 = vmatprep.mubr.bf16.mxu0 %v3622
        %6097 = vmatmul.mubr.bf16.gmra.mrb[0].mxu0 %v3621
        %v6098 = vpop.f32.mrb[0].mxu0
        %v6099 = vadd.f32 %v6058, %v6098
        %v6100 = vpop.f32.mrb[0].mxu0
        %v6101 = vpop.f32.mrb[0].mxu0
        %v6102 = vadd.f32 %v6061, %v6101
        %v6103 = vpop.f32.mrb[0].mxu0
        %6104 = vdwg.mxu0
        %6105 = vmatprep.subr.bf16.mxu0 0
        %6106 = vmatpush1.bf16.msra.mxu0 %v1987
        %6107 = vmatprep.subr.bf16.mxu0 0
        %6108 = vmatpush1.bf16.msra.mxu0 %v1992
        %6109 = vmatprep.subr.bf16.mxu0 0
        %6110 = vmatpush1.bf16.msra.mxu0 %v1997
        %6111 = vmatprep.subr.bf16.mxu0 0
        %6112 = vmatpush1.bf16.msra.mxu0 %v2002
        %6113 = vmatprep.subr.bf16.mxu0 0
        %6114 = vmatpush1.bf16.msra.mxu0 %v2007
        %6115 = vmatprep.subr.bf16.mxu0 0
        %6116 = vmatpush1.bf16.msra.mxu0 %v2012
        %6117 = vmatprep.subr.bf16.mxu0 0
        %6118 = vmatpush1.bf16.msra.mxu0 %v2017
        %6119 = vmatprep.subr.bf16.mxu0 0
        %6120 = vmatpush1.bf16.msra.mxu0 %v2022
        %6121 = vmatprep.subr.bf16.mxu0 0
        %6122 = vmatpush1.bf16.msra.mxu0 %v2027
        %6123 = vmatprep.subr.bf16.mxu0 0
        %6124 = vmatpush1.bf16.msra.mxu0 %v2032
        %6125 = vmatprep.subr.bf16.mxu0 0
        %6126 = vmatpush1.bf16.msra.mxu0 %v2037
        %6127 = vmatprep.subr.bf16.mxu0 0
        %6128 = vmatpush1.bf16.msra.mxu0 %v2042
        %6129 = vmatprep.subr.bf16.mxu0 0
        %6130 = vmatpush1.bf16.msra.mxu0 %v2047
        %6131 = vmatprep.subr.bf16.mxu0 0
        %6132 = vmatpush1.bf16.msra.mxu0 %v2052
        %6133 = vmatprep.subr.bf16.mxu0 0
        %6134 = vmatpush1.bf16.msra.mxu0 %v2057
        %6135 = vmatprep.subr.bf16.mxu0 0
        %6136 = vmatpush1.bf16.msra.mxu0 %v2062
        %6137 = vmatprep.mubr.bf16.mxu0 %v3624
        %6138 = vmatmul.mubr.bf16.gmra.mrb[0].mxu0 %v3623
        %v6139 = vpop.f32.mrb[0].mxu0
        %v6140 = vadd.f32 %v6099, %v6139
        %v6141 = vpop.f32.mrb[0].mxu0
        %v6142 = vpop.f32.mrb[0].mxu0
        %v6143 = vadd.f32 %v6102, %v6142
        %v6144 = vpop.f32.mrb[0].mxu0
        %6145 = vdwg.mxu0
        %6146 = vmatprep.subr.bf16.mxu0 0
        %6147 = vmatpush1.bf16.msra.mxu0 %v2067
        %6148 = vmatprep.subr.bf16.mxu0 0
        %6149 = vmatpush1.bf16.msra.mxu0 %v2072
        %6150 = vmatprep.subr.bf16.mxu0 0
        %6151 = vmatpush1.bf16.msra.mxu0 %v2077
        %6152 = vmatprep.subr.bf16.mxu0 0
        %6153 = vmatpush1.bf16.msra.mxu0 %v2082
        %6154 = vmatprep.subr.bf16.mxu0 0
        %6155 = vmatpush1.bf16.msra.mxu0 %v2087
        %6156 = vmatprep.subr.bf16.mxu0 0
        %6157 = vmatpush1.bf16.msra.mxu0 %v2092
        %6158 = vmatprep.subr.bf16.mxu0 0
        %6159 = vmatpush1.bf16.msra.mxu0 %v2097
        %6160 = vmatprep.subr.bf16.mxu0 0
        %6161 = vmatpush1.bf16.msra.mxu0 %v2102
        %6162 = vmatprep.subr.bf16.mxu0 0
        %6163 = vmatpush1.bf16.msra.mxu0 %v2107
        %6164 = vmatprep.subr.bf16.mxu0 0
        %6165 = vmatpush1.bf16.msra.mxu0 %v2112
        %6166 = vmatprep.subr.bf16.mxu0 0
        %6167 = vmatpush1.bf16.msra.mxu0 %v2117
        %6168 = vmatprep.subr.bf16.mxu0 0
        %6169 = vmatpush1.bf16.msra.mxu0 %v2122
        %6170 = vmatprep.subr.bf16.mxu0 0
        %6171 = vmatpush1.bf16.msra.mxu0 %v2127
        %6172 = vmatprep.subr.bf16.mxu0 0
        %6173 = vmatpush1.bf16.msra.mxu0 %v2132
        %6174 = vmatprep.subr.bf16.mxu0 0
        %6175 = vmatpush1.bf16.msra.mxu0 %v2137
        %6176 = vmatprep.subr.bf16.mxu0 0
        %6177 = vmatpush1.bf16.msra.mxu0 %v2142
        %6178 = vmatprep.mubr.bf16.mxu0 %v3626
        %6179 = vmatmul.mubr.bf16.gmra.mrb[0].mxu0 %v3625
        %v6180 = vpop.f32.mrb[0].mxu0
        %v6181 = vadd.f32 %v6140, %v6180
        %v6182 = vpop.f32.mrb[0].mxu0
        %v6183 = vpop.f32.mrb[0].mxu0
        %v6184 = vadd.f32 %v6143, %v6183
        %v6185 = vpop.f32.mrb[0].mxu0
        %6186 = vdwg.mxu0
        %6187 = vmatprep.subr.bf16.mxu0 0
        %6188 = vmatpush1.bf16.msra.mxu0 %v2147
        %6189 = vmatprep.subr.bf16.mxu0 0
        %6190 = vmatpush1.bf16.msra.mxu0 %v2152
        %6191 = vmatprep.subr.bf16.mxu0 0
        %6192 = vmatpush1.bf16.msra.mxu0 %v2157
        %6193 = vmatprep.subr.bf16.mxu0 0
        %6194 = vmatpush1.bf16.msra.mxu0 %v2162
        %6195 = vmatprep.subr.bf16.mxu0 0
        %6196 = vmatpush1.bf16.msra.mxu0 %v2167
        %6197 = vmatprep.subr.bf16.mxu0 0
        %6198 = vmatpush1.bf16.msra.mxu0 %v2172
        %6199 = vmatprep.subr.bf16.mxu0 0
        %6200 = vmatpush1.bf16.msra.mxu0 %v2177
        %6201 = vmatprep.subr.bf16.mxu0 0
        %6202 = vmatpush1.bf16.msra.mxu0 %v2182
        %6203 = vmatprep.subr.bf16.mxu0 0
        %6204 = vmatpush1.bf16.msra.mxu0 %v2187
        %6205 = vmatprep.subr.bf16.mxu0 0
        %6206 = vmatpush1.bf16.msra.mxu0 %v2192
        %6207 = vmatprep.subr.bf16.mxu0 0
        %6208 = vmatpush1.bf16.msra.mxu0 %v2197
        %6209 = vmatprep.subr.bf16.mxu0 0
        %6210 = vmatpush1.bf16.msra.mxu0 %v2202
        %6211 = vmatprep.subr.bf16.mxu0 0
        %6212 = vmatpush1.bf16.msra.mxu0 %v2207
        %6213 = vmatprep.subr.bf16.mxu0 0
        %6214 = vmatpush1.bf16.msra.mxu0 %v2212
        %6215 = vmatprep.subr.bf16.mxu0 0
        %6216 = vmatpush1.bf16.msra.mxu0 %v2217
        %6217 = vmatprep.subr.bf16.mxu0 0
        %6218 = vmatpush1.bf16.msra.mxu0 %v2222
        %6219 = vmatprep.mubr.bf16.mxu0 %v3628
        %6220 = vmatmul.mubr.bf16.gmra.mrb[0].mxu0 %v3627
        %v6221 = vpop.f32.mrb[0].mxu0
        %v6222 = vadd.f32 %v6181, %v6221
        %v6223 = vpop.f32.mrb[0].mxu0
        %v6224 = vpop.f32.mrb[0].mxu0
        %v6225 = vadd.f32 %v6184, %v6224
        %v6226 = vpop.f32.mrb[0].mxu0
        %6227 = vdwg.mxu0
        %6228 = vmatprep.subr.bf16.mxu0 0
        %6229 = vmatpush1.bf16.msra.mxu0 %v2227
        %6230 = vmatprep.subr.bf16.mxu0 0
        %6231 = vmatpush1.bf16.msra.mxu0 %v2232
        %6232 = vmatprep.subr.bf16.mxu0 0
        %6233 = vmatpush1.bf16.msra.mxu0 %v2237
        %6234 = vmatprep.subr.bf16.mxu0 0
        %6235 = vmatpush1.bf16.msra.mxu0 %v2242
        %6236 = vmatprep.subr.bf16.mxu0 0
        %6237 = vmatpush1.bf16.msra.mxu0 %v2247
        %6238 = vmatprep.subr.bf16.mxu0 0
        %6239 = vmatpush1.bf16.msra.mxu0 %v2252
        %6240 = vmatprep.subr.bf16.mxu0 0
        %6241 = vmatpush1.bf16.msra.mxu0 %v2257
        %6242 = vmatprep.subr.bf16.mxu0 0
        %6243 = vmatpush1.bf16.msra.mxu0 %v2262
        %6244 = vmatprep.subr.bf16.mxu0 0
        %6245 = vmatpush1.bf16.msra.mxu0 %v2267
        %6246 = vmatprep.subr.bf16.mxu0 0
        %6247 = vmatpush1.bf16.msra.mxu0 %v2272
        %6248 = vmatprep.subr.bf16.mxu0 0
        %6249 = vmatpush1.bf16.msra.mxu0 %v2277
        %6250 = vmatprep.subr.bf16.mxu0 0
        %6251 = vmatpush1.bf16.msra.mxu0 %v2282
        %6252 = vmatprep.subr.bf16.mxu0 0
        %6253 = vmatpush1.bf16.msra.mxu0 %v2287
        %6254 = vmatprep.subr.bf16.mxu0 0
        %6255 = vmatpush1.bf16.msra.mxu0 %v2292
        %6256 = vmatprep.subr.bf16.mxu0 0
        %6257 = vmatpush1.bf16.msra.mxu0 %v2297
        %6258 = vmatprep.subr.bf16.mxu0 0
        %6259 = vmatpush1.bf16.msra.mxu0 %v2302
        %6260 = vmatprep.mubr.bf16.mxu0 %v3630
        %6261 = vmatmul.mubr.bf16.gmra.mrb[0].mxu0 %v3629
        %v6262 = vpop.f32.mrb[0].mxu0
        %v6263 = vadd.f32 %v6222, %v6262
        %v6264 = vpop.f32.mrb[0].mxu0
        %v6265 = vpop.f32.mrb[0].mxu0
        %v6266 = vadd.f32 %v6225, %v6265
        %v6267 = vpop.f32.mrb[0].mxu0
        %6268 = vdwg.mxu0
        %6269 = vmatprep.subr.bf16.mxu0 0
        %6270 = vmatpush1.bf16.msra.mxu0 %v2307
        %6271 = vmatprep.subr.bf16.mxu0 0
        %6272 = vmatpush1.bf16.msra.mxu0 %v2312
        %6273 = vmatprep.subr.bf16.mxu0 0
        %6274 = vmatpush1.bf16.msra.mxu0 %v2317
        %6275 = vmatprep.subr.bf16.mxu0 0
        %6276 = vmatpush1.bf16.msra.mxu0 %v2322
        %6277 = vmatprep.subr.bf16.mxu0 0
        %6278 = vmatpush1.bf16.msra.mxu0 %v2327
        %6279 = vmatprep.subr.bf16.mxu0 0
        %6280 = vmatpush1.bf16.msra.mxu0 %v2332
        %6281 = vmatprep.subr.bf16.mxu0 0
        %6282 = vmatpush1.bf16.msra.mxu0 %v2337
        %6283 = vmatprep.subr.bf16.mxu0 0
        %6284 = vmatpush1.bf16.msra.mxu0 %v2342
        %6285 = vmatprep.subr.bf16.mxu0 0
        %6286 = vmatpush1.bf16.msra.mxu0 %v2347
        %6287 = vmatprep.subr.bf16.mxu0 0
        %6288 = vmatpush1.bf16.msra.mxu0 %v2352
        %6289 = vmatprep.subr.bf16.mxu0 0
        %6290 = vmatpush1.bf16.msra.mxu0 %v2357
        %6291 = vmatprep.subr.bf16.mxu0 0
        %6292 = vmatpush1.bf16.msra.mxu0 %v2362
        %6293 = vmatprep.subr.bf16.mxu0 0
        %6294 = vmatpush1.bf16.msra.mxu0 %v2367
        %6295 = vmatprep.subr.bf16.mxu0 0
        %6296 = vmatpush1.bf16.msra.mxu0 %v2372
        %6297 = vmatprep.subr.bf16.mxu0 0
        %6298 = vmatpush1.bf16.msra.mxu0 %v2377
        %6299 = vmatprep.subr.bf16.mxu0 0
        %6300 = vmatpush1.bf16.msra.mxu0 %v2382
        %6301 = vmatprep.mubr.bf16.mxu0 %v3632
        %6302 = vmatmul.mubr.bf16.gmra.mrb[0].mxu0 %v3631
        %v6303 = vpop.f32.mrb[0].mxu0
        %v6304 = vadd.f32 %v6263, %v6303
        %v6305 = vpop.f32.mrb[0].mxu0
        %v6306 = vpop.f32.mrb[0].mxu0
        %v6307 = vadd.f32 %v6266, %v6306
        %v6308 = vpop.f32.mrb[0].mxu0
        %6309 = vdwg.mxu0
        %6310 = vmatprep.subr.bf16.mxu0 0
        %6311 = vmatpush1.bf16.msra.mxu0 %v2387
        %6312 = vmatprep.subr.bf16.mxu0 0
        %6313 = vmatpush1.bf16.msra.mxu0 %v2392
        %6314 = vmatprep.subr.bf16.mxu0 0
        %6315 = vmatpush1.bf16.msra.mxu0 %v2397
        %6316 = vmatprep.subr.bf16.mxu0 0
        %6317 = vmatpush1.bf16.msra.mxu0 %v2402
        %6318 = vmatprep.subr.bf16.mxu0 0
        %6319 = vmatpush1.bf16.msra.mxu0 %v2407
        %6320 = vmatprep.subr.bf16.mxu0 0
        %6321 = vmatpush1.bf16.msra.mxu0 %v2412
        %6322 = vmatprep.subr.bf16.mxu0 0
        %6323 = vmatpush1.bf16.msra.mxu0 %v2417
        %6324 = vmatprep.subr.bf16.mxu0 0
        %6325 = vmatpush1.bf16.msra.mxu0 %v2422
        %6326 = vmatprep.subr.bf16.mxu0 0
        %6327 = vmatpush1.bf16.msra.mxu0 %v2427
        %6328 = vmatprep.subr.bf16.mxu0 0
        %6329 = vmatpush1.bf16.msra.mxu0 %v2432
        %6330 = vmatprep.subr.bf16.mxu0 0
        %6331 = vmatpush1.bf16.msra.mxu0 %v2437
        %6332 = vmatprep.subr.bf16.mxu0 0
        %6333 = vmatpush1.bf16.msra.mxu0 %v2442
        %6334 = vmatprep.subr.bf16.mxu0 0
        %6335 = vmatpush1.bf16.msra.mxu0 %v2447
        %6336 = vmatprep.subr.bf16.mxu0 0
        %6337 = vmatpush1.bf16.msra.mxu0 %v2452
        %6338 = vmatprep.subr.bf16.mxu0 0
        %6339 = vmatpush1.bf16.msra.mxu0 %v2457
        %6340 = vmatprep.subr.bf16.mxu0 0
        %6341 = vmatpush1.bf16.msra.mxu0 %v2462
        %6342 = vmatprep.mubr.bf16.mxu0 %v3634
        %6343 = vmatmul.mubr.bf16.gmra.mrb[0].mxu0 %v3633
        %v6344 = vpop.f32.mrb[0].mxu0
        %v6345 = vadd.f32 %v6304, %v6344
        %v6346 = vpop.f32.mrb[0].mxu0
        %v6347 = vpop.f32.mrb[0].mxu0
        %v6348 = vadd.f32 %v6307, %v6347
        %v6349 = vpop.f32.mrb[0].mxu0
        %6350 = vdwg.mxu0
        %6351 = vmatprep.subr.bf16.mxu0 0
        %6352 = vmatpush1.bf16.msra.mxu0 %v2467
        %6353 = vmatprep.subr.bf16.mxu0 0
        %6354 = vmatpush1.bf16.msra.mxu0 %v2472
        %6355 = vmatprep.subr.bf16.mxu0 0
        %6356 = vmatpush1.bf16.msra.mxu0 %v2477
        %6357 = vmatprep.subr.bf16.mxu0 0
        %6358 = vmatpush1.bf16.msra.mxu0 %v2482
        %6359 = vmatprep.subr.bf16.mxu0 0
        %6360 = vmatpush1.bf16.msra.mxu0 %v2487
        %6361 = vmatprep.subr.bf16.mxu0 0
        %6362 = vmatpush1.bf16.msra.mxu0 %v2492
        %6363 = vmatprep.subr.bf16.mxu0 0
        %6364 = vmatpush1.bf16.msra.mxu0 %v2497
        %6365 = vmatprep.subr.bf16.mxu0 0
        %6366 = vmatpush1.bf16.msra.mxu0 %v2502
        %6367 = vmatprep.subr.bf16.mxu0 0
        %6368 = vmatpush1.bf16.msra.mxu0 %v2507
        %6369 = vmatprep.subr.bf16.mxu0 0
        %6370 = vmatpush1.bf16.msra.mxu0 %v2512
        %6371 = vmatprep.subr.bf16.mxu0 0
        %6372 = vmatpush1.bf16.msra.mxu0 %v2517
        %6373 = vmatprep.subr.bf16.mxu0 0
        %6374 = vmatpush1.bf16.msra.mxu0 %v2522
        %6375 = vmatprep.subr.bf16.mxu0 0
        %6376 = vmatpush1.bf16.msra.mxu0 %v2527
        %6377 = vmatprep.subr.bf16.mxu0 0
        %6378 = vmatpush1.bf16.msra.mxu0 %v2532
        %6379 = vmatprep.subr.bf16.mxu0 0
        %6380 = vmatpush1.bf16.msra.mxu0 %v2537
        %6381 = vmatprep.subr.bf16.mxu0 0
        %6382 = vmatpush1.bf16.msra.mxu0 %v2542
        %6383 = vmatprep.mubr.bf16.mxu0 %v3636
        %6384 = vmatmul.mubr.bf16.gmra.mrb[0].mxu0 %v3635
        %v6385 = vpop.f32.mrb[0].mxu0
        %v6386 = vadd.f32 %v6345, %v6385
        %v6387 = vpop.f32.mrb[0].mxu0
        %v6388 = vpop.f32.mrb[0].mxu0
        %v6389 = vadd.f32 %v6348, %v6388
        %v6390 = vpop.f32.mrb[0].mxu0
        %6391 = vdwg.mxu0
        %6392 = vmatprep.subr.bf16.mxu0 0
        %6393 = vmatpush1.bf16.msra.mxu0 %v2547
        %6394 = vmatprep.subr.bf16.mxu0 0
        %6395 = vmatpush1.bf16.msra.mxu0 %v2552
        %6396 = vmatprep.subr.bf16.mxu0 0
        %6397 = vmatpush1.bf16.msra.mxu0 %v2557
        %6398 = vmatprep.subr.bf16.mxu0 0
        %6399 = vmatpush1.bf16.msra.mxu0 %v2562
        %6400 = vmatprep.subr.bf16.mxu0 0
        %6401 = vmatpush1.bf16.msra.mxu0 %v2567
        %6402 = vmatprep.subr.bf16.mxu0 0
        %6403 = vmatpush1.bf16.msra.mxu0 %v2572
        %6404 = vmatprep.subr.bf16.mxu0 0
        %6405 = vmatpush1.bf16.msra.mxu0 %v2577
        %6406 = vmatprep.subr.bf16.mxu0 0
        %6407 = vmatpush1.bf16.msra.mxu0 %v2582
        %6408 = vmatprep.subr.bf16.mxu0 0
        %6409 = vmatpush1.bf16.msra.mxu0 %v2587
        %6410 = vmatprep.subr.bf16.mxu0 0
        %6411 = vmatpush1.bf16.msra.mxu0 %v2592
        %6412 = vmatprep.subr.bf16.mxu0 0
        %6413 = vmatpush1.bf16.msra.mxu0 %v2597
        %6414 = vmatprep.subr.bf16.mxu0 0
        %6415 = vmatpush1.bf16.msra.mxu0 %v2602
        %6416 = vmatprep.subr.bf16.mxu0 0
        %6417 = vmatpush1.bf16.msra.mxu0 %v2607
        %6418 = vmatprep.subr.bf16.mxu0 0
        %6419 = vmatpush1.bf16.msra.mxu0 %v2612
        %6420 = vmatprep.subr.bf16.mxu0 0
        %6421 = vmatpush1.bf16.msra.mxu0 %v2617
        %6422 = vmatprep.subr.bf16.mxu0 0
        %6423 = vmatpush1.bf16.msra.mxu0 %v2622
        %6424 = vmatprep.mubr.bf16.mxu0 %v3638
        %6425 = vmatmul.mubr.bf16.gmra.mrb[0].mxu0 %v3637
        %v6426 = vpop.f32.mrb[0].mxu0
        %v6427 = vadd.f32 %v6386, %v6426
        %v6428 = vpop.f32.mrb[0].mxu0
        %v6429 = vpop.f32.mrb[0].mxu0
        %v6430 = vadd.f32 %v6389, %v6429
        %v6431 = vpop.f32.mrb[0].mxu0
        %6432 = vdwg.mxu0
        %6433 = vmatprep.subr.bf16.mxu0 0
        %6434 = vmatpush1.bf16.msra.mxu0 %v2627
        %6435 = vmatprep.subr.bf16.mxu0 0
        %6436 = vmatpush1.bf16.msra.mxu0 %v2632
        %6437 = vmatprep.subr.bf16.mxu0 0
        %6438 = vmatpush1.bf16.msra.mxu0 %v2637
        %6439 = vmatprep.subr.bf16.mxu0 0
        %6440 = vmatpush1.bf16.msra.mxu0 %v2642
        %6441 = vmatprep.subr.bf16.mxu0 0
        %6442 = vmatpush1.bf16.msra.mxu0 %v2647
        %6443 = vmatprep.subr.bf16.mxu0 0
        %6444 = vmatpush1.bf16.msra.mxu0 %v2652
        %6445 = vmatprep.subr.bf16.mxu0 0
        %6446 = vmatpush1.bf16.msra.mxu0 %v2657
        %6447 = vmatprep.subr.bf16.mxu0 0
        %6448 = vmatpush1.bf16.msra.mxu0 %v2662
        %6449 = vmatprep.subr.bf16.mxu0 0
        %6450 = vmatpush1.bf16.msra.mxu0 %v2667
        %6451 = vmatprep.subr.bf16.mxu0 0
        %6452 = vmatpush1.bf16.msra.mxu0 %v2672
        %6453 = vmatprep.subr.bf16.mxu0 0
        %6454 = vmatpush1.bf16.msra.mxu0 %v2677
        %6455 = vmatprep.subr.bf16.mxu0 0
        %6456 = vmatpush1.bf16.msra.mxu0 %v2682
        %6457 = vmatprep.subr.bf16.mxu0 0
        %6458 = vmatpush1.bf16.msra.mxu0 %v2687
        %6459 = vmatprep.subr.bf16.mxu0 0
        %6460 = vmatpush1.bf16.msra.mxu0 %v2692
        %6461 = vmatprep.subr.bf16.mxu0 0
        %6462 = vmatpush1.bf16.msra.mxu0 %v2697
        %6463 = vmatprep.subr.bf16.mxu0 0
        %6464 = vmatpush1.bf16.msra.mxu0 %v2702
        %6465 = vmatprep.mubr.bf16.mxu0 %v3640
        %6466 = vmatmul.mubr.bf16.gmra.mrb[0].mxu0 %v3639
        %v6467 = vpop.f32.mrb[0].mxu0
        %v6468 = vadd.f32 %v6427, %v6467
        %v6469 = vpop.f32.mrb[0].mxu0
        %v6470 = vpop.f32.mrb[0].mxu0
        %v6471 = vadd.f32 %v6430, %v6470
        %v6472 = vpop.f32.mrb[0].mxu0
        %6473 = vdwg.mxu0
        %6474 = vmatprep.subr.bf16.mxu0 0
        %6475 = vmatpush1.bf16.msra.mxu0 %v2707
        %6476 = vmatprep.subr.bf16.mxu0 0
        %6477 = vmatpush1.bf16.msra.mxu0 %v2712
        %6478 = vmatprep.subr.bf16.mxu0 0
        %6479 = vmatpush1.bf16.msra.mxu0 %v2717
        %6480 = vmatprep.subr.bf16.mxu0 0
        %6481 = vmatpush1.bf16.msra.mxu0 %v2722
        %6482 = vmatprep.subr.bf16.mxu0 0
        %6483 = vmatpush1.bf16.msra.mxu0 %v2727
        %6484 = vmatprep.subr.bf16.mxu0 0
        %6485 = vmatpush1.bf16.msra.mxu0 %v2732
        %6486 = vmatprep.subr.bf16.mxu0 0
        %6487 = vmatpush1.bf16.msra.mxu0 %v2737
        %6488 = vmatprep.subr.bf16.mxu0 0
        %6489 = vmatpush1.bf16.msra.mxu0 %v2742
        %6490 = vmatprep.subr.bf16.mxu0 0
        %6491 = vmatpush1.bf16.msra.mxu0 %v2747
        %6492 = vmatprep.subr.bf16.mxu0 0
        %6493 = vmatpush1.bf16.msra.mxu0 %v2752
        %6494 = vmatprep.subr.bf16.mxu0 0
        %6495 = vmatpush1.bf16.msra.mxu0 %v2757
        %6496 = vmatprep.subr.bf16.mxu0 0
        %6497 = vmatpush1.bf16.msra.mxu0 %v2762
        %6498 = vmatprep.subr.bf16.mxu0 0
        %6499 = vmatpush1.bf16.msra.mxu0 %v2767
        %6500 = vmatprep.subr.bf16.mxu0 0
        %6501 = vmatpush1.bf16.msra.mxu0 %v2772
        %6502 = vmatprep.subr.bf16.mxu0 0
        %6503 = vmatpush1.bf16.msra.mxu0 %v2777
        %6504 = vmatprep.subr.bf16.mxu0 0
        %6505 = vmatpush1.bf16.msra.mxu0 %v2782
        %6506 = vmatprep.mubr.bf16.mxu0 %v3642
        %6507 = vmatmul.mubr.bf16.gmra.mrb[0].mxu0 %v3641
        %v6508 = vpop.f32.mrb[0].mxu0
        %v6509 = vadd.f32 %v6468, %v6508
        %v6510 = vpop.f32.mrb[0].mxu0
        %v6511 = vpop.f32.mrb[0].mxu0
        %v6512 = vadd.f32 %v6471, %v6511
        %v6513 = vpop.f32.mrb[0].mxu0
        %6514 = vdwg.mxu0
        %6515 = vmatprep.subr.bf16.mxu0 0
        %6516 = vmatpush1.bf16.msra.mxu0 %v2787
        %6517 = vmatprep.subr.bf16.mxu0 0
        %6518 = vmatpush1.bf16.msra.mxu0 %v2792
        %6519 = vmatprep.subr.bf16.mxu0 0
        %6520 = vmatpush1.bf16.msra.mxu0 %v2797
        %6521 = vmatprep.subr.bf16.mxu0 0
        %6522 = vmatpush1.bf16.msra.mxu0 %v2802
        %6523 = vmatprep.subr.bf16.mxu0 0
        %6524 = vmatpush1.bf16.msra.mxu0 %v2807
        %6525 = vmatprep.subr.bf16.mxu0 0
        %6526 = vmatpush1.bf16.msra.mxu0 %v2812
        %6527 = vmatprep.subr.bf16.mxu0 0
        %6528 = vmatpush1.bf16.msra.mxu0 %v2817
        %6529 = vmatprep.subr.bf16.mxu0 0
        %6530 = vmatpush1.bf16.msra.mxu0 %v2822
        %6531 = vmatprep.subr.bf16.mxu0 0
        %6532 = vmatpush1.bf16.msra.mxu0 %v2827
        %6533 = vmatprep.subr.bf16.mxu0 0
        %6534 = vmatpush1.bf16.msra.mxu0 %v2832
        %6535 = vmatprep.subr.bf16.mxu0 0
        %6536 = vmatpush1.bf16.msra.mxu0 %v2837
        %6537 = vmatprep.subr.bf16.mxu0 0
        %6538 = vmatpush1.bf16.msra.mxu0 %v2842
        %6539 = vmatprep.subr.bf16.mxu0 0
        %6540 = vmatpush1.bf16.msra.mxu0 %v2847
        %6541 = vmatprep.subr.bf16.mxu0 0
        %6542 = vmatpush1.bf16.msra.mxu0 %v2852
        %6543 = vmatprep.subr.bf16.mxu0 0
        %6544 = vmatpush1.bf16.msra.mxu0 %v2857
        %6545 = vmatprep.subr.bf16.mxu0 0
        %6546 = vmatpush1.bf16.msra.mxu0 %v2862
        %6547 = vmatprep.mubr.bf16.mxu0 %v3644
        %6548 = vmatmul.mubr.bf16.gmra.mrb[0].mxu0 %v3643
        %v6549 = vpop.f32.mrb[0].mxu0
        %v6550 = vadd.f32 %v6509, %v6549
        %v6551 = vpop.f32.mrb[0].mxu0
        %v6552 = vpop.f32.mrb[0].mxu0
        %v6553 = vadd.f32 %v6512, %v6552
        %v6554 = vpop.f32.mrb[0].mxu0
        %6555 = vdwg.mxu0
        %6556 = vmatprep.subr.bf16.mxu0 0
        %6557 = vmatpush1.bf16.msra.mxu0 %v2867
        %6558 = vmatprep.subr.bf16.mxu0 0
        %6559 = vmatpush1.bf16.msra.mxu0 %v2872
        %6560 = vmatprep.subr.bf16.mxu0 0
        %6561 = vmatpush1.bf16.msra.mxu0 %v2877
        %6562 = vmatprep.subr.bf16.mxu0 0
        %6563 = vmatpush1.bf16.msra.mxu0 %v2882
        %6564 = vmatprep.subr.bf16.mxu0 0
        %6565 = vmatpush1.bf16.msra.mxu0 %v2887
        %6566 = vmatprep.subr.bf16.mxu0 0
        %6567 = vmatpush1.bf16.msra.mxu0 %v2892
        %6568 = vmatprep.subr.bf16.mxu0 0
        %6569 = vmatpush1.bf16.msra.mxu0 %v2897
        %6570 = vmatprep.subr.bf16.mxu0 0
        %6571 = vmatpush1.bf16.msra.mxu0 %v2902
        %6572 = vmatprep.subr.bf16.mxu0 0
        %6573 = vmatpush1.bf16.msra.mxu0 %v2907
        %6574 = vmatprep.subr.bf16.mxu0 0
        %6575 = vmatpush1.bf16.msra.mxu0 %v2912
        %6576 = vmatprep.subr.bf16.mxu0 0
        %6577 = vmatpush1.bf16.msra.mxu0 %v2917
        %6578 = vmatprep.subr.bf16.mxu0 0
        %6579 = vmatpush1.bf16.msra.mxu0 %v2922
        %6580 = vmatprep.subr.bf16.mxu0 0
        %6581 = vmatpush1.bf16.msra.mxu0 %v2927
        %6582 = vmatprep.subr.bf16.mxu0 0
        %6583 = vmatpush1.bf16.msra.mxu0 %v2932
        %6584 = vmatprep.subr.bf16.mxu0 0
        %6585 = vmatpush1.bf16.msra.mxu0 %v2937
        %6586 = vmatprep.subr.bf16.mxu0 0
        %6587 = vmatpush1.bf16.msra.mxu0 %v2942
        %6588 = vmatprep.mubr.bf16.mxu0 %v3646
        %6589 = vmatmul.mubr.bf16.gmra.mrb[0].mxu0 %v3645
        %v6590 = vpop.f32.mrb[0].mxu0
        %v6591 = vadd.f32 %v6550, %v6590
        %v6592 = vpop.f32.mrb[0].mxu0
        %v6593 = vpop.f32.mrb[0].mxu0
        %v6594 = vadd.f32 %v6553, %v6593
        %v6595 = vpop.f32.mrb[0].mxu0
        %6596 = vdwg.mxu0
        %6597 = vmatprep.subr.bf16.mxu0 0
        %6598 = vmatpush1.bf16.msra.mxu0 %v2947
        %6599 = vmatprep.subr.bf16.mxu0 0
        %6600 = vmatpush1.bf16.msra.mxu0 %v2952
        %6601 = vmatprep.subr.bf16.mxu0 0
        %6602 = vmatpush1.bf16.msra.mxu0 %v2957
        %6603 = vmatprep.subr.bf16.mxu0 0
        %6604 = vmatpush1.bf16.msra.mxu0 %v2962
        %6605 = vmatprep.subr.bf16.mxu0 0
        %6606 = vmatpush1.bf16.msra.mxu0 %v2967
        %6607 = vmatprep.subr.bf16.mxu0 0
        %6608 = vmatpush1.bf16.msra.mxu0 %v2972
        %6609 = vmatprep.subr.bf16.mxu0 0
        %6610 = vmatpush1.bf16.msra.mxu0 %v2977
        %6611 = vmatprep.subr.bf16.mxu0 0
        %6612 = vmatpush1.bf16.msra.mxu0 %v2982
        %6613 = vmatprep.subr.bf16.mxu0 0
        %6614 = vmatpush1.bf16.msra.mxu0 %v2987
        %6615 = vmatprep.subr.bf16.mxu0 0
        %6616 = vmatpush1.bf16.msra.mxu0 %v2992
        %6617 = vmatprep.subr.bf16.mxu0 0
        %6618 = vmatpush1.bf16.msra.mxu0 %v2997
        %6619 = vmatprep.subr.bf16.mxu0 0
        %6620 = vmatpush1.bf16.msra.mxu0 %v3002
        %6621 = vmatprep.subr.bf16.mxu0 0
        %6622 = vmatpush1.bf16.msra.mxu0 %v3007
        %6623 = vmatprep.subr.bf16.mxu0 0
        %6624 = vmatpush1.bf16.msra.mxu0 %v3012
        %6625 = vmatprep.subr.bf16.mxu0 0
        %6626 = vmatpush1.bf16.msra.mxu0 %v3017
        %6627 = vmatprep.subr.bf16.mxu0 0
        %6628 = vmatpush1.bf16.msra.mxu0 %v3022
        %6629 = vmatprep.mubr.bf16.mxu0 %v3648
        %6630 = vmatmul.mubr.bf16.gmra.mrb[0].mxu0 %v3647
        %v6631 = vpop.f32.mrb[0].mxu0
        %v6632 = vadd.f32 %v6591, %v6631
        %v6633 = vpop.f32.mrb[0].mxu0
        %v6634 = vpop.f32.mrb[0].mxu0
        %v6635 = vadd.f32 %v6594, %v6634
        %v6636 = vpop.f32.mrb[0].mxu0
        %6637 = vdwg.mxu0
        %6638 = vmatprep.subr.bf16.mxu0 0
        %6639 = vmatpush1.bf16.msra.mxu0 %v3027
        %6640 = vmatprep.subr.bf16.mxu0 0
        %6641 = vmatpush1.bf16.msra.mxu0 %v3032
        %6642 = vmatprep.subr.bf16.mxu0 0
        %6643 = vmatpush1.bf16.msra.mxu0 %v3037
        %6644 = vmatprep.subr.bf16.mxu0 0
        %6645 = vmatpush1.bf16.msra.mxu0 %v3042
        %6646 = vmatprep.subr.bf16.mxu0 0
        %6647 = vmatpush1.bf16.msra.mxu0 %v3047
        %6648 = vmatprep.subr.bf16.mxu0 0
        %6649 = vmatpush1.bf16.msra.mxu0 %v3052
        %6650 = vmatprep.subr.bf16.mxu0 0
        %6651 = vmatpush1.bf16.msra.mxu0 %v3057
        %6652 = vmatprep.subr.bf16.mxu0 0
        %6653 = vmatpush1.bf16.msra.mxu0 %v3062
        %6654 = vmatprep.subr.bf16.mxu0 0
        %6655 = vmatpush1.bf16.msra.mxu0 %v3067
        %6656 = vmatprep.subr.bf16.mxu0 0
        %6657 = vmatpush1.bf16.msra.mxu0 %v3072
        %6658 = vmatprep.subr.bf16.mxu0 0
        %6659 = vmatpush1.bf16.msra.mxu0 %v3077
        %6660 = vmatprep.subr.bf16.mxu0 0
        %6661 = vmatpush1.bf16.msra.mxu0 %v3082
        %6662 = vmatprep.subr.bf16.mxu0 0
        %6663 = vmatpush1.bf16.msra.mxu0 %v3087
        %6664 = vmatprep.subr.bf16.mxu0 0
        %6665 = vmatpush1.bf16.msra.mxu0 %v3092
        %6666 = vmatprep.subr.bf16.mxu0 0
        %6667 = vmatpush1.bf16.msra.mxu0 %v3097
        %6668 = vmatprep.subr.bf16.mxu0 0
        %6669 = vmatpush1.bf16.msra.mxu0 %v3102
        %6670 = vmatprep.mubr.bf16.mxu0 %v3650
        %6671 = vmatmul.mubr.bf16.gmra.mrb[0].mxu0 %v3649
        %v6672 = vpop.f32.mrb[0].mxu0
        %v6673 = vadd.f32 %v6632, %v6672
        %v6674 = vpop.f32.mrb[0].mxu0
        %v6675 = vpop.f32.mrb[0].mxu0
        %v6676 = vadd.f32 %v6635, %v6675
        %v6677 = vpop.f32.mrb[0].mxu0
        %6678 = vdwg.mxu0
        %6679 = vmatprep.subr.bf16.mxu0 0
        %6680 = vmatpush1.bf16.msra.mxu0 %v3107
        %6681 = vmatprep.subr.bf16.mxu0 0
        %6682 = vmatpush1.bf16.msra.mxu0 %v3112
        %6683 = vmatprep.subr.bf16.mxu0 0
        %6684 = vmatpush1.bf16.msra.mxu0 %v3117
        %6685 = vmatprep.subr.bf16.mxu0 0
        %6686 = vmatpush1.bf16.msra.mxu0 %v3122
        %6687 = vmatprep.subr.bf16.mxu0 0
        %6688 = vmatpush1.bf16.msra.mxu0 %v3127
        %6689 = vmatprep.subr.bf16.mxu0 0
        %6690 = vmatpush1.bf16.msra.mxu0 %v3132
        %6691 = vmatprep.subr.bf16.mxu0 0
        %6692 = vmatpush1.bf16.msra.mxu0 %v3137
        %6693 = vmatprep.subr.bf16.mxu0 0
        %6694 = vmatpush1.bf16.msra.mxu0 %v3142
        %6695 = vmatprep.subr.bf16.mxu0 0
        %6696 = vmatpush1.bf16.msra.mxu0 %v3147
        %6697 = vmatprep.subr.bf16.mxu0 0
        %6698 = vmatpush1.bf16.msra.mxu0 %v3152
        %6699 = vmatprep.subr.bf16.mxu0 0
        %6700 = vmatpush1.bf16.msra.mxu0 %v3157
        %6701 = vmatprep.subr.bf16.mxu0 0
        %6702 = vmatpush1.bf16.msra.mxu0 %v3162
        %6703 = vmatprep.subr.bf16.mxu0 0
        %6704 = vmatpush1.bf16.msra.mxu0 %v3167
        %6705 = vmatprep.subr.bf16.mxu0 0
        %6706 = vmatpush1.bf16.msra.mxu0 %v3172
        %6707 = vmatprep.subr.bf16.mxu0 0
        %6708 = vmatpush1.bf16.msra.mxu0 %v3177
        %6709 = vmatprep.subr.bf16.mxu0 0
        %6710 = vmatpush1.bf16.msra.mxu0 %v3182
        %6711 = vmatprep.mubr.bf16.mxu0 %v3652
        %6712 = vmatmul.mubr.bf16.gmra.mrb[0].mxu0 %v3651
        %v6713 = vpop.f32.mrb[0].mxu0
        %v6714 = vadd.f32 %v6673, %v6713
        %v6715 = vpop.f32.mrb[0].mxu0
        %v6716 = vpop.f32.mrb[0].mxu0
        %v6717 = vadd.f32 %v6676, %v6716
        %v6718 = vpop.f32.mrb[0].mxu0
        %6719 = vdwg.mxu0
        %6720 = vmatprep.subr.bf16.mxu0 0
        %6721 = vmatpush1.bf16.msra.mxu0 %v3187
        %6722 = vmatprep.subr.bf16.mxu0 0
        %6723 = vmatpush1.bf16.msra.mxu0 %v3192
        %6724 = vmatprep.subr.bf16.mxu0 0
        %6725 = vmatpush1.bf16.msra.mxu0 %v3197
        %6726 = vmatprep.subr.bf16.mxu0 0
        %6727 = vmatpush1.bf16.msra.mxu0 %v3202
        %6728 = vmatprep.subr.bf16.mxu0 0
        %6729 = vmatpush1.bf16.msra.mxu0 %v3207
        %6730 = vmatprep.subr.bf16.mxu0 0
        %6731 = vmatpush1.bf16.msra.mxu0 %v3212
        %6732 = vmatprep.subr.bf16.mxu0 0
        %6733 = vmatpush1.bf16.msra.mxu0 %v3217
        %6734 = vmatprep.subr.bf16.mxu0 0
        %6735 = vmatpush1.bf16.msra.mxu0 %v3222
        %6736 = vmatprep.subr.bf16.mxu0 0
        %6737 = vmatpush1.bf16.msra.mxu0 %v3227
        %6738 = vmatprep.subr.bf16.mxu0 0
        %6739 = vmatpush1.bf16.msra.mxu0 %v3232
        %6740 = vmatprep.subr.bf16.mxu0 0
        %6741 = vmatpush1.bf16.msra.mxu0 %v3237
        %6742 = vmatprep.subr.bf16.mxu0 0
        %6743 = vmatpush1.bf16.msra.mxu0 %v3242
        %6744 = vmatprep.subr.bf16.mxu0 0
        %6745 = vmatpush1.bf16.msra.mxu0 %v3247
        %6746 = vmatprep.subr.bf16.mxu0 0
        %6747 = vmatpush1.bf16.msra.mxu0 %v3252
        %6748 = vmatprep.subr.bf16.mxu0 0
        %6749 = vmatpush1.bf16.msra.mxu0 %v3257
        %6750 = vmatprep.subr.bf16.mxu0 0
        %6751 = vmatpush1.bf16.msra.mxu0 %v3262
        %6752 = vmatprep.mubr.bf16.mxu0 %v3654
        %6753 = vmatmul.mubr.bf16.gmra.mrb[0].mxu0 %v3653
        %v6754 = vpop.f32.mrb[0].mxu0
        %v6755 = vadd.f32 %v6714, %v6754
        %v6756 = vpop.f32.mrb[0].mxu0
        %v6757 = vpop.f32.mrb[0].mxu0
        %v6758 = vadd.f32 %v6717, %v6757
        %v6759 = vpop.f32.mrb[0].mxu0
        %6760 = vdwg.mxu0
        %6761 = vmatprep.subr.bf16.mxu0 0
        %6762 = vmatpush1.bf16.msra.mxu0 %v3267
        %6763 = vmatprep.subr.bf16.mxu0 0
        %6764 = vmatpush1.bf16.msra.mxu0 %v3272
        %6765 = vmatprep.subr.bf16.mxu0 0
        %6766 = vmatpush1.bf16.msra.mxu0 %v3277
        %6767 = vmatprep.subr.bf16.mxu0 0
        %6768 = vmatpush1.bf16.msra.mxu0 %v3282
        %6769 = vmatprep.subr.bf16.mxu0 0
        %6770 = vmatpush1.bf16.msra.mxu0 %v3287
        %6771 = vmatprep.subr.bf16.mxu0 0
        %6772 = vmatpush1.bf16.msra.mxu0 %v3292
        %6773 = vmatprep.subr.bf16.mxu0 0
        %6774 = vmatpush1.bf16.msra.mxu0 %v3297
        %6775 = vmatprep.subr.bf16.mxu0 0
        %6776 = vmatpush1.bf16.msra.mxu0 %v3302
        %6777 = vmatprep.subr.bf16.mxu0 0
        %6778 = vmatpush1.bf16.msra.mxu0 %v3307
        %6779 = vmatprep.subr.bf16.mxu0 0
        %6780 = vmatpush1.bf16.msra.mxu0 %v3312
        %6781 = vmatprep.subr.bf16.mxu0 0
        %6782 = vmatpush1.bf16.msra.mxu0 %v3317
        %6783 = vmatprep.subr.bf16.mxu0 0
        %6784 = vmatpush1.bf16.msra.mxu0 %v3322
        %6785 = vmatprep.subr.bf16.mxu0 0
        %6786 = vmatpush1.bf16.msra.mxu0 %v3327
        %6787 = vmatprep.subr.bf16.mxu0 0
        %6788 = vmatpush1.bf16.msra.mxu0 %v3332
        %6789 = vmatprep.subr.bf16.mxu0 0
        %6790 = vmatpush1.bf16.msra.mxu0 %v3337
        %6791 = vmatprep.subr.bf16.mxu0 0
        %6792 = vmatpush1.bf16.msra.mxu0 %v3342
        %6793 = vmatprep.mubr.bf16.mxu0 %v3656
        %6794 = vmatmul.mubr.bf16.gmra.mrb[0].mxu0 %v3655
        %v6795 = vpop.f32.mrb[0].mxu0
        %v6796 = vadd.f32 %v6755, %v6795
        %v6797 = vpop.f32.mrb[0].mxu0
        %v6798 = vpop.f32.mrb[0].mxu0
        %v6799 = vadd.f32 %v6758, %v6798
        %v6800 = vpop.f32.mrb[0].mxu0
        %6801 = vdwg.mxu0
        %6802 = vmatprep.subr.bf16.mxu0 0
        %6803 = vmatpush1.bf16.msra.mxu0 %v3347
        %6804 = vmatprep.subr.bf16.mxu0 0
        %6805 = vmatpush1.bf16.msra.mxu0 %v3352
        %6806 = vmatprep.subr.bf16.mxu0 0
        %6807 = vmatpush1.bf16.msra.mxu0 %v3357
        %6808 = vmatprep.subr.bf16.mxu0 0
        %6809 = vmatpush1.bf16.msra.mxu0 %v3362
        %6810 = vmatprep.subr.bf16.mxu0 0
        %6811 = vmatpush1.bf16.msra.mxu0 %v3367
        %6812 = vmatprep.subr.bf16.mxu0 0
        %6813 = vmatpush1.bf16.msra.mxu0 %v3372
        %6814 = vmatprep.subr.bf16.mxu0 0
        %6815 = vmatpush1.bf16.msra.mxu0 %v3377
        %6816 = vmatprep.subr.bf16.mxu0 0
        %6817 = vmatpush1.bf16.msra.mxu0 %v3382
        %6818 = vmatprep.subr.bf16.mxu0 0
        %6819 = vmatpush1.bf16.msra.mxu0 %v3387
        %6820 = vmatprep.subr.bf16.mxu0 0
        %6821 = vmatpush1.bf16.msra.mxu0 %v3392
        %6822 = vmatprep.subr.bf16.mxu0 0
        %6823 = vmatpush1.bf16.msra.mxu0 %v3397
        %6824 = vmatprep.subr.bf16.mxu0 0
        %6825 = vmatpush1.bf16.msra.mxu0 %v3402
        %6826 = vmatprep.subr.bf16.mxu0 0
        %6827 = vmatpush1.bf16.msra.mxu0 %v3407
        %6828 = vmatprep.subr.bf16.mxu0 0
        %6829 = vmatpush1.bf16.msra.mxu0 %v3412
        %6830 = vmatprep.subr.bf16.mxu0 0
        %6831 = vmatpush1.bf16.msra.mxu0 %v3417
        %6832 = vmatprep.subr.bf16.mxu0 0
        %6833 = vmatpush1.bf16.msra.mxu0 %v3422
        %6834 = vmatprep.mubr.bf16.mxu0 %v3658
        %6835 = vmatmul.mubr.bf16.gmra.mrb[0].mxu0 %v3657
        %v6836 = vpop.f32.mrb[0].mxu0
        %v6837 = vadd.f32 %v6796, %v6836
        %v6838 = vpop.f32.mrb[0].mxu0
        %v6839 = vpop.f32.mrb[0].mxu0
        %v6840 = vadd.f32 %v6799, %v6839
        %v6841 = vpop.f32.mrb[0].mxu0
        %6842 = vdwg.mxu0
        %6843 = vmatprep.subr.bf16.mxu0 0
        %6844 = vmatpush1.bf16.msra.mxu0 %v3427
        %6845 = vmatprep.subr.bf16.mxu0 0
        %6846 = vmatpush1.bf16.msra.mxu0 %v3432
        %6847 = vmatprep.subr.bf16.mxu0 0
        %6848 = vmatpush1.bf16.msra.mxu0 %v3437
        %6849 = vmatprep.subr.bf16.mxu0 0
        %6850 = vmatpush1.bf16.msra.mxu0 %v3442
        %6851 = vmatprep.subr.bf16.mxu0 0
        %6852 = vmatpush1.bf16.msra.mxu0 %v3447
        %6853 = vmatprep.subr.bf16.mxu0 0
        %6854 = vmatpush1.bf16.msra.mxu0 %v3452
        %6855 = vmatprep.subr.bf16.mxu0 0
        %6856 = vmatpush1.bf16.msra.mxu0 %v3457
        %6857 = vmatprep.subr.bf16.mxu0 0
        %6858 = vmatpush1.bf16.msra.mxu0 %v3462
        %6859 = vmatprep.subr.bf16.mxu0 0
        %6860 = vmatpush1.bf16.msra.mxu0 0
        %6861 = vmatprep.subr.bf16.mxu0 0
        %6862 = vmatpush1.bf16.msra.mxu0 0
        %6863 = vmatprep.subr.bf16.mxu0 0
        %6864 = vmatpush1.bf16.msra.mxu0 0
        %6865 = vmatprep.subr.bf16.mxu0 0
        %6866 = vmatpush1.bf16.msra.mxu0 0
        %6867 = vmatprep.subr.bf16.mxu0 0
        %6868 = vmatpush1.bf16.msra.mxu0 0
        %6869 = vmatprep.subr.bf16.mxu0 0
        %6870 = vmatpush1.bf16.msra.mxu0 0
        %6871 = vmatprep.subr.bf16.mxu0 0
        %6872 = vmatpush1.bf16.msra.mxu0 0
        %6873 = vmatprep.subr.bf16.mxu0 0
        %6874 = vmatpush1.bf16.msra.mxu0 0
        %6875 = vmatprep.mubr.bf16.mxu0 0
        %6876 = vmatmul.mubr.bf16.gmra.mrb[0].mxu0 %v3659
        %v6877 = vpop.f32.mrb[0].mxu0
        %v6878 = vadd.f32 %v6837, %v6877
        %v6879 = vpop.f32.mrb[0].mxu0
        %v6880 = vpop.f32.mrb[0].mxu0
        %v6881 = vadd.f32 %v6840, %v6880
        %v6882 = vpop.f32.mrb[0].mxu0
        %6883 = vdwg.mxu0
        %v6884 = vadd.f32 %v463, %v4776
        %v6885 = vadd.f32 %v464, %v4778
        %v6886 = vadd.f32 %v465, %v5851
        %v6887 = vadd.f32 %v466, %v5853
        %v6888 = vadd.f32 %v467, %v6878
        %v6889 = vadd.f32 %v468, %v4780
        %v6890 = vadd.f32 %v469, %v4782
        %v6891 = vadd.f32 %v470, %v5855
        %v6892 = vadd.f32 %v471, %v5857
        %v6893 = vadd.f32 %v472, %v6881
        %6894 = vst [vmem:[#allocation2] sm:$0xff] %v6884
        %6895 = vst [vmem:[#allocation2 + $0x8] sm:$0xff] %v6885
        %6896 = vst [vmem:[#allocation2 + $0x10] sm:$0xff] %v6886
        %6897 = vst [vmem:[#allocation2 + $0x18] sm:$0xff] %v6887
        %6898 = vst [vmem:[#allocation2 + $0x20] sm:$0xff] %v6888
        %6899 = vst [vmem:[#allocation2 + $0x28] sm:$0xff] %v6889
        %6900 = vst [vmem:[#allocation2 + $0x30] sm:$0xff] %v6890
        %6901 = vst [vmem:[#allocation2 + $0x38] sm:$0xff] %v6891
        %6902 = vst [vmem:[#allocation2 + $0x40] sm:$0xff] %v6892
        %6903 = vst [vmem:[#allocation2 + $0x48] sm:$0xff] %v6893
        %p6904 = scmp.eq.s32.totalorder %s35, 3
        // Predicated region
        $region81: #{tpu_custom_call.1} parent=47 // pred_check
          %p6905 = pneg %p6904
        $region82: #{tpu_custom_call.1} parent=47 // pred_check_branch
          %6907 = sbr.rel (%p6905) target = $region84
        $region83: #{tpu_custom_call.1} parent=47 // pred_region
          %v6908 = vld [vmem:[#allocation2] sm:$0xff]
          %v6909 = vld [vmem:[#allocation2 + $0x8] sm:$0xff]
          %v6910 = vld [vmem:[#allocation2 + $0x10] sm:$0xff]
          %v6911 = vld [vmem:[#allocation2 + $0x18] sm:$0xff]
          %v6912 = vld [vmem:[#allocation2 + $0x20] sm:$0xff]
          %v6913 = vld [vmem:[#allocation2 + $0x28] sm:$0xff]
          %v6914 = vld [vmem:[#allocation2 + $0x30] sm:$0xff]
          %v6915 = vld [vmem:[#allocation2 + $0x38] sm:$0xff]
          %v6916 = vld [vmem:[#allocation2 + $0x40] sm:$0xff]
          %v6917 = vld [vmem:[#allocation2 + $0x48] sm:$0xff]
          %v6918 = vld [vmem:[#allocation8] sm:$0x1f]
          %v6920 = vlaneseq
          %v6921 = vshrl.u32 %v6920, 7
          %v6922 = vsub.s32 0, %v6921
          %v6923 = vrot.slane %v6918, %v6922
          %v6924 = vlaneseq
          %v6925 = vshrl.u32 %v6924, 7
          %v6926 = vsub.s32 1, %v6925
          %v6927 = vrot.slane %v6918, %v6926
          %v6928 = vlaneseq
          %v6929 = vshrl.u32 %v6928, 7
          %v6930 = vsub.s32 2, %v6929
          %v6931 = vrot.slane %v6918, %v6930
          %v6932 = vlaneseq
          %v6933 = vshrl.u32 %v6932, 7
          %v6934 = vsub.s32 3, %v6933
          %v6935 = vrot.slane %v6918, %v6934
          %v6936 = vlaneseq
          %v6937 = vshrl.u32 %v6936, 7
          %v6938 = vsub.s32 4, %v6937
          %v6939 = vrot.slane %v6918, %v6938
          %v6945 = vmul.f32 %v6908, %v6923
          %v6946 = vmul.f32 %v6909, %v6927
          %v6947 = vmul.f32 %v6910, %v6931
          %v6948 = vmul.f32 %v6911, %v6935
          %v6949 = vmul.f32 %v6912, %v6939
          %v6950 = vmul.f32 %v6913, %v6923
          %v6951 = vmul.f32 %v6914, %v6927
          %v6952 = vmul.f32 %v6915, %v6931
          %v6953 = vmul.f32 %v6916, %v6935
          %v6954 = vmul.f32 %v6917, %v6939
          %v6955 = vld [vmem:[#allocation9] sm:$0xf]
          %v6957 = vlaneseq
          %v6958 = vshrl.u32 %v6957, 7
          %v6959 = vsub.s32 0, %v6958
          %v6960 = vrot.slane %v6955, %v6959
          %v6961 = vlaneseq
          %v6962 = vshrl.u32 %v6961, 7
          %v6963 = vsub.s32 1, %v6962
          %v6964 = vrot.slane %v6955, %v6963
          %v6965 = vlaneseq
          %v6966 = vshrl.u32 %v6965, 7
          %v6967 = vsub.s32 2, %v6966
          %v6968 = vrot.slane %v6955, %v6967
          %v6969 = vlaneseq
          %v6970 = vshrl.u32 %v6969, 7
          %v6971 = vsub.s32 3, %v6970
          %v6972 = vrot.slane %v6955, %v6971
          %v6977 = vadd.f32 %v6945, %v6960
          %v6978 = vadd.f32 %v6946, %v6964
          %v6979 = vadd.f32 %v6947, %v6968
          %v6980 = vadd.f32 %v6948, %v6972
          %v6981 = vadd.f32 %v6950, %v6960
          %v6982 = vadd.f32 %v6951, %v6964
          %v6983 = vadd.f32 %v6952, %v6968
          %v6984 = vadd.f32 %v6953, %v6972
          %v6985 = vmax.f32 %v6977, 0.0
          %v6986 = vmax.f32 %v6978, 0.0
          %v6987 = vmax.f32 %v6979, 0.0
          %v6988 = vmax.f32 %v6980, 0.0
          %v6989 = vmax.f32 %v6981, 0.0
          %v6990 = vmax.f32 %v6982, 0.0
          %v6991 = vmax.f32 %v6983, 0.0
          %v6992 = vmax.f32 %v6984, 0.0
          %v6993 = vld [vmem:[#allocation11] sm:$0xff]
          %v6994 = vld [vmem:[#allocation11 + $0x8] sm:$0xff]
          %v6995 = vld [vmem:[#allocation11 + $0x10] sm:$0xff]
          %v6996 = vld [vmem:[#allocation11 + $0x18] sm:$0xff]
          %v6997 = vld [vmem:[#allocation11 + $0x20] sm:$0xff]
          %v6998 = vld [vmem:[#allocation11 + $0x28] sm:$0xff]
          %v6999 = vld [vmem:[#allocation11 + $0x30] sm:$0xff]
          %v7000 = vld [vmem:[#allocation11 + $0x38] sm:$0xff]
          %v7001 = vld [vmem:[#allocation11 + $0x40] sm:$0xff]
          %v7002 = vld [vmem:[#allocation11 + $0x48] sm:$0xff]
          %v7003 = vld [vmem:[#allocation11 + $0x50] sm:$0xff]
          %v7004 = vld [vmem:[#allocation11 + $0x58] sm:$0xff]
          %v7005 = vld [vmem:[#allocation11 + $0x60] sm:$0xff]
          %v7006 = vld [vmem:[#allocation11 + $0x68] sm:$0xff]
          %v7007 = vld [vmem:[#allocation11 + $0x70] sm:$0xff]
          %v7008 = vld [vmem:[#allocation11 + $0x78] sm:$0xff]
          %v7009 = vld [vmem:[#allocation11 + $0x80] sm:$0xff]
          %v7010 = vld [vmem:[#allocation11 + $0x88] sm:$0xff]
          %v7011 = vld [vmem:[#allocation11 + $0x90] sm:$0xff]
          %v7012 = vld [vmem:[#allocation11 + $0x98] sm:$0xff]
          %v7013 = vld [vmem:[#allocation11 + $0xa0] sm:$0xff]
          %v7014 = vld [vmem:[#allocation11 + $0xa8] sm:$0xff]
          %v7015 = vld [vmem:[#allocation11 + $0xb0] sm:$0xff]
          %v7016 = vld [vmem:[#allocation11 + $0xb8] sm:$0xff]
          %v7017 = vld [vmem:[#allocation11 + $0xc0] sm:$0xff]
          %v7018 = vld [vmem:[#allocation11 + $0xc8] sm:$0xff]
          %v7019 = vld [vmem:[#allocation11 + $0xd0] sm:$0xff]
          %v7020 = vld [vmem:[#allocation11 + $0xd8] sm:$0xff]
          %v7021 = vld [vmem:[#allocation11 + $0xe0] sm:$0xff]
          %v7022 = vld [vmem:[#allocation11 + $0xe8] sm:$0xff]
          %v7023 = vld [vmem:[#allocation11 + $0xf0] sm:$0xff]
          %v7024 = vld [vmem:[#allocation11 + $0xf8] sm:$0xff]
          %v7025 = vld [vmem:[#allocation11 + $0x100] sm:$0xff]
          %v7026 = vld [vmem:[#allocation11 + $0x108] sm:$0xff]
          %v7027 = vld [vmem:[#allocation11 + $0x110] sm:$0xff]
          %v7028 = vld [vmem:[#allocation11 + $0x118] sm:$0xff]
          %v7029 = vld [vmem:[#allocation11 + $0x120] sm:$0xff]
          %v7030 = vld [vmem:[#allocation11 + $0x128] sm:$0xff]
          %v7031 = vld [vmem:[#allocation11 + $0x130] sm:$0xff]
          %v7032 = vld [vmem:[#allocation11 + $0x138] sm:$0xff]
          %v7033 = vld [vmem:[#allocation11 + $0x140] sm:$0xff]
          %v7034 = vld [vmem:[#allocation11 + $0x148] sm:$0xff]
          %v7035 = vld [vmem:[#allocation11 + $0x150] sm:$0xff]
          %v7036 = vld [vmem:[#allocation11 + $0x158] sm:$0xff]
          %v7037 = vld [vmem:[#allocation11 + $0x160] sm:$0xff]
          %v7038 = vld [vmem:[#allocation11 + $0x168] sm:$0xff]
          %v7039 = vld [vmem:[#allocation11 + $0x170] sm:$0xff]
          %v7040 = vld [vmem:[#allocation11 + $0x178] sm:$0xff]
          %v7041 = vld [vmem:[#allocation11 + $0x180] sm:$0xff]
          %v7042 = vld [vmem:[#allocation11 + $0x188] sm:$0xff]
          %v7043 = vld [vmem:[#allocation11 + $0x190] sm:$0xff]
          %v7044 = vld [vmem:[#allocation11 + $0x198] sm:$0xff]
          %v7045 = vld [vmem:[#allocation11 + $0x1a0] sm:$0xff]
          %v7046 = vld [vmem:[#allocation11 + $0x1a8] sm:$0xff]
          %v7047 = vld [vmem:[#allocation11 + $0x1b0] sm:$0xff]
          %v7048 = vld [vmem:[#allocation11 + $0x1b8] sm:$0xff]
          %v7049 = vld [vmem:[#allocation11 + $0x1c0] sm:$0xff]
          %v7050 = vld [vmem:[#allocation11 + $0x1c8] sm:$0xff]
          %v7051 = vld [vmem:[#allocation11 + $0x1d0] sm:$0xff]
          %v7052 = vld [vmem:[#allocation11 + $0x1d8] sm:$0xff]
          %v7053 = vld [vmem:[#allocation11 + $0x1e0] sm:$0xff]
          %v7054 = vld [vmem:[#allocation11 + $0x1e8] sm:$0xff]
          %v7055 = vld [vmem:[#allocation11 + $0x1f0] sm:$0xff]
          %v7056 = vld [vmem:[#allocation11 + $0x1f8] sm:$0xff]
          %v7057 = vld [vmem:[#allocation12] sm:$0x1]
          %v7059 = vlaneseq
          %v7060 = vshrl.u32 %v7059, 7
          %v7061 = vsub.s32 0, %v7060
          %v7062 = vrot.slane %v7057, %v7061
          %7064 = vmatprep.subr.mxu0 0.0
          %7065 = vmatpush1.msra.mxu0 %v6993
          %7066 = vmatprep.subr.mxu0 0.0
          %7067 = vmatpush1.msra.mxu0 %v6994
          %7068 = vmatprep.subr.mxu0 0.0
          %7069 = vmatpush1.msra.mxu0 %v6995
          %7070 = vmatprep.subr.mxu0 0.0
          %7071 = vmatpush1.msra.mxu0 %v6996
          %7072 = vmatprep.subr.mxu0 0.0
          %7073 = vmatpush1.msra.mxu0 %v6997
          %7074 = vmatprep.subr.mxu0 0.0
          %7075 = vmatpush1.msra.mxu0 %v6998
          %7076 = vmatprep.subr.mxu0 0.0
          %7077 = vmatpush1.msra.mxu0 %v6999
          %7078 = vmatprep.subr.mxu0 0.0
          %7079 = vmatpush1.msra.mxu0 %v7000
          %7080 = vmatprep.subr.mxu0 0.0
          %7081 = vmatpush1.msra.mxu0 %v7001
          %7082 = vmatprep.subr.mxu0 0.0
          %7083 = vmatpush1.msra.mxu0 %v7002
          %7084 = vmatprep.subr.mxu0 0.0
          %7085 = vmatpush1.msra.mxu0 %v7003
          %7086 = vmatprep.subr.mxu0 0.0
          %7087 = vmatpush1.msra.mxu0 %v7004
          %7088 = vmatprep.subr.mxu0 0.0
          %7089 = vmatpush1.msra.mxu0 %v7005
          %7090 = vmatprep.subr.mxu0 0.0
          %7091 = vmatpush1.msra.mxu0 %v7006
          %7092 = vmatprep.subr.mxu0 0.0
          %7093 = vmatpush1.msra.mxu0 %v7007
          %7094 = vmatprep.subr.mxu0 0.0
          %7095 = vmatpush1.msra.mxu0 %v7008
          %7096 = vmatprep.subr.mxu0 0.0
          %7097 = vmatpush1.msra.mxu0 %v7009
          %7098 = vmatprep.subr.mxu0 0.0
          %7099 = vmatpush1.msra.mxu0 %v7010
          %7100 = vmatprep.subr.mxu0 0.0
          %7101 = vmatpush1.msra.mxu0 %v7011
          %7102 = vmatprep.subr.mxu0 0.0
          %7103 = vmatpush1.msra.mxu0 %v7012
          %7104 = vmatprep.subr.mxu0 0.0
          %7105 = vmatpush1.msra.mxu0 %v7013
          %7106 = vmatprep.subr.mxu0 0.0
          %7107 = vmatpush1.msra.mxu0 %v7014
          %7108 = vmatprep.subr.mxu0 0.0
          %7109 = vmatpush1.msra.mxu0 %v7015
          %7110 = vmatprep.subr.mxu0 0.0
          %7111 = vmatpush1.msra.mxu0 %v7016
          %7112 = vmatprep.subr.mxu0 0.0
          %7113 = vmatpush1.msra.mxu0 %v7017
          %7114 = vmatprep.subr.mxu0 0.0
          %7115 = vmatpush1.msra.mxu0 %v7018
          %7116 = vmatprep.subr.mxu0 0.0
          %7117 = vmatpush1.msra.mxu0 %v7019
          %7118 = vmatprep.subr.mxu0 0.0
          %7119 = vmatpush1.msra.mxu0 %v7020
          %7120 = vmatprep.subr.mxu0 0.0
          %7121 = vmatpush1.msra.mxu0 %v7021
          %7122 = vmatprep.subr.mxu0 0.0
          %7123 = vmatpush1.msra.mxu0 %v7022
          %7124 = vmatprep.subr.mxu0 0.0
          %7125 = vmatpush1.msra.mxu0 %v7023
          %7126 = vmatprep.subr.mxu0 0.0
          %7127 = vmatpush1.msra.mxu0 %v7024
          %7128 = vmatprep.mubr.f32.mxu0 %v6986
          %7129 = vmatmul.mubr.f32.gmra.mrb[0].mxu0 %v6985
          %v7130 = vpop.f32.mrb[0].mxu0
          %v7131 = vadd.f32 %v7062, %v7130
          %v7132 = vpop.f32.mrb[0].mxu0
          %7133 = vmatprep.mubr.f32.mxu0 %v6990
          %7134 = vmatmul.mubr.f32.gmra.mrb[0].mxu0 %v6989
          %v7135 = vpop.f32.mrb[0].mxu0
          %v7136 = vadd.f32 %v7062, %v7135
          %v7137 = vpop.f32.mrb[0].mxu0
          %7138 = vdwg.mxu0
          %7139 = vmatprep.subr.mxu0 0.0
          %7140 = vmatpush1.msra.mxu0 %v7025
          %7141 = vmatprep.subr.mxu0 0.0
          %7142 = vmatpush1.msra.mxu0 %v7026
          %7143 = vmatprep.subr.mxu0 0.0
          %7144 = vmatpush1.msra.mxu0 %v7027
          %7145 = vmatprep.subr.mxu0 0.0
          %7146 = vmatpush1.msra.mxu0 %v7028
          %7147 = vmatprep.subr.mxu0 0.0
          %7148 = vmatpush1.msra.mxu0 %v7029
          %7149 = vmatprep.subr.mxu0 0.0
          %7150 = vmatpush1.msra.mxu0 %v7030
          %7151 = vmatprep.subr.mxu0 0.0
          %7152 = vmatpush1.msra.mxu0 %v7031
          %7153 = vmatprep.subr.mxu0 0.0
          %7154 = vmatpush1.msra.mxu0 %v7032
          %7155 = vmatprep.subr.mxu0 0.0
          %7156 = vmatpush1.msra.mxu0 %v7033
          %7157 = vmatprep.subr.mxu0 0.0
          %7158 = vmatpush1.msra.mxu0 %v7034
          %7159 = vmatprep.subr.mxu0 0.0
          %7160 = vmatpush1.msra.mxu0 %v7035
          %7161 = vmatprep.subr.mxu0 0.0
          %7162 = vmatpush1.msra.mxu0 %v7036
          %7163 = vmatprep.subr.mxu0 0.0
          %7164 = vmatpush1.msra.mxu0 %v7037
          %7165 = vmatprep.subr.mxu0 0.0
          %7166 = vmatpush1.msra.mxu0 %v7038
          %7167 = vmatprep.subr.mxu0 0.0
          %7168 = vmatpush1.msra.mxu0 %v7039
          %7169 = vmatprep.subr.mxu0 0.0
          %7170 = vmatpush1.msra.mxu0 %v7040
          %7171 = vmatprep.subr.mxu0 0.0
          %7172 = vmatpush1.msra.mxu0 %v7041
          %7173 = vmatprep.subr.mxu0 0.0
          %7174 = vmatpush1.msra.mxu0 %v7042
          %7175 = vmatprep.subr.mxu0 0.0
          %7176 = vmatpush1.msra.mxu0 %v7043
          %7177 = vmatprep.subr.mxu0 0.0
          %7178 = vmatpush1.msra.mxu0 %v7044
          %7179 = vmatprep.subr.mxu0 0.0
          %7180 = vmatpush1.msra.mxu0 %v7045
          %7181 = vmatprep.subr.mxu0 0.0
          %7182 = vmatpush1.msra.mxu0 %v7046
          %7183 = vmatprep.subr.mxu0 0.0
          %7184 = vmatpush1.msra.mxu0 %v7047
          %7185 = vmatprep.subr.mxu0 0.0
          %7186 = vmatpush1.msra.mxu0 %v7048
          %7187 = vmatprep.subr.mxu0 0.0
          %7188 = vmatpush1.msra.mxu0 %v7049
          %7189 = vmatprep.subr.mxu0 0.0
          %7190 = vmatpush1.msra.mxu0 %v7050
          %7191 = vmatprep.subr.mxu0 0.0
          %7192 = vmatpush1.msra.mxu0 %v7051
          %7193 = vmatprep.subr.mxu0 0.0
          %7194 = vmatpush1.msra.mxu0 %v7052
          %7195 = vmatprep.subr.mxu0 0.0
          %7196 = vmatpush1.msra.mxu0 %v7053
          %7197 = vmatprep.subr.mxu0 0.0
          %7198 = vmatpush1.msra.mxu0 %v7054
          %7199 = vmatprep.subr.mxu0 0.0
          %7200 = vmatpush1.msra.mxu0 %v7055
          %7201 = vmatprep.subr.mxu0 0.0
          %7202 = vmatpush1.msra.mxu0 %v7056
          %7203 = vmatprep.mubr.f32.mxu0 %v6988
          %7204 = vmatmul.mubr.f32.gmra.mrb[0].mxu0 %v6987
          %v7205 = vpop.f32.mrb[0].mxu0
          %v7206 = vadd.f32 %v7131, %v7205
          %v7207 = vpop.f32.mrb[0].mxu0
          %7208 = vmatprep.mubr.f32.mxu0 %v6992
          %7209 = vmatmul.mubr.f32.gmra.mrb[0].mxu0 %v6991
          %v7210 = vpop.f32.mrb[0].mxu0
          %v7211 = vadd.f32 %v7136, %v7210
          %v7212 = vpop.f32.mrb[0].mxu0
          %7213 = vdwg.mxu0
          %v7214 = vtanh.pop %v7206
          %v7215 = vtanh.pop %v7211
          %7216 = vst [vmem:[#allocation16] sm:$0xff] %v7214
          %7217 = vst [vmem:[#allocation16 + $0x8] sm:$0xff] %v7215
          %v7218 = vld [vmem:[#allocation14] sm:$0x1]
          %v7220 = vlaneseq
          %v7221 = vshrl.u32 %v7220, 7
          %v7222 = vsub.s32 0, %v7221
          %v7223 = vrot.slane %v7218, %v7222
          %v7225 = vadd.f32 %v6949, %v7223
          %v7226 = vadd.f32 %v6954, %v7223
          %7227 = vst [vmem:[#allocation15] sm:$0xff] %v7225
          %7228 = vst [vmem:[#allocation15 + $0x8] sm:$0xff] %v7226
        $region84: #{tpu_custom_call.1} parent=47 // pred_fallthru
          _
        // Predicated region
        $region85: #{tpu_custom_call.1} parent=47 // pred_check
          %p7229 = pneg %p219
        $region86: #{tpu_custom_call.1} parent=47 // pred_check_branch
          %7231 = sbr.rel (%p7229) target = $region88
        $region87: #{tpu_custom_call.1} parent=47 // pred_region
          %s7232 = smul.u32 2, %s34
          %s7234 = ssub.s32 256, 256
          %7235 = vsyncadd [#allocation5], %s7234
          %s7236 = smul.addr %s7232, 128
          %s7237 = scalar_lea.hbm %s7, %s7236
          %s7238 = sshll.u32 [#allocation15], 4
          %s7239 = int_to_ptr.vmem [resolvable:$true] %s7238
          %7244 = dma.vmem_to_hbm [thread:$0]  %s7239, 256, %s7237, [#allocation5], 128, 128, 8
        $region88: #{tpu_custom_call.1} parent=47 // pred_fallthru
          _
        // Predicated region
        $region89: #{tpu_custom_call.1} parent=47 // pred_check
          %p7245 = pneg %p245
        $region90: #{tpu_custom_call.1} parent=47 // pred_check_branch
          %7247 = sbr.rel (%p7245) target = $region92
        $region91: #{tpu_custom_call.1} parent=47 // pred_region
          %s7248 = smul.u32 2, %s34
          %s7250 = ssub.s32 256, 256
          %7251 = vsyncadd [#allocation17], %s7250
          %s7252 = smul.addr %s7248, 128
          %s7253 = scalar_lea.hbm %s8, %s7252
          %s7254 = sshll.u32 [#allocation16], 4
          %s7255 = int_to_ptr.vmem [resolvable:$true] %s7254
          %7260 = dma.vmem_to_hbm [thread:$0]  %s7255, 256, %s7253, [#allocation17], 128, 128, 8
        $region92: #{tpu_custom_call.1} parent=47 // pred_fallthru
          _
        // Predicated region
        $region93: #{tpu_custom_call.1} parent=47 // pred_check
          %p7261 = pneg %p219
        $region94: #{tpu_custom_call.1} parent=47 // pred_check_branch
          %7263 = sbr.rel (%p7261) target = $region96
        $region95: #{tpu_custom_call.1} parent=47 // pred_region
          %7264 = dma.done [#allocation5], 256
        $region96: #{tpu_custom_call.1} parent=47 // pred_fallthru
          _
        // Predicated region
        $region97: #{tpu_custom_call.1} parent=47 // pred_check
          %p7265 = pneg %p245
        $region98: #{tpu_custom_call.1} parent=47 // pred_check_branch
          %7267 = sbr.rel (%p7265) target = $region100
        $region99: #{tpu_custom_call.1} parent=47 // pred_region
          %7268 = dma.done [#allocation17], 256
        $region100: #{tpu_custom_call.1} parent=47 // pred_fallthru
          _
      $region48: #{tpu_custom_call.1} parent=5 // pred_fallthru
        _
      %p7269 = scmp.le.s32.totalorder 2, %s25
      // Predicated region
      $region101: #{tpu_custom_call.1} parent=5 // pred_check
        %p7270 = pneg %p7269
      $region102: #{tpu_custom_call.1} parent=5 // pred_check_branch
        %7272 = sbr.rel (%p7270) target = $region104
      $region103: #{tpu_custom_call.1} parent=5 // pred_region
        %s7273 = ssub.s32 %s25, 2
      $region104: #{tpu_custom_call.1} parent=5 // pred_fallthru
        _
    $region6: #{tpu_custom_call.1} parent=1 // loop_footer
      %s29 = sadd.s32 1, %s25
    $region7: #{tpu_custom_call.1} parent=1 // loop_footer_branch
      %24 = sbr.rel target = $region3
    $region8: #{tpu_custom_call.1} parent=1 // loop_exit
      _
    %7274 = vsyncpa [#allocation4], 1
    %s7275 = scalar_lea.sflag [#allocation4], 1
    %7276 = vsyncpa %s7275, 1
    %7277 = vsyncpa [#allocation7], 1
    %s7278 = scalar_lea.sflag [#allocation7], 1
    %7279 = vsyncpa %s7278, 1
    %7280 = vsyncpa [#allocation10], 1
    %7281 = vsyncpa [#allocation13], 1
    %7282 = vsyncpa [#allocation5], 1
    %s7283 = scalar_lea.sflag [#allocation5], 1
    %7284 = vsyncpa %s7283, 1
    %7285 = vsyncpa [#allocation17], 1

</llo_original>
